<compile_context>
chip_gen: v7x
topology: tpu7x:2x2x1
jax: 0.10.0
libtpu: 0.0.40
codegen_flags: <defaults>
</compile_context>

<pallas_src>
import functools

import jax
import jax.numpy as jnp
from jax.experimental import pallas as pl
from jax.experimental.pallas import tpu as pltpu

_EPS = float(jnp.finfo(jnp.float32).eps)  # nn.RMSNorm default eps (finfo eps)


def _device_kind():
    try:
        return jax.devices()[0].device_kind.lower()
    except Exception:
        return ""


_KIND = _device_kind()
_OLD_GEN = ("v5" in _KIND) or ("v6" in _KIND)
# v5e/v6e have 128 MiB physical VMEM -> raise the scoped limit; v7x (64 MiB
# physical) and unknown chips get a conservative 48 MiB.
_VMEM_LIMIT = (96 if _OLD_GEN else 48) * 1024 * 1024
_MLP_BH = 512 if _OLD_GEN else 256   # drop hidden tile on 64 MiB-VMEM parts


def _tile(dim, pref, mult):
    """Largest tile <= pref that is a multiple of `mult` and divides `dim`.

    Falls back to the full dimension (always a legal block shape)."""
    if dim <= pref:
        return dim
    t = (min(pref, dim) // mult) * mult
    while t >= mult:
        if dim % t == 0:
            return t
        t -= mult
    return dim


def _head_group(num_heads, head_dim):
    """Heads per attention grid step: lane-dense (multiple of 128) and <=256."""
    for g in range(num_heads, 0, -1):
        gd = g * head_dim
        if num_heads % g == 0 and gd <= 256 and gd % 128 == 0:
            return g
    return num_heads


# ----------------------------------------------------------------------------
# norm1 fused into the QKV projection; also emits the f32 residual base
# ----------------------------------------------------------------------------
def _rms_qkv_kernel(x_ref, nw_ref, w_ref, xn_ref, qkv_ref, xnb_ref):
    @pl.when(pl.program_id(1) == 0)
    def _():
        x = x_ref[...]
        ms = jnp.mean(x * x, axis=-1, keepdims=True)
        xn = (x * jax.lax.rsqrt(ms + _EPS)) * nw_ref[...]
        xn_ref[...] = xn                         # f32 residual base (output)
        xnb_ref[...] = xn.astype(jnp.bfloat16)   # bf16 MXU A operand (scratch)

    qkv_ref[...] = jnp.dot(xnb_ref[...], w_ref[...],
                           preferred_element_type=jnp.float32).astype(qkv_ref.dtype)


def rmsnorm_qkv(x2d, nw, wqkv, *, bm=256, bn=512):
    m, d = x2d.shape
    d2, n3 = wqkv.shape
    assert d == d2
    tm = _tile(m, bm, 8)
    tn = _tile(n3, bn, 128)
    return pl.pallas_call(
        _rms_qkv_kernel,
        out_shape=(jax.ShapeDtypeStruct((m, d), jnp.float32),
                   jax.ShapeDtypeStruct((m, n3), jnp.bfloat16)),
        grid=(m // tm, n3 // tn),
        in_specs=[
            pl.BlockSpec((tm, d), lambda i, j: (i, 0)),
            pl.BlockSpec((1, d), lambda i, j: (0, 0)),
            pl.BlockSpec((d, tn), lambda i, j: (0, j)),
        ],
        out_specs=(
            pl.BlockSpec((tm, d), lambda i, j: (i, 0)),
            pl.BlockSpec((tm, tn), lambda i, j: (i, j)),
        ),
        scratch_shapes=[pltpu.VMEM((tm, d), jnp.bfloat16)],
        compiler_params=pltpu.CompilerParams(
            dimension_semantics=("parallel", "arbitrary"),
            vmem_limit_bytes=_VMEM_LIMIT),
    )(x2d, nw.reshape(1, d), wqkv)


# ----------------------------------------------------------------------------
# RoPE applied once to Q and K (softmax scale folded into Q tables)
# ----------------------------------------------------------------------------
def _rope_kernel(qkv_ref, cq_ref, sq_ref, ck_ref, sk_ref, o_ref,
                 *, num_heads, head_dim, d_model):
    half = head_dim // 2
    x = qkv_ref[0]                       # (tq, 3D) bf16
    cq = cq_ref[...]
    sq = sq_ref[...]
    ck = ck_ref[...]
    sk = sk_ref[...]
    for h in range(num_heads):
        qs = slice(h * head_dim, (h + 1) * head_dim)
        ks = slice(d_model + h * head_dim, d_model + (h + 1) * head_dim)
        q = x[:, qs].astype(jnp.float32)
        k = x[:, ks].astype(jnp.float32)
        # rotate_half folded into the (sign-carrying, pre-scaled) sin tables
        o_ref[0, :, qs] = (q * cq + pltpu.roll(q, shift=half, axis=1) * sq
                           ).astype(o_ref.dtype)
        o_ref[0, :, ks] = (k * ck + pltpu.roll(k, shift=half, axis=1) * sk
                           ).astype(o_ref.dtype)
    vs = slice(2 * d_model, 3 * d_model)
    o_ref[0, :, vs] = x[:, vs]           # V passthrough


def rope_qkv(qkv3, cq, sq, ck, sk, num_heads, head_dim, *, bs=256):
    b, s, d3 = qkv3.shape
    d = d3 // 3
    ts = _tile(s, bs, 8)
    kern = functools.partial(_rope_kernel, num_heads=num_heads,
                             head_dim=head_dim, d_model=d)
    return pl.pallas_call(
        kern,
        out_shape=jax.ShapeDtypeStruct((b, s, d3), jnp.bfloat16),
        grid=(b, s // ts),
        in_specs=[
            pl.BlockSpec((1, ts, d3), lambda bi, si: (bi, si, 0)),
            pl.BlockSpec((ts, head_dim), lambda bi, si: (si, 0)),
            pl.BlockSpec((ts, head_dim), lambda bi, si: (si, 0)),
            pl.BlockSpec((ts, head_dim), lambda bi, si: (si, 0)),
            pl.BlockSpec((ts, head_dim), lambda bi, si: (si, 0)),
        ],
        out_specs=pl.BlockSpec((1, ts, d3), lambda bi, si: (bi, si, 0)),
        compiler_params=pltpu.CompilerParams(
            dimension_semantics=("parallel", "parallel"),
            vmem_limit_bytes=_VMEM_LIMIT),
    )(qkv3, cq, sq, ck, sk)


# ----------------------------------------------------------------------------
# Flash attention: head-group grid axis, clamped causal K/V fetch,
# mask only on the diagonal tile
# ----------------------------------------------------------------------------
def _attn_kernel(q_ref, k_ref, v_ref, o_ref, m_sc, l_sc, acc_sc,
                 *, gheads, head_dim):
    qi = pl.program_id(2)
    ki = pl.program_id(3)
    tq = q_ref.shape[1]
    tk = k_ref.shape[1]
    dh = head_dim

    @pl.when(ki == 0)
    def _():
        m_sc[...] = jnp.full_like(m_sc, -jnp.inf)
        l_sc[...] = jnp.zeros_like(l_sc)
        acc_sc[...] = jnp.zeros_like(acc_sc)

    def process(masked):
        if masked:
            q_pos = qi * tq + jax.lax.broadcasted_iota(jnp.int32, (tq, tk), 0)
            k_pos = ki * tk + jax.lax.broadcasted_iota(jnp.int32, (tq, tk), 1)
            causal = k_pos <= q_pos
        for h in range(gheads):
            sl = slice(h * dh, (h + 1) * dh)
            # softmax scale already folded into q via the rope tables
            s = jax.lax.dot_general(
                q_ref[0, :, sl], k_ref[0, :, sl],
                (((1,), (1,)), ((), ())),
                preferred_element_type=jnp.float32)
            if masked:
                s = jnp.where(causal, s, -1e30)
            m_prev = m_sc[:, h:h + 1]
            m_new = jnp.maximum(m_prev, jnp.max(s, axis=-1, keepdims=True))
            alpha = jnp.exp(m_prev - m_new)
            p = jnp.exp(s - m_new)
            l_sc[:, h:h + 1] = alpha * l_sc[:, h:h + 1] + jnp.sum(
                p, axis=-1, keepdims=True)
            acc_sc[:, sl] = alpha * acc_sc[:, sl] + jax.lax.dot_general(
                p.astype(jnp.bfloat16), v_ref[0, :, sl],
                (((1,), (0,)), ((), ())),
                preferred_element_type=jnp.float32)
            m_sc[:, h:h + 1] = m_new

    @pl.when(ki < qi)     # fully in the past: no mask work at all
    def _():
        process(False)

    @pl.when(ki == qi)    # diagonal tile: build + apply the causal mask
    def _():
        process(True)

    @pl.when(ki == pl.num_programs(3) - 1)
    def _():
        for h in range(gheads):
            sl = slice(h * dh, (h + 1) * dh)
            o_ref[0, :, sl] = (acc_sc[:, sl] / l_sc[:, h:h + 1]
                               ).astype(o_ref.dtype)


def flash_attention(qkv_roped, num_heads, *, bq=256, bkv=256):
    b, s, d3 = qkv_roped.shape
    d = d3 // 3
    dh = d // num_heads
    gheads = _head_group(num_heads, dh)
    gd = gheads * dh
    ngroups = num_heads // gheads
    tq = _tile(s, bq, 8)
    tk = tq                      # diagonal-tile logic requires tq == tk
    del bkv

    kern = functools.partial(_attn_kernel, gheads=gheads, head_dim=dh)
    return pl.pallas_call(
        kern,
        out_shape=jax.ShapeDtypeStruct((b, s, d), jnp.bfloat16),
        grid=(b, ngroups, s // tq, s // tk),
        in_specs=[
            # q / k / v are lane slices of the same fused roped (B, S, 3D) tensor.
            pl.BlockSpec((1, tq, gd), lambda bi, g, qi, ki: (bi, qi, g)),
            # K/V block index clamped to the diagonal: causally-dead tiles are
            # never DMA'd (same block index as the previous step -> no fetch).
            pl.BlockSpec((1, tk, gd),
                         lambda bi, g, qi, ki: (bi, jnp.minimum(ki, qi),
                                                ngroups + g)),
            pl.BlockSpec((1, tk, gd),
                         lambda bi, g, qi, ki: (bi, jnp.minimum(ki, qi),
                                                2 * ngroups + g)),
        ],
        out_specs=pl.BlockSpec((1, tq, gd), lambda bi, g, qi, ki: (bi, qi, g)),
        scratch_shapes=[
            pltpu.VMEM((tq, gheads), jnp.float32),   # m (lane-packed per head)
            pltpu.VMEM((tq, gheads), jnp.float32),   # l
            pltpu.VMEM((tq, gd), jnp.float32),       # acc (lane-dense)
        ],
        compiler_params=pltpu.CompilerParams(
            dimension_semantics=("parallel", "parallel", "parallel", "arbitrary"),
            vmem_limit_bytes=_VMEM_LIMIT),
    )(qkv_roped, qkv_roped, qkv_roped)


# ----------------------------------------------------------------------------
# O-projection matmul with the residual add fused into the epilogue
# ----------------------------------------------------------------------------
def _matmul_res_kernel(a_ref, b_ref, r_ref, o_ref, acc_ref):
    @pl.when(pl.program_id(2) == 0)
    def _():
        acc_ref[...] = jnp.zeros_like(acc_ref)

    acc_ref[...] += jnp.dot(a_ref[...], b_ref[...],
                            preferred_element_type=jnp.float32)

    @pl.when(pl.program_id(2) == pl.num_programs(2) - 1)
    def _():
        o_ref[...] = (acc_ref[...] + r_ref[...]).astype(o_ref.dtype)


def matmul_residual(a, b, res, *, out_dtype=jnp.float32, bm=256, bn=256, bk=512):
    m, k = a.shape
    k2, n = b.shape
    assert k == k2
    tm = _tile(m, bm, 8)
    tn = _tile(n, bn, 128)
    tk = _tile(k, bk, 128)
    return pl.pallas_call(
        _matmul_res_kernel,
        out_shape=jax.ShapeDtypeStruct((m, n), out_dtype),
        grid=(m // tm, n // tn, k // tk),
        in_specs=[
            pl.BlockSpec((tm, tk), lambda i, j, kk: (i, kk)),
            pl.BlockSpec((tk, tn), lambda i, j, kk: (kk, j)),
            pl.BlockSpec((tm, tn), lambda i, j, kk: (i, j)),
        ],
        out_specs=pl.BlockSpec((tm, tn), lambda i, j, kk: (i, j)),
        scratch_shapes=[pltpu.VMEM((tm, tn), jnp.float32)],
        compiler_params=pltpu.CompilerParams(
            dimension_semantics=("parallel", "parallel", "arbitrary"),
            vmem_limit_bytes=_VMEM_LIMIT),
    )(a, b, res)


# ----------------------------------------------------------------------------
# Fused norm2 + SwiGLU MLP (+ residual add), hidden dim streamed
# ----------------------------------------------------------------------------
def _mlp_kernel(x_ref, nw_ref, wg_ref, wu_ref, wd_ref, o_ref, acc_ref, xn_ref):
    h_idx = pl.program_id(1)

    @pl.when(h_idx == 0)
    def _():
        x = x_ref[...]
        ms = jnp.mean(x * x, axis=-1, keepdims=True)
        xn_ref[...] = ((x * jax.lax.rsqrt(ms + _EPS)) * nw_ref[...]
                       ).astype(jnp.bfloat16)
        acc_ref[...] = jnp.zeros_like(acc_ref)

    xn = xn_ref[...]
    g = jnp.dot(xn, wg_ref[...], preferred_element_type=jnp.float32)
    u = jnp.dot(xn, wu_ref[...], preferred_element_type=jnp.float32)
    # Reference module: down_proj(gate_proj(x) * F.silu(up_proj(x)))
    hval = (g * (u * jax.nn.sigmoid(u))).astype(jnp.bfloat16)
    acc_ref[...] += jnp.dot(hval, wd_ref[...], preferred_element_type=jnp.float32)

    @pl.when(h_idx == pl.num_programs(1) - 1)
    def _():
        o_ref[...] = x_ref[...] + acc_ref[...]   # fused residual add


def llama_mlp(x2d, nw, wg, wu, wd, *, bm=256, bh=None):
    if bh is None:
        bh = _MLP_BH
    n, d = x2d.shape
    hidden = wg.shape[1]
    tm = _tile(n, bm, 8)
    th = _tile(hidden, bh, 128)
    return pl.pallas_call(
        _mlp_kernel,
        out_shape=jax.ShapeDtypeStruct((n, d), jnp.float32),
        grid=(n // tm, hidden // th),
        in_specs=[
            pl.BlockSpec((tm, d), lambda i, h: (i, 0)),
            pl.BlockSpec((1, d), lambda i, h: (0, 0)),
            pl.BlockSpec((d, th), lambda i, h: (0, h)),
            pl.BlockSpec((d, th), lambda i, h: (0, h)),
            pl.BlockSpec((th, d), lambda i, h: (h, 0)),
        ],
        out_specs=pl.BlockSpec((tm, d), lambda i, h: (i, 0)),
        scratch_shapes=[pltpu.VMEM((tm, d), jnp.float32),
                        pltpu.VMEM((tm, d), jnp.bfloat16)],
        compiler_params=pltpu.CompilerParams(
            dimension_semantics=("parallel", "arbitrary"),
            vmem_limit_bytes=_VMEM_LIMIT),
    )(x2d, nw.reshape(1, d), wg, wu, wd)


# ----------------------------------------------------------------------------
# Fused RMSNorm + matmul (final norm + LM head); large row tile
# ----------------------------------------------------------------------------
def _rms_matmul_kernel(x_ref, nw_ref, w_ref, o_ref):
    x = x_ref[...]
    ms = jnp.mean(x * x, axis=-1, keepdims=True)
    xn = ((x * jax.lax.rsqrt(ms + _EPS)) * nw_ref[...]).astype(jnp.bfloat16)
    o_ref[...] = jnp.dot(xn, w_ref[...],
                         preferred_element_type=jnp.float32).astype(o_ref.dtype)


def rmsnorm_matmul(x2d, nw, w, *, out_dtype=jnp.float32, bm=512, bn=512):
    m, d = x2d.shape
    d2, n = w.shape
    assert d == d2
    tm = _tile(m, bm, 8)
    tn = _tile(n, bn, 128)
    return pl.pallas_call(
        _rms_matmul_kernel,
        out_shape=jax.ShapeDtypeStruct((m, n), out_dtype),
        grid=(m // tm, n // tn),
        in_specs=[
            pl.BlockSpec((tm, d), lambda i, j: (i, 0)),
            pl.BlockSpec((1, d), lambda i, j: (0, 0)),
            pl.BlockSpec((d, tn), lambda i, j: (0, j)),
        ],
        out_specs=pl.BlockSpec((tm, tn), lambda i, j: (i, j)),
        compiler_params=pltpu.CompilerParams(
            dimension_semantics=("parallel", "parallel"),
            vmem_limit_bytes=_VMEM_LIMIT),
    )(x2d, nw.reshape(1, d), w)


# ----------------------------------------------------------------------------
# Model glue
# ----------------------------------------------------------------------------
def _rope_tables(seq_len, head_dim, sm_scale, theta=10000.0):
    half = head_dim // 2
    inv_freq = 1.0 / (theta ** (jnp.arange(0, head_dim, 2, dtype=jnp.float32)
                                / head_dim))
    pos = jnp.arange(seq_len, dtype=jnp.float32)
    ang = jnp.outer(pos, inv_freq)                       # (S, Dh/2)
    ang = jnp.concatenate([ang, ang], axis=-1)           # (S, Dh)
    cos = jnp.cos(ang)
    sin = jnp.sin(ang)
    # rotate_half sign pattern folded into the sin tables; 1/sqrt(Dh) folded
    # into the Q-side tables so attention never rescales.
    sign = jnp.concatenate([-jnp.ones((half,), jnp.float32),
                            jnp.ones((half,), jnp.float32)])
    sin_s = sin * sign
    return cos * sm_scale, sin_s * sm_scale, cos, sin_s


def decoder_block(p, x2d, bsz, seq, num_heads, head_dim, rope_tabs):
    d = x2d.shape[-1]
    # Reference: x = norm1(x); the normed x is both attn input and residual base.
    xn, qkv = rmsnorm_qkv(x2d, p["norm1"], p["wqkv"])
    cq, sq, ck, sk = rope_tabs
    qkv_r = rope_qkv(qkv.reshape(bsz, seq, 3 * d), cq, sq, ck, sk,
                     num_heads, head_dim)
    attn = flash_attention(qkv_r, num_heads)
    # x = xn + attn @ Wo   (residual add fused into the O-proj epilogue)
    x2d = matmul_residual(attn.reshape(bsz * seq, d), p["wo"], xn)
    # x = x + mlp(norm2(x))  (norm2 + SwiGLU + residual fused)
    x2d = llama_mlp(x2d, p["norm2"], p["wg"], p["wu"], p["wd"])
    return x2d


def llama_forward(params, tokens, *, num_heads):
    bsz, seq = tokens.shape
    d = params["embed"].shape[1]
    dh = d // num_heads
    x2d = params["embed"][tokens].reshape(bsz * seq, d)   # embedding gather (glue)
    # dropout(p=0.0) -> identity
    rope_tabs = _rope_tables(seq, dh, 1.0 / float(dh) ** 0.5)
    for layer_p in params["layers"]:
        x2d = decoder_block(layer_p, x2d, bsz, seq, num_heads, dh, rope_tabs)
    # final norm fused into the LM head matmul
    logits = rmsnorm_matmul(x2d, params["norm_f"], params["fc"])
    return logits.reshape(bsz, seq, -1)


# ----------------------------------------------------------------------------
# Deterministic parameter init (weights in bf16, norms/embed in f32)
# ----------------------------------------------------------------------------
def init_params(key, vocab, d_model, num_layers, hidden):
    keys = iter(jax.random.split(key, 4 + 8 * num_layers))

    def lin(in_d, out_d):
        w = jax.random.normal(next(keys), (in_d, out_d), jnp.float32)
        return (w / jnp.sqrt(jnp.float32(in_d))).astype(jnp.bfloat16)

    params = {
        "embed": 0.02 * jax.random.normal(next(keys), (vocab, d_model),
                                          jnp.float32),
        "layers": [],
        "norm_f": jnp.ones((d_model,), jnp.float32),
        "fc": lin(d_model, vocab),
    }
    for _ in range(num_layers):
        wq = lin(d_model, d_model)
        wk = lin(d_model, d_model)
        wv = lin(d_model, d_model)
        params["layers"].append({
            "wqkv": jnp.concatenate([wq, wk, wv], axis=1),   # (D, 3D)
            "wo": lin(d_model, d_model),
            "wg": lin(d_model, hidden),
            "wu": lin(d_model, hidden),
            "wd": lin(hidden, d_model),
            "norm1": jnp.ones((d_model,), jnp.float32),
            "norm2": jnp.ones((d_model,), jnp.float32),
        })
    return params


if __name__ == "__main__":
    VOCAB = 256
    D_MODEL = 128
    NUM_HEADS = 4
    NUM_LAYERS = 2
    SEQ = 16
    BATCH = 2
    HIDDEN = 4 * D_MODEL

    root = jax.random.PRNGKey(0)
    k_param, k_tok = jax.random.split(root)
    params = init_params(k_param, VOCAB, D_MODEL, NUM_LAYERS, HIDDEN)
    tokens = jax.random.randint(k_tok, (BATCH, SEQ), 0, VOCAB, dtype=jnp.int32)

    fwd = jax.jit(functools.partial(llama_forward, num_heads=NUM_HEADS))
    logits = jax.block_until_ready(fwd(params, tokens))
    assert logits.shape == (BATCH, SEQ, VOCAB)
    assert bool(jnp.all(jnp.isfinite(logits)))
    print("KERNEL_OK")
</pallas_src>

<mosaic_0001>
module attributes {stable_mosaic.version = 11 : i64} {
  func.func @_attn_kernel(%arg0: i32, %arg1: i32, %arg2: i32, %arg3: i32, %arg4: memref<1x16x128xbf16, #tpu.memory_space<vmem>>, %arg5: memref<1x16x128xbf16, #tpu.memory_space<vmem>>, %arg6: memref<1x16x128xbf16, #tpu.memory_space<vmem>>, %arg7: memref<1x16x128xbf16, #tpu.memory_space<vmem>>, %arg8: memref<16x4xf32, #tpu.memory_space<vmem>>, %arg9: memref<16x4xf32, #tpu.memory_space<vmem>>, %arg10: memref<16x128xf32, #tpu.memory_space<vmem>>) attributes {dimension_semantics = [#tpu.dimension_semantics<parallel>, #tpu.dimension_semantics<parallel>, #tpu.dimension_semantics<parallel>, #tpu.dimension_semantics<arbitrary>], iteration_bounds = array<i64: 2, 1, 1, 1>, scalar_prefetch = 0 : i64, scratch_operands = 3 : i64, tpu.core_type = #tpu.core_type<tc>, window_params = [{transform_indices = @transform_0, window_bounds = array<i64: 1, 16, 128>}, {transform_indices = @transform_1, window_bounds = array<i64: 1, 16, 128>}, {transform_indices = @transform_2, window_bounds = array<i64: 1, 16, 128>}, {transform_indices = @transform_3, window_bounds = array<i64: 1, 16, 128>}]} {
    %c0_i32 = arith.constant 0 : i32
    %0 = arith.cmpi eq, %arg3, %c0_i32 : i32
    %1 = arith.extui %0 : i1 to i32
    %c0_i32_0 = arith.constant 0 : i32
    %2 = arith.cmpi ne, %1, %c0_i32_0 : i32
    scf.if %2 {
      %cst = arith.constant 0xFF800000 : f32
      %12 = vector.broadcast %cst : f32 to vector<16x4xf32>
      %c0 = arith.constant 0 : index
      %c0_5 = arith.constant 0 : index
      %13 = vector.load %arg8[%c0, %c0_5] : memref<16x4xf32, #tpu.memory_space<vmem>>, vector<16x4xf32>
      tpu.vector_store %arg8[%c0, %c0_5], %12 {strides = array<i32>} : memref<16x4xf32, #tpu.memory_space<vmem>>, vector<16x4xf32>,
      %cst_6 = arith.constant 0.000000e+00 : f32
      %14 = vector.broadcast %cst_6 : f32 to vector<16x4xf32>
      %c0_7 = arith.constant 0 : index
      %c0_8 = arith.constant 0 : index
      %15 = vector.load %arg9[%c0_7, %c0_8] : memref<16x4xf32, #tpu.memory_space<vmem>>, vector<16x4xf32>
      tpu.vector_store %arg9[%c0_7, %c0_8], %14 {strides = array<i32>} : memref<16x4xf32, #tpu.memory_space<vmem>>, vector<16x4xf32>,
      %cst_9 = arith.constant 0.000000e+00 : f32
      %16 = vector.broadcast %cst_9 : f32 to vector<16x128xf32>
      %c0_10 = arith.constant 0 : index
      %c0_11 = arith.constant 0 : index
      %17 = vector.load %arg10[%c0_10, %c0_11] : memref<16x128xf32, #tpu.memory_space<vmem>>, vector<16x128xf32>
      tpu.vector_store %arg10[%c0_10, %c0_11], %16 {strides = array<i32>} : memref<16x128xf32, #tpu.memory_space<vmem>>, vector<16x128xf32>,
    } else {
    }
    %3 = arith.cmpi slt, %arg3, %arg2 : i32
    %4 = arith.extui %3 : i1 to i32
    %c0_i32_1 = arith.constant 0 : i32
    %5 = arith.cmpi ne, %4, %c0_i32_1 : i32
    scf.if %5 {
      %c0 = arith.constant 0 : index
      %c0_5 = arith.constant 0 : index
      %c0_6 = arith.constant 0 : index
      %12 = vector.load %arg4[%c0, %c0_5, %c0_6] : memref<1x16x128xbf16, #tpu.memory_space<vmem>>, vector<1x16x32xbf16>
      %13 = vector.shape_cast %12 : vector<1x16x32xbf16> to vector<16x32xbf16>
      %c0_7 = arith.constant 0 : index
      %c0_8 = arith.constant 0 : index
      %c0_9 = arith.constant 0 : index
      %14 = vector.load %arg5[%c0_7, %c0_8, %c0_9] : memref<1x16x128xbf16, #tpu.memory_space<vmem>>, vector<1x16x32xbf16>
      %15 = vector.shape_cast %14 : vector<1x16x32xbf16> to vector<16x32xbf16>
      %cst = arith.constant dense<0.000000e+00> : vector<16x16xf32>
      %16 = tpu.matmul %13, %15, %cst {dimension_numbers = #tpu.dot_dimension_numbers<[1], [1], [0], [0], [0, 0, 1, 0], [], []>} : vector<16x32xbf16>, vector<16x32xbf16>, vector<16x16xf32> -> vector<16x16xf32>
      %c0_10 = arith.constant 0 : index
      %c0_11 = arith.constant 0 : index
      %17 = vector.load %arg8[%c0_10, %c0_11] : memref<16x4xf32, #tpu.memory_space<vmem>>, vector<16x1xf32>
      %cst_12 = arith.constant dense<0xFF800000> : vector<16xf32>
      %18 = vector.multi_reduction <maximumf>, %16, %cst_12 [1] : vector<16x16xf32> to vector<16xf32>
      %19 = vector.shape_cast %18 : vector<16xf32> to vector<16x1xf32>
      %20 = arith.maximumf %17, %19 : vector<16x1xf32>
      %21 = arith.subf %17, %20 : vector<16x1xf32>
      %22 = math.exp %21 : vector<16x1xf32>
      %23 = vector.broadcast %20 : vector<16x1xf32> to vector<16x16xf32>
      %24 = arith.subf %16, %23 : vector<16x16xf32>
      %25 = math.exp %24 : vector<16x16xf32>
      %c0_13 = arith.constant 0 : index
      %c0_14 = arith.constant 0 : index
      %26 = vector.load %arg9[%c0_13, %c0_14] : memref<16x4xf32, #tpu.memory_space<vmem>>, vector<16x1xf32>
      %27 = arith.mulf %22, %26 : vector<16x1xf32>
      %cst_15 = arith.constant dense<0.000000e+00> : vector<16xf32>
      %28 = vector.multi_reduction <add>, %25, %cst_15 [1] : vector<16x16xf32> to vector<16xf32>
      %29 = vector.shape_cast %28 : vector<16xf32> to vector<16x1xf32>
      %30 = arith.addf %27, %29 : vector<16x1xf32>
      %c0_16 = arith.constant 0 : index
      %c0_17 = arith.constant 0 : index
      %31 = vector.load %arg9[%c0_16, %c0_17] : memref<16x4xf32, #tpu.memory_space<vmem>>, vector<16x1xf32>
      tpu.vector_store %arg9[%c0_16, %c0_17], %30 {strides = array<i32>} : memref<16x4xf32, #tpu.memory_space<vmem>>, vector<16x1xf32>,
      %c0_18 = arith.constant 0 : index
      %c0_19 = arith.constant 0 : index
      %32 = vector.load %arg10[%c0_18, %c0_19] : memref<16x128xf32, #tpu.memory_space<vmem>>, vector<16x32xf32>
      %33 = vector.broadcast %22 : vector<16x1xf32> to vector<16x32xf32>
      %34 = arith.mulf %33, %32 : vector<16x32xf32>
      %35 = arith.truncf %25 : vector<16x16xf32> to vector<16x16xbf16>
      %c0_20 = arith.constant 0 : index
      %c0_21 = arith.constant 0 : index
      %c0_22 = arith.constant 0 : index
      %36 = vector.load %arg6[%c0_20, %c0_21, %c0_22] : memref<1x16x128xbf16, #tpu.memory_space<vmem>>, vector<1x16x32xbf16>
      %37 = vector.shape_cast %36 : vector<1x16x32xbf16> to vector<16x32xbf16>
      %cst_23 = arith.constant dense<0.000000e+00> : vector<16x32xf32>
      %38 = tpu.matmul %35, %37, %cst_23 {dimension_numbers = #tpu.dot_dimension_numbers<[1], [0], [0], [1], [0, 0, 1, 1], [], []>} : vector<16x16xbf16>, vector<16x32xbf16>, vector<16x32xf32> -> vector<16x32xf32>
      %39 = arith.addf %34, %38 : vector<16x32xf32>
      %c0_24 = arith.constant 0 : index
      %c0_25 = arith.constant 0 : index
      %40 = vector.load %arg10[%c0_24, %c0_25] : memref<16x128xf32, #tpu.memory_space<vmem>>, vector<16x32xf32>
      tpu.vector_store %arg10[%c0_24, %c0_25], %39 {strides = array<i32>} : memref<16x128xf32, #tpu.memory_space<vmem>>, vector<16x32xf32>,
      %c0_26 = arith.constant 0 : index
      %c0_27 = arith.constant 0 : index
      %41 = vector.load %arg8[%c0_26, %c0_27] : memref<16x4xf32, #tpu.memory_space<vmem>>, vector<16x1xf32>
      tpu.vector_store %arg8[%c0_26, %c0_27], %20 {strides = array<i32>} : memref<16x4xf32, #tpu.memory_space<vmem>>, vector<16x1xf32>,
      %c0_28 = arith.constant 0 : index
      %c0_29 = arith.constant 0 : index
      %c32 = arith.constant 32 : index
      %42 = vector.load %arg4[%c0_28, %c0_29, %c32] : memref<1x16x128xbf16, #tpu.memory_space<vmem>>, vector<1x16x32xbf16>
      %43 = vector.shape_cast %42 : vector<1x16x32xbf16> to vector<16x32xbf16>
      %c0_30 = arith.constant 0 : index
      %c0_31 = arith.constant 0 : index
      %c32_32 = arith.constant 32 : index
      %44 = vector.load %arg5[%c0_30, %c0_31, %c32_32] : memref<1x16x128xbf16, #tpu.memory_space<vmem>>, vector<1x16x32xbf16>
      %45 = vector.shape_cast %44 : vector<1x16x32xbf16> to vector<16x32xbf16>
      %cst_33 = arith.constant dense<0.000000e+00> : vector<16x16xf32>
      %46 = tpu.matmul %43, %45, %cst_33 {dimension_numbers = #tpu.dot_dimension_numbers<[1], [1], [0], [0], [0, 0, 1, 0], [], []>} : vector<16x32xbf16>, vector<16x32xbf16>, vector<16x16xf32> -> vector<16x16xf32>
      %c0_34 = arith.constant 0 : index
      %c1 = arith.constant 1 : index
      %47 = vector.load %arg8[%c0_34, %c1] : memref<16x4xf32, #tpu.memory_space<vmem>>, vector<16x1xf32>
      %cst_35 = arith.constant dense<0xFF800000> : vector<16xf32>
      %48 = vector.multi_reduction <maximumf>, %46, %cst_35 [1] : vector<16x16xf32> to vector<16xf32>
      %49 = vector.shape_cast %48 : vector<16xf32> to vector<16x1xf32>
      %50 = arith.maximumf %47, %49 : vector<16x1xf32>
      %51 = arith.subf %47, %50 : vector<16x1xf32>
      %52 = math.exp %51 : vector<16x1xf32>
      %53 = vector.broadcast %50 : vector<16x1xf32> to vector<16x16xf32>
      %54 = arith.subf %46, %53 : vector<16x16xf32>
      %55 = math.exp %54 : vector<16x16xf32>
      %c0_36 = arith.constant 0 : index
      %c1_37 = arith.constant 1 : index
      %56 = vector.load %arg9[%c0_36, %c1_37] : memref<16x4xf32, #tpu.memory_space<vmem>>, vector<16x1xf32>
      %57 = arith.mulf %52, %56 : vector<16x1xf32>
      %cst_38 = arith.constant dense<0.000000e+00> : vector<16xf32>
      %58 = vector.multi_reduction <add>, %55, %cst_38 [1] : vector<16x16xf32> to vector<16xf32>
      %59 = vector.shape_cast %58 : vector<16xf32> to vector<16x1xf32>
      %60 = arith.addf %57, %59 : vector<16x1xf32>
      %c0_39 = arith.constant 0 : index
      %c1_40 = arith.constant 1 : index
      %61 = vector.load %arg9[%c0_39, %c1_40] : memref<16x4xf32, #tpu.memory_space<vmem>>, vector<16x1xf32>
      tpu.vector_store %arg9[%c0_39, %c1_40], %60 {strides = array<i32>} : memref<16x4xf32, #tpu.memory_space<vmem>>, vector<16x1xf32>,
      %c0_41 = arith.constant 0 : index
      %c32_42 = arith.constant 32 : index
      %62 = vector.load %arg10[%c0_41, %c32_42] : memref<16x128xf32, #tpu.memory_space<vmem>>, vector<16x32xf32>
      %63 = vector.broadcast %52 : vector<16x1xf32> to vector<16x32xf32>
      %64 = arith.mulf %63, %62 : vector<16x32xf32>
      %65 = arith.truncf %55 : vector<16x16xf32> to vector<16x16xbf16>
      %c0_43 = arith.constant 0 : index
      %c0_44 = arith.constant 0 : index
      %c32_45 = arith.constant 32 : index
      %66 = vector.load %arg6[%c0_43, %c0_44, %c32_45] : memref<1x16x128xbf16, #tpu.memory_space<vmem>>, vector<1x16x32xbf16>
      %67 = vector.shape_cast %66 : vector<1x16x32xbf16> to vector<16x32xbf16>
      %cst_46 = arith.constant dense<0.000000e+00> : vector<16x32xf32>
      %68 = tpu.matmul %65, %67, %cst_46 {dimension_numbers = #tpu.dot_dimension_numbers<[1], [0], [0], [1], [0, 0, 1, 1], [], []>} : vector<16x16xbf16>, vector<16x32xbf16>, vector<16x32xf32> -> vector<16x32xf32>
      %69 = arith.addf %64, %68 : vector<16x32xf32>
      %c0_47 = arith.constant 0 : index
      %c32_48 = arith.constant 32 : index
      %70 = vector.load %arg10[%c0_47, %c32_48] : memref<16x128xf32, #tpu.memory_space<vmem>>, vector<16x32xf32>
      tpu.vector_store %arg10[%c0_47, %c32_48], %69 {strides = array<i32>} : memref<16x128xf32, #tpu.memory_space<vmem>>, vector<16x32xf32>,
      %c0_49 = arith.constant 0 : index
      %c1_50 = arith.constant 1 : index
      %71 = vector.load %arg8[%c0_49, %c1_50] : memref<16x4xf32, #tpu.memory_space<vmem>>, vector<16x1xf32>
      tpu.vector_store %arg8[%c0_49, %c1_50], %50 {strides = array<i32>} : memref<16x4xf32, #tpu.memory_space<vmem>>, vector<16x1xf32>,
      %c0_51 = arith.constant 0 : index
      %c0_52 = arith.constant 0 : index
      %c64 = arith.constant 64 : index
      %72 = vector.load %arg4[%c0_51, %c0_52, %c64] : memref<1x16x128xbf16, #tpu.memory_space<vmem>>, vector<1x16x32xbf16>
      %73 = vector.shape_cast %72 : vector<1x16x32xbf16> to vector<16x32xbf16>
      %c0_53 = arith.constant 0 : index
      %c0_54 = arith.constant 0 : index
      %c64_55 = arith.constant 64 : index
      %74 = vector.load %arg5[%c0_53, %c0_54, %c64_55] : memref<1x16x128xbf16, #tpu.memory_space<vmem>>, vector<1x16x32xbf16>
      %75 = vector.shape_cast %74 : vector<1x16x32xbf16> to vector<16x32xbf16>
      %cst_56 = arith.constant dense<0.000000e+00> : vector<16x16xf32>
      %76 = tpu.matmul %73, %75, %cst_56 {dimension_numbers = #tpu.dot_dimension_numbers<[1], [1], [0], [0], [0, 0, 1, 0], [], []>} : vector<16x32xbf16>, vector<16x32xbf16>, vector<16x16xf32> -> vector<16x16xf32>
      %c0_57 = arith.constant 0 : index
      %c2 = arith.constant 2 : index
      %77 = vector.load %arg8[%c0_57, %c2] : memref<16x4xf32, #tpu.memory_space<vmem>>, vector<16x1xf32>
      %cst_58 = arith.constant dense<0xFF800000> : vector<16xf32>
      %78 = vector.multi_reduction <maximumf>, %76, %cst_58 [1] : vector<16x16xf32> to vector<16xf32>
      %79 = vector.shape_cast %78 : vector<16xf32> to vector<16x1xf32>
      %80 = arith.maximumf %77, %79 : vector<16x1xf32>
      %81 = arith.subf %77, %80 : vector<16x1xf32>
      %82 = math.exp %81 : vector<16x1xf32>
      %83 = vector.broadcast %80 : vector<16x1xf32> to vector<16x16xf32>
      %84 = arith.subf %76, %83 : vector<16x16xf32>
      %85 = math.exp %84 : vector<16x16xf32>
      %c0_59 = arith.constant 0 : index
      %c2_60 = arith.constant 2 : index
      %86 = vector.load %arg9[%c0_59, %c2_60] : memref<16x4xf32, #tpu.memory_space<vmem>>, vector<16x1xf32>
      %87 = arith.mulf %82, %86 : vector<16x1xf32>
      %cst_61 = arith.constant dense<0.000000e+00> : vector<16xf32>
      %88 = vector.multi_reduction <add>, %85, %cst_61 [1] : vector<16x16xf32> to vector<16xf32>
      %89 = vector.shape_cast %88 : vector<16xf32> to vector<16x1xf32>
      %90 = arith.addf %87, %89 : vector<16x1xf32>
      %c0_62 = arith.constant 0 : index
      %c2_63 = arith.constant 2 : index
      %91 = vector.load %arg9[%c0_62, %c2_63] : memref<16x4xf32, #tpu.memory_space<vmem>>, vector<16x1xf32>
      tpu.vector_store %arg9[%c0_62, %c2_63], %90 {strides = array<i32>} : memref<16x4xf32, #tpu.memory_space<vmem>>, vector<16x1xf32>,
      %c0_64 = arith.constant 0 : index
      %c64_65 = arith.constant 64 : index
      %92 = vector.load %arg10[%c0_64, %c64_65] : memref<16x128xf32, #tpu.memory_space<vmem>>, vector<16x32xf32>
      %93 = vector.broadcast %82 : vector<16x1xf32> to vector<16x32xf32>
      %94 = arith.mulf %93, %92 : vector<16x32xf32>
      %95 = arith.truncf %85 : vector<16x16xf32> to vector<16x16xbf16>
      %c0_66 = arith.constant 0 : index
      %c0_67 = arith.constant 0 : index
      %c64_68 = arith.constant 64 : index
      %96 = vector.load %arg6[%c0_66, %c0_67, %c64_68] : memref<1x16x128xbf16, #tpu.memory_space<vmem>>, vector<1x16x32xbf16>
      %97 = vector.shape_cast %96 : vector<1x16x32xbf16> to vector<16x32xbf16>
      %cst_69 = arith.constant dense<0.000000e+00> : vector<16x32xf32>
      %98 = tpu.matmul %95, %97, %cst_69 {dimension_numbers = #tpu.dot_dimension_numbers<[1], [0], [0], [1], [0, 0, 1, 1], [], []>} : vector<16x16xbf16>, vector<16x32xbf16>, vector<16x32xf32> -> vector<16x32xf32>
      %99 = arith.addf %94, %98 : vector<16x32xf32>
      %c0_70 = arith.constant 0 : index
      %c64_71 = arith.constant 64 : index
      %100 = vector.load %arg10[%c0_70, %c64_71] : memref<16x128xf32, #tpu.memory_space<vmem>>, vector<16x32xf32>
      tpu.vector_store %arg10[%c0_70, %c64_71], %99 {strides = array<i32>} : memref<16x128xf32, #tpu.memory_space<vmem>>, vector<16x32xf32>,
      %c0_72 = arith.constant 0 : index
      %c2_73 = arith.constant 2 : index
      %101 = vector.load %arg8[%c0_72, %c2_73] : memref<16x4xf32, #tpu.memory_space<vmem>>, vector<16x1xf32>
      tpu.vector_store %arg8[%c0_72, %c2_73], %80 {strides = array<i32>} : memref<16x4xf32, #tpu.memory_space<vmem>>, vector<16x1xf32>,
      %c0_74 = arith.constant 0 : index
      %c0_75 = arith.constant 0 : index
      %c96 = arith.constant 96 : index
      %102 = vector.load %arg4[%c0_74, %c0_75, %c96] : memref<1x16x128xbf16, #tpu.memory_space<vmem>>, vector<1x16x32xbf16>
      %103 = vector.shape_cast %102 : vector<1x16x32xbf16> to vector<16x32xbf16>
      %c0_76 = arith.constant 0 : index
      %c0_77 = arith.constant 0 : index
      %c96_78 = arith.constant 96 : index
      %104 = vector.load %arg5[%c0_76, %c0_77, %c96_78] : memref<1x16x128xbf16, #tpu.memory_space<vmem>>, vector<1x16x32xbf16>
      %105 = vector.shape_cast %104 : vector<1x16x32xbf16> to vector<16x32xbf16>
      %cst_79 = arith.constant dense<0.000000e+00> : vector<16x16xf32>
      %106 = tpu.matmul %103, %105, %cst_79 {dimension_numbers = #tpu.dot_dimension_numbers<[1], [1], [0], [0], [0, 0, 1, 0], [], []>} : vector<16x32xbf16>, vector<16x32xbf16>, vector<16x16xf32> -> vector<16x16xf32>
      %c0_80 = arith.constant 0 : index
      %c3 = arith.constant 3 : index
      %107 = vector.load %arg8[%c0_80, %c3] : memref<16x4xf32, #tpu.memory_space<vmem>>, vector<16x1xf32>
      %cst_81 = arith.constant dense<0xFF800000> : vector<16xf32>
      %108 = vector.multi_reduction <maximumf>, %106, %cst_81 [1] : vector<16x16xf32> to vector<16xf32>
      %109 = vector.shape_cast %108 : vector<16xf32> to vector<16x1xf32>
      %110 = arith.maximumf %107, %109 : vector<16x1xf32>
      %111 = arith.subf %107, %110 : vector<16x1xf32>
      %112 = math.exp %111 : vector<16x1xf32>
      %113 = vector.broadcast %110 : vector<16x1xf32> to vector<16x16xf32>
      %114 = arith.subf %106, %113 : vector<16x16xf32>
      %115 = math.exp %114 : vector<16x16xf32>
      %c0_82 = arith.constant 0 : index
      %c3_83 = arith.constant 3 : index
      %116 = vector.load %arg9[%c0_82, %c3_83] : memref<16x4xf32, #tpu.memory_space<vmem>>, vector<16x1xf32>
      %117 = arith.mulf %112, %116 : vector<16x1xf32>
      %cst_84 = arith.constant dense<0.000000e+00> : vector<16xf32>
      %118 = vector.multi_reduction <add>, %115, %cst_84 [1] : vector<16x16xf32> to vector<16xf32>
      %119 = vector.shape_cast %118 : vector<16xf32> to vector<16x1xf32>
      %120 = arith.addf %117, %119 : vector<16x1xf32>
      %c0_85 = arith.constant 0 : index
      %c3_86 = arith.constant 3 : index
      %121 = vector.load %arg9[%c0_85, %c3_86] : memref<16x4xf32, #tpu.memory_space<vmem>>, vector<16x1xf32>
      tpu.vector_store %arg9[%c0_85, %c3_86], %120 {strides = array<i32>} : memref<16x4xf32, #tpu.memory_space<vmem>>, vector<16x1xf32>,
      %c0_87 = arith.constant 0 : index
      %c96_88 = arith.constant 96 : index
      %122 = vector.load %arg10[%c0_87, %c96_88] : memref<16x128xf32, #tpu.memory_space<vmem>>, vector<16x32xf32>
      %123 = vector.broadcast %112 : vector<16x1xf32> to vector<16x32xf32>
      %124 = arith.mulf %123, %122 : vector<16x32xf32>
      %125 = arith.truncf %115 : vector<16x16xf32> to vector<16x16xbf16>
      %c0_89 = arith.constant 0 : index
      %c0_90 = arith.constant 0 : index
      %c96_91 = arith.constant 96 : index
      %126 = vector.load %arg6[%c0_89, %c0_90, %c96_91] : memref<1x16x128xbf16, #tpu.memory_space<vmem>>, vector<1x16x32xbf16>
      %127 = vector.shape_cast %126 : vector<1x16x32xbf16> to vector<16x32xbf16>
      %cst_92 = arith.constant dense<0.000000e+00> : vector<16x32xf32>
      %128 = tpu.matmul %125, %127, %cst_92 {dimension_numbers = #tpu.dot_dimension_numbers<[1], [0], [0], [1], [0, 0, 1, 1], [], []>} : vector<16x16xbf16>, vector<16x32xbf16>, vector<16x32xf32> -> vector<16x32xf32>
      %129 = arith.addf %124, %128 : vector<16x32xf32>
      %c0_93 = arith.constant 0 : index
      %c96_94 = arith.constant 96 : index
      %130 = vector.load %arg10[%c0_93, %c96_94] : memref<16x128xf32, #tpu.memory_space<vmem>>, vector<16x32xf32>
      tpu.vector_store %arg10[%c0_93, %c96_94], %129 {strides = array<i32>} : memref<16x128xf32, #tpu.memory_space<vmem>>, vector<16x32xf32>,
      %c0_95 = arith.constant 0 : index
      %c3_96 = arith.constant 3 : index
      %131 = vector.load %arg8[%c0_95, %c3_96] : memref<16x4xf32, #tpu.memory_space<vmem>>, vector<16x1xf32>
      tpu.vector_store %arg8[%c0_95, %c3_96], %110 {strides = array<i32>} : memref<16x4xf32, #tpu.memory_space<vmem>>, vector<16x1xf32>,
    } else {
    }
    %6 = arith.cmpi eq, %arg3, %arg2 : i32
    %7 = arith.extui %6 : i1 to i32
    %c0_i32_2 = arith.constant 0 : i32
    %8 = arith.cmpi ne, %7, %c0_i32_2 : i32
    scf.if %8 {
      %c16_i32 = arith.constant 16 : i32
      %12 = arith.muli %arg2, %c16_i32 : i32
      %13 = tpu.iota {dimensions = array<i32: 0>} : vector<16x16xi32>
      %14 = vector.broadcast %12 : i32 to vector<16x16xi32>
      %15 = arith.addi %14, %13 : vector<16x16xi32>
      %c16_i32_5 = arith.constant 16 : i32
      %16 = arith.muli %arg3, %c16_i32_5 : i32
      %17 = tpu.iota {dimensions = array<i32: 1>} : vector<16x16xi32>
      %18 = vector.broadcast %16 : i32 to vector<16x16xi32>
      %19 = arith.addi %18, %17 : vector<16x16xi32>
      %20 = arith.cmpi sle, %19, %15 : vector<16x16xi32>
      %c0 = arith.constant 0 : index
      %c0_6 = arith.constant 0 : index
      %c0_7 = arith.constant 0 : index
      %21 = vector.load %arg4[%c0, %c0_6, %c0_7] : memref<1x16x128xbf16, #tpu.memory_space<vmem>>, vector<1x16x32xbf16>
      %22 = vector.shape_cast %21 : vector<1x16x32xbf16> to vector<16x32xbf16>
      %c0_8 = arith.constant 0 : index
      %c0_9 = arith.constant 0 : index
      %c0_10 = arith.constant 0 : index
      %23 = vector.load %arg5[%c0_8, %c0_9, %c0_10] : memref<1x16x128xbf16, #tpu.memory_space<vmem>>, vector<1x16x32xbf16>
      %24 = vector.shape_cast %23 : vector<1x16x32xbf16> to vector<16x32xbf16>
      %cst = arith.constant dense<0.000000e+00> : vector<16x16xf32>
      %25 = tpu.matmul %22, %24, %cst {dimension_numbers = #tpu.dot_dimension_numbers<[1], [1], [0], [0], [0, 0, 1, 0], [], []>} : vector<16x32xbf16>, vector<16x32xbf16>, vector<16x16xf32> -> vector<16x16xf32>
      %cst_11 = arith.constant -1.000000e+30 : f32
      %26 = vector.broadcast %cst_11 : f32 to vector<16x16xf32>
      %27 = arith.select %20, %25, %26 : vector<16x16xi1>, vector<16x16xf32>
      %c0_12 = arith.constant 0 : index
      %c0_13 = arith.constant 0 : index
      %28 = vector.load %arg8[%c0_12, %c0_13] : memref<16x4xf32, #tpu.memory_space<vmem>>, vector<16x1xf32>
      %cst_14 = arith.constant dense<0xFF800000> : vector<16xf32>
      %29 = vector.multi_reduction <maximumf>, %27, %cst_14 [1] : vector<16x16xf32> to vector<16xf32>
      %30 = vector.shape_cast %29 : vector<16xf32> to vector<16x1xf32>
      %31 = arith.maximumf %28, %30 : vector<16x1xf32>
      %32 = arith.subf %28, %31 : vector<16x1xf32>
      %33 = math.exp %32 : vector<16x1xf32>
      %34 = vector.broadcast %31 : vector<16x1xf32> to vector<16x16xf32>
      %35 = arith.subf %27, %34 : vector<16x16xf32>
      %36 = math.exp %35 : vector<16x16xf32>
      %c0_15 = arith.constant 0 : index
      %c0_16 = arith.constant 0 : index
      %37 = vector.load %arg9[%c0_15, %c0_16] : memref<16x4xf32, #tpu.memory_space<vmem>>, vector<16x1xf32>
      %38 = arith.mulf %33, %37 : vector<16x1xf32>
      %cst_17 = arith.constant dense<0.000000e+00> : vector<16xf32>
      %39 = vector.multi_reduction <add>, %36, %cst_17 [1] : vector<16x16xf32> to vector<16xf32>
      %40 = vector.shape_cast %39 : vector<16xf32> to vector<16x1xf32>
      %41 = arith.addf %38, %40 : vector<16x1xf32>
      %c0_18 = arith.constant 0 : index
      %c0_19 = arith.constant 0 : index
      %42 = vector.load %arg9[%c0_18, %c0_19] : memref<16x4xf32, #tpu.memory_space<vmem>>, vector<16x1xf32>
      tpu.vector_store %arg9[%c0_18, %c0_19], %41 {strides = array<i32>} : memref<16x4xf32, #tpu.memory_space<vmem>>, vector<16x1xf32>,
      %c0_20 = arith.constant 0 : index
      %c0_21 = arith.constant 0 : index
      %43 = vector.load %arg10[%c0_20, %c0_21] : memref<16x128xf32, #tpu.memory_space<vmem>>, vector<16x32xf32>
      %44 = vector.broadcast %33 : vector<16x1xf32> to vector<16x32xf32>
      %45 = arith.mulf %44, %43 : vector<16x32xf32>
      %46 = arith.truncf %36 : vector<16x16xf32> to vector<16x16xbf16>
      %c0_22 = arith.constant 0 : index
      %c0_23 = arith.constant 0 : index
      %c0_24 = arith.constant 0 : index
      %47 = vector.load %arg6[%c0_22, %c0_23, %c0_24] : memref<1x16x128xbf16, #tpu.memory_space<vmem>>, vector<1x16x32xbf16>
      %48 = vector.shape_cast %47 : vector<1x16x32xbf16> to vector<16x32xbf16>
      %cst_25 = arith.constant dense<0.000000e+00> : vector<16x32xf32>
      %49 = tpu.matmul %46, %48, %cst_25 {dimension_numbers = #tpu.dot_dimension_numbers<[1], [0], [0], [1], [0, 0, 1, 1], [], []>} : vector<16x16xbf16>, vector<16x32xbf16>, vector<16x32xf32> -> vector<16x32xf32>
      %50 = arith.addf %45, %49 : vector<16x32xf32>
      %c0_26 = arith.constant 0 : index
      %c0_27 = arith.constant 0 : index
      %51 = vector.load %arg10[%c0_26, %c0_27] : memref<16x128xf32, #tpu.memory_space<vmem>>, vector<16x32xf32>
      tpu.vector_store %arg10[%c0_26, %c0_27], %50 {strides = array<i32>} : memref<16x128xf32, #tpu.memory_space<vmem>>, vector<16x32xf32>,
      %c0_28 = arith.constant 0 : index
      %c0_29 = arith.constant 0 : index
      %52 = vector.load %arg8[%c0_28, %c0_29] : memref<16x4xf32, #tpu.memory_space<vmem>>, vector<16x1xf32>
      tpu.vector_store %arg8[%c0_28, %c0_29], %31 {strides = array<i32>} : memref<16x4xf32, #tpu.memory_space<vmem>>, vector<16x1xf32>,
      %c0_30 = arith.constant 0 : index
      %c0_31 = arith.constant 0 : index
      %c32 = arith.constant 32 : index
      %53 = vector.load %arg4[%c0_30, %c0_31, %c32] : memref<1x16x128xbf16, #tpu.memory_space<vmem>>, vector<1x16x32xbf16>
      %54 = vector.shape_cast %53 : vector<1x16x32xbf16> to vector<16x32xbf16>
      %c0_32 = arith.constant 0 : index
      %c0_33 = arith.constant 0 : index
      %c32_34 = arith.constant 32 : index
      %55 = vector.load %arg5[%c0_32, %c0_33, %c32_34] : memref<1x16x128xbf16, #tpu.memory_space<vmem>>, vector<1x16x32xbf16>
      %56 = vector.shape_cast %55 : vector<1x16x32xbf16> to vector<16x32xbf16>
      %cst_35 = arith.constant dense<0.000000e+00> : vector<16x16xf32>
      %57 = tpu.matmul %54, %56, %cst_35 {dimension_numbers = #tpu.dot_dimension_numbers<[1], [1], [0], [0], [0, 0, 1, 0], [], []>} : vector<16x32xbf16>, vector<16x32xbf16>, vector<16x16xf32> -> vector<16x16xf32>
      %cst_36 = arith.constant -1.000000e+30 : f32
      %58 = vector.broadcast %cst_36 : f32 to vector<16x16xf32>
      %59 = arith.select %20, %57, %58 : vector<16x16xi1>, vector<16x16xf32>
      %c0_37 = arith.constant 0 : index
      %c1 = arith.constant 1 : index
      %60 = vector.load %arg8[%c0_37, %c1] : memref<16x4xf32, #tpu.memory_space<vmem>>, vector<16x1xf32>
      %cst_38 = arith.constant dense<0xFF800000> : vector<16xf32>
      %61 = vector.multi_reduction <maximumf>, %59, %cst_38 [1] : vector<16x16xf32> to vector<16xf32>
      %62 = vector.shape_cast %61 : vector<16xf32> to vector<16x1xf32>
      %63 = arith.maximumf %60, %62 : vector<16x1xf32>
      %64 = arith.subf %60, %63 : vector<16x1xf32>
      %65 = math.exp %64 : vector<16x1xf32>
      %66 = vector.broadcast %63 : vector<16x1xf32> to vector<16x16xf32>
      %67 = arith.subf %59, %66 : vector<16x16xf32>
      %68 = math.exp %67 : vector<16x16xf32>
      %c0_39 = arith.constant 0 : index
      %c1_40 = arith.constant 1 : index
      %69 = vector.load %arg9[%c0_39, %c1_40] : memref<16x4xf32, #tpu.memory_space<vmem>>, vector<16x1xf32>
      %70 = arith.mulf %65, %69 : vector<16x1xf32>
      %cst_41 = arith.constant dense<0.000000e+00> : vector<16xf32>
      %71 = vector.multi_reduction <add>, %68, %cst_41 [1] : vector<16x16xf32> to vector<16xf32>
      %72 = vector.shape_cast %71 : vector<16xf32> to vector<16x1xf32>
      %73 = arith.addf %70, %72 : vector<16x1xf32>
      %c0_42 = arith.constant 0 : index
      %c1_43 = arith.constant 1 : index
      %74 = vector.load %arg9[%c0_42, %c1_43] : memref<16x4xf32, #tpu.memory_space<vmem>>, vector<16x1xf32>
      tpu.vector_store %arg9[%c0_42, %c1_43], %73 {strides = array<i32>} : memref<16x4xf32, #tpu.memory_space<vmem>>, vector<16x1xf32>,
      %c0_44 = arith.constant 0 : index
      %c32_45 = arith.constant 32 : index
      %75 = vector.load %arg10[%c0_44, %c32_45] : memref<16x128xf32, #tpu.memory_space<vmem>>, vector<16x32xf32>
      %76 = vector.broadcast %65 : vector<16x1xf32> to vector<16x32xf32>
      %77 = arith.mulf %76, %75 : vector<16x32xf32>
      %78 = arith.truncf %68 : vector<16x16xf32> to vector<16x16xbf16>
      %c0_46 = arith.constant 0 : index
      %c0_47 = arith.constant 0 : index
      %c32_48 = arith.constant 32 : index
      %79 = vector.load %arg6[%c0_46, %c0_47, %c32_48] : memref<1x16x128xbf16, #tpu.memory_space<vmem>>, vector<1x16x32xbf16>
      %80 = vector.shape_cast %79 : vector<1x16x32xbf16> to vector<16x32xbf16>
      %cst_49 = arith.constant dense<0.000000e+00> : vector<16x32xf32>
      %81 = tpu.matmul %78, %80, %cst_49 {dimension_numbers = #tpu.dot_dimension_numbers<[1], [0], [0], [1], [0, 0, 1, 1], [], []>} : vector<16x16xbf16>, vector<16x32xbf16>, vector<16x32xf32> -> vector<16x32xf32>
      %82 = arith.addf %77, %81 : vector<16x32xf32>
      %c0_50 = arith.constant 0 : index
      %c32_51 = arith.constant 32 : index
      %83 = vector.load %arg10[%c0_50, %c32_51] : memref<16x128xf32, #tpu.memory_space<vmem>>, vector<16x32xf32>
      tpu.vector_store %arg10[%c0_50, %c32_51], %82 {strides = array<i32>} : memref<16x128xf32, #tpu.memory_space<vmem>>, vector<16x32xf32>,
      %c0_52 = arith.constant 0 : index
      %c1_53 = arith.constant 1 : index
      %84 = vector.load %arg8[%c0_52, %c1_53] : memref<16x4xf32, #tpu.memory_space<vmem>>, vector<16x1xf32>
      tpu.vector_store %arg8[%c0_52, %c1_53], %63 {strides = array<i32>} : memref<16x4xf32, #tpu.memory_space<vmem>>, vector<16x1xf32>,
      %c0_54 = arith.constant 0 : index
      %c0_55 = arith.constant 0 : index
      %c64 = arith.constant 64 : index
      %85 = vector.load %arg4[%c0_54, %c0_55, %c64] : memref<1x16x128xbf16, #tpu.memory_space<vmem>>, vector<1x16x32xbf16>
      %86 = vector.shape_cast %85 : vector<1x16x32xbf16> to vector<16x32xbf16>
      %c0_56 = arith.constant 0 : index
      %c0_57 = arith.constant 0 : index
      %c64_58 = arith.constant 64 : index
      %87 = vector.load %arg5[%c0_56, %c0_57, %c64_58] : memref<1x16x128xbf16, #tpu.memory_space<vmem>>, vector<1x16x32xbf16>
      %88 = vector.shape_cast %87 : vector<1x16x32xbf16> to vector<16x32xbf16>
      %cst_59 = arith.constant dense<0.000000e+00> : vector<16x16xf32>
      %89 = tpu.matmul %86, %88, %cst_59 {dimension_numbers = #tpu.dot_dimension_numbers<[1], [1], [0], [0], [0, 0, 1, 0], [], []>} : vector<16x32xbf16>, vector<16x32xbf16>, vector<16x16xf32> -> vector<16x16xf32>
      %cst_60 = arith.constant -1.000000e+30 : f32
      %90 = vector.broadcast %cst_60 : f32 to vector<16x16xf32>
      %91 = arith.select %20, %89, %90 : vector<16x16xi1>, vector<16x16xf32>
      %c0_61 = arith.constant 0 : index
      %c2 = arith.constant 2 : index
      %92 = vector.load %arg8[%c0_61, %c2] : memref<16x4xf32, #tpu.memory_space<vmem>>, vector<16x1xf32>
      %cst_62 = arith.constant dense<0xFF800000> : vector<16xf32>
      %93 = vector.multi_reduction <maximumf>, %91, %cst_62 [1] : vector<16x16xf32> to vector<16xf32>
      %94 = vector.shape_cast %93 : vector<16xf32> to vector<16x1xf32>
      %95 = arith.maximumf %92, %94 : vector<16x1xf32>
      %96 = arith.subf %92, %95 : vector<16x1xf32>
      %97 = math.exp %96 : vector<16x1xf32>
      %98 = vector.broadcast %95 : vector<16x1xf32> to vector<16x16xf32>
      %99 = arith.subf %91, %98 : vector<16x16xf32>
      %100 = math.exp %99 : vector<16x16xf32>
      %c0_63 = arith.constant 0 : index
      %c2_64 = arith.constant 2 : index
      %101 = vector.load %arg9[%c0_63, %c2_64] : memref<16x4xf32, #tpu.memory_space<vmem>>, vector<16x1xf32>
      %102 = arith.mulf %97, %101 : vector<16x1xf32>
      %cst_65 = arith.constant dense<0.000000e+00> : vector<16xf32>
      %103 = vector.multi_reduction <add>, %100, %cst_65 [1] : vector<16x16xf32> to vector<16xf32>
      %104 = vector.shape_cast %103 : vector<16xf32> to vector<16x1xf32>
      %105 = arith.addf %102, %104 : vector<16x1xf32>
      %c0_66 = arith.constant 0 : index
      %c2_67 = arith.constant 2 : index
      %106 = vector.load %arg9[%c0_66, %c2_67] : memref<16x4xf32, #tpu.memory_space<vmem>>, vector<16x1xf32>
      tpu.vector_store %arg9[%c0_66, %c2_67], %105 {strides = array<i32>} : memref<16x4xf32, #tpu.memory_space<vmem>>, vector<16x1xf32>,
      %c0_68 = arith.constant 0 : index
      %c64_69 = arith.constant 64 : index
      %107 = vector.load %arg10[%c0_68, %c64_69] : memref<16x128xf32, #tpu.memory_space<vmem>>, vector<16x32xf32>
      %108 = vector.broadcast %97 : vector<16x1xf32> to vector<16x32xf32>
      %109 = arith.mulf %108, %107 : vector<16x32xf32>
      %110 = arith.truncf %100 : vector<16x16xf32> to vector<16x16xbf16>
      %c0_70 = arith.constant 0 : index
      %c0_71 = arith.constant 0 : index
      %c64_72 = arith.constant 64 : index
      %111 = vector.load %arg6[%c0_70, %c0_71, %c64_72] : memref<1x16x128xbf16, #tpu.memory_space<vmem>>, vector<1x16x32xbf16>
      %112 = vector.shape_cast %111 : vector<1x16x32xbf16> to vector<16x32xbf16>
      %cst_73 = arith.constant dense<0.000000e+00> : vector<16x32xf32>
      %113 = tpu.matmul %110, %112, %cst_73 {dimension_numbers = #tpu.dot_dimension_numbers<[1], [0], [0], [1], [0, 0, 1, 1], [], []>} : vector<16x16xbf16>, vector<16x32xbf16>, vector<16x32xf32> -> vector<16x32xf32>
      %114 = arith.addf %109, %113 : vector<16x32xf32>
      %c0_74 = arith.constant 0 : index
      %c64_75 = arith.constant 64 : index
      %115 = vector.load %arg10[%c0_74, %c64_75] : memref<16x128xf32, #tpu.memory_space<vmem>>, vector<16x32xf32>
      tpu.vector_store %arg10[%c0_74, %c64_75], %114 {strides = array<i32>} : memref<16x128xf32, #tpu.memory_space<vmem>>, vector<16x32xf32>,
      %c0_76 = arith.constant 0 : index
      %c2_77 = arith.constant 2 : index
      %116 = vector.load %arg8[%c0_76, %c2_77] : memref<16x4xf32, #tpu.memory_space<vmem>>, vector<16x1xf32>
      tpu.vector_store %arg8[%c0_76, %c2_77], %95 {strides = array<i32>} : memref<16x4xf32, #tpu.memory_space<vmem>>, vector<16x1xf32>,
      %c0_78 = arith.constant 0 : index
      %c0_79 = arith.constant 0 : index
      %c96 = arith.constant 96 : index
      %117 = vector.load %arg4[%c0_78, %c0_79, %c96] : memref<1x16x128xbf16, #tpu.memory_space<vmem>>, vector<1x16x32xbf16>
      %118 = vector.shape_cast %117 : vector<1x16x32xbf16> to vector<16x32xbf16>
      %c0_80 = arith.constant 0 : index
      %c0_81 = arith.constant 0 : index
      %c96_82 = arith.constant 96 : index
      %119 = vector.load %arg5[%c0_80, %c0_81, %c96_82] : memref<1x16x128xbf16, #tpu.memory_space<vmem>>, vector<1x16x32xbf16>
      %120 = vector.shape_cast %119 : vector<1x16x32xbf16> to vector<16x32xbf16>
      %cst_83 = arith.constant dense<0.000000e+00> : vector<16x16xf32>
      %121 = tpu.matmul %118, %120, %cst_83 {dimension_numbers = #tpu.dot_dimension_numbers<[1], [1], [0], [0], [0, 0, 1, 0], [], []>} : vector<16x32xbf16>, vector<16x32xbf16>, vector<16x16xf32> -> vector<16x16xf32>
      %cst_84 = arith.constant -1.000000e+30 : f32
      %122 = vector.broadcast %cst_84 : f32 to vector<16x16xf32>
      %123 = arith.select %20, %121, %122 : vector<16x16xi1>, vector<16x16xf32>
      %c0_85 = arith.constant 0 : index
      %c3 = arith.constant 3 : index
      %124 = vector.load %arg8[%c0_85, %c3] : memref<16x4xf32, #tpu.memory_space<vmem>>, vector<16x1xf32>
      %cst_86 = arith.constant dense<0xFF800000> : vector<16xf32>
      %125 = vector.multi_reduction <maximumf>, %123, %cst_86 [1] : vector<16x16xf32> to vector<16xf32>
      %126 = vector.shape_cast %125 : vector<16xf32> to vector<16x1xf32>
      %127 = arith.maximumf %124, %126 : vector<16x1xf32>
      %128 = arith.subf %124, %127 : vector<16x1xf32>
      %129 = math.exp %128 : vector<16x1xf32>
      %130 = vector.broadcast %127 : vector<16x1xf32> to vector<16x16xf32>
      %131 = arith.subf %123, %130 : vector<16x16xf32>
      %132 = math.exp %131 : vector<16x16xf32>
      %c0_87 = arith.constant 0 : index
      %c3_88 = arith.constant 3 : index
      %133 = vector.load %arg9[%c0_87, %c3_88] : memref<16x4xf32, #tpu.memory_space<vmem>>, vector<16x1xf32>
      %134 = arith.mulf %129, %133 : vector<16x1xf32>
      %cst_89 = arith.constant dense<0.000000e+00> : vector<16xf32>
      %135 = vector.multi_reduction <add>, %132, %cst_89 [1] : vector<16x16xf32> to vector<16xf32>
      %136 = vector.shape_cast %135 : vector<16xf32> to vector<16x1xf32>
      %137 = arith.addf %134, %136 : vector<16x1xf32>
      %c0_90 = arith.constant 0 : index
      %c3_91 = arith.constant 3 : index
      %138 = vector.load %arg9[%c0_90, %c3_91] : memref<16x4xf32, #tpu.memory_space<vmem>>, vector<16x1xf32>
      tpu.vector_store %arg9[%c0_90, %c3_91], %137 {strides = array<i32>} : memref<16x4xf32, #tpu.memory_space<vmem>>, vector<16x1xf32>,
      %c0_92 = arith.constant 0 : index
      %c96_93 = arith.constant 96 : index
      %139 = vector.load %arg10[%c0_92, %c96_93] : memref<16x128xf32, #tpu.memory_space<vmem>>, vector<16x32xf32>
      %140 = vector.broadcast %129 : vector<16x1xf32> to vector<16x32xf32>
      %141 = arith.mulf %140, %139 : vector<16x32xf32>
      %142 = arith.truncf %132 : vector<16x16xf32> to vector<16x16xbf16>
      %c0_94 = arith.constant 0 : index
      %c0_95 = arith.constant 0 : index
      %c96_96 = arith.constant 96 : index
      %143 = vector.load %arg6[%c0_94, %c0_95, %c96_96] : memref<1x16x128xbf16, #tpu.memory_space<vmem>>, vector<1x16x32xbf16>
      %144 = vector.shape_cast %143 : vector<1x16x32xbf16> to vector<16x32xbf16>
      %cst_97 = arith.constant dense<0.000000e+00> : vector<16x32xf32>
      %145 = tpu.matmul %142, %144, %cst_97 {dimension_numbers = #tpu.dot_dimension_numbers<[1], [0], [0], [1], [0, 0, 1, 1], [], []>} : vector<16x16xbf16>, vector<16x32xbf16>, vector<16x32xf32> -> vector<16x32xf32>
      %146 = arith.addf %141, %145 : vector<16x32xf32>
      %c0_98 = arith.constant 0 : index
      %c96_99 = arith.constant 96 : index
      %147 = vector.load %arg10[%c0_98, %c96_99] : memref<16x128xf32, #tpu.memory_space<vmem>>, vector<16x32xf32>
      tpu.vector_store %arg10[%c0_98, %c96_99], %146 {strides = array<i32>} : memref<16x128xf32, #tpu.memory_space<vmem>>, vector<16x32xf32>,
      %c0_100 = arith.constant 0 : index
      %c3_101 = arith.constant 3 : index
      %148 = vector.load %arg8[%c0_100, %c3_101] : memref<16x4xf32, #tpu.memory_space<vmem>>, vector<16x1xf32>
      tpu.vector_store %arg8[%c0_100, %c3_101], %127 {strides = array<i32>} : memref<16x4xf32, #tpu.memory_space<vmem>>, vector<16x1xf32>,
    } else {
    }
    %c0_i32_3 = arith.constant 0 : i32
    %9 = arith.cmpi eq, %arg3, %c0_i32_3 : i32
    %10 = arith.extui %9 : i1 to i32
    %c0_i32_4 = arith.constant 0 : i32
    %11 = arith.cmpi ne, %10, %c0_i32_4 : i32
    scf.if %11 {
      %c0 = arith.constant 0 : index
      %c0_5 = arith.constant 0 : index
      %12 = vector.load %arg10[%c0, %c0_5] : memref<16x128xf32, #tpu.memory_space<vmem>>, vector<16x32xf32>
      %c0_6 = arith.constant 0 : index
      %c0_7 = arith.constant 0 : index
      %13 = vector.load %arg9[%c0_6, %c0_7] : memref<16x4xf32, #tpu.memory_space<vmem>>, vector<16x1xf32>
      %14 = vector.broadcast %13 : vector<16x1xf32> to vector<16x32xf32>
      %15 = arith.divf %12, %14 : vector<16x32xf32>
      %16 = arith.truncf %15 : vector<16x32xf32> to vector<16x32xbf16>
      %c0_8 = arith.constant 0 : index
      %c0_9 = arith.constant 0 : index
      %c0_10 = arith.constant 0 : index
      %17 = vector.load %arg7[%c0_8, %c0_9, %c0_10] : memref<1x16x128xbf16, #tpu.memory_space<vmem>>, vector<1x16x32xbf16>
      %18 = vector.shape_cast %17 : vector<1x16x32xbf16> to vector<16x32xbf16>
      %19 = vector.shape_cast %16 : vector<16x32xbf16> to vector<1x16x32xbf16>
      tpu.vector_store %arg7[%c0_8, %c0_9, %c0_10], %19 {strides = array<i32>} : memref<1x16x128xbf16, #tpu.memory_space<vmem>>, vector<1x16x32xbf16>,
      %c0_11 = arith.constant 0 : index
      %c32 = arith.constant 32 : index
      %20 = vector.load %arg10[%c0_11, %c32] : memref<16x128xf32, #tpu.memory_space<vmem>>, vector<16x32xf32>
      %c0_12 = arith.constant 0 : index
      %c1 = arith.constant 1 : index
      %21 = vector.load %arg9[%c0_12, %c1] : memref<16x4xf32, #tpu.memory_space<vmem>>, vector<16x1xf32>
      %22 = vector.broadcast %21 : vector<16x1xf32> to vector<16x32xf32>
      %23 = arith.divf %20, %22 : vector<16x32xf32>
      %24 = arith.truncf %23 : vector<16x32xf32> to vector<16x32xbf16>
      %c0_13 = arith.constant 0 : index
      %c0_14 = arith.constant 0 : index
      %c32_15 = arith.constant 32 : index
      %25 = vector.load %arg7[%c0_13, %c0_14, %c32_15] : memref<1x16x128xbf16, #tpu.memory_space<vmem>>, vector<1x16x32xbf16>
      %26 = vector.shape_cast %25 : vector<1x16x32xbf16> to vector<16x32xbf16>
      %27 = vector.shape_cast %24 : vector<16x32xbf16> to vector<1x16x32xbf16>
      tpu.vector_store %arg7[%c0_13, %c0_14, %c32_15], %27 {strides = array<i32>} : memref<1x16x128xbf16, #tpu.memory_space<vmem>>, vector<1x16x32xbf16>,
      %c0_16 = arith.constant 0 : index
      %c64 = arith.constant 64 : index
      %28 = vector.load %arg10[%c0_16, %c64] : memref<16x128xf32, #tpu.memory_space<vmem>>, vector<16x32xf32>
      %c0_17 = arith.constant 0 : index
      %c2 = arith.constant 2 : index
      %29 = vector.load %arg9[%c0_17, %c2] : memref<16x4xf32, #tpu.memory_space<vmem>>, vector<16x1xf32>
      %30 = vector.broadcast %29 : vector<16x1xf32> to vector<16x32xf32>
      %31 = arith.divf %28, %30 : vector<16x32xf32>
      %32 = arith.truncf %31 : vector<16x32xf32> to vector<16x32xbf16>
      %c0_18 = arith.constant 0 : index
      %c0_19 = arith.constant 0 : index
      %c64_20 = arith.constant 64 : index
      %33 = vector.load %arg7[%c0_18, %c0_19, %c64_20] : memref<1x16x128xbf16, #tpu.memory_space<vmem>>, vector<1x16x32xbf16>
      %34 = vector.shape_cast %33 : vector<1x16x32xbf16> to vector<16x32xbf16>
      %35 = vector.shape_cast %32 : vector<16x32xbf16> to vector<1x16x32xbf16>
      tpu.vector_store %arg7[%c0_18, %c0_19, %c64_20], %35 {strides = array<i32>} : memref<1x16x128xbf16, #tpu.memory_space<vmem>>, vector<1x16x32xbf16>,
      %c0_21 = arith.constant 0 : index
      %c96 = arith.constant 96 : index
      %36 = vector.load %arg10[%c0_21, %c96] : memref<16x128xf32, #tpu.memory_space<vmem>>, vector<16x32xf32>
      %c0_22 = arith.constant 0 : index
      %c3 = arith.constant 3 : index
      %37 = vector.load %arg9[%c0_22, %c3] : memref<16x4xf32, #tpu.memory_space<vmem>>, vector<16x1xf32>
      %38 = vector.broadcast %37 : vector<16x1xf32> to vector<16x32xf32>
      %39 = arith.divf %36, %38 : vector<16x32xf32>
      %40 = arith.truncf %39 : vector<16x32xf32> to vector<16x32xbf16>
      %c0_23 = arith.constant 0 : index
      %c0_24 = arith.constant 0 : index
      %c96_25 = arith.constant 96 : index
      %41 = vector.load %arg7[%c0_23, %c0_24, %c96_25] : memref<1x16x128xbf16, #tpu.memory_space<vmem>>, vector<1x16x32xbf16>
      %42 = vector.shape_cast %41 : vector<1x16x32xbf16> to vector<16x32xbf16>
      %43 = vector.shape_cast %40 : vector<16x32xbf16> to vector<1x16x32xbf16>
      tpu.vector_store %arg7[%c0_23, %c0_24, %c96_25], %43 {strides = array<i32>} : memref<1x16x128xbf16, #tpu.memory_space<vmem>>, vector<1x16x32xbf16>,
    } else {
    }
    return
  }
  func.func @transform_0(%arg0: i32, %arg1: i32, %arg2: i32, %arg3: i32) -> (i32, i32, i32) {
    %c0_i32 = arith.constant 0 : i32
    return %arg0, %arg2, %arg1 : i32, i32, i32
  }
  func.func @transform_1(%arg0: i32, %arg1: i32, %arg2: i32, %arg3: i32) -> (i32, i32, i32) {
    %0 = arith.minsi %arg3, %arg2 : i32
    %c1_i32 = arith.constant 1 : i32
    %1 = arith.addi %c1_i32, %arg1 : i32
    %c0_i32 = arith.constant 0 : i32
    return %arg0, %0, %1 : i32, i32, i32
  }
  func.func @transform_2(%arg0: i32, %arg1: i32, %arg2: i32, %arg3: i32) -> (i32, i32, i32) {
    %0 = arith.minsi %arg3, %arg2 : i32
    %c2_i32 = arith.constant 2 : i32
    %1 = arith.addi %c2_i32, %arg1 : i32
    %c0_i32 = arith.constant 0 : i32
    return %arg0, %0, %1 : i32, i32, i32
  }
  func.func @transform_3(%arg0: i32, %arg1: i32, %arg2: i32, %arg3: i32) -> (i32, i32, i32) {
    %c0_i32 = arith.constant 0 : i32
    return %arg0, %arg2, %arg1 : i32, i32, i32
  }
}

module attributes {stable_mosaic.version = 11 : i64} {
  func.func @_rms_qkv_kernel(%arg0: i32, %arg1: i32, %arg2: memref<32x128xf32, #tpu.memory_space<vmem>>, %arg3: memref<1x128xf32, #tpu.memory_space<vmem>>, %arg4: memref<128x384xbf16, #tpu.memory_space<vmem>>, %arg5: memref<32x128xf32, #tpu.memory_space<vmem>>, %arg6: memref<32x384xbf16, #tpu.memory_space<vmem>>, %arg7: memref<32x128xbf16, #tpu.memory_space<vmem>>) attributes {dimension_semantics = [#tpu.dimension_semantics<parallel>, #tpu.dimension_semantics<arbitrary>], iteration_bounds = array<i64: 1, 1>, scalar_prefetch = 0 : i64, scratch_operands = 1 : i64, tpu.core_type = #tpu.core_type<tc>, window_params = [{transform_indices = @transform_0, window_bounds = array<i64: 32, 128>}, {pipeline_mode = #tpu.pipeline_mode<synchronous>, transform_indices = @transform_1, window_bounds = array<i64: 1, 128>}, {transform_indices = @transform_2, window_bounds = array<i64: 128, 384>}, {transform_indices = @transform_3, window_bounds = array<i64: 32, 128>}, {transform_indices = @transform_4, window_bounds = array<i64: 32, 384>}]} {
    %c0_i32 = arith.constant 0 : i32
    %0 = arith.cmpi eq, %arg1, %c0_i32 : i32
    %1 = arith.extui %0 : i1 to i32
    %c0_i32_0 = arith.constant 0 : i32
    %2 = arith.cmpi ne, %1, %c0_i32_0 : i32
    scf.if %2 {
      %c0_6 = arith.constant 0 : index
      %c0_7 = arith.constant 0 : index
      %8 = vector.load %arg2[%c0_6, %c0_7] : memref<32x128xf32, #tpu.memory_space<vmem>>, vector<32x128xf32>
      %9 = arith.mulf %8, %8 : vector<32x128xf32>
      %cst_8 = arith.constant dense<0.000000e+00> : vector<32xf32>
      %10 = vector.multi_reduction <add>, %9, %cst_8 [1] : vector<32x128xf32> to vector<32xf32>
      %11 = vector.shape_cast %10 : vector<32xf32> to vector<32x1xf32>
      %cst_9 = arith.constant 1.280000e+02 : f32
      %12 = vector.broadcast %cst_9 : f32 to vector<32x1xf32>
      %13 = arith.divf %11, %12 : vector<32x1xf32>
      %cst_10 = arith.constant 1.1920929E-7 : f32
      %14 = vector.broadcast %cst_10 : f32 to vector<32x1xf32>
      %15 = arith.addf %13, %14 : vector<32x1xf32>
      %16 = math.rsqrt %15 : vector<32x1xf32>
      %17 = vector.broadcast %16 : vector<32x1xf32> to vector<32x128xf32>
      %18 = arith.mulf %8, %17 : vector<32x128xf32>
      %c0_11 = arith.constant 0 : index
      %c0_12 = arith.constant 0 : index
      %19 = vector.load %arg3[%c0_11, %c0_12] : memref<1x128xf32, #tpu.memory_space<vmem>>, vector<1x128xf32>
      %20 = vector.broadcast %19 : vector<1x128xf32> to vector<32x128xf32>
      %21 = arith.mulf %18, %20 : vector<32x128xf32>
      %c0_13 = arith.constant 0 : index
      %c0_14 = arith.constant 0 : index
      %22 = vector.load %arg5[%c0_13, %c0_14] : memref<32x128xf32, #tpu.memory_space<vmem>>, vector<32x128xf32>
      tpu.vector_store %arg5[%c0_13, %c0_14], %21 {strides = array<i32>} : memref<32x128xf32, #tpu.memory_space<vmem>>, vector<32x128xf32>,
      %23 = arith.truncf %21 : vector<32x128xf32> to vector<32x128xbf16>
      %c0_15 = arith.constant 0 : index
      %c0_16 = arith.constant 0 : index
      %24 = vector.load %arg7[%c0_15, %c0_16] : memref<32x128xbf16, #tpu.memory_space<vmem>>, vector<32x128xbf16>
      tpu.vector_store %arg7[%c0_15, %c0_16], %23 {strides = array<i32>} : memref<32x128xbf16, #tpu.memory_space<vmem>>, vector<32x128xbf16>,
    } else {
    }
    %c0 = arith.constant 0 : index
    %c0_1 = arith.constant 0 : index
    %3 = vector.load %arg7[%c0, %c0_1] : memref<32x128xbf16, #tpu.memory_space<vmem>>, vector<32x128xbf16>
    %c0_2 = arith.constant 0 : index
    %c0_3 = arith.constant 0 : index
    %4 = vector.load %arg4[%c0_2, %c0_3] : memref<128x384xbf16, #tpu.memory_space<vmem>>, vector<128x384xbf16>
    %cst = arith.constant dense<0.000000e+00> : vector<32x384xf32>
    %5 = tpu.matmul %3, %4, %cst {dimension_numbers = #tpu.dot_dimension_numbers<[1], [0], [0], [1], [0, 0, 1, 1], [], []>} : vector<32x128xbf16>, vector<128x384xbf16>, vector<32x384xf32> -> vector<32x384xf32>
    %6 = arith.truncf %5 : vector<32x384xf32> to vector<32x384xbf16>
    %c0_4 = arith.constant 0 : index
    %c0_5 = arith.constant 0 : index
    %7 = vector.load %arg6[%c0_4, %c0_5] : memref<32x384xbf16, #tpu.memory_space<vmem>>, vector<32x384xbf16>
    tpu.vector_store %arg6[%c0_4, %c0_5], %6 {strides = array<i32>} : memref<32x384xbf16, #tpu.memory_space<vmem>>, vector<32x384xbf16>,
    return
  }
  func.func @transform_0(%arg0: i32, %arg1: i32) -> (i32, i32) {
    %c0_i32 = arith.constant 0 : i32
    %c0_i32_0 = arith.constant 0 : i32
    return %arg0, %c0_i32 : i32, i32
  }
  func.func @transform_1(%arg0: i32, %arg1: i32) -> (i32, i32) {
    %c0_i32 = arith.constant 0 : i32
    %c0_i32_0 = arith.constant 0 : i32
    %c0_i32_1 = arith.constant 0 : i32
    return %c0_i32, %c0_i32_0 : i32, i32
  }
  func.func @transform_2(%arg0: i32, %arg1: i32) -> (i32, i32) {
    %c0_i32 = arith.constant 0 : i32
    %c0_i32_0 = arith.constant 0 : i32
    return %c0_i32, %arg1 : i32, i32
  }
  func.func @transform_3(%arg0: i32, %arg1: i32) -> (i32, i32) {
    %c0_i32 = arith.constant 0 : i32
    %c0_i32_0 = arith.constant 0 : i32
    return %arg0, %c0_i32 : i32, i32
  }
  func.func @transform_4(%arg0: i32, %arg1: i32) -> (i32, i32) {
    %c0_i32 = arith.constant 0 : i32
    return %arg0, %arg1 : i32, i32
  }
}

module attributes {stable_mosaic.version = 11 : i64} {
  func.func @_rope_kernel(%arg0: i32, %arg1: i32, %arg2: memref<1x16x384xbf16, #tpu.memory_space<vmem>>, %arg3: memref<16x32xf32, #tpu.memory_space<vmem>>, %arg4: memref<16x32xf32, #tpu.memory_space<vmem>>, %arg5: memref<16x32xf32, #tpu.memory_space<vmem>>, %arg6: memref<16x32xf32, #tpu.memory_space<vmem>>, %arg7: memref<1x16x384xbf16, #tpu.memory_space<vmem>>) attributes {dimension_semantics = [#tpu.dimension_semantics<parallel>, #tpu.dimension_semantics<parallel>], iteration_bounds = array<i64: 2, 1>, scalar_prefetch = 0 : i64, scratch_operands = 0 : i64, tpu.core_type = #tpu.core_type<tc>, window_params = [{transform_indices = @transform_0, window_bounds = array<i64: 1, 16, 384>}, {transform_indices = @transform_1, window_bounds = array<i64: 16, 32>}, {transform_indices = @transform_2, window_bounds = array<i64: 16, 32>}, {transform_indices = @transform_3, window_bounds = array<i64: 16, 32>}, {transform_indices = @transform_4, window_bounds = array<i64: 16, 32>}, {transform_indices = @transform_5, window_bounds = array<i64: 1, 16, 384>}]} {
    %c0 = arith.constant 0 : index
    %c0_0 = arith.constant 0 : index
    %c0_1 = arith.constant 0 : index
    %0 = vector.load %arg2[%c0, %c0_0, %c0_1] : memref<1x16x384xbf16, #tpu.memory_space<vmem>>, vector<1x16x384xbf16>
    %1 = vector.shape_cast %0 : vector<1x16x384xbf16> to vector<16x384xbf16>
    %c0_2 = arith.constant 0 : index
    %c0_3 = arith.constant 0 : index
    %2 = vector.load %arg3[%c0_2, %c0_3] : memref<16x32xf32, #tpu.memory_space<vmem>>, vector<16x32xf32>
    %c0_4 = arith.constant 0 : index
    %c0_5 = arith.constant 0 : index
    %3 = vector.load %arg4[%c0_4, %c0_5] : memref<16x32xf32, #tpu.memory_space<vmem>>, vector<16x32xf32>
    %c0_6 = arith.constant 0 : index
    %c0_7 = arith.constant 0 : index
    %4 = vector.load %arg5[%c0_6, %c0_7] : memref<16x32xf32, #tpu.memory_space<vmem>>, vector<16x32xf32>
    %c0_8 = arith.constant 0 : index
    %c0_9 = arith.constant 0 : index
    %5 = vector.load %arg6[%c0_8, %c0_9] : memref<16x32xf32, #tpu.memory_space<vmem>>, vector<16x32xf32>
    %6 = vector.extract_strided_slice %1 {offsets = [0, 0], sizes = [16, 32], strides = [1, 1]} : vector<16x384xbf16> to vector<16x32xbf16>
    %7 = arith.extf %6 : vector<16x32xbf16> to vector<16x32xf32>
    %8 = vector.extract_strided_slice %1 {offsets = [0, 128], sizes = [16, 32], strides = [1, 1]} : vector<16x384xbf16> to vector<16x32xbf16>
    %9 = arith.extf %8 : vector<16x32xbf16> to vector<16x32xf32>
    %10 = arith.mulf %7, %2 : vector<16x32xf32>
    %c16_i32 = arith.constant 16 : i32
    %11 = tpu.dynamic_rotate %7 by %c16_i32 dim 1 : vector<16x32xf32>, i32 -> vector<16x32xf32>
    %12 = arith.mulf %11, %3 : vector<16x32xf32>
    %13 = arith.addf %10, %12 : vector<16x32xf32>
    %14 = arith.truncf %13 : vector<16x32xf32> to vector<16x32xbf16>
    %c0_10 = arith.constant 0 : index
    %c0_11 = arith.constant 0 : index
    %c0_12 = arith.constant 0 : index
    %15 = vector.load %arg7[%c0_10, %c0_11, %c0_12] : memref<1x16x384xbf16, #tpu.memory_space<vmem>>, vector<1x16x32xbf16>
    %16 = vector.shape_cast %15 : vector<1x16x32xbf16> to vector<16x32xbf16>
    %17 = vector.shape_cast %14 : vector<16x32xbf16> to vector<1x16x32xbf16>
    tpu.vector_store %arg7[%c0_10, %c0_11, %c0_12], %17 {strides = array<i32>} : memref<1x16x384xbf16, #tpu.memory_space<vmem>>, vector<1x16x32xbf16>,
    %18 = arith.mulf %9, %4 : vector<16x32xf32>
    %c16_i32_13 = arith.constant 16 : i32
    %19 = tpu.dynamic_rotate %9 by %c16_i32_13 dim 1 : vector<16x32xf32>, i32 -> vector<16x32xf32>
    %20 = arith.mulf %19, %5 : vector<16x32xf32>
    %21 = arith.addf %18, %20 : vector<16x32xf32>
    %22 = arith.truncf %21 : vector<16x32xf32> to vector<16x32xbf16>
    %c0_14 = arith.constant 0 : index
    %c0_15 = arith.constant 0 : index
    %c128 = arith.constant 128 : index
    %23 = vector.load %arg7[%c0_14, %c0_15, %c128] : memref<1x16x384xbf16, #tpu.memory_space<vmem>>, vector<1x16x32xbf16>
    %24 = vector.shape_cast %23 : vector<1x16x32xbf16> to vector<16x32xbf16>
    %25 = vector.shape_cast %22 : vector<16x32xbf16> to vector<1x16x32xbf16>
    tpu.vector_store %arg7[%c0_14, %c0_15, %c128], %25 {strides = array<i32>} : memref<1x16x384xbf16, #tpu.memory_space<vmem>>, vector<1x16x32xbf16>,
    %26 = vector.extract_strided_slice %1 {offsets = [0, 32], sizes = [16, 32], strides = [1, 1]} : vector<16x384xbf16> to vector<16x32xbf16>
    %27 = arith.extf %26 : vector<16x32xbf16> to vector<16x32xf32>
    %28 = vector.extract_strided_slice %1 {offsets = [0, 160], sizes = [16, 32], strides = [1, 1]} : vector<16x384xbf16> to vector<16x32xbf16>
    %29 = arith.extf %28 : vector<16x32xbf16> to vector<16x32xf32>
    %30 = arith.mulf %27, %2 : vector<16x32xf32>
    %c16_i32_16 = arith.constant 16 : i32
    %31 = tpu.dynamic_rotate %27 by %c16_i32_16 dim 1 : vector<16x32xf32>, i32 -> vector<16x32xf32>
    %32 = arith.mulf %31, %3 : vector<16x32xf32>
    %33 = arith.addf %30, %32 : vector<16x32xf32>
    %34 = arith.truncf %33 : vector<16x32xf32> to vector<16x32xbf16>
    %c0_17 = arith.constant 0 : index
    %c0_18 = arith.constant 0 : index
    %c32 = arith.constant 32 : index
    %35 = vector.load %arg7[%c0_17, %c0_18, %c32] : memref<1x16x384xbf16, #tpu.memory_space<vmem>>, vector<1x16x32xbf16>
    %36 = vector.shape_cast %35 : vector<1x16x32xbf16> to vector<16x32xbf16>
    %37 = vector.shape_cast %34 : vector<16x32xbf16> to vector<1x16x32xbf16>
    tpu.vector_store %arg7[%c0_17, %c0_18, %c32], %37 {strides = array<i32>} : memref<1x16x384xbf16, #tpu.memory_space<vmem>>, vector<1x16x32xbf16>,
    %38 = arith.mulf %29, %4 : vector<16x32xf32>
    %c16_i32_19 = arith.constant 16 : i32
    %39 = tpu.dynamic_rotate %29 by %c16_i32_19 dim 1 : vector<16x32xf32>, i32 -> vector<16x32xf32>
    %40 = arith.mulf %39, %5 : vector<16x32xf32>
    %41 = arith.addf %38, %40 : vector<16x32xf32>
    %42 = arith.truncf %41 : vector<16x32xf32> to vector<16x32xbf16>
    %c0_20 = arith.constant 0 : index
    %c0_21 = arith.constant 0 : index
    %c160 = arith.constant 160 : index
    %43 = vector.load %arg7[%c0_20, %c0_21, %c160] : memref<1x16x384xbf16, #tpu.memory_space<vmem>>, vector<1x16x32xbf16>
    %44 = vector.shape_cast %43 : vector<1x16x32xbf16> to vector<16x32xbf16>
    %45 = vector.shape_cast %42 : vector<16x32xbf16> to vector<1x16x32xbf16>
    tpu.vector_store %arg7[%c0_20, %c0_21, %c160], %45 {strides = array<i32>} : memref<1x16x384xbf16, #tpu.memory_space<vmem>>, vector<1x16x32xbf16>,
    %46 = vector.extract_strided_slice %1 {offsets = [0, 64], sizes = [16, 32], strides = [1, 1]} : vector<16x384xbf16> to vector<16x32xbf16>
    %47 = arith.extf %46 : vector<16x32xbf16> to vector<16x32xf32>
    %48 = vector.extract_strided_slice %1 {offsets = [0, 192], sizes = [16, 32], strides = [1, 1]} : vector<16x384xbf16> to vector<16x32xbf16>
    %49 = arith.extf %48 : vector<16x32xbf16> to vector<16x32xf32>
    %50 = arith.mulf %47, %2 : vector<16x32xf32>
    %c16_i32_22 = arith.constant 16 : i32
    %51 = tpu.dynamic_rotate %47 by %c16_i32_22 dim 1 : vector<16x32xf32>, i32 -> vector<16x32xf32>
    %52 = arith.mulf %51, %3 : vector<16x32xf32>
    %53 = arith.addf %50, %52 : vector<16x32xf32>
    %54 = arith.truncf %53 : vector<16x32xf32> to vector<16x32xbf16>
    %c0_23 = arith.constant 0 : index
    %c0_24 = arith.constant 0 : index
    %c64 = arith.constant 64 : index
    %55 = vector.load %arg7[%c0_23, %c0_24, %c64] : memref<1x16x384xbf16, #tpu.memory_space<vmem>>, vector<1x16x32xbf16>
    %56 = vector.shape_cast %55 : vector<1x16x32xbf16> to vector<16x32xbf16>
    %57 = vector.shape_cast %54 : vector<16x32xbf16> to vector<1x16x32xbf16>
    tpu.vector_store %arg7[%c0_23, %c0_24, %c64], %57 {strides = array<i32>} : memref<1x16x384xbf16, #tpu.memory_space<vmem>>, vector<1x16x32xbf16>,
    %58 = arith.mulf %49, %4 : vector<16x32xf32>
    %c16_i32_25 = arith.constant 16 : i32
    %59 = tpu.dynamic_rotate %49 by %c16_i32_25 dim 1 : vector<16x32xf32>, i32 -> vector<16x32xf32>
    %60 = arith.mulf %59, %5 : vector<16x32xf32>
    %61 = arith.addf %58, %60 : vector<16x32xf32>
    %62 = arith.truncf %61 : vector<16x32xf32> to vector<16x32xbf16>
    %c0_26 = arith.constant 0 : index
    %c0_27 = arith.constant 0 : index
    %c192 = arith.constant 192 : index
    %63 = vector.load %arg7[%c0_26, %c0_27, %c192] : memref<1x16x384xbf16, #tpu.memory_space<vmem>>, vector<1x16x32xbf16>
    %64 = vector.shape_cast %63 : vector<1x16x32xbf16> to vector<16x32xbf16>
    %65 = vector.shape_cast %62 : vector<16x32xbf16> to vector<1x16x32xbf16>
    tpu.vector_store %arg7[%c0_26, %c0_27, %c192], %65 {strides = array<i32>} : memref<1x16x384xbf16, #tpu.memory_space<vmem>>, vector<1x16x32xbf16>,
    %66 = vector.extract_strided_slice %1 {offsets = [0, 96], sizes = [16, 32], strides = [1, 1]} : vector<16x384xbf16> to vector<16x32xbf16>
    %67 = arith.extf %66 : vector<16x32xbf16> to vector<16x32xf32>
    %68 = vector.extract_strided_slice %1 {offsets = [0, 224], sizes = [16, 32], strides = [1, 1]} : vector<16x384xbf16> to vector<16x32xbf16>
    %69 = arith.extf %68 : vector<16x32xbf16> to vector<16x32xf32>
    %70 = arith.mulf %67, %2 : vector<16x32xf32>
    %c16_i32_28 = arith.constant 16 : i32
    %71 = tpu.dynamic_rotate %67 by %c16_i32_28 dim 1 : vector<16x32xf32>, i32 -> vector<16x32xf32>
    %72 = arith.mulf %71, %3 : vector<16x32xf32>
    %73 = arith.addf %70, %72 : vector<16x32xf32>
    %74 = arith.truncf %73 : vector<16x32xf32> to vector<16x32xbf16>
    %c0_29 = arith.constant 0 : index
    %c0_30 = arith.constant 0 : index
    %c96 = arith.constant 96 : index
    %75 = vector.load %arg7[%c0_29, %c0_30, %c96] : memref<1x16x384xbf16, #tpu.memory_space<vmem>>, vector<1x16x32xbf16>
    %76 = vector.shape_cast %75 : vector<1x16x32xbf16> to vector<16x32xbf16>
    %77 = vector.shape_cast %74 : vector<16x32xbf16> to vector<1x16x32xbf16>
    tpu.vector_store %arg7[%c0_29, %c0_30, %c96], %77 {strides = array<i32>} : memref<1x16x384xbf16, #tpu.memory_space<vmem>>, vector<1x16x32xbf16>,
    %78 = arith.mulf %69, %4 : vector<16x32xf32>
    %c16_i32_31 = arith.constant 16 : i32
    %79 = tpu.dynamic_rotate %69 by %c16_i32_31 dim 1 : vector<16x32xf32>, i32 -> vector<16x32xf32>
    %80 = arith.mulf %79, %5 : vector<16x32xf32>
    %81 = arith.addf %78, %80 : vector<16x32xf32>
    %82 = arith.truncf %81 : vector<16x32xf32> to vector<16x32xbf16>
    %c0_32 = arith.constant 0 : index
    %c0_33 = arith.constant 0 : index
    %c224 = arith.constant 224 : index
    %83 = vector.load %arg7[%c0_32, %c0_33, %c224] : memref<1x16x384xbf16, #tpu.memory_space<vmem>>, vector<1x16x32xbf16>
    %84 = vector.shape_cast %83 : vector<1x16x32xbf16> to vector<16x32xbf16>
    %85 = vector.shape_cast %82 : vector<16x32xbf16> to vector<1x16x32xbf16>
    tpu.vector_store %arg7[%c0_32, %c0_33, %c224], %85 {strides = array<i32>} : memref<1x16x384xbf16, #tpu.memory_space<vmem>>, vector<1x16x32xbf16>,
    %86 = vector.extract_strided_slice %1 {offsets = [0, 256], sizes = [16, 128], strides = [1, 1]} : vector<16x384xbf16> to vector<16x128xbf16>
    %c0_34 = arith.constant 0 : index
    %c0_35 = arith.constant 0 : index
    %c256 = arith.constant 256 : index
    %87 = vector.load %arg7[%c0_34, %c0_35, %c256] : memref<1x16x384xbf16, #tpu.memory_space<vmem>>, vector<1x16x128xbf16>
    %88 = vector.shape_cast %87 : vector<1x16x128xbf16> to vector<16x128xbf16>
    %89 = vector.shape_cast %86 : vector<16x128xbf16> to vector<1x16x128xbf16>
    tpu.vector_store %arg7[%c0_34, %c0_35, %c256], %89 {strides = array<i32>} : memref<1x16x384xbf16, #tpu.memory_space<vmem>>, vector<1x16x128xbf16>,
    return
  }
  func.func @transform_0(%arg0: i32, %arg1: i32) -> (i32, i32, i32) {
    %c0_i32 = arith.constant 0 : i32
    %c0_i32_0 = arith.constant 0 : i32
    return %arg0, %arg1, %c0_i32 : i32, i32, i32
  }
  func.func @transform_1(%arg0: i32, %arg1: i32) -> (i32, i32) {
    %c0_i32 = arith.constant 0 : i32
    %c0_i32_0 = arith.constant 0 : i32
    return %arg1, %c0_i32 : i32, i32
  }
  func.func @transform_2(%arg0: i32, %arg1: i32) -> (i32, i32) {
    %c0_i32 = arith.constant 0 : i32
    %c0_i32_0 = arith.constant 0 : i32
    return %arg1, %c0_i32 : i32, i32
  }
  func.func @transform_3(%arg0: i32, %arg1: i32) -> (i32, i32) {
    %c0_i32 = arith.constant 0 : i32
    %c0_i32_0 = arith.constant 0 : i32
    return %arg1, %c0_i32 : i32, i32
  }
  func.func @transform_4(%arg0: i32, %arg1: i32) -> (i32, i32) {
    %c0_i32 = arith.constant 0 : i32
    %c0_i32_0 = arith.constant 0 : i32
    return %arg1, %c0_i32 : i32, i32
  }
  func.func @transform_5(%arg0: i32, %arg1: i32) -> (i32, i32, i32) {
    %c0_i32 = arith.constant 0 : i32
    %c0_i32_0 = arith.constant 0 : i32
    return %arg0, %arg1, %c0_i32 : i32, i32, i32
  }
}

module attributes {stable_mosaic.version = 11 : i64} {
  func.func @_matmul_res_kernel(%arg0: i32, %arg1: i32, %arg2: i32, %arg3: memref<32x128xbf16, #tpu.memory_space<vmem>>, %arg4: memref<128x128xbf16, #tpu.memory_space<vmem>>, %arg5: memref<32x128xf32, #tpu.memory_space<vmem>>, %arg6: memref<32x128xf32, #tpu.memory_space<vmem>>, %arg7: memref<32x128xf32, #tpu.memory_space<vmem>>) attributes {dimension_semantics = [#tpu.dimension_semantics<parallel>, #tpu.dimension_semantics<parallel>, #tpu.dimension_semantics<arbitrary>], iteration_bounds = array<i64: 1, 1, 1>, scalar_prefetch = 0 : i64, scratch_operands = 1 : i64, tpu.core_type = #tpu.core_type<tc>, window_params = [{transform_indices = @transform_0, window_bounds = array<i64: 32, 128>}, {transform_indices = @transform_1, window_bounds = array<i64: 128, 128>}, {transform_indices = @transform_2, window_bounds = array<i64: 32, 128>}, {transform_indices = @transform_3, window_bounds = array<i64: 32, 128>}]} {
    %c0_i32 = arith.constant 0 : i32
    %0 = arith.cmpi eq, %arg2, %c0_i32 : i32
    %1 = arith.extui %0 : i1 to i32
    %c0_i32_0 = arith.constant 0 : i32
    %2 = arith.cmpi ne, %1, %c0_i32_0 : i32
    scf.if %2 {
      %cst_10 = arith.constant 0.000000e+00 : f32
      %12 = vector.broadcast %cst_10 : f32 to vector<32x128xf32>
      %c0_11 = arith.constant 0 : index
      %c0_12 = arith.constant 0 : index
      %13 = vector.load %arg7[%c0_11, %c0_12] : memref<32x128xf32, #tpu.memory_space<vmem>>, vector<32x128xf32>
      tpu.vector_store %arg7[%c0_11, %c0_12], %12 {strides = array<i32>} : memref<32x128xf32, #tpu.memory_space<vmem>>, vector<32x128xf32>,
    } else {
    }
    %c0 = arith.constant 0 : index
    %c0_1 = arith.constant 0 : index
    %3 = vector.load %arg7[%c0, %c0_1] : memref<32x128xf32, #tpu.memory_space<vmem>>, vector<32x128xf32>
    %c0_2 = arith.constant 0 : index
    %c0_3 = arith.constant 0 : index
    %4 = vector.load %arg3[%c0_2, %c0_3] : memref<32x128xbf16, #tpu.memory_space<vmem>>, vector<32x128xbf16>
    %c0_4 = arith.constant 0 : index
    %c0_5 = arith.constant 0 : index
    %5 = vector.load %arg4[%c0_4, %c0_5] : memref<128x128xbf16, #tpu.memory_space<vmem>>, vector<128x128xbf16>
    %cst = arith.constant dense<0.000000e+00> : vector<32x128xf32>
    %6 = tpu.matmul %4, %5, %cst {dimension_numbers = #tpu.dot_dimension_numbers<[1], [0], [0], [1], [0, 0, 1, 1], [], []>} : vector<32x128xbf16>, vector<128x128xbf16>, vector<32x128xf32> -> vector<32x128xf32>
    %7 = arith.addf %3, %6 : vector<32x128xf32>
    %c0_6 = arith.constant 0 : index
    %c0_7 = arith.constant 0 : index
    %8 = vector.load %arg7[%c0_6, %c0_7] : memref<32x128xf32, #tpu.memory_space<vmem>>, vector<32x128xf32>
    tpu.vector_store %arg7[%c0_6, %c0_7], %7 {strides = array<i32>} : memref<32x128xf32, #tpu.memory_space<vmem>>, vector<32x128xf32>,
    %c0_i32_8 = arith.constant 0 : i32
    %9 = arith.cmpi eq, %arg2, %c0_i32_8 : i32
    %10 = arith.extui %9 : i1 to i32
    %c0_i32_9 = arith.constant 0 : i32
    %11 = arith.cmpi ne, %10, %c0_i32_9 : i32
    scf.if %11 {
      %c0_10 = arith.constant 0 : index
      %c0_11 = arith.constant 0 : index
      %12 = vector.load %arg7[%c0_10, %c0_11] : memref<32x128xf32, #tpu.memory_space<vmem>>, vector<32x128xf32>
      %c0_12 = arith.constant 0 : index
      %c0_13 = arith.constant 0 : index
      %13 = vector.load %arg5[%c0_12, %c0_13] : memref<32x128xf32, #tpu.memory_space<vmem>>, vector<32x128xf32>
      %14 = arith.addf %12, %13 : vector<32x128xf32>
      %c0_14 = arith.constant 0 : index
      %c0_15 = arith.constant 0 : index
      %15 = vector.load %arg6[%c0_14, %c0_15] : memref<32x128xf32, #tpu.memory_space<vmem>>, vector<32x128xf32>
      tpu.vector_store %arg6[%c0_14, %c0_15], %14 {strides = array<i32>} : memref<32x128xf32, #tpu.memory_space<vmem>>, vector<32x128xf32>,
    } else {
    }
    return
  }
  func.func @transform_0(%arg0: i32, %arg1: i32, %arg2: i32) -> (i32, i32) {
    %c0_i32 = arith.constant 0 : i32
    return %arg0, %arg2 : i32, i32
  }
  func.func @transform_1(%arg0: i32, %arg1: i32, %arg2: i32) -> (i32, i32) {
    %c0_i32 = arith.constant 0 : i32
    return %arg2, %arg1 : i32, i32
  }
  func.func @transform_2(%arg0: i32, %arg1: i32, %arg2: i32) -> (i32, i32) {
    %c0_i32 = arith.constant 0 : i32
    return %arg0, %arg1 : i32, i32
  }
  func.func @transform_3(%arg0: i32, %arg1: i32, %arg2: i32) -> (i32, i32) {
    %c0_i32 = arith.constant 0 : i32
    return %arg0, %arg1 : i32, i32
  }
}

module attributes {stable_mosaic.version = 11 : i64} {
  func.func @_mlp_kernel(%arg0: i32, %arg1: i32, %arg2: memref<32x128xf32, #tpu.memory_space<vmem>>, %arg3: memref<1x128xf32, #tpu.memory_space<vmem>>, %arg4: memref<128x256xbf16, #tpu.memory_space<vmem>>, %arg5: memref<128x256xbf16, #tpu.memory_space<vmem>>, %arg6: memref<256x128xbf16, #tpu.memory_space<vmem>>, %arg7: memref<32x128xf32, #tpu.memory_space<vmem>>, %arg8: memref<32x128xf32, #tpu.memory_space<vmem>>, %arg9: memref<32x128xbf16, #tpu.memory_space<vmem>>) attributes {dimension_semantics = [#tpu.dimension_semantics<parallel>, #tpu.dimension_semantics<arbitrary>], iteration_bounds = array<i64: 1, 2>, scalar_prefetch = 0 : i64, scratch_operands = 2 : i64, tpu.core_type = #tpu.core_type<tc>, window_params = [{transform_indices = @transform_0, window_bounds = array<i64: 32, 128>}, {pipeline_mode = #tpu.pipeline_mode<synchronous>, transform_indices = @transform_1, window_bounds = array<i64: 1, 128>}, {transform_indices = @transform_2, window_bounds = array<i64: 128, 256>}, {transform_indices = @transform_3, window_bounds = array<i64: 128, 256>}, {transform_indices = @transform_4, window_bounds = array<i64: 256, 128>}, {transform_indices = @transform_5, window_bounds = array<i64: 32, 128>}]} {
    %c0_i32 = arith.constant 0 : i32
    %0 = arith.cmpi eq, %arg1, %c0_i32 : i32
    %1 = arith.extui %0 : i1 to i32
    %c0_i32_0 = arith.constant 0 : i32
    %2 = arith.cmpi ne, %1, %c0_i32_0 : i32
    scf.if %2 {
      %c0_16 = arith.constant 0 : index
      %c0_17 = arith.constant 0 : index
      %24 = vector.load %arg2[%c0_16, %c0_17] : memref<32x128xf32, #tpu.memory_space<vmem>>, vector<32x128xf32>
      %25 = arith.mulf %24, %24 : vector<32x128xf32>
      %cst_18 = arith.constant dense<0.000000e+00> : vector<32xf32>
      %26 = vector.multi_reduction <add>, %25, %cst_18 [1] : vector<32x128xf32> to vector<32xf32>
      %27 = vector.shape_cast %26 : vector<32xf32> to vector<32x1xf32>
      %cst_19 = arith.constant 1.280000e+02 : f32
      %28 = vector.broadcast %cst_19 : f32 to vector<32x1xf32>
      %29 = arith.divf %27, %28 : vector<32x1xf32>
      %cst_20 = arith.constant 1.1920929E-7 : f32
      %30 = vector.broadcast %cst_20 : f32 to vector<32x1xf32>
      %31 = arith.addf %29, %30 : vector<32x1xf32>
      %32 = math.rsqrt %31 : vector<32x1xf32>
      %33 = vector.broadcast %32 : vector<32x1xf32> to vector<32x128xf32>
      %34 = arith.mulf %24, %33 : vector<32x128xf32>
      %c0_21 = arith.constant 0 : index
      %c0_22 = arith.constant 0 : index
      %35 = vector.load %arg3[%c0_21, %c0_22] : memref<1x128xf32, #tpu.memory_space<vmem>>, vector<1x128xf32>
      %36 = vector.broadcast %35 : vector<1x128xf32> to vector<32x128xf32>
      %37 = arith.mulf %34, %36 : vector<32x128xf32>
      %38 = arith.truncf %37 : vector<32x128xf32> to vector<32x128xbf16>
      %c0_23 = arith.constant 0 : index
      %c0_24 = arith.constant 0 : index
      %39 = vector.load %arg9[%c0_23, %c0_24] : memref<32x128xbf16, #tpu.memory_space<vmem>>, vector<32x128xbf16>
      tpu.vector_store %arg9[%c0_23, %c0_24], %38 {strides = array<i32>} : memref<32x128xbf16, #tpu.memory_space<vmem>>, vector<32x128xbf16>,
      %cst_25 = arith.constant 0.000000e+00 : f32
      %40 = vector.broadcast %cst_25 : f32 to vector<32x128xf32>
      %c0_26 = arith.constant 0 : index
      %c0_27 = arith.constant 0 : index
      %41 = vector.load %arg8[%c0_26, %c0_27] : memref<32x128xf32, #tpu.memory_space<vmem>>, vector<32x128xf32>
      tpu.vector_store %arg8[%c0_26, %c0_27], %40 {strides = array<i32>} : memref<32x128xf32, #tpu.memory_space<vmem>>, vector<32x128xf32>,
    } else {
    }
    %c0 = arith.constant 0 : index
    %c0_1 = arith.constant 0 : index
    %3 = vector.load %arg9[%c0, %c0_1] : memref<32x128xbf16, #tpu.memory_space<vmem>>, vector<32x128xbf16>
    %c0_2 = arith.constant 0 : index
    %c0_3 = arith.constant 0 : index
    %4 = vector.load %arg4[%c0_2, %c0_3] : memref<128x256xbf16, #tpu.memory_space<vmem>>, vector<128x256xbf16>
    %cst = arith.constant dense<0.000000e+00> : vector<32x256xf32>
    %5 = tpu.matmul %3, %4, %cst {dimension_numbers = #tpu.dot_dimension_numbers<[1], [0], [0], [1], [0, 0, 1, 1], [], []>} : vector<32x128xbf16>, vector<128x256xbf16>, vector<32x256xf32> -> vector<32x256xf32>
    %c0_4 = arith.constant 0 : index
    %c0_5 = arith.constant 0 : index
    %6 = vector.load %arg5[%c0_4, %c0_5] : memref<128x256xbf16, #tpu.memory_space<vmem>>, vector<128x256xbf16>
    %cst_6 = arith.constant dense<0.000000e+00> : vector<32x256xf32>
    %7 = tpu.matmul %3, %6, %cst_6 {dimension_numbers = #tpu.dot_dimension_numbers<[1], [0], [0], [1], [0, 0, 1, 1], [], []>} : vector<32x128xbf16>, vector<128x256xbf16>, vector<32x256xf32> -> vector<32x256xf32>
    %8 = arith.negf %7 : vector<32x256xf32>
    %9 = math.exp %8 : vector<32x256xf32>
    %cst_7 = arith.constant 1.000000e+00 : f32
    %10 = vector.broadcast %cst_7 : f32 to vector<32x256xf32>
    %11 = arith.addf %10, %9 : vector<32x256xf32>
    %12 = arith.divf %10, %11 : vector<32x256xf32>
    %13 = arith.mulf %7, %12 : vector<32x256xf32>
    %14 = arith.mulf %5, %13 : vector<32x256xf32>
    %15 = arith.truncf %14 : vector<32x256xf32> to vector<32x256xbf16>
    %c0_8 = arith.constant 0 : index
    %c0_9 = arith.constant 0 : index
    %16 = vector.load %arg8[%c0_8, %c0_9] : memref<32x128xf32, #tpu.memory_space<vmem>>, vector<32x128xf32>
    %c0_10 = arith.constant 0 : index
    %c0_11 = arith.constant 0 : index
    %17 = vector.load %arg6[%c0_10, %c0_11] : memref<256x128xbf16, #tpu.memory_space<vmem>>, vector<256x128xbf16>
    %cst_12 = arith.constant dense<0.000000e+00> : vector<32x128xf32>
    %18 = tpu.matmul %15, %17, %cst_12 {dimension_numbers = #tpu.dot_dimension_numbers<[1], [0], [0], [1], [0, 0, 1, 1], [], []>} : vector<32x256xbf16>, vector<256x128xbf16>, vector<32x128xf32> -> vector<32x128xf32>
    %19 = arith.addf %16, %18 : vector<32x128xf32>
    %c0_13 = arith.constant 0 : index
    %c0_14 = arith.constant 0 : index
    %20 = vector.load %arg8[%c0_13, %c0_14] : memref<32x128xf32, #tpu.memory_space<vmem>>, vector<32x128xf32>
    tpu.vector_store %arg8[%c0_13, %c0_14], %19 {strides = array<i32>} : memref<32x128xf32, #tpu.memory_space<vmem>>, vector<32x128xf32>,
    %c1_i32 = arith.constant 1 : i32
    %21 = arith.cmpi eq, %arg1, %c1_i32 : i32
    %22 = arith.extui %21 : i1 to i32
    %c0_i32_15 = arith.constant 0 : i32
    %23 = arith.cmpi ne, %22, %c0_i32_15 : i32
    scf.if %23 {
      %c0_16 = arith.constant 0 : index
      %c0_17 = arith.constant 0 : index
      %24 = vector.load %arg2[%c0_16, %c0_17] : memref<32x128xf32, #tpu.memory_space<vmem>>, vector<32x128xf32>
      %c0_18 = arith.constant 0 : index
      %c0_19 = arith.constant 0 : index
      %25 = vector.load %arg8[%c0_18, %c0_19] : memref<32x128xf32, #tpu.memory_space<vmem>>, vector<32x128xf32>
      %26 = arith.addf %24, %25 : vector<32x128xf32>
      %c0_20 = arith.constant 0 : index
      %c0_21 = arith.constant 0 : index
      %27 = vector.load %arg7[%c0_20, %c0_21] : memref<32x128xf32, #tpu.memory_space<vmem>>, vector<32x128xf32>
      tpu.vector_store %arg7[%c0_20, %c0_21], %26 {strides = array<i32>} : memref<32x128xf32, #tpu.memory_space<vmem>>, vector<32x128xf32>,
    } else {
    }
    return
  }
  func.func @transform_0(%arg0: i32, %arg1: i32) -> (i32, i32) {
    %c0_i32 = arith.constant 0 : i32
    %c0_i32_0 = arith.constant 0 : i32
    return %arg0, %c0_i32 : i32, i32
  }
  func.func @transform_1(%arg0: i32, %arg1: i32) -> (i32, i32) {
    %c0_i32 = arith.constant 0 : i32
    %c0_i32_0 = arith.constant 0 : i32
    %c0_i32_1 = arith.constant 0 : i32
    return %c0_i32, %c0_i32_0 : i32, i32
  }
  func.func @transform_2(%arg0: i32, %arg1: i32) -> (i32, i32) {
    %c0_i32 = arith.constant 0 : i32
    %c0_i32_0 = arith.constant 0 : i32
    return %c0_i32, %arg1 : i32, i32
  }
  func.func @transform_3(%arg0: i32, %arg1: i32) -> (i32, i32) {
    %c0_i32 = arith.constant 0 : i32
    %c0_i32_0 = arith.constant 0 : i32
    return %c0_i32, %arg1 : i32, i32
  }
  func.func @transform_4(%arg0: i32, %arg1: i32) -> (i32, i32) {
    %c0_i32 = arith.constant 0 : i32
    %c0_i32_0 = arith.constant 0 : i32
    return %arg1, %c0_i32 : i32, i32
  }
  func.func @transform_5(%arg0: i32, %arg1: i32) -> (i32, i32) {
    %c0_i32 = arith.constant 0 : i32
    %c0_i32_0 = arith.constant 0 : i32
    return %arg0, %c0_i32 : i32, i32
  }
}

module attributes {stable_mosaic.version = 11 : i64} {
  func.func @_rms_matmul_kernel(%arg0: i32, %arg1: i32, %arg2: memref<32x128xf32, #tpu.memory_space<vmem>>, %arg3: memref<1x128xf32, #tpu.memory_space<vmem>>, %arg4: memref<128x256xbf16, #tpu.memory_space<vmem>>, %arg5: memref<32x256xf32, #tpu.memory_space<vmem>>) attributes {dimension_semantics = [#tpu.dimension_semantics<parallel>, #tpu.dimension_semantics<parallel>], iteration_bounds = array<i64: 1, 1>, scalar_prefetch = 0 : i64, scratch_operands = 0 : i64, tpu.core_type = #tpu.core_type<tc>, window_params = [{transform_indices = @transform_0, window_bounds = array<i64: 32, 128>}, {pipeline_mode = #tpu.pipeline_mode<synchronous>, transform_indices = @transform_1, window_bounds = array<i64: 1, 128>}, {transform_indices = @transform_2, window_bounds = array<i64: 128, 256>}, {transform_indices = @transform_3, window_bounds = array<i64: 32, 256>}]} {
    %c0 = arith.constant 0 : index
    %c0_0 = arith.constant 0 : index
    %0 = vector.load %arg2[%c0, %c0_0] : memref<32x128xf32, #tpu.memory_space<vmem>>, vector<32x128xf32>
    %1 = arith.mulf %0, %0 : vector<32x128xf32>
    %cst = arith.constant dense<0.000000e+00> : vector<32xf32>
    %2 = vector.multi_reduction <add>, %1, %cst [1] : vector<32x128xf32> to vector<32xf32>
    %3 = vector.shape_cast %2 : vector<32xf32> to vector<32x1xf32>
    %cst_1 = arith.constant 1.280000e+02 : f32
    %4 = vector.broadcast %cst_1 : f32 to vector<32x1xf32>
    %5 = arith.divf %3, %4 : vector<32x1xf32>
    %cst_2 = arith.constant 1.1920929E-7 : f32
    %6 = vector.broadcast %cst_2 : f32 to vector<32x1xf32>
    %7 = arith.addf %5, %6 : vector<32x1xf32>
    %8 = math.rsqrt %7 : vector<32x1xf32>
    %9 = vector.broadcast %8 : vector<32x1xf32> to vector<32x128xf32>
    %10 = arith.mulf %0, %9 : vector<32x128xf32>
    %c0_3 = arith.constant 0 : index
    %c0_4 = arith.constant 0 : index
    %11 = vector.load %arg3[%c0_3, %c0_4] : memref<1x128xf32, #tpu.memory_space<vmem>>, vector<1x128xf32>
    %12 = vector.broadcast %11 : vector<1x128xf32> to vector<32x128xf32>
    %13 = arith.mulf %10, %12 : vector<32x128xf32>
    %14 = arith.truncf %13 : vector<32x128xf32> to vector<32x128xbf16>
    %c0_5 = arith.constant 0 : index
    %c0_6 = arith.constant 0 : index
    %15 = vector.load %arg4[%c0_5, %c0_6] : memref<128x256xbf16, #tpu.memory_space<vmem>>, vector<128x256xbf16>
    %cst_7 = arith.constant dense<0.000000e+00> : vector<32x256xf32>
    %16 = tpu.matmul %14, %15, %cst_7 {dimension_numbers = #tpu.dot_dimension_numbers<[1], [0], [0], [1], [0, 0, 1, 1], [], []>} : vector<32x128xbf16>, vector<128x256xbf16>, vector<32x256xf32> -> vector<32x256xf32>
    %c0_8 = arith.constant 0 : index
    %c0_9 = arith.constant 0 : index
    %17 = vector.load %arg5[%c0_8, %c0_9] : memref<32x256xf32, #tpu.memory_space<vmem>>, vector<32x256xf32>
    tpu.vector_store %arg5[%c0_8, %c0_9], %16 {strides = array<i32>} : memref<32x256xf32, #tpu.memory_space<vmem>>, vector<32x256xf32>,
    return
  }
  func.func @transform_0(%arg0: i32, %arg1: i32) -> (i32, i32) {
    %c0_i32 = arith.constant 0 : i32
    %c0_i32_0 = arith.constant 0 : i32
    return %arg0, %c0_i32 : i32, i32
  }
  func.func @transform_1(%arg0: i32, %arg1: i32) -> (i32, i32) {
    %c0_i32 = arith.constant 0 : i32
    %c0_i32_0 = arith.constant 0 : i32
    %c0_i32_1 = arith.constant 0 : i32
    return %c0_i32, %c0_i32_0 : i32, i32
  }
  func.func @transform_2(%arg0: i32, %arg1: i32) -> (i32, i32) {
    %c0_i32 = arith.constant 0 : i32
    %c0_i32_0 = arith.constant 0 : i32
    return %c0_i32, %arg1 : i32, i32
  }
  func.func @transform_3(%arg0: i32, %arg1: i32) -> (i32, i32) {
    %c0_i32 = arith.constant 0 : i32
    return %arg0, %arg1 : i32, i32
  }
}

</mosaic_0001>

<llo_original>
// kernel: llama_forward.14
$region0: #{llama_forward.14}
  #allocation0 [shape = 'u32[]', space=smem, size = 0x4, offset = 0x4, fixed_abs, tag = 'smem constant byte address 0x4 - core index']
  #allocation1 [shape = 'u32[144,128]{1,0:T(1,128)}', space=vmem, size = 0x12000, scoped, tag = 'internal scratch']
  #allocation2 [shape = 'f32[32,128]{1,0:T(8,128)}', space=vmem, size = 0x4000, scoped, tag = 'scratch operand']
  %s0 = inlined_call_operand.vmem [shape: bf16[32,128], index: 0, kind: input, shape index: {}]
  %s1 = inlined_call_operand.vmem [shape: bf16[128,128], index: 1, kind: input, shape index: {}]
  %s2 = inlined_call_operand.vmem [shape: f32[32,128], index: 2, kind: input, shape index: {}]
  %s3 = inlined_call_operand.vmem [shape: f32[32,128], index: 3, kind: output, shape index: {}]
  %s4 = sld [smem:[#allocation0]]
  $region30: #{llama_forward.14} parent=0
    _
  %s6 = ssub.s32 1, %s4
  %s7 = scalar_select 0, %s6, %s4
  // Predicated region
  $region2: #{llama_forward.14} parent=0 // pred_check
    _
  $region3: #{llama_forward.14} parent=0 // pred_check_branch
    %9 = sbr.rel (0) target = $region5
  $region4: #{llama_forward.14} parent=0 // pred_region
    _
  $region5: #{llama_forward.14} parent=0 // pred_fallthru
    _
  // Predicated region
  $region6: #{llama_forward.14} parent=0 // pred_check
    _
  $region7: #{llama_forward.14} parent=0 // pred_check_branch
    %11 = sbr.rel (0) target = $region9
  $region8: #{llama_forward.14} parent=0 // pred_region
    _
  $region9: #{llama_forward.14} parent=0 // pred_fallthru
    _
  // Predicated region
  $region10: #{llama_forward.14} parent=0 // pred_check
    _
  $region11: #{llama_forward.14} parent=0 // pred_check_branch
    %13 = sbr.rel (0) target = $region13
  $region12: #{llama_forward.14} parent=0 // pred_region
    _
  $region13: #{llama_forward.14} parent=0 // pred_fallthru
    _
  %p15 = scmp.eq.s32.totalorder 0, 0
  // Predicated region
  $region14: #{llama_forward.14} parent=0 // pred_check
    %p16 = pneg %p15
  $region15: #{llama_forward.14} parent=0 // pred_check_branch
    %18 = sbr.rel (%p16) target = $region17
  $region16: #{llama_forward.14} parent=0 // pred_region
    %19 = vst [vmem:[#allocation2] sm:$0xff] 0.0
    %20 = vst [vmem:[#allocation2 + $0x8] sm:$0xff] 0.0
    %21 = vst [vmem:[#allocation2 + $0x10] sm:$0xff] 0.0
    %22 = vst [vmem:[#allocation2 + $0x18] sm:$0xff] 0.0
  $region17: #{llama_forward.14} parent=0 // pred_fallthru
    _
  %v23 = vld [vmem:[#allocation2] sm:$0xff]
  %v24 = vld [vmem:[#allocation2 + $0x8] sm:$0xff]
  %v25 = vld [vmem:[#allocation2 + $0x10] sm:$0xff]
  %v26 = vld [vmem:[#allocation2 + $0x18] sm:$0xff]
  %v27 = vld [vmem:[%s0] sm:$0xf]
  %v28 = vld [vmem:[%s0 + $0x4] sm:$0xf]
  %v29 = vld [vmem:[%s0 + $0x8] sm:$0xf]
  %v30 = vld [vmem:[%s0 + $0xc] sm:$0xf]
  %v31 = vld [vmem:[%s1] sm:$0xf]
  %v32 = vld [vmem:[%s1 + $0x4] sm:$0xf]
  %v33 = vld [vmem:[%s1 + $0x8] sm:$0xf]
  %v34 = vld [vmem:[%s1 + $0xc] sm:$0xf]
  %v35 = vld [vmem:[%s1 + $0x10] sm:$0xf]
  %v36 = vld [vmem:[%s1 + $0x14] sm:$0xf]
  %v37 = vld [vmem:[%s1 + $0x18] sm:$0xf]
  %v38 = vld [vmem:[%s1 + $0x1c] sm:$0xf]
  %v39 = vld [vmem:[%s1 + $0x20] sm:$0xf]
  %v40 = vld [vmem:[%s1 + $0x24] sm:$0xf]
  %v41 = vld [vmem:[%s1 + $0x28] sm:$0xf]
  %v42 = vld [vmem:[%s1 + $0x2c] sm:$0xf]
  %v43 = vld [vmem:[%s1 + $0x30] sm:$0xf]
  %v44 = vld [vmem:[%s1 + $0x34] sm:$0xf]
  %v45 = vld [vmem:[%s1 + $0x38] sm:$0xf]
  %v46 = vld [vmem:[%s1 + $0x3c] sm:$0xf]
  %v51 = vunpack.c.l.b16 %v27
  %v52 = vunpack.c.l.b16 %v28
  %v53 = vunpack.c.l.b16 %v29
  %v54 = vunpack.c.l.b16 %v30
  %v55 = vpack.c.b16 %v52, %v51
  %v56 = vpack.c.b16 %v54, %v53
  %v75 = vunpack.c.l.b16 %v31
  %v76 = vunpack.c.l.b16 %v32
  %v77 = vunpack.c.l.b16 %v33
  %v78 = vunpack.c.l.b16 %v34
  %v79 = vunpack.c.l.b16 %v35
  %v80 = vunpack.c.l.b16 %v36
  %v81 = vunpack.c.l.b16 %v37
  %v82 = vunpack.c.l.b16 %v38
  %v83 = vunpack.c.l.b16 %v39
  %v84 = vunpack.c.l.b16 %v40
  %v85 = vunpack.c.l.b16 %v41
  %v86 = vunpack.c.l.b16 %v42
  %v87 = vunpack.c.l.b16 %v43
  %v88 = vunpack.c.l.b16 %v44
  %v89 = vunpack.c.l.b16 %v45
  %v90 = vunpack.c.l.b16 %v46
  %v91 = vpack.c.b16 %v76, %v75
  %v92 = vpack.c.b16 %v78, %v77
  %v93 = vpack.c.b16 %v80, %v79
  %v94 = vpack.c.b16 %v82, %v81
  %v95 = vpack.c.b16 %v84, %v83
  %v96 = vpack.c.b16 %v86, %v85
  %v97 = vpack.c.b16 %v88, %v87
  %v98 = vpack.c.b16 %v90, %v89
  %107 = vmatprep.subr.bf16.mxu0 0
  %108 = vmatpush1.bf16.msra.mxu0 %v91
  %109 = vmatprep.subr.bf16.mxu0 0
  %110 = vmatpush1.bf16.msra.mxu0 %v92
  %111 = vmatprep.subr.bf16.mxu0 0
  %112 = vmatpush1.bf16.msra.mxu0 %v93
  %113 = vmatprep.subr.bf16.mxu0 0
  %114 = vmatpush1.bf16.msra.mxu0 %v94
  %115 = vmatprep.subr.bf16.mxu0 0
  %116 = vmatpush1.bf16.msra.mxu0 %v95
  %117 = vmatprep.subr.bf16.mxu0 0
  %118 = vmatpush1.bf16.msra.mxu0 %v96
  %119 = vmatprep.subr.bf16.mxu0 0
  %120 = vmatpush1.bf16.msra.mxu0 %v97
  %121 = vmatprep.subr.bf16.mxu0 0
  %122 = vmatpush1.bf16.msra.mxu0 %v98
  %123 = vmatprep.subr.bf16.mxu0 0
  %124 = vmatpush1.bf16.msra.mxu0 0
  %125 = vmatprep.subr.bf16.mxu0 0
  %126 = vmatpush1.bf16.msra.mxu0 0
  %127 = vmatprep.subr.bf16.mxu0 0
  %128 = vmatpush1.bf16.msra.mxu0 0
  %129 = vmatprep.subr.bf16.mxu0 0
  %130 = vmatpush1.bf16.msra.mxu0 0
  %131 = vmatprep.subr.bf16.mxu0 0
  %132 = vmatpush1.bf16.msra.mxu0 0
  %133 = vmatprep.subr.bf16.mxu0 0
  %134 = vmatpush1.bf16.msra.mxu0 0
  %135 = vmatprep.subr.bf16.mxu0 0
  %136 = vmatpush1.bf16.msra.mxu0 0
  %137 = vmatprep.subr.bf16.mxu0 0
  %138 = vmatpush1.bf16.msra.mxu0 0
  %139 = vmatprep.mubr.bf16.mxu0 0
  %140 = vmatmul.mubr.bf16.gmra.mrb[0].mxu0 %v55
  %v141 = vpop.f32.mrb[0].mxu0
  %v142 = vadd.f32 0.0, %v141
  %v143 = vpop.f32.mrb[0].mxu0
  %v144 = vpop.f32.mrb[0].mxu0
  %v145 = vadd.f32 0.0, %v144
  %v146 = vpop.f32.mrb[0].mxu0
  %147 = vmatprep.mubr.bf16.mxu0 0
  %148 = vmatmul.mubr.bf16.gmra.mrb[0].mxu0 %v56
  %v149 = vpop.f32.mrb[0].mxu0
  %v150 = vadd.f32 0.0, %v149
  %v151 = vpop.f32.mrb[0].mxu0
  %v152 = vpop.f32.mrb[0].mxu0
  %v153 = vadd.f32 0.0, %v152
  %v154 = vpop.f32.mrb[0].mxu0
  %155 = vdwg.mxu0
  %v156 = vadd.f32 %v23, %v142
  %v157 = vadd.f32 %v24, %v145
  %v158 = vadd.f32 %v25, %v150
  %v159 = vadd.f32 %v26, %v153
  %160 = vst [vmem:[#allocation2] sm:$0xff] %v156
  %161 = vst [vmem:[#allocation2 + $0x8] sm:$0xff] %v157
  %162 = vst [vmem:[#allocation2 + $0x10] sm:$0xff] %v158
  %163 = vst [vmem:[#allocation2 + $0x18] sm:$0xff] %v159
  // Predicated region
  $region18: #{llama_forward.14} parent=0 // pred_check
    %p164 = pneg %p15
  $region19: #{llama_forward.14} parent=0 // pred_check_branch
    %166 = sbr.rel (%p164) target = $region21
  $region20: #{llama_forward.14} parent=0 // pred_region
    %v167 = vld [vmem:[#allocation2] sm:$0xff]
    %v168 = vld [vmem:[#allocation2 + $0x8] sm:$0xff]
    %v169 = vld [vmem:[#allocation2 + $0x10] sm:$0xff]
    %v170 = vld [vmem:[#allocation2 + $0x18] sm:$0xff]
    %v171 = vld [vmem:[%s2] sm:$0xff]
    %v172 = vld [vmem:[%s2 + $0x8] sm:$0xff]
    %v173 = vld [vmem:[%s2 + $0x10] sm:$0xff]
    %v174 = vld [vmem:[%s2 + $0x18] sm:$0xff]
    %v175 = vadd.f32 %v167, %v171
    %v176 = vadd.f32 %v168, %v172
    %v177 = vadd.f32 %v169, %v173
    %v178 = vadd.f32 %v170, %v174
    %179 = vst [vmem:[%s3] sm:$0xff] %v175
    %180 = vst [vmem:[%s3 + $0x8] sm:$0xff] %v176
    %181 = vst [vmem:[%s3 + $0x10] sm:$0xff] %v177
    %182 = vst [vmem:[%s3 + $0x18] sm:$0xff] %v178
  $region21: #{llama_forward.14} parent=0 // pred_fallthru
    _
  // Predicated region
  $region22: #{llama_forward.14} parent=0 // pred_check
    _
  $region23: #{llama_forward.14} parent=0 // pred_check_branch
    %184 = sbr.rel (0) target = $region25
  $region24: #{llama_forward.14} parent=0 // pred_region
    _
  $region25: #{llama_forward.14} parent=0 // pred_fallthru
    _
  // Predicated region
  $region26: #{llama_forward.14} parent=0 // pred_check
    _
  $region27: #{llama_forward.14} parent=0 // pred_check_branch
    %186 = sbr.rel (0) target = $region29
  $region28: #{llama_forward.14} parent=0 // pred_region
    _
  $region29: #{llama_forward.14} parent=0 // pred_fallthru
    _

// kernel: llama_forward.11
$region0: #{llama_forward.11}
  #allocation0 [shape = 'u32[]', space=smem, size = 0x4, offset = 0x4, fixed_abs, tag = 'smem constant byte address 0x4 - core index']
  #allocation1 [shape = 'u32[144,128]{1,0:T(1,128)}', space=vmem, size = 0x12000, scoped, tag = 'internal scratch']
  #allocation2 [shape = 'bf16[32,128]{1,0:T(16,128)(2,1)}', space=vmem, size = 0x2000, scoped, tag = 'scratch operand']
  %s0 = inlined_call_operand.vmem [shape: f32[32,128], index: 0, kind: input, shape index: {}]
  %s1 = inlined_call_operand.vmem [shape: f32[1,128], index: 1, kind: input, shape index: {}]
  %s2 = inlined_call_operand.vmem [shape: bf16[128,384], index: 2, kind: input, shape index: {}]
  %s3 = inlined_call_operand.vmem [shape: f32[32,128], index: 3, kind: output, shape index: {0}]
  %s4 = inlined_call_operand.vmem [shape: bf16[32,384], index: 4, kind: output, shape index: {1}]
  %5 = xla_tuple %s3, %s4
  %s6 = sld [smem:[#allocation0]]
  $region34: #{llama_forward.11} parent=0
    _
  %s8 = ssub.s32 1, %s6
  %s9 = scalar_select 0, %s8, %s6
  // Predicated region
  $region2: #{llama_forward.11} parent=0 // pred_check
    _
  $region3: #{llama_forward.11} parent=0 // pred_check_branch
    %11 = sbr.rel (0) target = $region5
  $region4: #{llama_forward.11} parent=0 // pred_region
    _
  $region5: #{llama_forward.11} parent=0 // pred_fallthru
    _
  // Predicated region
  $region6: #{llama_forward.11} parent=0 // pred_check
    _
  $region7: #{llama_forward.11} parent=0 // pred_check_branch
    %13 = sbr.rel (0) target = $region9
  $region8: #{llama_forward.11} parent=0 // pred_region
    _
  $region9: #{llama_forward.11} parent=0 // pred_fallthru
    _
  // Predicated region
  $region10: #{llama_forward.11} parent=0 // pred_check
    _
  $region11: #{llama_forward.11} parent=0 // pred_check_branch
    %15 = sbr.rel (0) target = $region13
  $region12: #{llama_forward.11} parent=0 // pred_region
    _
  $region13: #{llama_forward.11} parent=0 // pred_fallthru
    _
  %p17 = scmp.eq.s32.totalorder 0, 0
  // Predicated region
  $region14: #{llama_forward.11} parent=0 // pred_check
    %p18 = pneg %p17
  $region15: #{llama_forward.11} parent=0 // pred_check_branch
    %20 = sbr.rel (%p18) target = $region17
  $region16: #{llama_forward.11} parent=0 // pred_region
    %v21 = vld [vmem:[%s0] sm:$0xff]
    %v22 = vld [vmem:[%s0 + $0x8] sm:$0xff]
    %v23 = vld [vmem:[%s0 + $0x10] sm:$0xff]
    %v24 = vld [vmem:[%s0 + $0x18] sm:$0xff]
    %v25 = vmul.f32 %v21, %v21
    %v26 = vmul.f32 %v22, %v22
    %v27 = vmul.f32 %v23, %v23
    %v28 = vmul.f32 %v24, %v24
    %29 = vadd.xlane.f32.xlu0 %v25
    %v30 = vpop.xlane.xlu0 %29
    %31 = vadd.xlane.f32.xlu0 %v26
    %v32 = vpop.xlane.xlu0 %31
    %33 = vadd.xlane.f32.xlu0 %v27
    %v34 = vpop.xlane.xlu0 %33
    %35 = vadd.xlane.f32.xlu0 %v28
    %v36 = vpop.xlane.xlu0 %35
    %v37 = vrcp.pop 128.0
    %v38 = vmul.f32 %v30, %v37
    %v39 = vmul.f32 %v32, %v37
    %v40 = vmul.f32 %v34, %v37
    %v41 = vmul.f32 %v36, %v37
    %v42 = vadd.f32 %v38, 1.1920929e-07
    %v43 = vadd.f32 %v39, 1.1920929e-07
    %v44 = vadd.f32 %v40, 1.1920929e-07
    %v45 = vadd.f32 %v41, 1.1920929e-07
    %v46 = vrsqrt.pop %v42
    %v47 = vrsqrt.pop %v43
    %v48 = vrsqrt.pop %v44
    %v49 = vrsqrt.pop %v45
    %v50 = vmul.f32 %v21, %v46
    %v51 = vmul.f32 %v22, %v47
    %v52 = vmul.f32 %v23, %v48
    %v53 = vmul.f32 %v24, %v49
    %v54 = vld [vmem:[%s1] sm:$0x1]
    %v56 = vlaneseq
    %v57 = vshrl.u32 %v56, 7
    %v58 = vsub.s32 0, %v57
    %v59 = vrot.slane %v54, %v58
    %v61 = vmul.f32 %v50, %v59
    %v62 = vmul.f32 %v51, %v59
    %v63 = vmul.f32 %v52, %v59
    %v64 = vmul.f32 %v53, %v59
    %65 = vst [vmem:[%s3] sm:$0xff] %v61
    %66 = vst [vmem:[%s3 + $0x8] sm:$0xff] %v62
    %67 = vst [vmem:[%s3 + $0x10] sm:$0xff] %v63
    %68 = vst [vmem:[%s3 + $0x18] sm:$0xff] %v64
    %v69 = vpack.c.bf16 %v62, %v61
    %v70 = vpack.c.bf16 %v64, %v63
    %71 = vst [vmem:[#allocation2] sm:$0xff] %v69
    %72 = vst [vmem:[#allocation2 + $0x8] sm:$0xff] %v70
  $region17: #{llama_forward.11} parent=0 // pred_fallthru
    _
  %v73 = vld [vmem:[#allocation2] sm:$0xff]
  %v74 = vld [vmem:[#allocation2 + $0x8] sm:$0xff]
  %v75 = vld [vmem:[%s2] sm:$0xff]
  %v76 = vld [vmem:[%s2 + $0x8] sm:$0xf]
  %v77 = vld [vmem:[%s2 + $0xc] sm:$0xff]
  %v78 = vld [vmem:[%s2 + $0x14] sm:$0xf]
  %v79 = vld [vmem:[%s2 + $0x18] sm:$0xff]
  %v80 = vld [vmem:[%s2 + $0x20] sm:$0xf]
  %v81 = vld [vmem:[%s2 + $0x24] sm:$0xff]
  %v82 = vld [vmem:[%s2 + $0x2c] sm:$0xf]
  %v83 = vld [vmem:[%s2 + $0x30] sm:$0xff]
  %v84 = vld [vmem:[%s2 + $0x38] sm:$0xf]
  %v85 = vld [vmem:[%s2 + $0x3c] sm:$0xff]
  %v86 = vld [vmem:[%s2 + $0x44] sm:$0xf]
  %v87 = vld [vmem:[%s2 + $0x48] sm:$0xff]
  %v88 = vld [vmem:[%s2 + $0x50] sm:$0xf]
  %v89 = vld [vmem:[%s2 + $0x54] sm:$0xff]
  %v90 = vld [vmem:[%s2 + $0x5c] sm:$0xf]
  %v91 = vld [vmem:[%s2 + $0x60] sm:$0xff]
  %v92 = vld [vmem:[%s2 + $0x68] sm:$0xf]
  %v93 = vld [vmem:[%s2 + $0x6c] sm:$0xff]
  %v94 = vld [vmem:[%s2 + $0x74] sm:$0xf]
  %v95 = vld [vmem:[%s2 + $0x78] sm:$0xff]
  %v96 = vld [vmem:[%s2 + $0x80] sm:$0xf]
  %v97 = vld [vmem:[%s2 + $0x84] sm:$0xff]
  %v98 = vld [vmem:[%s2 + $0x8c] sm:$0xf]
  %v99 = vld [vmem:[%s2 + $0x90] sm:$0xff]
  %v100 = vld [vmem:[%s2 + $0x98] sm:$0xf]
  %v101 = vld [vmem:[%s2 + $0x9c] sm:$0xff]
  %v102 = vld [vmem:[%s2 + $0xa4] sm:$0xf]
  %v103 = vld [vmem:[%s2 + $0xa8] sm:$0xff]
  %v104 = vld [vmem:[%s2 + $0xb0] sm:$0xf]
  %v105 = vld [vmem:[%s2 + $0xb4] sm:$0xff]
  %v106 = vld [vmem:[%s2 + $0xbc] sm:$0xf]
  %v139 = vunpack.c.l.b16 %v75
  %v140 = vunpack.c.h.b16 %v75
  %v141 = vunpack.c.l.b16 %v76
  %v142 = vunpack.c.l.b16 %v77
  %v143 = vunpack.c.h.b16 %v77
  %v144 = vunpack.c.l.b16 %v78
  %v145 = vunpack.c.l.b16 %v79
  %v146 = vunpack.c.h.b16 %v79
  %v147 = vunpack.c.l.b16 %v80
  %v148 = vunpack.c.l.b16 %v81
  %v149 = vunpack.c.h.b16 %v81
  %v150 = vunpack.c.l.b16 %v82
  %v151 = vunpack.c.l.b16 %v83
  %v152 = vunpack.c.h.b16 %v83
  %v153 = vunpack.c.l.b16 %v84
  %v154 = vunpack.c.l.b16 %v85
  %v155 = vunpack.c.h.b16 %v85
  %v156 = vunpack.c.l.b16 %v86
  %v157 = vunpack.c.l.b16 %v87
  %v158 = vunpack.c.h.b16 %v87
  %v159 = vunpack.c.l.b16 %v88
  %v160 = vunpack.c.l.b16 %v89
  %v161 = vunpack.c.h.b16 %v89
  %v162 = vunpack.c.l.b16 %v90
  %v163 = vunpack.c.l.b16 %v91
  %v164 = vunpack.c.h.b16 %v91
  %v165 = vunpack.c.l.b16 %v92
  %v166 = vunpack.c.l.b16 %v93
  %v167 = vunpack.c.h.b16 %v93
  %v168 = vunpack.c.l.b16 %v94
  %v169 = vunpack.c.l.b16 %v95
  %v170 = vunpack.c.h.b16 %v95
  %v171 = vunpack.c.l.b16 %v96
  %v172 = vunpack.c.l.b16 %v97
  %v173 = vunpack.c.h.b16 %v97
  %v174 = vunpack.c.l.b16 %v98
  %v175 = vunpack.c.l.b16 %v99
  %v176 = vunpack.c.h.b16 %v99
  %v177 = vunpack.c.l.b16 %v100
  %v178 = vunpack.c.l.b16 %v101
  %v179 = vunpack.c.h.b16 %v101
  %v180 = vunpack.c.l.b16 %v102
  %v181 = vunpack.c.l.b16 %v103
  %v182 = vunpack.c.h.b16 %v103
  %v183 = vunpack.c.l.b16 %v104
  %v184 = vunpack.c.l.b16 %v105
  %v185 = vunpack.c.h.b16 %v105
  %v186 = vunpack.c.l.b16 %v106
  %v187 = vpack.c.b16 %v142, %v139
  %v188 = vpack.c.b16 %v143, %v140
  %v189 = vpack.c.b16 %v144, %v141
  %v190 = vpack.c.b16 %v148, %v145
  %v191 = vpack.c.b16 %v149, %v146
  %v192 = vpack.c.b16 %v150, %v147
  %v193 = vpack.c.b16 %v154, %v151
  %v194 = vpack.c.b16 %v155, %v152
  %v195 = vpack.c.b16 %v156, %v153
  %v196 = vpack.c.b16 %v160, %v157
  %v197 = vpack.c.b16 %v161, %v158
  %v198 = vpack.c.b16 %v162, %v159
  %v199 = vpack.c.b16 %v166, %v163
  %v200 = vpack.c.b16 %v167, %v164
  %v201 = vpack.c.b16 %v168, %v165
  %v202 = vpack.c.b16 %v172, %v169
  %v203 = vpack.c.b16 %v173, %v170
  %v204 = vpack.c.b16 %v174, %v171
  %v205 = vpack.c.b16 %v178, %v175
  %v206 = vpack.c.b16 %v179, %v176
  %v207 = vpack.c.b16 %v180, %v177
  %v208 = vpack.c.b16 %v184, %v181
  %v209 = vpack.c.b16 %v185, %v182
  %v210 = vpack.c.b16 %v186, %v183
  %235 = vmatprep.subr.bf16.mxu0 %v188
  %236 = vmatpush1.bf16.msra.mxu0 %v187
  %237 = vmatprep.subr.bf16.mxu0 %v191
  %238 = vmatpush1.bf16.msra.mxu0 %v190
  %239 = vmatprep.subr.bf16.mxu0 %v194
  %240 = vmatpush1.bf16.msra.mxu0 %v193
  %241 = vmatprep.subr.bf16.mxu0 %v197
  %242 = vmatpush1.bf16.msra.mxu0 %v196
  %243 = vmatprep.subr.bf16.mxu0 %v200
  %244 = vmatpush1.bf16.msra.mxu0 %v199
  %245 = vmatprep.subr.bf16.mxu0 %v203
  %246 = vmatpush1.bf16.msra.mxu0 %v202
  %247 = vmatprep.subr.bf16.mxu0 %v206
  %248 = vmatpush1.bf16.msra.mxu0 %v205
  %249 = vmatprep.subr.bf16.mxu0 %v209
  %250 = vmatpush1.bf16.msra.mxu0 %v208
  %251 = vmatprep.subr.bf16.mxu0 0
  %252 = vmatpush1.bf16.msra.mxu0 0
  %253 = vmatprep.subr.bf16.mxu0 0
  %254 = vmatpush1.bf16.msra.mxu0 0
  %255 = vmatprep.subr.bf16.mxu0 0
  %256 = vmatpush1.bf16.msra.mxu0 0
  %257 = vmatprep.subr.bf16.mxu0 0
  %258 = vmatpush1.bf16.msra.mxu0 0
  %259 = vmatprep.subr.bf16.mxu0 0
  %260 = vmatpush1.bf16.msra.mxu0 0
  %261 = vmatprep.subr.bf16.mxu0 0
  %262 = vmatpush1.bf16.msra.mxu0 0
  %263 = vmatprep.subr.bf16.mxu0 0
  %264 = vmatpush1.bf16.msra.mxu0 0
  %265 = vmatprep.subr.bf16.mxu0 0
  %266 = vmatpush1.bf16.msra.mxu0 0
  %267 = vmatprep.mubr.bf16.mxu0 0
  %268 = vmatmul.mubr.bf16.gmra.mrb[0].mxu0 %v73
  %v269 = vpop.f32.mrb[0].mxu0
  %v270 = vadd.f32 0.0, %v269
  %v271 = vpop.f32.mrb[0].mxu0
  %v272 = vadd.f32 0.0, %v271
  %v273 = vpop.f32.mrb[0].mxu0
  %v274 = vadd.f32 0.0, %v273
  %v275 = vpop.f32.mrb[0].mxu0
  %v276 = vadd.f32 0.0, %v275
  %277 = vmatprep.mubr.bf16.mxu0 0
  %278 = vmatmul.mubr.bf16.gmra.mrb[0].mxu0 %v74
  %v279 = vpop.f32.mrb[0].mxu0
  %v280 = vadd.f32 0.0, %v279
  %v281 = vpop.f32.mrb[0].mxu0
  %v282 = vadd.f32 0.0, %v281
  %v283 = vpop.f32.mrb[0].mxu0
  %v284 = vadd.f32 0.0, %v283
  %v285 = vpop.f32.mrb[0].mxu0
  %v286 = vadd.f32 0.0, %v285
  %287 = vdwg.mxu0
  %288 = vmatprep.subr.bf16.mxu0 0
  %289 = vmatpush1.bf16.msra.mxu0 %v189
  %290 = vmatprep.subr.bf16.mxu0 0
  %291 = vmatpush1.bf16.msra.mxu0 %v192
  %292 = vmatprep.subr.bf16.mxu0 0
  %293 = vmatpush1.bf16.msra.mxu0 %v195
  %294 = vmatprep.subr.bf16.mxu0 0
  %295 = vmatpush1.bf16.msra.mxu0 %v198
  %296 = vmatprep.subr.bf16.mxu0 0
  %297 = vmatpush1.bf16.msra.mxu0 %v201
  %298 = vmatprep.subr.bf16.mxu0 0
  %299 = vmatpush1.bf16.msra.mxu0 %v204
  %300 = vmatprep.subr.bf16.mxu0 0
  %301 = vmatpush1.bf16.msra.mxu0 %v207
  %302 = vmatprep.subr.bf16.mxu0 0
  %303 = vmatpush1.bf16.msra.mxu0 %v210
  %304 = vmatprep.subr.bf16.mxu0 0
  %305 = vmatpush1.bf16.msra.mxu0 0
  %306 = vmatprep.subr.bf16.mxu0 0
  %307 = vmatpush1.bf16.msra.mxu0 0
  %308 = vmatprep.subr.bf16.mxu0 0
  %309 = vmatpush1.bf16.msra.mxu0 0
  %310 = vmatprep.subr.bf16.mxu0 0
  %311 = vmatpush1.bf16.msra.mxu0 0
  %312 = vmatprep.subr.bf16.mxu0 0
  %313 = vmatpush1.bf16.msra.mxu0 0
  %314 = vmatprep.subr.bf16.mxu0 0
  %315 = vmatpush1.bf16.msra.mxu0 0
  %316 = vmatprep.subr.bf16.mxu0 0
  %317 = vmatpush1.bf16.msra.mxu0 0
  %318 = vmatprep.subr.bf16.mxu0 0
  %319 = vmatpush1.bf16.msra.mxu0 0
  %320 = vmatprep.mubr.bf16.mxu0 0
  %321 = vmatmul.mubr.bf16.gmra.mrb[0].mxu0 %v73
  %v322 = vpop.f32.mrb[0].mxu0
  %v323 = vadd.f32 0.0, %v322
  %v324 = vpop.f32.mrb[0].mxu0
  %v325 = vpop.f32.mrb[0].mxu0
  %v326 = vadd.f32 0.0, %v325
  %v327 = vpop.f32.mrb[0].mxu0
  %328 = vmatprep.mubr.bf16.mxu0 0
  %329 = vmatmul.mubr.bf16.gmra.mrb[0].mxu0 %v74
  %v330 = vpop.f32.mrb[0].mxu0
  %v331 = vadd.f32 0.0, %v330
  %v332 = vpop.f32.mrb[0].mxu0
  %v333 = vpop.f32.mrb[0].mxu0
  %v334 = vadd.f32 0.0, %v333
  %v335 = vpop.f32.mrb[0].mxu0
  %336 = vdwg.mxu0
  %v337 = vpack.c.bf16 %v274, %v270
  %v338 = vpack.c.bf16 %v276, %v272
  %v339 = vpack.c.bf16 %v326, %v323
  %v340 = vpack.c.bf16 %v284, %v280
  %v341 = vpack.c.bf16 %v286, %v282
  %v342 = vpack.c.bf16 %v334, %v331
  %v349 = vunpack.c.l.b16 %v337
  %v350 = vunpack.c.l.b16 %v338
  %v351 = vunpack.c.l.b16 %v339
  %v352 = vunpack.c.h.b16 %v337
  %v353 = vunpack.c.h.b16 %v338
  %v354 = vunpack.c.h.b16 %v339
  %v355 = vunpack.c.l.b16 %v340
  %v356 = vunpack.c.l.b16 %v341
  %v357 = vunpack.c.l.b16 %v342
  %v358 = vunpack.c.h.b16 %v340
  %v359 = vunpack.c.h.b16 %v341
  %v360 = vunpack.c.h.b16 %v342
  %v361 = vpack.c.b16 %v350, %v349
  %v362 = vpack.c.b16 %v351, %v351
  %v363 = vpack.c.b16 %v353, %v352
  %v364 = vpack.c.b16 %v354, %v354
  %v365 = vpack.c.b16 %v356, %v355
  %v366 = vpack.c.b16 %v357, %v357
  %v367 = vpack.c.b16 %v359, %v358
  %v368 = vpack.c.b16 %v360, %v360
  %377 = vst [vmem:[%s4] sm:$0xff] %v361
  %378 = vst [vmem:[%s4 + $0x8] sm:$0xf] %v362
  %379 = vst [vmem:[%s4 + $0xc] sm:$0xff] %v363
  %380 = vst [vmem:[%s4 + $0x14] sm:$0xf] %v364
  %381 = vst [vmem:[%s4 + $0x18] sm:$0xff] %v365
  %382 = vst [vmem:[%s4 + $0x20] sm:$0xf] %v366
  %383 = vst [vmem:[%s4 + $0x24] sm:$0xff] %v367
  %384 = vst [vmem:[%s4 + $0x2c] sm:$0xf] %v368
  // Predicated region
  $region18: #{llama_forward.11} parent=0 // pred_check
    _
  $region19: #{llama_forward.11} parent=0 // pred_check_branch
    %386 = sbr.rel (0) target = $region21
  $region20: #{llama_forward.11} parent=0 // pred_region
    _
  $region21: #{llama_forward.11} parent=0 // pred_fallthru
    _
  // Predicated region
  $region22: #{llama_forward.11} parent=0 // pred_check
    _
  $region23: #{llama_forward.11} parent=0 // pred_check_branch
    %388 = sbr.rel (0) target = $region25
  $region24: #{llama_forward.11} parent=0 // pred_region
    _
  $region25: #{llama_forward.11} parent=0 // pred_fallthru
    _
  // Predicated region
  $region26: #{llama_forward.11} parent=0 // pred_check
    _
  $region27: #{llama_forward.11} parent=0 // pred_check_branch
    %390 = sbr.rel (0) target = $region29
  $region28: #{llama_forward.11} parent=0 // pred_region
    _
  $region29: #{llama_forward.11} parent=0 // pred_fallthru
    _
  // Predicated region
  $region30: #{llama_forward.11} parent=0 // pred_check
    _
  $region31: #{llama_forward.11} parent=0 // pred_check_branch
    %392 = sbr.rel (0) target = $region33
  $region32: #{llama_forward.11} parent=0 // pred_region
    _
  $region33: #{llama_forward.11} parent=0 // pred_fallthru
    _

// kernel: llama_forward.12
$region0: #{llama_forward.12}
  #allocation0 [shape = 'u32[]', space=smem, size = 0x4, offset = 0x4, fixed_abs, tag = 'smem constant byte address 0x4 - core index']
  #allocation1 [shape = 'u32[144,128]{1,0:T(1,128)}', space=vmem, size = 0x12000, scoped, tag = 'internal scratch']
  %s0 = inlined_call_operand.vmem [shape: bf16[2,16,384], index: 0, kind: input, shape index: {}]
  %s1 = inlined_call_operand.vmem [shape: f32[16,32], index: 1, kind: input, shape index: {}]
  %s2 = inlined_call_operand.vmem [shape: f32[16,32], index: 2, kind: input, shape index: {}]
  %s3 = inlined_call_operand.vmem [shape: f32[16,32], index: 3, kind: input, shape index: {}]
  %s4 = inlined_call_operand.vmem [shape: f32[16,32], index: 4, kind: input, shape index: {}]
  %s5 = inlined_call_operand.vmem [shape: bf16[2,16,384], index: 5, kind: output, shape index: {}]
  %s6 = sld [smem:[#allocation0]]
  $region53: #{llama_forward.12} parent=0
    _
  %s8 = ssub.s32 1, %s6
  %s9 = scalar_select 0, %s8, %s6
  loop: start=0, step=1, limit=4
  $region2: #{llama_forward.12} parent=0 // loop_pre_header
    _
  $region3: #{llama_forward.12} parent=0 // loop_header
    %s11 = sphi 0, %s15
    %p12 = scmp.ge.s32.totalorder %s11, 4
    %s18 = sphi 0, %s30
    %s19 = sphi 0, %s26
    %s20 = sphi 0, %s18
    %s21 = sphi 0, %s19
    %s22 = sphi 0, %s20
    %s23 = sphi 0, %s21
    %s35 = sphi 0, %s37
    %s38 = sphi 0, %s35
    %s39 = sphi 0, %s38
    %s55 = sphi 0, %s39
    %s61 = sphi 0, %s63
    %s64 = sphi 0, %s61
    %s65 = sphi 0, %s64
    %s81 = sphi 0, %s65
    %s87 = sphi 0, %s89
    %s90 = sphi 0, %s87
    %s91 = sphi 0, %s90
    %s107 = sphi 0, %s91
    %s113 = sphi 0, %s115
    %s116 = sphi 0, %s113
    %s117 = sphi 0, %s116
    %s133 = sphi 0, %s117
    %s139 = sphi 0, %s141
    %s142 = sphi 0, %s139
    %s143 = sphi 0, %s142
    %s159 = sphi 0, %s143
    %s167 = sphi 0, %s169
    %s170 = sphi 0, %s167
    %s171 = sphi 0, %s170
    %s187 = sphi 0, %s171
  $region4: #{llama_forward.12} parent=0 // loop_header_branch
    %14 = sbr.rel (%p12) target = $region8
  $region5: #{llama_forward.12} parent=0 // loop_body
    %s16 = ssub.s32 %s11, 1
    %s17 = ssub.s32 %s11, 2
    %s24 = sadd.s32 1, %s19
    %p25 = scmp.ge.s32.totalorder %s24, 1
    %s26 = scalar_select %p25, 0, %s24
    %s27 = sadd.s32 1, %s18
    %s28 = scalar_select %p25, %s27, %s18
    %p29 = scmp.ge.s32.totalorder %s28, 2
    %s30 = scalar_select %p29, 0, %s28
    %s31 = ssub.s32 %s18, %s30
    %s32 = ssub.s32 %s19, %s26
    %s33 = sor.u32 %s31, %s32
    %p34 = scmp.eq.s32.totalorder %s33, 0
    %s36 = sadd.s32 %s35, 1
    %s37 = scalar_select %p34, %s35, %s36
    %p40 = pneg %p34
    %p41 = scmp.eq.s32.totalorder %s11, 1
    %p42 = por %p40, %p41
    %p43 = scmp.ne.s32.totalorder %s35, %s38
    %p44 = scmp.eq.s32.totalorder %s11, 0
    %p45 = por %p43, %p44
    %p46 = scmp.ne.s32.totalorder %s35, %s38
    %p47 = scmp.eq.s32.totalorder %s16, 1
    %p48 = por %p46, %p47
    %p49 = scmp.ne.s32.totalorder %s38, %s39
    %p50 = scmp.eq.s32.totalorder %s16, 0
    %p51 = por %p49, %p50
    %p52 = scmp.ne.s32.totalorder %s38, %s39
    %p53 = scmp.eq.s32.totalorder %s17, 1
    %p54 = por %p52, %p53
    %p56 = scmp.ne.s32.totalorder %s39, %s55
    %p57 = scmp.eq.s32.totalorder %s17, 0
    %p58 = por %p56, %p57
    %s59 = ssub.s32 %s19, %s26
    %p60 = scmp.eq.s32.totalorder %s59, 0
    %s62 = sadd.s32 %s61, 1
    %s63 = scalar_select %p60, %s61, %s62
    %p66 = pneg %p60
    %p67 = scmp.eq.s32.totalorder %s11, 1
    %p68 = por %p66, %p67
    %p69 = scmp.ne.s32.totalorder %s61, %s64
    %p70 = scmp.eq.s32.totalorder %s11, 0
    %p71 = por %p69, %p70
    %p72 = scmp.ne.s32.totalorder %s61, %s64
    %p73 = scmp.eq.s32.totalorder %s16, 1
    %p74 = por %p72, %p73
    %p75 = scmp.ne.s32.totalorder %s64, %s65
    %p76 = scmp.eq.s32.totalorder %s16, 0
    %p77 = por %p75, %p76
    %p78 = scmp.ne.s32.totalorder %s64, %s65
    %p79 = scmp.eq.s32.totalorder %s17, 1
    %p80 = por %p78, %p79
    %p82 = scmp.ne.s32.totalorder %s65, %s81
    %p83 = scmp.eq.s32.totalorder %s17, 0
    %p84 = por %p82, %p83
    %s85 = ssub.s32 %s19, %s26
    %p86 = scmp.eq.s32.totalorder %s85, 0
    %s88 = sadd.s32 %s87, 1
    %s89 = scalar_select %p86, %s87, %s88
    %p92 = pneg %p86
    %p93 = scmp.eq.s32.totalorder %s11, 1
    %p94 = por %p92, %p93
    %p95 = scmp.ne.s32.totalorder %s87, %s90
    %p96 = scmp.eq.s32.totalorder %s11, 0
    %p97 = por %p95, %p96
    %p98 = scmp.ne.s32.totalorder %s87, %s90
    %p99 = scmp.eq.s32.totalorder %s16, 1
    %p100 = por %p98, %p99
    %p101 = scmp.ne.s32.totalorder %s90, %s91
    %p102 = scmp.eq.s32.totalorder %s16, 0
    %p103 = por %p101, %p102
    %p104 = scmp.ne.s32.totalorder %s90, %s91
    %p105 = scmp.eq.s32.totalorder %s17, 1
    %p106 = por %p104, %p105
    %p108 = scmp.ne.s32.totalorder %s91, %s107
    %p109 = scmp.eq.s32.totalorder %s17, 0
    %p110 = por %p108, %p109
    %s111 = ssub.s32 %s19, %s26
    %p112 = scmp.eq.s32.totalorder %s111, 0
    %s114 = sadd.s32 %s113, 1
    %s115 = scalar_select %p112, %s113, %s114
    %p118 = pneg %p112
    %p119 = scmp.eq.s32.totalorder %s11, 1
    %p120 = por %p118, %p119
    %p121 = scmp.ne.s32.totalorder %s113, %s116
    %p122 = scmp.eq.s32.totalorder %s11, 0
    %p123 = por %p121, %p122
    %p124 = scmp.ne.s32.totalorder %s113, %s116
    %p125 = scmp.eq.s32.totalorder %s16, 1
    %p126 = por %p124, %p125
    %p127 = scmp.ne.s32.totalorder %s116, %s117
    %p128 = scmp.eq.s32.totalorder %s16, 0
    %p129 = por %p127, %p128
    %p130 = scmp.ne.s32.totalorder %s116, %s117
    %p131 = scmp.eq.s32.totalorder %s17, 1
    %p132 = por %p130, %p131
    %p134 = scmp.ne.s32.totalorder %s117, %s133
    %p135 = scmp.eq.s32.totalorder %s17, 0
    %p136 = por %p134, %p135
    %s137 = ssub.s32 %s19, %s26
    %p138 = scmp.eq.s32.totalorder %s137, 0
    %s140 = sadd.s32 %s139, 1
    %s141 = scalar_select %p138, %s139, %s140
    %p144 = pneg %p138
    %p145 = scmp.eq.s32.totalorder %s11, 1
    %p146 = por %p144, %p145
    %p147 = scmp.ne.s32.totalorder %s139, %s142
    %p148 = scmp.eq.s32.totalorder %s11, 0
    %p149 = por %p147, %p148
    %p150 = scmp.ne.s32.totalorder %s139, %s142
    %p151 = scmp.eq.s32.totalorder %s16, 1
    %p152 = por %p150, %p151
    %p153 = scmp.ne.s32.totalorder %s142, %s143
    %p154 = scmp.eq.s32.totalorder %s16, 0
    %p155 = por %p153, %p154
    %p156 = scmp.ne.s32.totalorder %s142, %s143
    %p157 = scmp.eq.s32.totalorder %s17, 1
    %p158 = por %p156, %p157
    %p160 = scmp.ne.s32.totalorder %s143, %s159
    %p161 = scmp.eq.s32.totalorder %s17, 0
    %p162 = por %p160, %p161
    %s163 = ssub.s32 %s18, %s30
    %s164 = ssub.s32 %s19, %s26
    %s165 = sor.u32 %s163, %s164
    %p166 = scmp.eq.s32.totalorder %s165, 0
    %s168 = sadd.s32 %s167, 1
    %s169 = scalar_select %p166, %s167, %s168
    %p172 = pneg %p166
    %p173 = scmp.eq.s32.totalorder %s11, 1
    %p174 = por %p172, %p173
    %p175 = scmp.ne.s32.totalorder %s167, %s170
    %p176 = scmp.eq.s32.totalorder %s11, 0
    %p177 = por %p175, %p176
    %p178 = scmp.ne.s32.totalorder %s167, %s170
    %p179 = scmp.eq.s32.totalorder %s16, 1
    %p180 = por %p178, %p179
    %p181 = scmp.ne.s32.totalorder %s170, %s171
    %p182 = scmp.eq.s32.totalorder %s16, 0
    %p183 = por %p181, %p182
    %p184 = scmp.ne.s32.totalorder %s170, %s171
    %p185 = scmp.eq.s32.totalorder %s17, 1
    %p186 = por %p184, %p185
    %p188 = scmp.ne.s32.totalorder %s171, %s187
    %p189 = scmp.eq.s32.totalorder %s17, 0
    %p190 = por %p188, %p189
    %p191 = scmp.le.s32.totalorder 1, %s11
    %p192 = scmp.lt.s32.totalorder %s11, 3
    %p193 = pnand %p191, %p192
    %p194 = pneg %p193
    // Predicated region
    $region9: #{llama_forward.12} parent=5 // pred_check
      _
    $region10: #{llama_forward.12} parent=5 // pred_check_branch
      %196 = sbr.rel (%p193) target = $region12
    $region11: #{llama_forward.12} parent=5 // pred_region
      %s197 = ssub.s32 %s11, 1
      // Predicated region
      $region13: #{llama_forward.12} parent=11 // pred_check
        %p198 = pneg %p77
      $region14: #{llama_forward.12} parent=11 // pred_check_branch
        %200 = sbr.rel (%p198) target = $region16
      $region15: #{llama_forward.12} parent=11 // pred_region
        %s201 = smul.u32 2, %s21
        %p202 = scmp.lt.s32.totalorder %s201, 1
        %s203 = scalar_select %p202, %s201, 1
        %s204 = smul.addr %s203, 8
        %s205 = scalar_lea.vmem %s1, %s204
        %s206 = smul.u32 2, %s21
      $region16: #{llama_forward.12} parent=11 // pred_fallthru
        _
      // Predicated region
      $region17: #{llama_forward.12} parent=11 // pred_check
        %p207 = pneg %p103
      $region18: #{llama_forward.12} parent=11 // pred_check_branch
        %209 = sbr.rel (%p207) target = $region20
      $region19: #{llama_forward.12} parent=11 // pred_region
        %s210 = smul.u32 2, %s21
        %p211 = scmp.lt.s32.totalorder %s210, 1
        %s212 = scalar_select %p211, %s210, 1
        %s213 = smul.addr %s212, 8
        %s214 = scalar_lea.vmem %s2, %s213
        %s215 = smul.u32 2, %s21
      $region20: #{llama_forward.12} parent=11 // pred_fallthru
        _
      // Predicated region
      $region21: #{llama_forward.12} parent=11 // pred_check
        %p216 = pneg %p129
      $region22: #{llama_forward.12} parent=11 // pred_check_branch
        %218 = sbr.rel (%p216) target = $region24
      $region23: #{llama_forward.12} parent=11 // pred_region
        %s219 = smul.u32 2, %s21
        %p220 = scmp.lt.s32.totalorder %s219, 1
        %s221 = scalar_select %p220, %s219, 1
        %s222 = smul.addr %s221, 8
        %s223 = scalar_lea.vmem %s3, %s222
        %s224 = smul.u32 2, %s21
      $region24: #{llama_forward.12} parent=11 // pred_fallthru
        _
      // Predicated region
      $region25: #{llama_forward.12} parent=11 // pred_check
        %p225 = pneg %p155
      $region26: #{llama_forward.12} parent=11 // pred_check_branch
        %227 = sbr.rel (%p225) target = $region28
      $region27: #{llama_forward.12} parent=11 // pred_region
        %s228 = smul.u32 2, %s21
        %p229 = scmp.lt.s32.totalorder %s228, 1
        %s230 = scalar_select %p229, %s228, 1
        %s231 = smul.addr %s230, 8
        %s232 = scalar_lea.vmem %s4, %s231
        %s233 = smul.u32 2, %s21
      $region28: #{llama_forward.12} parent=11 // pred_fallthru
        _
    $region12: #{llama_forward.12} parent=5 // pred_fallthru
      _
    %p234 = scmp.lt.s32.totalorder %s11, 2
    // Predicated region
    $region29: #{llama_forward.12} parent=5 // pred_check
      %p235 = pneg %p234
    $region30: #{llama_forward.12} parent=5 // pred_check_branch
      %237 = sbr.rel (%p235) target = $region32
    $region31: #{llama_forward.12} parent=5 // pred_region
      // Predicated region
      $region33: #{llama_forward.12} parent=31 // pred_check
        %p238 = pneg %p45
      $region34: #{llama_forward.12} parent=31 // pred_check_branch
        %240 = sbr.rel (%p238) target = $region36
      $region35: #{llama_forward.12} parent=31 // pred_region
        %s241 = smul.u32 2, %s19
        %p242 = scmp.lt.s32.totalorder %s18, 1
        %s243 = scalar_select %p242, %s18, 1
        %p244 = scmp.lt.s32.totalorder %s241, 1
        %s245 = scalar_select %p244, %s241, 1
        %s246 = smul.addr %s245, 3
        %s247 = smul.addr %s243, 6
        %s248 = sadd.s32 %s246, %s247
        %s249 = smul.addr %s248, 4
        %s250 = scalar_lea.vmem %s0, %s249
        %s251 = smul.u32 2, %s19
      $region36: #{llama_forward.12} parent=31 // pred_fallthru
        _
    $region32: #{llama_forward.12} parent=5 // pred_fallthru
      _
    %p252 = scmp.le.s32.totalorder 1, %s11
    %p253 = scmp.lt.s32.totalorder %s11, 3
    %p254 = pnand %p252, %p253
    %p255 = pneg %p254
    // Predicated region
    $region37: #{llama_forward.12} parent=5 // pred_check
      _
    $region38: #{llama_forward.12} parent=5 // pred_check_branch
      %257 = sbr.rel (%p254) target = $region40
    $region39: #{llama_forward.12} parent=5 // pred_region
      %s258 = ssub.s32 %s11, 1
      %s259 = smul.u32 2, %s21
      %p260 = scmp.lt.s32.totalorder %s20, 1
      %s261 = scalar_select %p260, %s20, 1
      %p262 = scmp.lt.s32.totalorder %s259, 1
      %s263 = scalar_select %p262, %s259, 1
      %s264 = smul.addr %s263, 3
      %s265 = smul.addr %s261, 6
      %s266 = sadd.s32 %s264, %s265
      %s267 = smul.addr %s266, 4
      %s268 = scalar_lea.vmem %s0, %s267
      %p269 = pneg %p51
      %p270 = pneg %p48
      %s271 = smul.u32 2, %s21
      %p272 = scmp.lt.s32.totalorder %s271, 1
      %s273 = scalar_select %p272, %s271, 1
      %s274 = smul.addr %s273, 8
      %s275 = scalar_lea.vmem %s1, %s274
      %p276 = pneg %p77
      %p277 = pneg %p74
      %s278 = smul.u32 2, %s21
      %p279 = scmp.lt.s32.totalorder %s278, 1
      %s280 = scalar_select %p279, %s278, 1
      %s281 = smul.addr %s280, 8
      %s282 = scalar_lea.vmem %s2, %s281
      %p283 = pneg %p103
      %p284 = pneg %p100
      %s285 = smul.u32 2, %s21
      %p286 = scmp.lt.s32.totalorder %s285, 1
      %s287 = scalar_select %p286, %s285, 1
      %s288 = smul.addr %s287, 8
      %s289 = scalar_lea.vmem %s3, %s288
      %p290 = pneg %p129
      %p291 = pneg %p126
      %s292 = smul.u32 2, %s21
      %p293 = scmp.lt.s32.totalorder %s292, 1
      %s294 = scalar_select %p293, %s292, 1
      %s295 = smul.addr %s294, 8
      %s296 = scalar_lea.vmem %s4, %s295
      %p297 = pneg %p155
      %p298 = pneg %p152
      %p299 = pneg %p183
      %p300 = pneg %p180
      %s301 = smul.u32 2, %s21
      %p302 = scmp.lt.s32.totalorder %s20, 1
      %s303 = scalar_select %p302, %s20, 1
      %p304 = scmp.lt.s32.totalorder %s301, 1
      %s305 = scalar_select %p304, %s301, 1
      %s306 = smul.addr %s305, 3
      %s307 = smul.addr %s303, 6
      %s308 = sadd.s32 %s306, %s307
      %s309 = smul.addr %s308, 4
      %s310 = scalar_lea.vmem %s5, %s309
      %s311 = smul.u32 2, %s21
      %p312 = scmp.lt.s32.totalorder %s20, 1
      %s313 = scalar_select %p312, %s20, 1
      %p314 = scmp.lt.s32.totalorder %s311, 1
      %s315 = scalar_select %p314, %s311, 1
      %s316 = smul.addr %s315, 3
      %s317 = smul.addr %s313, 6
      %s318 = sadd.s32 %s316, %s317
      %s319 = smul.addr %s318, 4
      %s320 = scalar_lea.vmem %s0, %s319
      %s321 = smul.u32 2, %s21
      %s322 = smul.u32 2, %s21
      %p323 = scmp.lt.s32.totalorder %s322, 1
      %s324 = scalar_select %p323, %s322, 1
      %s325 = smul.addr %s324, 8
      %s326 = scalar_lea.vmem %s1, %s325
      %s327 = smul.u32 2, %s21
      %s328 = smul.u32 2, %s21
      %p329 = scmp.lt.s32.totalorder %s328, 1
      %s330 = scalar_select %p329, %s328, 1
      %s331 = smul.addr %s330, 8
      %s332 = scalar_lea.vmem %s2, %s331
      %s333 = smul.u32 2, %s21
      %s334 = smul.u32 2, %s21
      %p335 = scmp.lt.s32.totalorder %s334, 1
      %s336 = scalar_select %p335, %s334, 1
      %s337 = smul.addr %s336, 8
      %s338 = scalar_lea.vmem %s3, %s337
      %s339 = smul.u32 2, %s21
      %s340 = smul.u32 2, %s21
      %p341 = scmp.lt.s32.totalorder %s340, 1
      %s342 = scalar_select %p341, %s340, 1
      %s343 = smul.addr %s342, 8
      %s344 = scalar_lea.vmem %s4, %s343
      %s345 = smul.u32 2, %s21
      %s346 = smul.u32 2, %s21
      %p347 = scmp.lt.s32.totalorder %s20, 1
      %s348 = scalar_select %p347, %s20, 1
      %p349 = scmp.lt.s32.totalorder %s346, 1
      %s350 = scalar_select %p349, %s346, 1
      %s351 = smul.addr %s350, 3
      %s352 = smul.addr %s348, 6
      %s353 = sadd.s32 %s351, %s352
      %s354 = smul.addr %s353, 4
      %s355 = scalar_lea.vmem %s5, %s354
      %s356 = smul.u32 2, %s21
      %v357 = vld [vmem:[%s320] sm:$0xff]
      %v358 = vld [vmem:[%s320 + $0x8] sm:$0xf]
      %v359 = vld [vmem:[%s320 + $0xc] sm:$0xff]
      %v360 = vld [vmem:[%s320 + $0x14] sm:$0xf]
      %v361 = vld [vmem:[%s326] sm:$0xff]
      %v362 = vld [vmem:[%s326 + $0x8] sm:$0xff]
      %v363 = vld [vmem:[%s332] sm:$0xff]
      %v364 = vld [vmem:[%s332 + $0x8] sm:$0xff]
      %v365 = vld [vmem:[%s338] sm:$0xff]
      %v366 = vld [vmem:[%s338 + $0x8] sm:$0xff]
      %v367 = vld [vmem:[%s344] sm:$0xff]
      %v368 = vld [vmem:[%s344 + $0x8] sm:$0xff]
      %v369 = vunpack.c.l.bf16 %v357
      %v370 = vunpack.c.l.bf16 %v359
      %v373 = vrot.slane %v357, 4
      %v374 = vrot.slane %v359, 4
      %v377 = vunpack.c.l.bf16 %v373
      %v378 = vunpack.c.l.bf16 %v374
      %v379 = vmul.f32 %v369, %v361
      %v380 = vmul.f32 %v370, %v362
      %vm381 = vcmask 1047808
      %382 = vrot.lane.b32.xlu0 %v369, 32
      %v383 = vpop.permute.xlu0 %382
      %v384 = vsel %vm381, %v383, %v369
      %385 = vrot.lane.b32.xlu0 %v370, 32
      %v386 = vpop.permute.xlu0 %385
      %v387 = vsel %vm381, %v386, %v370
      %388 = vrot.lane.b32.xlu0 %v384, 32
      %v389 = vpop.permute.xlu0 %388
      %390 = vrot.lane.b32.xlu0 %v387, 32
      %v391 = vpop.permute.xlu0 %390
      %v392 = vsel %vm381, %v389, %v369
      %v393 = vsel %vm381, %v391, %v370
      %396 = vrot.lane.b32.xlu0 %v363, 16
      %v397 = vpop.permute.xlu0 %396
      %398 = vrot.lane.b32.xlu0 %v364, 16
      %v399 = vpop.permute.xlu0 %398
      %v402 = vmul.f32 %v392, %v397
      %v403 = vmul.f32 %v393, %v399
      %406 = vrot.lane.b32.xlu0 %v402, 112
      %v407 = vpop.permute.xlu0 %406
      %408 = vrot.lane.b32.xlu0 %v403, 112
      %v409 = vpop.permute.xlu0 %408
      %v412 = vadd.f32 %v379, %v407
      %v413 = vadd.f32 %v380, %v409
      %v414 = vpack.c.bf16 %v413, %v412
      %v416 = vunpack.c.l.b16 %v414
      %v417 = vunpack.c.h.b16 %v414
      %v418 = vpack.c.b16 %v416, %v416
      %v419 = vpack.c.b16 %v417, %v417
      %vm422 = vcmask 257024
      %423 = vst.msk [vmem:[%s355] sm:$0xf] %vm422, %v418
      %424 = vst.msk [vmem:[%s355 + $0xc] sm:$0xf] %vm422, %v419
      %v425 = vmul.f32 %v377, %v365
      %v426 = vmul.f32 %v378, %v366
      %427 = vrot.lane.b32.xlu0 %v377, 32
      %v428 = vpop.permute.xlu0 %427
      %v429 = vsel %vm381, %v428, %v377
      %430 = vrot.lane.b32.xlu0 %v378, 32
      %v431 = vpop.permute.xlu0 %430
      %v432 = vsel %vm381, %v431, %v378
      %433 = vrot.lane.b32.xlu0 %v429, 32
      %v434 = vpop.permute.xlu0 %433
      %435 = vrot.lane.b32.xlu0 %v432, 32
      %v436 = vpop.permute.xlu0 %435
      %v437 = vsel %vm381, %v434, %v377
      %v438 = vsel %vm381, %v436, %v378
      %441 = vrot.lane.b32.xlu0 %v367, 16
      %v442 = vpop.permute.xlu0 %441
      %443 = vrot.lane.b32.xlu0 %v368, 16
      %v444 = vpop.permute.xlu0 %443
      %v447 = vmul.f32 %v437, %v442
      %v448 = vmul.f32 %v438, %v444
      %451 = vrot.lane.b32.xlu0 %v447, 112
      %v452 = vpop.permute.xlu0 %451
      %453 = vrot.lane.b32.xlu0 %v448, 112
      %v454 = vpop.permute.xlu0 %453
      %v457 = vadd.f32 %v425, %v452
      %v458 = vadd.f32 %v426, %v454
      %v459 = vpack.c.bf16 %v458, %v457
      %v461 = vunpack.c.l.b16 %v459
      %v462 = vunpack.c.h.b16 %v459
      %v463 = vpack.c.b16 %v461, %v461
      %v464 = vpack.c.b16 %v462, %v462
      %467 = vst.msk [vmem:[%s355 + $0x4] sm:$0xf] %vm422, %v463
      %468 = vst.msk [vmem:[%s355 + $0x10] sm:$0xf] %vm422, %v464
      %469 = vrot.lane.b32.xlu0 %v357, 96
      %v470 = vpop.permute.xlu0 %469
      %471 = vrot.lane.b32.xlu0 %v359, 96
      %v472 = vpop.permute.xlu0 %471
      %v473 = vrot.slane %v470, 4
      %v474 = vrot.slane %v472, 4
      %v477 = vunpack.c.l.bf16 %v473
      %v478 = vunpack.c.l.bf16 %v474
      %481 = vrot.lane.b32.xlu0 %v361, 32
      %v482 = vpop.permute.xlu0 %481
      %483 = vrot.lane.b32.xlu0 %v362, 32
      %v484 = vpop.permute.xlu0 %483
      %v487 = vmul.f32 %v369, %v482
      %v488 = vmul.f32 %v370, %v484
      %491 = vrot.lane.b32.xlu0 %v369, 96
      %v492 = vpop.permute.xlu0 %491
      %493 = vrot.lane.b32.xlu0 %v370, 96
      %v494 = vpop.permute.xlu0 %493
      %497 = vrot.lane.b32.xlu0 %v492, 32
      %v498 = vpop.permute.xlu0 %497
      %v499 = vsel %vm381, %v498, %v492
      %500 = vrot.lane.b32.xlu0 %v494, 32
      %v501 = vpop.permute.xlu0 %500
      %v502 = vsel %vm381, %v501, %v494
      %503 = vrot.lane.b32.xlu0 %v499, 32
      %v504 = vpop.permute.xlu0 %503
      %505 = vrot.lane.b32.xlu0 %v502, 32
      %v506 = vpop.permute.xlu0 %505
      %v507 = vsel %vm381, %v504, %v492
      %v508 = vsel %vm381, %v506, %v494
      %v509 = vmul.f32 %v507, %v397
      %v510 = vmul.f32 %v508, %v399
      %513 = vrot.lane.b32.xlu0 %v509, 16
      %v514 = vpop.permute.xlu0 %513
      %515 = vrot.lane.b32.xlu0 %v510, 16
      %v516 = vpop.permute.xlu0 %515
      %v519 = vadd.f32 %v487, %v514
      %v520 = vadd.f32 %v488, %v516
      %v521 = vpack.c.bf16 %v520, %v519
      %v523 = vunpack.c.l.b16 %v521
      %v524 = vunpack.c.h.b16 %v521
      %v525 = vpack.c.b16 %v523, %v523
      %v526 = vpack.c.b16 %v524, %v524
      %vm529 = vcmask 519424
      %530 = vst.msk [vmem:[%s355] sm:$0xf] %vm529, %v525
      %531 = vst.msk [vmem:[%s355 + $0xc] sm:$0xf] %vm529, %v526
      %v532 = vmul.f32 %v477, %v365
      %v533 = vmul.f32 %v478, %v366
      %534 = vrot.lane.b32.xlu0 %v477, 32
      %v535 = vpop.permute.xlu0 %534
      %v536 = vsel %vm381, %v535, %v477
      %537 = vrot.lane.b32.xlu0 %v478, 32
      %v538 = vpop.permute.xlu0 %537
      %v539 = vsel %vm381, %v538, %v478
      %540 = vrot.lane.b32.xlu0 %v536, 32
      %v541 = vpop.permute.xlu0 %540
      %542 = vrot.lane.b32.xlu0 %v539, 32
      %v543 = vpop.permute.xlu0 %542
      %v544 = vsel %vm381, %v541, %v477
      %v545 = vsel %vm381, %v543, %v478
      %v546 = vmul.f32 %v544, %v442
      %v547 = vmul.f32 %v545, %v444
      %550 = vrot.lane.b32.xlu0 %v546, 112
      %v551 = vpop.permute.xlu0 %550
      %552 = vrot.lane.b32.xlu0 %v547, 112
      %v553 = vpop.permute.xlu0 %552
      %v556 = vadd.f32 %v532, %v551
      %v557 = vadd.f32 %v533, %v553
      %v558 = vpack.c.bf16 %v557, %v556
      %v560 = vunpack.c.l.b16 %v558
      %v561 = vunpack.c.h.b16 %v558
      %v562 = vpack.c.b16 %v560, %v560
      %v563 = vpack.c.b16 %v561, %v561
      %564 = vrot.lane.b32.xlu0 %v562, 32
      %v565 = vpop.permute.xlu0 %564
      %566 = vrot.lane.b32.xlu0 %v563, 32
      %v567 = vpop.permute.xlu0 %566
      %570 = vst.msk [vmem:[%s355 + $0x4] sm:$0xf] %vm529, %v565
      %571 = vst.msk [vmem:[%s355 + $0x10] sm:$0xf] %vm529, %v567
      %572 = vrot.lane.b32.xlu0 %v357, 64
      %v573 = vpop.permute.xlu0 %572
      %574 = vrot.lane.b32.xlu0 %v359, 64
      %v575 = vpop.permute.xlu0 %574
      %v576 = vrot.slane %v573, 4
      %v577 = vrot.slane %v575, 4
      %v580 = vunpack.c.l.bf16 %v576
      %v581 = vunpack.c.l.bf16 %v577
      %582 = vrot.lane.b32.xlu0 %v361, 64
      %v583 = vpop.permute.xlu0 %582
      %584 = vrot.lane.b32.xlu0 %v362, 64
      %v585 = vpop.permute.xlu0 %584
      %v588 = vmul.f32 %v369, %v583
      %v589 = vmul.f32 %v370, %v585
      %590 = vrot.lane.b32.xlu0 %v369, 64
      %v591 = vpop.permute.xlu0 %590
      %592 = vrot.lane.b32.xlu0 %v370, 64
      %v593 = vpop.permute.xlu0 %592
      %596 = vrot.lane.b32.xlu0 %v591, 32
      %v597 = vpop.permute.xlu0 %596
      %v598 = vsel %vm381, %v597, %v591
      %599 = vrot.lane.b32.xlu0 %v593, 32
      %v600 = vpop.permute.xlu0 %599
      %v601 = vsel %vm381, %v600, %v593
      %602 = vrot.lane.b32.xlu0 %v598, 32
      %v603 = vpop.permute.xlu0 %602
      %604 = vrot.lane.b32.xlu0 %v601, 32
      %v605 = vpop.permute.xlu0 %604
      %v606 = vsel %vm381, %v603, %v591
      %v607 = vsel %vm381, %v605, %v593
      %v608 = vmul.f32 %v606, %v397
      %v609 = vmul.f32 %v607, %v399
      %612 = vrot.lane.b32.xlu0 %v608, 48
      %v613 = vpop.permute.xlu0 %612
      %614 = vrot.lane.b32.xlu0 %v609, 48
      %v615 = vpop.permute.xlu0 %614
      %v618 = vadd.f32 %v588, %v613
      %v619 = vadd.f32 %v589, %v615
      %v620 = vpack.c.bf16 %v619, %v618
      %v622 = vunpack.c.l.b16 %v620
      %v623 = vunpack.c.h.b16 %v620
      %v624 = vpack.c.b16 %v622, %v622
      %v625 = vpack.c.b16 %v623, %v623
      %vm628 = vcmask 781824
      %629 = vst.msk [vmem:[%s355] sm:$0xf] %vm628, %v624
      %630 = vst.msk [vmem:[%s355 + $0xc] sm:$0xf] %vm628, %v625
      %v631 = vmul.f32 %v580, %v365
      %v632 = vmul.f32 %v581, %v366
      %633 = vrot.lane.b32.xlu0 %v580, 32
      %v634 = vpop.permute.xlu0 %633
      %v635 = vsel %vm381, %v634, %v580
      %636 = vrot.lane.b32.xlu0 %v581, 32
      %v637 = vpop.permute.xlu0 %636
      %v638 = vsel %vm381, %v637, %v581
      %639 = vrot.lane.b32.xlu0 %v635, 32
      %v640 = vpop.permute.xlu0 %639
      %641 = vrot.lane.b32.xlu0 %v638, 32
      %v642 = vpop.permute.xlu0 %641
      %v643 = vsel %vm381, %v640, %v580
      %v644 = vsel %vm381, %v642, %v581
      %v645 = vmul.f32 %v643, %v442
      %v646 = vmul.f32 %v644, %v444
      %649 = vrot.lane.b32.xlu0 %v645, 112
      %v650 = vpop.permute.xlu0 %649
      %651 = vrot.lane.b32.xlu0 %v646, 112
      %v652 = vpop.permute.xlu0 %651
      %v655 = vadd.f32 %v631, %v650
      %v656 = vadd.f32 %v632, %v652
      %v657 = vpack.c.bf16 %v656, %v655
      %v659 = vunpack.c.l.b16 %v657
      %v660 = vunpack.c.h.b16 %v657
      %v661 = vpack.c.b16 %v659, %v659
      %v662 = vpack.c.b16 %v660, %v660
      %663 = vrot.lane.b32.xlu0 %v661, 64
      %v664 = vpop.permute.xlu0 %663
      %665 = vrot.lane.b32.xlu0 %v662, 64
      %v666 = vpop.permute.xlu0 %665
      %669 = vst.msk [vmem:[%s355 + $0x4] sm:$0xf] %vm628, %v664
      %670 = vst.msk [vmem:[%s355 + $0x10] sm:$0xf] %vm628, %v666
      %671 = vrot.lane.b32.xlu0 %v357, 32
      %v672 = vpop.permute.xlu0 %671
      %673 = vrot.lane.b32.xlu0 %v359, 32
      %v674 = vpop.permute.xlu0 %673
      %v675 = vrot.slane %v672, 4
      %v676 = vrot.slane %v674, 4
      %v679 = vunpack.c.l.bf16 %v675
      %v680 = vunpack.c.l.bf16 %v676
      %681 = vrot.lane.b32.xlu0 %v361, 96
      %v682 = vpop.permute.xlu0 %681
      %683 = vrot.lane.b32.xlu0 %v362, 96
      %v684 = vpop.permute.xlu0 %683
      %v687 = vmul.f32 %v369, %v682
      %v688 = vmul.f32 %v370, %v684
      %689 = vrot.lane.b32.xlu0 %v369, 32
      %v690 = vpop.permute.xlu0 %689
      %691 = vrot.lane.b32.xlu0 %v370, 32
      %v692 = vpop.permute.xlu0 %691
      %695 = vrot.lane.b32.xlu0 %v690, 32
      %v696 = vpop.permute.xlu0 %695
      %v697 = vsel %vm381, %v696, %v690
      %698 = vrot.lane.b32.xlu0 %v692, 32
      %v699 = vpop.permute.xlu0 %698
      %v700 = vsel %vm381, %v699, %v692
      %701 = vrot.lane.b32.xlu0 %v697, 32
      %v702 = vpop.permute.xlu0 %701
      %703 = vrot.lane.b32.xlu0 %v700, 32
      %v704 = vpop.permute.xlu0 %703
      %v705 = vsel %vm381, %v702, %v690
      %v706 = vsel %vm381, %v704, %v692
      %v707 = vmul.f32 %v705, %v397
      %v708 = vmul.f32 %v706, %v399
      %711 = vrot.lane.b32.xlu0 %v707, 80
      %v712 = vpop.permute.xlu0 %711
      %713 = vrot.lane.b32.xlu0 %v708, 80
      %v714 = vpop.permute.xlu0 %713
      %v717 = vadd.f32 %v687, %v712
      %v718 = vadd.f32 %v688, %v714
      %v719 = vpack.c.bf16 %v718, %v717
      %v721 = vunpack.c.l.b16 %v719
      %v722 = vunpack.c.h.b16 %v719
      %v723 = vpack.c.b16 %v721, %v721
      %v724 = vpack.c.b16 %v722, %v722
      %vm727 = vcmask 1044224
      %728 = vst.msk [vmem:[%s355] sm:$0xf] %vm727, %v723
      %729 = vst.msk [vmem:[%s355 + $0xc] sm:$0xf] %vm727, %v724
      %v730 = vmul.f32 %v679, %v365
      %v731 = vmul.f32 %v680, %v366
      %732 = vrot.lane.b32.xlu0 %v679, 32
      %v733 = vpop.permute.xlu0 %732
      %v734 = vsel %vm381, %v733, %v679
      %735 = vrot.lane.b32.xlu0 %v680, 32
      %v736 = vpop.permute.xlu0 %735
      %v737 = vsel %vm381, %v736, %v680
      %738 = vrot.lane.b32.xlu0 %v734, 32
      %v739 = vpop.permute.xlu0 %738
      %740 = vrot.lane.b32.xlu0 %v737, 32
      %v741 = vpop.permute.xlu0 %740
      %v742 = vsel %vm381, %v739, %v679
      %v743 = vsel %vm381, %v741, %v680
      %v744 = vmul.f32 %v742, %v442
      %v745 = vmul.f32 %v743, %v444
      %748 = vrot.lane.b32.xlu0 %v744, 112
      %v749 = vpop.permute.xlu0 %748
      %750 = vrot.lane.b32.xlu0 %v745, 112
      %v751 = vpop.permute.xlu0 %750
      %v754 = vadd.f32 %v730, %v749
      %v755 = vadd.f32 %v731, %v751
      %v756 = vpack.c.bf16 %v755, %v754
      %v758 = vunpack.c.l.b16 %v756
      %v759 = vunpack.c.h.b16 %v756
      %v760 = vpack.c.b16 %v758, %v758
      %v761 = vpack.c.b16 %v759, %v759
      %762 = vrot.lane.b32.xlu0 %v760, 96
      %v763 = vpop.permute.xlu0 %762
      %764 = vrot.lane.b32.xlu0 %v761, 96
      %v765 = vpop.permute.xlu0 %764
      %768 = vst.msk [vmem:[%s355 + $0x4] sm:$0xf] %vm727, %v763
      %769 = vst.msk [vmem:[%s355 + $0x10] sm:$0xf] %vm727, %v765
      %770 = vst [vmem:[%s355 + $0x8] sm:$0xf] %v358
      %771 = vst [vmem:[%s355 + $0x14] sm:$0xf] %v360
      %s772 = smul.u32 2, %s21
      %p773 = scmp.lt.s32.totalorder %s20, 1
      %s774 = scalar_select %p773, %s20, 1
      %p775 = scmp.lt.s32.totalorder %s772, 1
      %s776 = scalar_select %p775, %s772, 1
      %s777 = smul.addr %s776, 3
      %s778 = smul.addr %s774, 6
      %s779 = sadd.s32 %s777, %s778
      %s780 = smul.addr %s779, 4
      %s781 = scalar_lea.vmem %s5, %s780
      // Predicated region
      $region41: #{llama_forward.12} parent=39 // pred_check
        %p782 = pneg %p180
      $region42: #{llama_forward.12} parent=39 // pred_check_branch
        %784 = sbr.rel (%p782) target = $region44
      $region43: #{llama_forward.12} parent=39 // pred_region
        %s785 = smul.u32 2, %s21
      $region44: #{llama_forward.12} parent=39 // pred_fallthru
        _
    $region40: #{llama_forward.12} parent=5 // pred_fallthru
      _
    %p786 = scmp.le.s32.totalorder 2, %s11
    // Predicated region
    $region45: #{llama_forward.12} parent=5 // pred_check
      %p787 = pneg %p786
    $region46: #{llama_forward.12} parent=5 // pred_check_branch
      %789 = sbr.rel (%p787) target = $region48
    $region47: #{llama_forward.12} parent=5 // pred_region
      %s790 = ssub.s32 %s11, 2
      // Predicated region
      $region49: #{llama_forward.12} parent=47 // pred_check
        %p791 = pneg %p186
      $region50: #{llama_forward.12} parent=47 // pred_check_branch
        %793 = sbr.rel (%p791) target = $region52
      $region51: #{llama_forward.12} parent=47 // pred_region
        %s794 = smul.u32 2, %s23
        %p795 = scmp.lt.s32.totalorder %s22, 1
        %s796 = scalar_select %p795, %s22, 1
        %p797 = scmp.lt.s32.totalorder %s794, 1
        %s798 = scalar_select %p797, %s794, 1
        %s799 = smul.addr %s798, 3
        %s800 = smul.addr %s796, 6
        %s801 = sadd.s32 %s799, %s800
        %s802 = smul.addr %s801, 4
        %s803 = scalar_lea.vmem %s5, %s802
      $region52: #{llama_forward.12} parent=47 // pred_fallthru
        _
    $region48: #{llama_forward.12} parent=5 // pred_fallthru
      _
  $region6: #{llama_forward.12} parent=0 // loop_footer
    %s15 = sadd.s32 1, %s11
  $region7: #{llama_forward.12} parent=0 // loop_footer_branch
    %10 = sbr.rel target = $region3
  $region8: #{llama_forward.12} parent=0 // loop_exit
    _

// kernel: llama_forward.13
$region0: #{llama_forward.13}
  #allocation0 [shape = 'u32[]', space=smem, size = 0x4, offset = 0x4, fixed_abs, tag = 'smem constant byte address 0x4 - core index']
  #allocation1 [shape = 'u32[144,128]{1,0:T(1,128)}', space=vmem, size = 0x12000, scoped, tag = 'internal scratch']
  #allocation2 [shape = 'f32[16,4]{1,0:T(8,128)}', space=vmem, size = 0x2000, scoped, tag = 'scratch operand']
  #allocation3 [shape = 'f32[16,4]{1,0:T(8,128)}', space=vmem, size = 0x2000, scoped, tag = 'scratch operand']
  #allocation4 [shape = 'f32[16,128]{1,0:T(8,128)}', space=vmem, size = 0x2000, scoped, tag = 'scratch operand']
  %s0 = inlined_call_operand.vmem [shape: bf16[2,16,384], index: 0, kind: input, shape index: {}, may-alias: {0,1,2}]
  %s1 = inlined_call_operand.vmem [shape: bf16[2,16,384], index: 1, kind: input, shape index: {}, may-alias: {0,1,2}]
  %s2 = inlined_call_operand.vmem [shape: bf16[2,16,384], index: 2, kind: input, shape index: {}, may-alias: {0,1,2}]
  %s3 = inlined_call_operand.vmem [shape: bf16[2,16,128], index: 3, kind: output, shape index: {}]
  %s4 = sld [smem:[#allocation0]]
  $region184: #{llama_forward.13} parent=0
    _
  %s6 = ssub.s32 1, %s4
  %s7 = scalar_select 0, %s6, %s4
  $region1: #{llama_forward.13} parent=0
    #allocation5 [shape = 'u8[8192]{0}', space=vmem, size = 0x2000, scoped, tag = 'input window, operand 0']
    #allocation6 [shape = 'u8[8192]{0}', space=vmem, size = 0x2000, scoped, tag = 'input window, operand 1']
    #allocation7 [shape = 'u8[8192]{0}', space=vmem, size = 0x2000, scoped, tag = 'input window, operand 2']
    loop: start=0, step=1, limit=4
    $region2: #{llama_forward.13} parent=1 // loop_pre_header
      _
    $region3: #{llama_forward.13} parent=1 // loop_header
      %s9 = sphi 0, %s13
      %p10 = scmp.ge.s32.totalorder %s9, 4
      %s16 = sphi 0, %s42
      %s17 = sphi 0, %s38
      %s18 = sphi 0, %s34
      %s19 = sphi 0, %s30
      %s20 = sphi 0, %s16
      %s21 = sphi 0, %s17
      %s22 = sphi 0, %s18
      %s23 = sphi 0, %s19
      %s24 = sphi 0, %s20
      %s25 = sphi 0, %s21
      %s26 = sphi 0, %s22
      %s27 = sphi 0, %s23
      %s49 = sphi 0, %s51
      %s52 = sphi 0, %s49
      %s53 = sphi 0, %s52
      %s69 = sphi 0, %s53
      %s85 = sphi 0, %s87
      %s88 = sphi 0, %s85
      %s89 = sphi 0, %s88
      %s105 = sphi 0, %s89
      %s121 = sphi 0, %s123
      %s124 = sphi 0, %s121
      %s125 = sphi 0, %s124
      %s141 = sphi 0, %s125
      %s151 = sphi 0, %s153
      %s154 = sphi 0, %s151
      %s155 = sphi 0, %s154
      %s171 = sphi 0, %s155
    $region4: #{llama_forward.13} parent=1 // loop_header_branch
      %12 = sbr.rel (%p10) target = $region8
    $region5: #{llama_forward.13} parent=1 // loop_body
      %s14 = ssub.s32 %s9, 1
      %s15 = ssub.s32 %s9, 2
      %s28 = sadd.s32 1, %s19
      %p29 = scmp.ge.s32.totalorder %s28, 1
      %s30 = scalar_select %p29, 0, %s28
      %s31 = sadd.s32 1, %s18
      %s32 = scalar_select %p29, %s31, %s18
      %p33 = scmp.ge.s32.totalorder %s32, 1
      %s34 = scalar_select %p33, 0, %s32
      %s35 = sadd.s32 1, %s17
      %s36 = scalar_select %p33, %s35, %s17
      %p37 = scmp.ge.s32.totalorder %s36, 1
      %s38 = scalar_select %p37, 0, %s36
      %s39 = sadd.s32 1, %s16
      %s40 = scalar_select %p37, %s39, %s16
      %p41 = scmp.ge.s32.totalorder %s40, 2
      %s42 = scalar_select %p41, 0, %s40
      %s43 = ssub.s32 %s16, %s42
      %s44 = ssub.s32 %s18, %s34
      %s45 = sor.u32 %s43, %s44
      %s46 = ssub.s32 %s17, %s38
      %s47 = sor.u32 %s45, %s46
      %p48 = scmp.eq.s32.totalorder %s47, 0
      %s50 = sadd.s32 %s49, 1
      %s51 = scalar_select %p48, %s49, %s50
      %p54 = pneg %p48
      %p55 = scmp.eq.s32.totalorder %s9, 1
      %p56 = por %p54, %p55
      %p57 = scmp.ne.s32.totalorder %s49, %s52
      %p58 = scmp.eq.s32.totalorder %s9, 0
      %p59 = por %p57, %p58
      %p60 = scmp.ne.s32.totalorder %s49, %s52
      %p61 = scmp.eq.s32.totalorder %s14, 1
      %p62 = por %p60, %p61
      %p63 = scmp.ne.s32.totalorder %s52, %s53
      %p64 = scmp.eq.s32.totalorder %s14, 0
      %p65 = por %p63, %p64
      %p66 = scmp.ne.s32.totalorder %s52, %s53
      %p67 = scmp.eq.s32.totalorder %s15, 1
      %p68 = por %p66, %p67
      %p70 = scmp.ne.s32.totalorder %s53, %s69
      %p71 = scmp.eq.s32.totalorder %s15, 0
      %p72 = por %p70, %p71
      %p73 = scmp.lt.s32.totalorder %s19, %s18
      %s74 = scalar_select %p73, %s19, %s18
      %s75 = sadd.s32 %s17, 1
      %p76 = scmp.lt.s32.totalorder %s30, %s34
      %s77 = scalar_select %p76, %s30, %s34
      %s78 = sadd.s32 %s38, 1
      %s79 = ssub.s32 %s16, %s42
      %s80 = ssub.s32 %s74, %s77
      %s81 = sor.u32 %s79, %s80
      %s82 = ssub.s32 %s75, %s78
      %s83 = sor.u32 %s81, %s82
      %p84 = scmp.eq.s32.totalorder %s83, 0
      %s86 = sadd.s32 %s85, 1
      %s87 = scalar_select %p84, %s85, %s86
      %p90 = pneg %p84
      %p91 = scmp.eq.s32.totalorder %s9, 1
      %p92 = por %p90, %p91
      %p93 = scmp.ne.s32.totalorder %s85, %s88
      %p94 = scmp.eq.s32.totalorder %s9, 0
      %p95 = por %p93, %p94
      %p96 = scmp.ne.s32.totalorder %s85, %s88
      %p97 = scmp.eq.s32.totalorder %s14, 1
      %p98 = por %p96, %p97
      %p99 = scmp.ne.s32.totalorder %s88, %s89
      %p100 = scmp.eq.s32.totalorder %s14, 0
      %p101 = por %p99, %p100
      %p102 = scmp.ne.s32.totalorder %s88, %s89
      %p103 = scmp.eq.s32.totalorder %s15, 1
      %p104 = por %p102, %p103
      %p106 = scmp.ne.s32.totalorder %s89, %s105
      %p107 = scmp.eq.s32.totalorder %s15, 0
      %p108 = por %p106, %p107
      %p109 = scmp.lt.s32.totalorder %s19, %s18
      %s110 = scalar_select %p109, %s19, %s18
      %s111 = sadd.s32 %s17, 2
      %p112 = scmp.lt.s32.totalorder %s30, %s34
      %s113 = scalar_select %p112, %s30, %s34
      %s114 = sadd.s32 %s38, 2
      %s115 = ssub.s32 %s16, %s42
      %s116 = ssub.s32 %s110, %s113
      %s117 = sor.u32 %s115, %s116
      %s118 = ssub.s32 %s111, %s114
      %s119 = sor.u32 %s117, %s118
      %p120 = scmp.eq.s32.totalorder %s119, 0
      %s122 = sadd.s32 %s121, 1
      %s123 = scalar_select %p120, %s121, %s122
      %p126 = pneg %p120
      %p127 = scmp.eq.s32.totalorder %s9, 1
      %p128 = por %p126, %p127
      %p129 = scmp.ne.s32.totalorder %s121, %s124
      %p130 = scmp.eq.s32.totalorder %s9, 0
      %p131 = por %p129, %p130
      %p132 = scmp.ne.s32.totalorder %s121, %s124
      %p133 = scmp.eq.s32.totalorder %s14, 1
      %p134 = por %p132, %p133
      %p135 = scmp.ne.s32.totalorder %s124, %s125
      %p136 = scmp.eq.s32.totalorder %s14, 0
      %p137 = por %p135, %p136
      %p138 = scmp.ne.s32.totalorder %s124, %s125
      %p139 = scmp.eq.s32.totalorder %s15, 1
      %p140 = por %p138, %p139
      %p142 = scmp.ne.s32.totalorder %s125, %s141
      %p143 = scmp.eq.s32.totalorder %s15, 0
      %p144 = por %p142, %p143
      %s145 = ssub.s32 %s16, %s42
      %s146 = ssub.s32 %s18, %s34
      %s147 = sor.u32 %s145, %s146
      %s148 = ssub.s32 %s17, %s38
      %s149 = sor.u32 %s147, %s148
      %p150 = scmp.eq.s32.totalorder %s149, 0
      %s152 = sadd.s32 %s151, 1
      %s153 = scalar_select %p150, %s151, %s152
      %p156 = pneg %p150
      %p157 = scmp.eq.s32.totalorder %s9, 1
      %p158 = por %p156, %p157
      %p159 = scmp.ne.s32.totalorder %s151, %s154
      %p160 = scmp.eq.s32.totalorder %s9, 0
      %p161 = por %p159, %p160
      %p162 = scmp.ne.s32.totalorder %s151, %s154
      %p163 = scmp.eq.s32.totalorder %s14, 1
      %p164 = por %p162, %p163
      %p165 = scmp.ne.s32.totalorder %s154, %s155
      %p166 = scmp.eq.s32.totalorder %s14, 0
      %p167 = por %p165, %p166
      %p168 = scmp.ne.s32.totalorder %s154, %s155
      %p169 = scmp.eq.s32.totalorder %s15, 1
      %p170 = por %p168, %p169
      %p172 = scmp.ne.s32.totalorder %s155, %s171
      %p173 = scmp.eq.s32.totalorder %s15, 0
      %p174 = por %p172, %p173
      %p175 = scmp.le.s32.totalorder 1, %s9
      %p176 = scmp.lt.s32.totalorder %s9, 3
      %p177 = pnand %p175, %p176
      %p178 = pneg %p177
      // Predicated region
      $region9: #{llama_forward.13} parent=5 // pred_check
        _
      $region10: #{llama_forward.13} parent=5 // pred_check_branch
        %180 = sbr.rel (%p177) target = $region12
      $region11: #{llama_forward.13} parent=5 // pred_region
        %s181 = ssub.s32 %s9, 1
      $region12: #{llama_forward.13} parent=5 // pred_fallthru
        _
      %p182 = scmp.lt.s32.totalorder %s9, 2
      // Predicated region
      $region13: #{llama_forward.13} parent=5 // pred_check
        %p183 = pneg %p182
      $region14: #{llama_forward.13} parent=5 // pred_check_branch
        %185 = sbr.rel (%p183) target = $region16
      $region15: #{llama_forward.13} parent=5 // pred_region
        // Predicated region
        $region17: #{llama_forward.13} parent=15 // pred_check
          %p186 = pneg %p59
        $region18: #{llama_forward.13} parent=15 // pred_check_branch
          %188 = sbr.rel (%p186) target = $region20
        $region19: #{llama_forward.13} parent=15 // pred_region
          %s189 = sand.u32 %s49, 1
          %s190 = sand.u32 %s49, 1
          %s191 = smul.addr %s190, 8
          %s192 = scalar_lea.vmem [#allocation5], %s191
          %s193 = smul.u32 2, %s18
          %s194 = smul.addr %s193, 3
          %s195 = sadd.s32 %s17, %s194
          %s196 = smul.addr %s16, 6
          %s197 = sadd.s32 %s195, %s196
          %s198 = smul.addr %s197, 4
          %s199 = scalar_lea.vmem %s0, %s198
          // Predicated region
          $region21: #{llama_forward.13} parent=19 // pred_check
            _
          $region22: #{llama_forward.13} parent=19 // pred_check_branch
            %201 = sbr.rel (0) target = $region24
          $region23: #{llama_forward.13} parent=19 // pred_region
            // Predicated region
            $region25: #{llama_forward.13} parent=23 // pred_check
              _
            $region26: #{llama_forward.13} parent=23 // pred_check_branch
              %203 = sbr.rel target = $region28
            $region27: #{llama_forward.13} parent=23 // pred_region
              // Predicated region
              $region40: #{llama_forward.13} parent=27 // pred_check
                _
              $region41: #{llama_forward.13} parent=27 // pred_check_branch
                %220 = sbr.rel (0) target = $region43
              $region42: #{llama_forward.13} parent=27 // pred_region
                loop: start=0, step=1, limit=1
                $region44: #{llama_forward.13} parent=42 // loop_pre_header
                  _
                $region45: #{llama_forward.13} parent=42 // loop_header
                  %s222 = sphi 0, %s226
                  %p223 = scmp.ge.s32.totalorder %s222, 1
                  %s227 = sphi %s199, %s199
                  %s228 = sphi %s192, %s192
                $region46: #{llama_forward.13} parent=42 // loop_header_branch
                  %225 = sbr.rel (%p223) target = $region50
                $region47: #{llama_forward.13} parent=42 // loop_body
                  _
                $region48: #{llama_forward.13} parent=42 // loop_footer
                  %s226 = sadd.s32 1, %s222
                $region49: #{llama_forward.13} parent=42 // loop_footer_branch
                  %221 = sbr.rel target = $region45
                $region50: #{llama_forward.13} parent=42 // loop_exit
                  _
                loop: start=0, step=1, limit=1
                $region51: #{llama_forward.13} parent=42 // loop_pre_header
                  _
                $region52: #{llama_forward.13} parent=42 // loop_header
                  %s231 = sphi 0, %s235
                  %p232 = scmp.ge.s32.totalorder %s231, 1
                  %s236 = sphi %s199, %s199
                  %s237 = sphi %s192, %s192
                $region53: #{llama_forward.13} parent=42 // loop_header_branch
                  %234 = sbr.rel (%p232) target = $region57
                $region54: #{llama_forward.13} parent=42 // loop_body
                  %v238 = vld [vmem:[%s236] sm:$0xf]
                  %239 = vst [vmem:[%s237] sm:$0xf] %v238
                  %v240 = vld [vmem:[%s236 + $0xc] sm:$0xf]
                  %241 = vst [vmem:[%s237 + $0x4] sm:$0xf] %v240
                $region55: #{llama_forward.13} parent=42 // loop_footer
                  %s235 = sadd.s32 1, %s231
                $region56: #{llama_forward.13} parent=42 // loop_footer_branch
                  %230 = sbr.rel target = $region52
                $region57: #{llama_forward.13} parent=42 // loop_exit
                  _
              $region43: #{llama_forward.13} parent=27 // pred_fallthru
                _
            $region28: #{llama_forward.13} parent=23 // pred_fallthru
              _
            // Predicated region
            $region29: #{llama_forward.13} parent=23 // pred_check
              _
            $region30: #{llama_forward.13} parent=23 // pred_check_branch
              %205 = sbr.rel (0) target = $region32
            $region31: #{llama_forward.13} parent=23 // pred_region
              loop: start=0, step=1, limit=1
              $region33: #{llama_forward.13} parent=31 // loop_pre_header
                _
              $region34: #{llama_forward.13} parent=31 // loop_header
                %s208 = sphi 0, %s212
                %p209 = scmp.ge.s32.totalorder %s208, 1
                %s213 = sphi %s199, %s199
                %s214 = sphi %s192, %s192
              $region35: #{llama_forward.13} parent=31 // loop_header_branch
                %211 = sbr.rel (%p209) target = $region39
              $region36: #{llama_forward.13} parent=31 // loop_body
                %v215 = vld [vmem:[%s213] sm:$0xf]
                %216 = vst [vmem:[%s214] sm:$0xf] %v215
                %v217 = vld [vmem:[%s213 + $0xc] sm:$0xf]
                %218 = vst [vmem:[%s214 + $0x4] sm:$0xf] %v217
              $region37: #{llama_forward.13} parent=31 // loop_footer
                %s212 = sadd.s32 1, %s208
              $region38: #{llama_forward.13} parent=31 // loop_footer_branch
                %207 = sbr.rel target = $region34
              $region39: #{llama_forward.13} parent=31 // loop_exit
                _
            $region32: #{llama_forward.13} parent=23 // pred_fallthru
              _
          $region24: #{llama_forward.13} parent=19 // pred_fallthru
            _
          %242 = vnop
        $region20: #{llama_forward.13} parent=15 // pred_fallthru
          _
        // Predicated region
        $region58: #{llama_forward.13} parent=15 // pred_check
          %p243 = pneg %p95
        $region59: #{llama_forward.13} parent=15 // pred_check_branch
          %245 = sbr.rel (%p243) target = $region61
        $region60: #{llama_forward.13} parent=15 // pred_region
          %s246 = sand.u32 %s85, 1
          %s247 = sand.u32 %s85, 1
          %s248 = smul.addr %s247, 8
          %s249 = scalar_lea.vmem [#allocation6], %s248
          %p250 = scmp.lt.s32.totalorder %s19, %s18
          %s251 = scalar_select %p250, %s19, %s18
          %s252 = sadd.s32 %s17, 1
          %s253 = smul.u32 2, %s251
          %s254 = smul.addr %s253, 3
          %s255 = sadd.s32 %s252, %s254
          %s256 = smul.addr %s16, 6
          %s257 = sadd.s32 %s255, %s256
          %s258 = smul.addr %s257, 4
          %s259 = scalar_lea.vmem %s1, %s258
          // Predicated region
          $region62: #{llama_forward.13} parent=60 // pred_check
            _
          $region63: #{llama_forward.13} parent=60 // pred_check_branch
            %261 = sbr.rel (0) target = $region65
          $region64: #{llama_forward.13} parent=60 // pred_region
            // Predicated region
            $region66: #{llama_forward.13} parent=64 // pred_check
              _
            $region67: #{llama_forward.13} parent=64 // pred_check_branch
              %263 = sbr.rel target = $region69
            $region68: #{llama_forward.13} parent=64 // pred_region
              // Predicated region
              $region81: #{llama_forward.13} parent=68 // pred_check
                _
              $region82: #{llama_forward.13} parent=68 // pred_check_branch
                %280 = sbr.rel (0) target = $region84
              $region83: #{llama_forward.13} parent=68 // pred_region
                loop: start=0, step=1, limit=1
                $region85: #{llama_forward.13} parent=83 // loop_pre_header
                  _
                $region86: #{llama_forward.13} parent=83 // loop_header
                  %s282 = sphi 0, %s286
                  %p283 = scmp.ge.s32.totalorder %s282, 1
                  %s287 = sphi %s259, %s259
                  %s288 = sphi %s249, %s249
                $region87: #{llama_forward.13} parent=83 // loop_header_branch
                  %285 = sbr.rel (%p283) target = $region91
                $region88: #{llama_forward.13} parent=83 // loop_body
                  _
                $region89: #{llama_forward.13} parent=83 // loop_footer
                  %s286 = sadd.s32 1, %s282
                $region90: #{llama_forward.13} parent=83 // loop_footer_branch
                  %281 = sbr.rel target = $region86
                $region91: #{llama_forward.13} parent=83 // loop_exit
                  _
                loop: start=0, step=1, limit=1
                $region92: #{llama_forward.13} parent=83 // loop_pre_header
                  _
                $region93: #{llama_forward.13} parent=83 // loop_header
                  %s291 = sphi 0, %s295
                  %p292 = scmp.ge.s32.totalorder %s291, 1
                  %s296 = sphi %s259, %s259
                  %s297 = sphi %s249, %s249
                $region94: #{llama_forward.13} parent=83 // loop_header_branch
                  %294 = sbr.rel (%p292) target = $region98
                $region95: #{llama_forward.13} parent=83 // loop_body
                  %v298 = vld [vmem:[%s296] sm:$0xf]
                  %299 = vst [vmem:[%s297] sm:$0xf] %v298
                  %v300 = vld [vmem:[%s296 + $0xc] sm:$0xf]
                  %301 = vst [vmem:[%s297 + $0x4] sm:$0xf] %v300
                $region96: #{llama_forward.13} parent=83 // loop_footer
                  %s295 = sadd.s32 1, %s291
                $region97: #{llama_forward.13} parent=83 // loop_footer_branch
                  %290 = sbr.rel target = $region93
                $region98: #{llama_forward.13} parent=83 // loop_exit
                  _
              $region84: #{llama_forward.13} parent=68 // pred_fallthru
                _
            $region69: #{llama_forward.13} parent=64 // pred_fallthru
              _
            // Predicated region
            $region70: #{llama_forward.13} parent=64 // pred_check
              _
            $region71: #{llama_forward.13} parent=64 // pred_check_branch
              %265 = sbr.rel (0) target = $region73
            $region72: #{llama_forward.13} parent=64 // pred_region
              loop: start=0, step=1, limit=1
              $region74: #{llama_forward.13} parent=72 // loop_pre_header
                _
              $region75: #{llama_forward.13} parent=72 // loop_header
                %s268 = sphi 0, %s272
                %p269 = scmp.ge.s32.totalorder %s268, 1
                %s273 = sphi %s259, %s259
                %s274 = sphi %s249, %s249
              $region76: #{llama_forward.13} parent=72 // loop_header_branch
                %271 = sbr.rel (%p269) target = $region80
              $region77: #{llama_forward.13} parent=72 // loop_body
                %v275 = vld [vmem:[%s273] sm:$0xf]
                %276 = vst [vmem:[%s274] sm:$0xf] %v275
                %v277 = vld [vmem:[%s273 + $0xc] sm:$0xf]
                %278 = vst [vmem:[%s274 + $0x4] sm:$0xf] %v277
              $region78: #{llama_forward.13} parent=72 // loop_footer
                %s272 = sadd.s32 1, %s268
              $region79: #{llama_forward.13} parent=72 // loop_footer_branch
                %267 = sbr.rel target = $region75
              $region80: #{llama_forward.13} parent=72 // loop_exit
                _
            $region73: #{llama_forward.13} parent=64 // pred_fallthru
              _
          $region65: #{llama_forward.13} parent=60 // pred_fallthru
            _
          %302 = vnop
        $region61: #{llama_forward.13} parent=15 // pred_fallthru
          _
        // Predicated region
        $region99: #{llama_forward.13} parent=15 // pred_check
          %p303 = pneg %p131
        $region100: #{llama_forward.13} parent=15 // pred_check_branch
          %305 = sbr.rel (%p303) target = $region102
        $region101: #{llama_forward.13} parent=15 // pred_region
          %s306 = sand.u32 %s121, 1
          %s307 = sand.u32 %s121, 1
          %s308 = smul.addr %s307, 8
          %s309 = scalar_lea.vmem [#allocation7], %s308
          %p310 = scmp.lt.s32.totalorder %s19, %s18
          %s311 = scalar_select %p310, %s19, %s18
          %s312 = sadd.s32 %s17, 2
          %s313 = smul.u32 2, %s311
          %s314 = smul.addr %s313, 3
          %s315 = sadd.s32 %s312, %s314
          %s316 = smul.addr %s16, 6
          %s317 = sadd.s32 %s315, %s316
          %s318 = smul.addr %s317, 4
          %s319 = scalar_lea.vmem %s2, %s318
          // Predicated region
          $region103: #{llama_forward.13} parent=101 // pred_check
            _
          $region104: #{llama_forward.13} parent=101 // pred_check_branch
            %321 = sbr.rel (0) target = $region106
          $region105: #{llama_forward.13} parent=101 // pred_region
            // Predicated region
            $region107: #{llama_forward.13} parent=105 // pred_check
              _
            $region108: #{llama_forward.13} parent=105 // pred_check_branch
              %323 = sbr.rel target = $region110
            $region109: #{llama_forward.13} parent=105 // pred_region
              // Predicated region
              $region122: #{llama_forward.13} parent=109 // pred_check
                _
              $region123: #{llama_forward.13} parent=109 // pred_check_branch
                %340 = sbr.rel (0) target = $region125
              $region124: #{llama_forward.13} parent=109 // pred_region
                loop: start=0, step=1, limit=1
                $region126: #{llama_forward.13} parent=124 // loop_pre_header
                  _
                $region127: #{llama_forward.13} parent=124 // loop_header
                  %s342 = sphi 0, %s346
                  %p343 = scmp.ge.s32.totalorder %s342, 1
                  %s347 = sphi %s319, %s319
                  %s348 = sphi %s309, %s309
                $region128: #{llama_forward.13} parent=124 // loop_header_branch
                  %345 = sbr.rel (%p343) target = $region132
                $region129: #{llama_forward.13} parent=124 // loop_body
                  _
                $region130: #{llama_forward.13} parent=124 // loop_footer
                  %s346 = sadd.s32 1, %s342
                $region131: #{llama_forward.13} parent=124 // loop_footer_branch
                  %341 = sbr.rel target = $region127
                $region132: #{llama_forward.13} parent=124 // loop_exit
                  _
                loop: start=0, step=1, limit=1
                $region133: #{llama_forward.13} parent=124 // loop_pre_header
                  _
                $region134: #{llama_forward.13} parent=124 // loop_header
                  %s351 = sphi 0, %s355
                  %p352 = scmp.ge.s32.totalorder %s351, 1
                  %s356 = sphi %s319, %s319
                  %s357 = sphi %s309, %s309
                $region135: #{llama_forward.13} parent=124 // loop_header_branch
                  %354 = sbr.rel (%p352) target = $region139
                $region136: #{llama_forward.13} parent=124 // loop_body
                  %v358 = vld [vmem:[%s356] sm:$0xf]
                  %359 = vst [vmem:[%s357] sm:$0xf] %v358
                  %v360 = vld [vmem:[%s356 + $0xc] sm:$0xf]
                  %361 = vst [vmem:[%s357 + $0x4] sm:$0xf] %v360
                $region137: #{llama_forward.13} parent=124 // loop_footer
                  %s355 = sadd.s32 1, %s351
                $region138: #{llama_forward.13} parent=124 // loop_footer_branch
                  %350 = sbr.rel target = $region134
                $region139: #{llama_forward.13} parent=124 // loop_exit
                  _
              $region125: #{llama_forward.13} parent=109 // pred_fallthru
                _
            $region110: #{llama_forward.13} parent=105 // pred_fallthru
              _
            // Predicated region
            $region111: #{llama_forward.13} parent=105 // pred_check
              _
            $region112: #{llama_forward.13} parent=105 // pred_check_branch
              %325 = sbr.rel (0) target = $region114
            $region113: #{llama_forward.13} parent=105 // pred_region
              loop: start=0, step=1, limit=1
              $region115: #{llama_forward.13} parent=113 // loop_pre_header
                _
              $region116: #{llama_forward.13} parent=113 // loop_header
                %s328 = sphi 0, %s332
                %p329 = scmp.ge.s32.totalorder %s328, 1
                %s333 = sphi %s319, %s319
                %s334 = sphi %s309, %s309
              $region117: #{llama_forward.13} parent=113 // loop_header_branch
                %331 = sbr.rel (%p329) target = $region121
              $region118: #{llama_forward.13} parent=113 // loop_body
                %v335 = vld [vmem:[%s333] sm:$0xf]
                %336 = vst [vmem:[%s334] sm:$0xf] %v335
                %v337 = vld [vmem:[%s333 + $0xc] sm:$0xf]
                %338 = vst [vmem:[%s334 + $0x4] sm:$0xf] %v337
              $region119: #{llama_forward.13} parent=113 // loop_footer
                %s332 = sadd.s32 1, %s328
              $region120: #{llama_forward.13} parent=113 // loop_footer_branch
                %327 = sbr.rel target = $region116
              $region121: #{llama_forward.13} parent=113 // loop_exit
                _
            $region114: #{llama_forward.13} parent=105 // pred_fallthru
              _
          $region106: #{llama_forward.13} parent=101 // pred_fallthru
            _
          %362 = vnop
        $region102: #{llama_forward.13} parent=15 // pred_fallthru
          _
      $region16: #{llama_forward.13} parent=5 // pred_fallthru
        _
      %p363 = scmp.le.s32.totalorder 1, %s9
      %p364 = scmp.lt.s32.totalorder %s9, 3
      %p365 = pnand %p363, %p364
      %p366 = pneg %p365
      // Predicated region
      $region140: #{llama_forward.13} parent=5 // pred_check
        _
      $region141: #{llama_forward.13} parent=5 // pred_check_branch
        %368 = sbr.rel (%p365) target = $region143
      $region142: #{llama_forward.13} parent=5 // pred_region
        %s369 = ssub.s32 %s9, 1
        %s370 = sand.u32 %s52, 1
        %s371 = sand.u32 %s52, 1
        %s372 = smul.addr %s371, 8
        %s373 = scalar_lea.vmem [#allocation5], %s372
        // Predicated region
        $region144: #{llama_forward.13} parent=142 // pred_check
          %p374 = pneg %p65
        $region145: #{llama_forward.13} parent=142 // pred_check_branch
          %376 = sbr.rel (%p374) target = $region147
        $region146: #{llama_forward.13} parent=142 // pred_region
          _
        $region147: #{llama_forward.13} parent=142 // pred_fallthru
          _
        %s377 = sand.u32 %s88, 1
        %s378 = sand.u32 %s88, 1
        %s379 = smul.addr %s378, 8
        %s380 = scalar_lea.vmem [#allocation6], %s379
        // Predicated region
        $region148: #{llama_forward.13} parent=142 // pred_check
          %p381 = pneg %p101
        $region149: #{llama_forward.13} parent=142 // pred_check_branch
          %383 = sbr.rel (%p381) target = $region151
        $region150: #{llama_forward.13} parent=142 // pred_region
          _
        $region151: #{llama_forward.13} parent=142 // pred_fallthru
          _
        %s384 = sand.u32 %s124, 1
        %s385 = sand.u32 %s124, 1
        %s386 = smul.addr %s385, 8
        %s387 = scalar_lea.vmem [#allocation7], %s386
        // Predicated region
        $region152: #{llama_forward.13} parent=142 // pred_check
          %p388 = pneg %p137
        $region153: #{llama_forward.13} parent=142 // pred_check_branch
          %390 = sbr.rel (%p388) target = $region155
        $region154: #{llama_forward.13} parent=142 // pred_region
          _
        $region155: #{llama_forward.13} parent=142 // pred_fallthru
          _
        %s391 = sand.u32 %s52, 1
        %s392 = sand.u32 %s52, 1
        %s393 = smul.addr %s392, 8
        %s394 = scalar_lea.vmem [#allocation5], %s393
        %p395 = pneg %p65
        %p396 = pneg %p62
        %s397 = sand.u32 %s88, 1
        %s398 = sand.u32 %s88, 1
        %s399 = smul.addr %s398, 8
        %s400 = scalar_lea.vmem [#allocation6], %s399
        %p401 = pneg %p101
        %p402 = pneg %p98
        %s403 = sand.u32 %s124, 1
        %s404 = sand.u32 %s124, 1
        %s405 = smul.addr %s404, 8
        %s406 = scalar_lea.vmem [#allocation7], %s405
        %p407 = pneg %p137
        %p408 = pneg %p134
        %p409 = pneg %p167
        %p410 = pneg %p164
        %s411 = smul.u32 2, %s22
        %p412 = scmp.lt.s32.totalorder %s20, 1
        %s413 = scalar_select %p412, %s20, 1
        %p414 = scmp.lt.s32.totalorder %s411, 1
        %s415 = scalar_select %p414, %s411, 1
        %p416 = scmp.lt.s32.totalorder %s21, 0
        %s417 = scalar_select %p416, %s21, 0
        %s418 = sadd.s32 %s417, %s415
        %s419 = smul.addr %s413, 2
        %s420 = sadd.s32 %s418, %s419
        %s421 = smul.addr %s420, 4
        %s422 = scalar_lea.vmem %s3, %s421
        %s423 = smul.u32 2, %s22
        %p424 = scmp.lt.s32.totalorder %s23, %s22
        %s425 = scalar_select %p424, %s23, %s22
        %s426 = sadd.s32 %s21, 1
        %s427 = smul.u32 2, %s425
        %p428 = scmp.lt.s32.totalorder %s23, %s22
        %s429 = scalar_select %p428, %s23, %s22
        %s430 = sadd.s32 %s21, 2
        %s431 = smul.u32 2, %s429
        %s432 = smul.u32 2, %s22
        %p433 = scmp.lt.s32.totalorder %s20, 1
        %s434 = scalar_select %p433, %s20, 1
        %p435 = scmp.lt.s32.totalorder %s432, 1
        %s436 = scalar_select %p435, %s432, 1
        %p437 = scmp.lt.s32.totalorder %s21, 0
        %s438 = scalar_select %p437, %s21, 0
        %s439 = sadd.s32 %s438, %s436
        %s440 = smul.addr %s434, 2
        %s441 = sadd.s32 %s439, %s440
        %s442 = smul.addr %s441, 4
        %s443 = scalar_lea.vmem %s3, %s442
        %s444 = smul.u32 2, %s22
        %p446 = scmp.eq.s32.totalorder %s23, 0
        // Predicated region
        $region156: #{llama_forward.13} parent=142 // pred_check
          %p447 = pneg %p446
        $region157: #{llama_forward.13} parent=142 // pred_check_branch
          %449 = sbr.rel (%p447) target = $region159
        $region158: #{llama_forward.13} parent=142 // pred_region
          %vm450 = vcmask 31744
          %451 = vst.msk [vmem:[#allocation2] sm:$0xff] %vm450, -inf
          %452 = vst.msk [vmem:[#allocation2 + $0x8] sm:$0xff] %vm450, -inf
          %453 = vst.msk [vmem:[#allocation3] sm:$0xff] %vm450, 0.0
          %454 = vst.msk [vmem:[#allocation3 + $0x8] sm:$0xff] %vm450, 0.0
          %455 = vst [vmem:[#allocation4] sm:$0xff] 0.0
          %456 = vst [vmem:[#allocation4 + $0x8] sm:$0xff] 0.0
        $region159: #{llama_forward.13} parent=142 // pred_fallthru
          _
        %p457 = scmp.lt.s32.totalorder %s23, %s22
        // Predicated region
        $region160: #{llama_forward.13} parent=142 // pred_check
          %p458 = pneg %p457
        $region161: #{llama_forward.13} parent=142 // pred_check_branch
          %460 = sbr.rel (%p458) target = $region163
        $region162: #{llama_forward.13} parent=142 // pred_region
          %v461 = vld [vmem:[%s373] sm:$0xf]
          %v462 = vld [vmem:[%s373 + $0x4] sm:$0xf]
          %v463 = vld [vmem:[%s380] sm:$0xf]
          %v464 = vld [vmem:[%s380 + $0x4] sm:$0xf]
          %v467 = vunpack.c.l.b16 %v461
          %v468 = vunpack.c.l.b16 %v462
          %v469 = vpack.c.b16 %v468, %v467
          %v472 = vunpack.c.l.b16 %v463
          %v473 = vunpack.c.l.b16 %v464
          %v474 = vpack.c.b16 %v473, %v472
          %vm475 = vcmask 261120
          %v477 = vsel %vm475, %v469, 0
          %v480 = vsel %vm475, %v474, 0
          %482 = vmatprep.subr.bf16.mxu0 0
          %483 = vmatpush1.bf16.xpose.msra.mxu0 %v480
          %484 = vmatprep.subr.bf16.mxu0 0
          %485 = vmatpush1.bf16.xpose.msra.mxu0 0
          %486 = vmatprep.subr.bf16.mxu0 0
          %487 = vmatpush1.bf16.xpose.msra.mxu0 0
          %488 = vmatprep.subr.bf16.mxu0 0
          %489 = vmatpush1.bf16.xpose.msra.mxu0 0
          %490 = vmatprep.subr.bf16.mxu0 0
          %491 = vmatpush1.bf16.xpose.msra.mxu0 0
          %492 = vmatprep.subr.bf16.mxu0 0
          %493 = vmatpush1.bf16.xpose.msra.mxu0 0
          %494 = vmatprep.subr.bf16.mxu0 0
          %495 = vmatpush1.bf16.xpose.msra.mxu0 0
          %496 = vmatprep.subr.bf16.mxu0 0
          %497 = vmatpush1.bf16.xpose.msra.mxu0 0
          %498 = vmatprep.subr.bf16.mxu0 0
          %499 = vmatpush1.bf16.xpose.msra.mxu0 0
          %500 = vmatprep.subr.bf16.mxu0 0
          %501 = vmatpush1.bf16.xpose.msra.mxu0 0
          %502 = vmatprep.subr.bf16.mxu0 0
          %503 = vmatpush1.bf16.xpose.msra.mxu0 0
          %504 = vmatprep.subr.bf16.mxu0 0
          %505 = vmatpush1.bf16.xpose.msra.mxu0 0
          %506 = vmatprep.subr.bf16.mxu0 0
          %507 = vmatpush1.bf16.xpose.msra.mxu0 0
          %508 = vmatprep.subr.bf16.mxu0 0
          %509 = vmatpush1.bf16.xpose.msra.mxu0 0
          %510 = vmatprep.subr.bf16.mxu0 0
          %511 = vmatpush1.bf16.xpose.msra.mxu0 0
          %512 = vmatprep.subr.bf16.mxu0 0
          %513 = vmatpush1.bf16.xpose.msra.mxu0 0
          %514 = vmatprep.mubr.bf16.mxu0 0
          %515 = vmatmul.mubr.bf16.gmra.mrb[0].mxu0 %v477
          %v516 = vpop.f32.mrb[0].mxu0
          %v517 = vadd.f32 0.0, %v516
          %v518 = vpop.f32.mrb[0].mxu0
          %v519 = vpop.f32.mrb[0].mxu0
          %v520 = vadd.f32 0.0, %v519
          %v521 = vpop.f32.mrb[0].mxu0
          %522 = vdwg.mxu0
          %v523 = vld [vmem:[#allocation2] sm:$0xff]
          %v524 = vld [vmem:[#allocation2 + $0x8] sm:$0xff]
          %vm525 = vcmask 130048
          %v526 = vsel %vm525, %v517, -inf
          %527 = vmax.xlane.f32.xlu0 %v526
          %v528 = vpop.xlane.xlu0 %527
          %v529 = vsel %vm525, %v520, -inf
          %530 = vmax.xlane.f32.xlu0 %v529
          %v531 = vpop.xlane.xlu0 %530
          %v532 = vmax.f32 %v523, %v528
          %v533 = vmax.f32 %v524, %v531
          %v534 = vsub.f32 %v523, %v532
          %v535 = vsub.f32 %v524, %v533
          %v536 = vmul.f32 %v534, 1.442695
          %v537 = vpow.pop %v536
          %v538 = vmul.f32 %v535, 1.442695
          %v539 = vpow.pop %v538
          %541 = vset.pattern.permute.xlu0 0
          %542 = vperm.xlu0 %541, %v532
          %v543 = vpop.permute.xlu0 %542
          %546 = vset.pattern.permute.xlu0 0
          %547 = vperm.xlu0 %546, %v533
          %v548 = vpop.permute.xlu0 %547
          %v550 = vsub.f32 %v517, %v543
          %v551 = vsub.f32 %v520, %v548
          %v552 = vmul.f32 %v550, 1.442695
          %v553 = vpow.pop %v552
          %v554 = vmul.f32 %v551, 1.442695
          %v555 = vpow.pop %v554
          %v556 = vld [vmem:[#allocation3] sm:$0xff]
          %v557 = vld [vmem:[#allocation3 + $0x8] sm:$0xff]
          %v558 = vmul.f32 %v537, %v556
          %v559 = vmul.f32 %v539, %v557
          %v560 = vsel %vm525, %v553, 0.0
          %561 = vadd.xlane.f32.xlu0 %v560
          %v562 = vpop.xlane.xlu0 %561
          %v563 = vsel %vm525, %v555, 0.0
          %564 = vadd.xlane.f32.xlu0 %v563
          %v565 = vpop.xlane.xlu0 %564
          %v566 = vadd.f32 %v558, %v562
          %v567 = vadd.f32 %v559, %v565
          %vm568 = vcmask 7168
          %569 = vst.msk [vmem:[#allocation3] sm:$0xff] %vm568, %v566
          %570 = vst.msk [vmem:[#allocation3 + $0x8] sm:$0xff] %vm568, %v567
          %v571 = vld [vmem:[#allocation4] sm:$0xff]
          %v572 = vld [vmem:[#allocation4 + $0x8] sm:$0xff]
          %574 = vset.pattern.permute.xlu0 0
          %575 = vperm.xlu0 %574, %v537
          %v576 = vpop.permute.xlu0 %575
          %579 = vset.pattern.permute.xlu0 0
          %580 = vperm.xlu0 %579, %v539
          %v581 = vpop.permute.xlu0 %580
          %v583 = vmul.f32 %v576, %v571
          %v584 = vmul.f32 %v581, %v572
          %v585 = vpack.c.bf16 %v555, %v553
          %v586 = vld [vmem:[%s387] sm:$0xf]
          %v587 = vld [vmem:[%s387 + $0x4] sm:$0xf]
          %v590 = vunpack.c.l.b16 %v586
          %v591 = vunpack.c.l.b16 %v587
          %v592 = vpack.c.b16 %v591, %v590
          %v595 = vsel %vm525, %v585, 0
          %597 = vmatprep.subr.bf16.mxu0 0
          %598 = vmatpush1.bf16.msra.mxu0 %v592
          %599 = vmatprep.subr.bf16.mxu0 0
          %600 = vmatpush1.bf16.msra.mxu0 0
          %601 = vmatprep.subr.bf16.mxu0 0
          %602 = vmatpush1.bf16.msra.mxu0 0
          %603 = vmatprep.subr.bf16.mxu0 0
          %604 = vmatpush1.bf16.msra.mxu0 0
          %605 = vmatprep.subr.bf16.mxu0 0
          %606 = vmatpush1.bf16.msra.mxu0 0
          %607 = vmatprep.subr.bf16.mxu0 0
          %608 = vmatpush1.bf16.msra.mxu0 0
          %609 = vmatprep.subr.bf16.mxu0 0
          %610 = vmatpush1.bf16.msra.mxu0 0
          %611 = vmatprep.subr.bf16.mxu0 0
          %612 = vmatpush1.bf16.msra.mxu0 0
          %613 = vmatprep.subr.bf16.mxu0 0
          %614 = vmatpush1.bf16.msra.mxu0 0
          %615 = vmatprep.subr.bf16.mxu0 0
          %616 = vmatpush1.bf16.msra.mxu0 0
          %617 = vmatprep.subr.bf16.mxu0 0
          %618 = vmatpush1.bf16.msra.mxu0 0
          %619 = vmatprep.subr.bf16.mxu0 0
          %620 = vmatpush1.bf16.msra.mxu0 0
          %621 = vmatprep.subr.bf16.mxu0 0
          %622 = vmatpush1.bf16.msra.mxu0 0
          %623 = vmatprep.subr.bf16.mxu0 0
          %624 = vmatpush1.bf16.msra.mxu0 0
          %625 = vmatprep.subr.bf16.mxu0 0
          %626 = vmatpush1.bf16.msra.mxu0 0
          %627 = vmatprep.subr.bf16.mxu0 0
          %628 = vmatpush1.bf16.msra.mxu0 0
          %629 = vmatprep.mubr.bf16.mxu0 0
          %630 = vmatmul.mubr.bf16.gmra.mrb[0].mxu0 %v595
          %v631 = vpop.f32.mrb[0].mxu0
          %v632 = vadd.f32 0.0, %v631
          %v633 = vpop.f32.mrb[0].mxu0
          %v634 = vpop.f32.mrb[0].mxu0
          %v635 = vadd.f32 0.0, %v634
          %v636 = vpop.f32.mrb[0].mxu0
          %637 = vdwg.mxu0
          %v638 = vadd.f32 %v583, %v632
          %v639 = vadd.f32 %v584, %v635
          %640 = vst.msk [vmem:[#allocation4] sm:$0xff] %vm475, %v638
          %641 = vst.msk [vmem:[#allocation4 + $0x8] sm:$0xff] %vm475, %v639
          %642 = vst.msk [vmem:[#allocation2] sm:$0xff] %vm568, %v532
          %643 = vst.msk [vmem:[#allocation2 + $0x8] sm:$0xff] %vm568, %v533
          %v644 = vld [vmem:[%s373] sm:$0xf]
          %v645 = vld [vmem:[%s373 + $0x4] sm:$0xf]
          %v646 = vld [vmem:[%s380] sm:$0xf]
          %v647 = vld [vmem:[%s380 + $0x4] sm:$0xf]
          %v650 = vunpack.c.l.b16 %v644
          %v651 = vunpack.c.l.b16 %v645
          %v652 = vpack.c.b16 %v651, %v650
          %653 = vrot.lane.b32.xlu0 %v652, 96
          %v654 = vpop.permute.xlu0 %653
          %v657 = vunpack.c.l.b16 %v646
          %v658 = vunpack.c.l.b16 %v647
          %v659 = vpack.c.b16 %v658, %v657
          %660 = vrot.lane.b32.xlu0 %v659, 96
          %v661 = vpop.permute.xlu0 %660
          %v663 = vsel %vm475, %v654, 0
          %v666 = vsel %vm475, %v661, 0
          %668 = vmatprep.subr.bf16.mxu0 0
          %669 = vmatpush1.bf16.xpose.msra.mxu0 %v666
          %670 = vmatprep.subr.bf16.mxu0 0
          %671 = vmatpush1.bf16.xpose.msra.mxu0 0
          %672 = vmatprep.subr.bf16.mxu0 0
          %673 = vmatpush1.bf16.xpose.msra.mxu0 0
          %674 = vmatprep.subr.bf16.mxu0 0
          %675 = vmatpush1.bf16.xpose.msra.mxu0 0
          %676 = vmatprep.subr.bf16.mxu0 0
          %677 = vmatpush1.bf16.xpose.msra.mxu0 0
          %678 = vmatprep.subr.bf16.mxu0 0
          %679 = vmatpush1.bf16.xpose.msra.mxu0 0
          %680 = vmatprep.subr.bf16.mxu0 0
          %681 = vmatpush1.bf16.xpose.msra.mxu0 0
          %682 = vmatprep.subr.bf16.mxu0 0
          %683 = vmatpush1.bf16.xpose.msra.mxu0 0
          %684 = vmatprep.subr.bf16.mxu0 0
          %685 = vmatpush1.bf16.xpose.msra.mxu0 0
          %686 = vmatprep.subr.bf16.mxu0 0
          %687 = vmatpush1.bf16.xpose.msra.mxu0 0
          %688 = vmatprep.subr.bf16.mxu0 0
          %689 = vmatpush1.bf16.xpose.msra.mxu0 0
          %690 = vmatprep.subr.bf16.mxu0 0
          %691 = vmatpush1.bf16.xpose.msra.mxu0 0
          %692 = vmatprep.subr.bf16.mxu0 0
          %693 = vmatpush1.bf16.xpose.msra.mxu0 0
          %694 = vmatprep.subr.bf16.mxu0 0
          %695 = vmatpush1.bf16.xpose.msra.mxu0 0
          %696 = vmatprep.subr.bf16.mxu0 0
          %697 = vmatpush1.bf16.xpose.msra.mxu0 0
          %698 = vmatprep.subr.bf16.mxu0 0
          %699 = vmatpush1.bf16.xpose.msra.mxu0 0
          %700 = vmatprep.mubr.bf16.mxu0 0
          %701 = vmatmul.mubr.bf16.gmra.mrb[0].mxu0 %v663
          %v702 = vpop.f32.mrb[0].mxu0
          %v703 = vadd.f32 0.0, %v702
          %v704 = vpop.f32.mrb[0].mxu0
          %v705 = vpop.f32.mrb[0].mxu0
          %v706 = vadd.f32 0.0, %v705
          %v707 = vpop.f32.mrb[0].mxu0
          %708 = vdwg.mxu0
          %v709 = vld [vmem:[#allocation2] sm:$0xff]
          %v710 = vld [vmem:[#allocation2 + $0x8] sm:$0xff]
          %v711 = vsel %vm525, %v703, -inf
          %712 = vmax.xlane.f32.xlu0 %v711
          %v713 = vpop.xlane.xlu0 %712
          %v714 = vsel %vm525, %v706, -inf
          %715 = vmax.xlane.f32.xlu0 %v714
          %v716 = vpop.xlane.xlu0 %715
          %v717 = vmax.f32 %v709, %v713
          %v718 = vmax.f32 %v710, %v716
          %v719 = vsub.f32 %v709, %v717
          %v720 = vsub.f32 %v710, %v718
          %v721 = vmul.f32 %v719, 1.442695
          %v722 = vpow.pop %v721
          %v723 = vmul.f32 %v720, 1.442695
          %v724 = vpow.pop %v723
          %726 = vset.pattern.permute.xlu0 1
          %727 = vperm.xlu0 %726, %v717
          %v728 = vpop.permute.xlu0 %727
          %731 = vset.pattern.permute.xlu0 1
          %732 = vperm.xlu0 %731, %v718
          %v733 = vpop.permute.xlu0 %732
          %v735 = vsub.f32 %v703, %v728
          %v736 = vsub.f32 %v706, %v733
          %v737 = vmul.f32 %v735, 1.442695
          %v738 = vpow.pop %v737
          %v739 = vmul.f32 %v736, 1.442695
          %v740 = vpow.pop %v739
          %v741 = vld [vmem:[#allocation3] sm:$0xff]
          %v742 = vld [vmem:[#allocation3 + $0x8] sm:$0xff]
          %v743 = vmul.f32 %v722, %v741
          %v744 = vmul.f32 %v724, %v742
          %v745 = vsel %vm525, %v738, 0.0
          %746 = vadd.xlane.f32.xlu0 %v745
          %v747 = vpop.xlane.xlu0 %746
          %v748 = vsel %vm525, %v740, 0.0
          %749 = vadd.xlane.f32.xlu0 %v748
          %v750 = vpop.xlane.xlu0 %749
          %v751 = vadd.f32 %v743, %v747
          %v752 = vadd.f32 %v744, %v750
          %vm753 = vcmask 15368
          %754 = vst.msk [vmem:[#allocation3] sm:$0xff] %vm753, %v751
          %755 = vst.msk [vmem:[#allocation3 + $0x8] sm:$0xff] %vm753, %v752
          %v756 = vld [vmem:[#allocation4] sm:$0xff]
          %v757 = vld [vmem:[#allocation4 + $0x8] sm:$0xff]
          %759 = vset.pattern.permute.xlu0 1
          %760 = vperm.xlu0 %759, %v722
          %v761 = vpop.permute.xlu0 %760
          %764 = vset.pattern.permute.xlu0 1
          %765 = vperm.xlu0 %764, %v724
          %v766 = vpop.permute.xlu0 %765
          %v768 = vmul.f32 %v761, %v756
          %v769 = vmul.f32 %v766, %v757
          %v770 = vpack.c.bf16 %v740, %v738
          %v771 = vld [vmem:[%s387] sm:$0xf]
          %v772 = vld [vmem:[%s387 + $0x4] sm:$0xf]
          %v775 = vunpack.c.l.b16 %v771
          %v776 = vunpack.c.l.b16 %v772
          %v777 = vpack.c.b16 %v776, %v775
          %778 = vrot.lane.b32.xlu0 %v777, 96
          %v779 = vpop.permute.xlu0 %778
          %v782 = vsel %vm525, %v770, 0
          %784 = vmatprep.subr.bf16.mxu0 0
          %785 = vmatpush1.bf16.msra.mxu0 %v779
          %786 = vmatprep.subr.bf16.mxu0 0
          %787 = vmatpush1.bf16.msra.mxu0 0
          %788 = vmatprep.subr.bf16.mxu0 0
          %789 = vmatpush1.bf16.msra.mxu0 0
          %790 = vmatprep.subr.bf16.mxu0 0
          %791 = vmatpush1.bf16.msra.mxu0 0
          %792 = vmatprep.subr.bf16.mxu0 0
          %793 = vmatpush1.bf16.msra.mxu0 0
          %794 = vmatprep.subr.bf16.mxu0 0
          %795 = vmatpush1.bf16.msra.mxu0 0
          %796 = vmatprep.subr.bf16.mxu0 0
          %797 = vmatpush1.bf16.msra.mxu0 0
          %798 = vmatprep.subr.bf16.mxu0 0
          %799 = vmatpush1.bf16.msra.mxu0 0
          %800 = vmatprep.subr.bf16.mxu0 0
          %801 = vmatpush1.bf16.msra.mxu0 0
          %802 = vmatprep.subr.bf16.mxu0 0
          %803 = vmatpush1.bf16.msra.mxu0 0
          %804 = vmatprep.subr.bf16.mxu0 0
          %805 = vmatpush1.bf16.msra.mxu0 0
          %806 = vmatprep.subr.bf16.mxu0 0
          %807 = vmatpush1.bf16.msra.mxu0 0
          %808 = vmatprep.subr.bf16.mxu0 0
          %809 = vmatpush1.bf16.msra.mxu0 0
          %810 = vmatprep.subr.bf16.mxu0 0
          %811 = vmatpush1.bf16.msra.mxu0 0
          %812 = vmatprep.subr.bf16.mxu0 0
          %813 = vmatpush1.bf16.msra.mxu0 0
          %814 = vmatprep.subr.bf16.mxu0 0
          %815 = vmatpush1.bf16.msra.mxu0 0
          %816 = vmatprep.mubr.bf16.mxu0 0
          %817 = vmatmul.mubr.bf16.gmra.mrb[0].mxu0 %v782
          %v818 = vpop.f32.mrb[0].mxu0
          %v819 = vadd.f32 0.0, %v818
          %v820 = vpop.f32.mrb[0].mxu0
          %v821 = vpop.f32.mrb[0].mxu0
          %v822 = vadd.f32 0.0, %v821
          %v823 = vpop.f32.mrb[0].mxu0
          %824 = vdwg.mxu0
          %827 = vrot.lane.b32.xlu0 %v819, 32
          %v828 = vpop.permute.xlu0 %827
          %829 = vrot.lane.b32.xlu0 %v822, 32
          %v830 = vpop.permute.xlu0 %829
          %v833 = vadd.f32 %v768, %v828
          %v834 = vadd.f32 %v769, %v830
          %vm835 = vcmask 523520
          %836 = vst.msk [vmem:[#allocation4] sm:$0xff] %vm835, %v833
          %837 = vst.msk [vmem:[#allocation4 + $0x8] sm:$0xff] %vm835, %v834
          %838 = vst.msk [vmem:[#allocation2] sm:$0xff] %vm753, %v717
          %839 = vst.msk [vmem:[#allocation2 + $0x8] sm:$0xff] %vm753, %v718
          %v840 = vld [vmem:[%s373] sm:$0xf]
          %v841 = vld [vmem:[%s373 + $0x4] sm:$0xf]
          %v842 = vld [vmem:[%s380] sm:$0xf]
          %v843 = vld [vmem:[%s380 + $0x4] sm:$0xf]
          %v846 = vunpack.c.l.b16 %v840
          %v847 = vunpack.c.l.b16 %v841
          %v848 = vpack.c.b16 %v847, %v846
          %849 = vrot.lane.b32.xlu0 %v848, 64
          %v850 = vpop.permute.xlu0 %849
          %v853 = vunpack.c.l.b16 %v842
          %v854 = vunpack.c.l.b16 %v843
          %v855 = vpack.c.b16 %v854, %v853
          %856 = vrot.lane.b32.xlu0 %v855, 64
          %v857 = vpop.permute.xlu0 %856
          %v859 = vsel %vm475, %v850, 0
          %v862 = vsel %vm475, %v857, 0
          %864 = vmatprep.subr.bf16.mxu0 0
          %865 = vmatpush1.bf16.xpose.msra.mxu0 %v862
          %866 = vmatprep.subr.bf16.mxu0 0
          %867 = vmatpush1.bf16.xpose.msra.mxu0 0
          %868 = vmatprep.subr.bf16.mxu0 0
          %869 = vmatpush1.bf16.xpose.msra.mxu0 0
          %870 = vmatprep.subr.bf16.mxu0 0
          %871 = vmatpush1.bf16.xpose.msra.mxu0 0
          %872 = vmatprep.subr.bf16.mxu0 0
          %873 = vmatpush1.bf16.xpose.msra.mxu0 0
          %874 = vmatprep.subr.bf16.mxu0 0
          %875 = vmatpush1.bf16.xpose.msra.mxu0 0
          %876 = vmatprep.subr.bf16.mxu0 0
          %877 = vmatpush1.bf16.xpose.msra.mxu0 0
          %878 = vmatprep.subr.bf16.mxu0 0
          %879 = vmatpush1.bf16.xpose.msra.mxu0 0
          %880 = vmatprep.subr.bf16.mxu0 0
          %881 = vmatpush1.bf16.xpose.msra.mxu0 0
          %882 = vmatprep.subr.bf16.mxu0 0
          %883 = vmatpush1.bf16.xpose.msra.mxu0 0
          %884 = vmatprep.subr.bf16.mxu0 0
          %885 = vmatpush1.bf16.xpose.msra.mxu0 0
          %886 = vmatprep.subr.bf16.mxu0 0
          %887 = vmatpush1.bf16.xpose.msra.mxu0 0
          %888 = vmatprep.subr.bf16.mxu0 0
          %889 = vmatpush1.bf16.xpose.msra.mxu0 0
          %890 = vmatprep.subr.bf16.mxu0 0
          %891 = vmatpush1.bf16.xpose.msra.mxu0 0
          %892 = vmatprep.subr.bf16.mxu0 0
          %893 = vmatpush1.bf16.xpose.msra.mxu0 0
          %894 = vmatprep.subr.bf16.mxu0 0
          %895 = vmatpush1.bf16.xpose.msra.mxu0 0
          %896 = vmatprep.mubr.bf16.mxu0 0
          %897 = vmatmul.mubr.bf16.gmra.mrb[0].mxu0 %v859
          %v898 = vpop.f32.mrb[0].mxu0
          %v899 = vadd.f32 0.0, %v898
          %v900 = vpop.f32.mrb[0].mxu0
          %v901 = vpop.f32.mrb[0].mxu0
          %v902 = vadd.f32 0.0, %v901
          %v903 = vpop.f32.mrb[0].mxu0
          %904 = vdwg.mxu0
          %v905 = vld [vmem:[#allocation2] sm:$0xff]
          %v906 = vld [vmem:[#allocation2 + $0x8] sm:$0xff]
          %v907 = vsel %vm525, %v899, -inf
          %908 = vmax.xlane.f32.xlu0 %v907
          %v909 = vpop.xlane.xlu0 %908
          %v910 = vsel %vm525, %v902, -inf
          %911 = vmax.xlane.f32.xlu0 %v910
          %v912 = vpop.xlane.xlu0 %911
          %v913 = vmax.f32 %v905, %v909
          %v914 = vmax.f32 %v906, %v912
          %v915 = vsub.f32 %v905, %v913
          %v916 = vsub.f32 %v906, %v914
          %v917 = vmul.f32 %v915, 1.442695
          %v918 = vpow.pop %v917
          %v919 = vmul.f32 %v916, 1.442695
          %v920 = vpow.pop %v919
          %922 = vset.pattern.permute.xlu0 2
          %923 = vperm.xlu0 %922, %v913
          %v924 = vpop.permute.xlu0 %923
          %927 = vset.pattern.permute.xlu0 2
          %928 = vperm.xlu0 %927, %v914
          %v929 = vpop.permute.xlu0 %928
          %v931 = vsub.f32 %v899, %v924
          %v932 = vsub.f32 %v902, %v929
          %v933 = vmul.f32 %v931, 1.442695
          %v934 = vpow.pop %v933
          %v935 = vmul.f32 %v932, 1.442695
          %v936 = vpow.pop %v935
          %v937 = vld [vmem:[#allocation3] sm:$0xff]
          %v938 = vld [vmem:[#allocation3 + $0x8] sm:$0xff]
          %v939 = vmul.f32 %v918, %v937
          %v940 = vmul.f32 %v920, %v938
          %v941 = vsel %vm525, %v934, 0.0
          %942 = vadd.xlane.f32.xlu0 %v941
          %v943 = vpop.xlane.xlu0 %942
          %v944 = vsel %vm525, %v936, 0.0
          %945 = vadd.xlane.f32.xlu0 %v944
          %v946 = vpop.xlane.xlu0 %945
          %v947 = vadd.f32 %v939, %v943
          %v948 = vadd.f32 %v940, %v946
          %vm949 = vcmask 23568
          %950 = vst.msk [vmem:[#allocation3] sm:$0xff] %vm949, %v947
          %951 = vst.msk [vmem:[#allocation3 + $0x8] sm:$0xff] %vm949, %v948
          %v952 = vld [vmem:[#allocation4] sm:$0xff]
          %v953 = vld [vmem:[#allocation4 + $0x8] sm:$0xff]
          %955 = vset.pattern.permute.xlu0 2
          %956 = vperm.xlu0 %955, %v918
          %v957 = vpop.permute.xlu0 %956
          %960 = vset.pattern.permute.xlu0 2
          %961 = vperm.xlu0 %960, %v920
          %v962 = vpop.permute.xlu0 %961
          %v964 = vmul.f32 %v957, %v952
          %v965 = vmul.f32 %v962, %v953
          %v966 = vpack.c.bf16 %v936, %v934
          %v967 = vld [vmem:[%s387] sm:$0xf]
          %v968 = vld [vmem:[%s387 + $0x4] sm:$0xf]
          %v971 = vunpack.c.l.b16 %v967
          %v972 = vunpack.c.l.b16 %v968
          %v973 = vpack.c.b16 %v972, %v971
          %974 = vrot.lane.b32.xlu0 %v973, 64
          %v975 = vpop.permute.xlu0 %974
          %v978 = vsel %vm525, %v966, 0
          %980 = vmatprep.subr.bf16.mxu0 0
          %981 = vmatpush1.bf16.msra.mxu0 %v975
          %982 = vmatprep.subr.bf16.mxu0 0
          %983 = vmatpush1.bf16.msra.mxu0 0
          %984 = vmatprep.subr.bf16.mxu0 0
          %985 = vmatpush1.bf16.msra.mxu0 0
          %986 = vmatprep.subr.bf16.mxu0 0
          %987 = vmatpush1.bf16.msra.mxu0 0
          %988 = vmatprep.subr.bf16.mxu0 0
          %989 = vmatpush1.bf16.msra.mxu0 0
          %990 = vmatprep.subr.bf16.mxu0 0
          %991 = vmatpush1.bf16.msra.mxu0 0
          %992 = vmatprep.subr.bf16.mxu0 0
          %993 = vmatpush1.bf16.msra.mxu0 0
          %994 = vmatprep.subr.bf16.mxu0 0
          %995 = vmatpush1.bf16.msra.mxu0 0
          %996 = vmatprep.subr.bf16.mxu0 0
          %997 = vmatpush1.bf16.msra.mxu0 0
          %998 = vmatprep.subr.bf16.mxu0 0
          %999 = vmatpush1.bf16.msra.mxu0 0
          %1000 = vmatprep.subr.bf16.mxu0 0
          %1001 = vmatpush1.bf16.msra.mxu0 0
          %1002 = vmatprep.subr.bf16.mxu0 0
          %1003 = vmatpush1.bf16.msra.mxu0 0
          %1004 = vmatprep.subr.bf16.mxu0 0
          %1005 = vmatpush1.bf16.msra.mxu0 0
          %1006 = vmatprep.subr.bf16.mxu0 0
          %1007 = vmatpush1.bf16.msra.mxu0 0
          %1008 = vmatprep.subr.bf16.mxu0 0
          %1009 = vmatpush1.bf16.msra.mxu0 0
          %1010 = vmatprep.subr.bf16.mxu0 0
          %1011 = vmatpush1.bf16.msra.mxu0 0
          %1012 = vmatprep.mubr.bf16.mxu0 0
          %1013 = vmatmul.mubr.bf16.gmra.mrb[0].mxu0 %v978
          %v1014 = vpop.f32.mrb[0].mxu0
          %v1015 = vadd.f32 0.0, %v1014
          %v1016 = vpop.f32.mrb[0].mxu0
          %v1017 = vpop.f32.mrb[0].mxu0
          %v1018 = vadd.f32 0.0, %v1017
          %v1019 = vpop.f32.mrb[0].mxu0
          %1020 = vdwg.mxu0
          %1023 = vrot.lane.b32.xlu0 %v1015, 64
          %v1024 = vpop.permute.xlu0 %1023
          %1025 = vrot.lane.b32.xlu0 %v1018, 64
          %v1026 = vpop.permute.xlu0 %1025
          %v1029 = vadd.f32 %v964, %v1024
          %v1030 = vadd.f32 %v965, %v1026
          %vm1031 = vcmask 785920
          %1032 = vst.msk [vmem:[#allocation4] sm:$0xff] %vm1031, %v1029
          %1033 = vst.msk [vmem:[#allocation4 + $0x8] sm:$0xff] %vm1031, %v1030
          %1034 = vst.msk [vmem:[#allocation2] sm:$0xff] %vm949, %v913
          %1035 = vst.msk [vmem:[#allocation2 + $0x8] sm:$0xff] %vm949, %v914
          %v1036 = vld [vmem:[%s373] sm:$0xf]
          %v1037 = vld [vmem:[%s373 + $0x4] sm:$0xf]
          %v1038 = vld [vmem:[%s380] sm:$0xf]
          %v1039 = vld [vmem:[%s380 + $0x4] sm:$0xf]
          %v1042 = vunpack.c.l.b16 %v1036
          %v1043 = vunpack.c.l.b16 %v1037
          %v1044 = vpack.c.b16 %v1043, %v1042
          %1045 = vrot.lane.b32.xlu0 %v1044, 32
          %v1046 = vpop.permute.xlu0 %1045
          %v1049 = vunpack.c.l.b16 %v1038
          %v1050 = vunpack.c.l.b16 %v1039
          %v1051 = vpack.c.b16 %v1050, %v1049
          %1052 = vrot.lane.b32.xlu0 %v1051, 32
          %v1053 = vpop.permute.xlu0 %1052
          %v1055 = vsel %vm475, %v1046, 0
          %v1058 = vsel %vm475, %v1053, 0
          %1060 = vmatprep.subr.bf16.mxu0 0
          %1061 = vmatpush1.bf16.xpose.msra.mxu0 %v1058
          %1062 = vmatprep.subr.bf16.mxu0 0
          %1063 = vmatpush1.bf16.xpose.msra.mxu0 0
          %1064 = vmatprep.subr.bf16.mxu0 0
          %1065 = vmatpush1.bf16.xpose.msra.mxu0 0
          %1066 = vmatprep.subr.bf16.mxu0 0
          %1067 = vmatpush1.bf16.xpose.msra.mxu0 0
          %1068 = vmatprep.subr.bf16.mxu0 0
          %1069 = vmatpush1.bf16.xpose.msra.mxu0 0
          %1070 = vmatprep.subr.bf16.mxu0 0
          %1071 = vmatpush1.bf16.xpose.msra.mxu0 0
          %1072 = vmatprep.subr.bf16.mxu0 0
          %1073 = vmatpush1.bf16.xpose.msra.mxu0 0
          %1074 = vmatprep.subr.bf16.mxu0 0
          %1075 = vmatpush1.bf16.xpose.msra.mxu0 0
          %1076 = vmatprep.subr.bf16.mxu0 0
          %1077 = vmatpush1.bf16.xpose.msra.mxu0 0
          %1078 = vmatprep.subr.bf16.mxu0 0
          %1079 = vmatpush1.bf16.xpose.msra.mxu0 0
          %1080 = vmatprep.subr.bf16.mxu0 0
          %1081 = vmatpush1.bf16.xpose.msra.mxu0 0
          %1082 = vmatprep.subr.bf16.mxu0 0
          %1083 = vmatpush1.bf16.xpose.msra.mxu0 0
          %1084 = vmatprep.subr.bf16.mxu0 0
          %1085 = vmatpush1.bf16.xpose.msra.mxu0 0
          %1086 = vmatprep.subr.bf16.mxu0 0
          %1087 = vmatpush1.bf16.xpose.msra.mxu0 0
          %1088 = vmatprep.subr.bf16.mxu0 0
          %1089 = vmatpush1.bf16.xpose.msra.mxu0 0
          %1090 = vmatprep.subr.bf16.mxu0 0
          %1091 = vmatpush1.bf16.xpose.msra.mxu0 0
          %1092 = vmatprep.mubr.bf16.mxu0 0
          %1093 = vmatmul.mubr.bf16.gmra.mrb[0].mxu0 %v1055
          %v1094 = vpop.f32.mrb[0].mxu0
          %v1095 = vadd.f32 0.0, %v1094
          %v1096 = vpop.f32.mrb[0].mxu0
          %v1097 = vpop.f32.mrb[0].mxu0
          %v1098 = vadd.f32 0.0, %v1097
          %v1099 = vpop.f32.mrb[0].mxu0
          %1100 = vdwg.mxu0
          %v1101 = vld [vmem:[#allocation2] sm:$0xff]
          %v1102 = vld [vmem:[#allocation2 + $0x8] sm:$0xff]
          %v1103 = vsel %vm525, %v1095, -inf
          %1104 = vmax.xlane.f32.xlu0 %v1103
          %v1105 = vpop.xlane.xlu0 %1104
          %v1106 = vsel %vm525, %v1098, -inf
          %1107 = vmax.xlane.f32.xlu0 %v1106
          %v1108 = vpop.xlane.xlu0 %1107
          %v1109 = vmax.f32 %v1101, %v1105
          %v1110 = vmax.f32 %v1102, %v1108
          %v1111 = vsub.f32 %v1101, %v1109
          %v1112 = vsub.f32 %v1102, %v1110
          %v1113 = vmul.f32 %v1111, 1.442695
          %v1114 = vpow.pop %v1113
          %v1115 = vmul.f32 %v1112, 1.442695
          %v1116 = vpow.pop %v1115
          %1118 = vset.pattern.permute.xlu0 3
          %1119 = vperm.xlu0 %1118, %v1109
          %v1120 = vpop.permute.xlu0 %1119
          %1123 = vset.pattern.permute.xlu0 3
          %1124 = vperm.xlu0 %1123, %v1110
          %v1125 = vpop.permute.xlu0 %1124
          %v1127 = vsub.f32 %v1095, %v1120
          %v1128 = vsub.f32 %v1098, %v1125
          %v1129 = vmul.f32 %v1127, 1.442695
          %v1130 = vpow.pop %v1129
          %v1131 = vmul.f32 %v1128, 1.442695
          %v1132 = vpow.pop %v1131
          %v1133 = vld [vmem:[#allocation3] sm:$0xff]
          %v1134 = vld [vmem:[#allocation3 + $0x8] sm:$0xff]
          %v1135 = vmul.f32 %v1114, %v1133
          %v1136 = vmul.f32 %v1116, %v1134
          %v1137 = vsel %vm525, %v1130, 0.0
          %1138 = vadd.xlane.f32.xlu0 %v1137
          %v1139 = vpop.xlane.xlu0 %1138
          %v1140 = vsel %vm525, %v1132, 0.0
          %1141 = vadd.xlane.f32.xlu0 %v1140
          %v1142 = vpop.xlane.xlu0 %1141
          %v1143 = vadd.f32 %v1135, %v1139
          %v1144 = vadd.f32 %v1136, %v1142
          %vm1145 = vcmask 31768
          %1146 = vst.msk [vmem:[#allocation3] sm:$0xff] %vm1145, %v1143
          %1147 = vst.msk [vmem:[#allocation3 + $0x8] sm:$0xff] %vm1145, %v1144
          %v1148 = vld [vmem:[#allocation4] sm:$0xff]
          %v1149 = vld [vmem:[#allocation4 + $0x8] sm:$0xff]
          %1151 = vset.pattern.permute.xlu0 3
          %1152 = vperm.xlu0 %1151, %v1114
          %v1153 = vpop.permute.xlu0 %1152
          %1156 = vset.pattern.permute.xlu0 3
          %1157 = vperm.xlu0 %1156, %v1116
          %v1158 = vpop.permute.xlu0 %1157
          %v1160 = vmul.f32 %v1153, %v1148
          %v1161 = vmul.f32 %v1158, %v1149
          %v1162 = vpack.c.bf16 %v1132, %v1130
          %v1163 = vld [vmem:[%s387] sm:$0xf]
          %v1164 = vld [vmem:[%s387 + $0x4] sm:$0xf]
          %v1167 = vunpack.c.l.b16 %v1163
          %v1168 = vunpack.c.l.b16 %v1164
          %v1169 = vpack.c.b16 %v1168, %v1167
          %1170 = vrot.lane.b32.xlu0 %v1169, 32
          %v1171 = vpop.permute.xlu0 %1170
          %v1174 = vsel %vm525, %v1162, 0
          %1176 = vmatprep.subr.bf16.mxu0 0
          %1177 = vmatpush1.bf16.msra.mxu0 %v1171
          %1178 = vmatprep.subr.bf16.mxu0 0
          %1179 = vmatpush1.bf16.msra.mxu0 0
          %1180 = vmatprep.subr.bf16.mxu0 0
          %1181 = vmatpush1.bf16.msra.mxu0 0
          %1182 = vmatprep.subr.bf16.mxu0 0
          %1183 = vmatpush1.bf16.msra.mxu0 0
          %1184 = vmatprep.subr.bf16.mxu0 0
          %1185 = vmatpush1.bf16.msra.mxu0 0
          %1186 = vmatprep.subr.bf16.mxu0 0
          %1187 = vmatpush1.bf16.msra.mxu0 0
          %1188 = vmatprep.subr.bf16.mxu0 0
          %1189 = vmatpush1.bf16.msra.mxu0 0
          %1190 = vmatprep.subr.bf16.mxu0 0
          %1191 = vmatpush1.bf16.msra.mxu0 0
          %1192 = vmatprep.subr.bf16.mxu0 0
          %1193 = vmatpush1.bf16.msra.mxu0 0
          %1194 = vmatprep.subr.bf16.mxu0 0
          %1195 = vmatpush1.bf16.msra.mxu0 0
          %1196 = vmatprep.subr.bf16.mxu0 0
          %1197 = vmatpush1.bf16.msra.mxu0 0
          %1198 = vmatprep.subr.bf16.mxu0 0
          %1199 = vmatpush1.bf16.msra.mxu0 0
          %1200 = vmatprep.subr.bf16.mxu0 0
          %1201 = vmatpush1.bf16.msra.mxu0 0
          %1202 = vmatprep.subr.bf16.mxu0 0
          %1203 = vmatpush1.bf16.msra.mxu0 0
          %1204 = vmatprep.subr.bf16.mxu0 0
          %1205 = vmatpush1.bf16.msra.mxu0 0
          %1206 = vmatprep.subr.bf16.mxu0 0
          %1207 = vmatpush1.bf16.msra.mxu0 0
          %1208 = vmatprep.mubr.bf16.mxu0 0
          %1209 = vmatmul.mubr.bf16.gmra.mrb[0].mxu0 %v1174
          %v1210 = vpop.f32.mrb[0].mxu0
          %v1211 = vadd.f32 0.0, %v1210
          %v1212 = vpop.f32.mrb[0].mxu0
          %v1213 = vpop.f32.mrb[0].mxu0
          %v1214 = vadd.f32 0.0, %v1213
          %v1215 = vpop.f32.mrb[0].mxu0
          %1216 = vdwg.mxu0
          %1219 = vrot.lane.b32.xlu0 %v1211, 96
          %v1220 = vpop.permute.xlu0 %1219
          %1221 = vrot.lane.b32.xlu0 %v1214, 96
          %v1222 = vpop.permute.xlu0 %1221
          %v1225 = vadd.f32 %v1160, %v1220
          %v1226 = vadd.f32 %v1161, %v1222
          %vm1227 = vcmask 1048320
          %1228 = vst.msk [vmem:[#allocation4] sm:$0xff] %vm1227, %v1225
          %1229 = vst.msk [vmem:[#allocation4 + $0x8] sm:$0xff] %vm1227, %v1226
          %1230 = vst.msk [vmem:[#allocation2] sm:$0xff] %vm1145, %v1109
          %1231 = vst.msk [vmem:[#allocation2 + $0x8] sm:$0xff] %vm1145, %v1110
        $region163: #{llama_forward.13} parent=142 // pred_fallthru
          _
        %p1232 = scmp.eq.s32.totalorder %s23, %s22
        // Predicated region
        $region164: #{llama_forward.13} parent=142 // pred_check
          %p1233 = pneg %p1232
        $region165: #{llama_forward.13} parent=142 // pred_check_branch
          %1235 = sbr.rel (%p1233) target = $region167
        $region166: #{llama_forward.13} parent=142 // pred_region
          %s1236 = smul.u32 %s22, 16
          %v1237 = vlaneseq
          %v1238 = vshrl.u32 %v1237, 7
          %v1239 = vadd.s32 %v1238, 8
          %v1240 = vstv %s1236
          %v1241 = vadd.s32 %v1240, %v1238
          %v1242 = vadd.s32 %v1240, %v1239
          %s1243 = smul.u32 %s23, 16
          %v1244 = vlaneseq
          %v1245 = vand.u32 %v1244, 127
          %v1246 = vstv %s1243
          %v1247 = vadd.s32 %v1246, %v1245
          %vm1248 = vcmp.le.s32.totalorder %v1247, %v1241
          %vm1249 = vcmp.le.s32.totalorder %v1247, %v1242
          %v1250 = vld [vmem:[%s373] sm:$0xf]
          %v1251 = vld [vmem:[%s373 + $0x4] sm:$0xf]
          %v1252 = vld [vmem:[%s380] sm:$0xf]
          %v1253 = vld [vmem:[%s380 + $0x4] sm:$0xf]
          %v1256 = vunpack.c.l.b16 %v1250
          %v1257 = vunpack.c.l.b16 %v1251
          %v1258 = vpack.c.b16 %v1257, %v1256
          %v1261 = vunpack.c.l.b16 %v1252
          %v1262 = vunpack.c.l.b16 %v1253
          %v1263 = vpack.c.b16 %v1262, %v1261
          %vm1264 = vcmask 261120
          %v1266 = vsel %vm1264, %v1258, 0
          %v1269 = vsel %vm1264, %v1263, 0
          %1271 = vmatprep.subr.bf16.mxu0 0
          %1272 = vmatpush1.bf16.xpose.msra.mxu0 %v1269
          %1273 = vmatprep.subr.bf16.mxu0 0
          %1274 = vmatpush1.bf16.xpose.msra.mxu0 0
          %1275 = vmatprep.subr.bf16.mxu0 0
          %1276 = vmatpush1.bf16.xpose.msra.mxu0 0
          %1277 = vmatprep.subr.bf16.mxu0 0
          %1278 = vmatpush1.bf16.xpose.msra.mxu0 0
          %1279 = vmatprep.subr.bf16.mxu0 0
          %1280 = vmatpush1.bf16.xpose.msra.mxu0 0
          %1281 = vmatprep.subr.bf16.mxu0 0
          %1282 = vmatpush1.bf16.xpose.msra.mxu0 0
          %1283 = vmatprep.subr.bf16.mxu0 0
          %1284 = vmatpush1.bf16.xpose.msra.mxu0 0
          %1285 = vmatprep.subr.bf16.mxu0 0
          %1286 = vmatpush1.bf16.xpose.msra.mxu0 0
          %1287 = vmatprep.subr.bf16.mxu0 0
          %1288 = vmatpush1.bf16.xpose.msra.mxu0 0
          %1289 = vmatprep.subr.bf16.mxu0 0
          %1290 = vmatpush1.bf16.xpose.msra.mxu0 0
          %1291 = vmatprep.subr.bf16.mxu0 0
          %1292 = vmatpush1.bf16.xpose.msra.mxu0 0
          %1293 = vmatprep.subr.bf16.mxu0 0
          %1294 = vmatpush1.bf16.xpose.msra.mxu0 0
          %1295 = vmatprep.subr.bf16.mxu0 0
          %1296 = vmatpush1.bf16.xpose.msra.mxu0 0
          %1297 = vmatprep.subr.bf16.mxu0 0
          %1298 = vmatpush1.bf16.xpose.msra.mxu0 0
          %1299 = vmatprep.subr.bf16.mxu0 0
          %1300 = vmatpush1.bf16.xpose.msra.mxu0 0
          %1301 = vmatprep.subr.bf16.mxu0 0
          %1302 = vmatpush1.bf16.xpose.msra.mxu0 0
          %1303 = vmatprep.mubr.bf16.mxu0 0
          %1304 = vmatmul.mubr.bf16.gmra.mrb[0].mxu0 %v1266
          %v1305 = vpop.f32.mrb[0].mxu0
          %v1306 = vadd.f32 0.0, %v1305
          %v1307 = vpop.f32.mrb[0].mxu0
          %v1308 = vpop.f32.mrb[0].mxu0
          %v1309 = vadd.f32 0.0, %v1308
          %v1310 = vpop.f32.mrb[0].mxu0
          %1311 = vdwg.mxu0
          %v1312 = vsel %vm1248, %v1306, -1e+30
          %v1313 = vsel %vm1249, %v1309, -1e+30
          %v1314 = vld [vmem:[#allocation2] sm:$0xff]
          %v1315 = vld [vmem:[#allocation2 + $0x8] sm:$0xff]
          %vm1316 = vcmask 130048
          %v1317 = vsel %vm1316, %v1312, -inf
          %1318 = vmax.xlane.f32.xlu0 %v1317
          %v1319 = vpop.xlane.xlu0 %1318
          %v1320 = vsel %vm1316, %v1313, -inf
          %1321 = vmax.xlane.f32.xlu0 %v1320
          %v1322 = vpop.xlane.xlu0 %1321
          %v1323 = vmax.f32 %v1314, %v1319
          %v1324 = vmax.f32 %v1315, %v1322
          %v1325 = vsub.f32 %v1314, %v1323
          %v1326 = vsub.f32 %v1315, %v1324
          %v1327 = vmul.f32 %v1325, 1.442695
          %v1328 = vpow.pop %v1327
          %v1329 = vmul.f32 %v1326, 1.442695
          %v1330 = vpow.pop %v1329
          %1332 = vset.pattern.permute.xlu0 0
          %1333 = vperm.xlu0 %1332, %v1323
          %v1334 = vpop.permute.xlu0 %1333
          %1337 = vset.pattern.permute.xlu0 0
          %1338 = vperm.xlu0 %1337, %v1324
          %v1339 = vpop.permute.xlu0 %1338
          %v1341 = vsub.f32 %v1312, %v1334
          %v1342 = vsub.f32 %v1313, %v1339
          %v1343 = vmul.f32 %v1341, 1.442695
          %v1344 = vpow.pop %v1343
          %v1345 = vmul.f32 %v1342, 1.442695
          %v1346 = vpow.pop %v1345
          %v1347 = vld [vmem:[#allocation3] sm:$0xff]
          %v1348 = vld [vmem:[#allocation3 + $0x8] sm:$0xff]
          %v1349 = vmul.f32 %v1328, %v1347
          %v1350 = vmul.f32 %v1330, %v1348
          %v1351 = vsel %vm1316, %v1344, 0.0
          %1352 = vadd.xlane.f32.xlu0 %v1351
          %v1353 = vpop.xlane.xlu0 %1352
          %v1354 = vsel %vm1316, %v1346, 0.0
          %1355 = vadd.xlane.f32.xlu0 %v1354
          %v1356 = vpop.xlane.xlu0 %1355
          %v1357 = vadd.f32 %v1349, %v1353
          %v1358 = vadd.f32 %v1350, %v1356
          %vm1359 = vcmask 7168
          %1360 = vst.msk [vmem:[#allocation3] sm:$0xff] %vm1359, %v1357
          %1361 = vst.msk [vmem:[#allocation3 + $0x8] sm:$0xff] %vm1359, %v1358
          %v1362 = vld [vmem:[#allocation4] sm:$0xff]
          %v1363 = vld [vmem:[#allocation4 + $0x8] sm:$0xff]
          %1365 = vset.pattern.permute.xlu0 0
          %1366 = vperm.xlu0 %1365, %v1328
          %v1367 = vpop.permute.xlu0 %1366
          %1370 = vset.pattern.permute.xlu0 0
          %1371 = vperm.xlu0 %1370, %v1330
          %v1372 = vpop.permute.xlu0 %1371
          %v1374 = vmul.f32 %v1367, %v1362
          %v1375 = vmul.f32 %v1372, %v1363
          %v1376 = vpack.c.bf16 %v1346, %v1344
          %v1377 = vld [vmem:[%s387] sm:$0xf]
          %v1378 = vld [vmem:[%s387 + $0x4] sm:$0xf]
          %v1381 = vunpack.c.l.b16 %v1377
          %v1382 = vunpack.c.l.b16 %v1378
          %v1383 = vpack.c.b16 %v1382, %v1381
          %v1386 = vsel %vm1316, %v1376, 0
          %1388 = vmatprep.subr.bf16.mxu0 0
          %1389 = vmatpush1.bf16.msra.mxu0 %v1383
          %1390 = vmatprep.subr.bf16.mxu0 0
          %1391 = vmatpush1.bf16.msra.mxu0 0
          %1392 = vmatprep.subr.bf16.mxu0 0
          %1393 = vmatpush1.bf16.msra.mxu0 0
          %1394 = vmatprep.subr.bf16.mxu0 0
          %1395 = vmatpush1.bf16.msra.mxu0 0
          %1396 = vmatprep.subr.bf16.mxu0 0
          %1397 = vmatpush1.bf16.msra.mxu0 0
          %1398 = vmatprep.subr.bf16.mxu0 0
          %1399 = vmatpush1.bf16.msra.mxu0 0
          %1400 = vmatprep.subr.bf16.mxu0 0
          %1401 = vmatpush1.bf16.msra.mxu0 0
          %1402 = vmatprep.subr.bf16.mxu0 0
          %1403 = vmatpush1.bf16.msra.mxu0 0
          %1404 = vmatprep.subr.bf16.mxu0 0
          %1405 = vmatpush1.bf16.msra.mxu0 0
          %1406 = vmatprep.subr.bf16.mxu0 0
          %1407 = vmatpush1.bf16.msra.mxu0 0
          %1408 = vmatprep.subr.bf16.mxu0 0
          %1409 = vmatpush1.bf16.msra.mxu0 0
          %1410 = vmatprep.subr.bf16.mxu0 0
          %1411 = vmatpush1.bf16.msra.mxu0 0
          %1412 = vmatprep.subr.bf16.mxu0 0
          %1413 = vmatpush1.bf16.msra.mxu0 0
          %1414 = vmatprep.subr.bf16.mxu0 0
          %1415 = vmatpush1.bf16.msra.mxu0 0
          %1416 = vmatprep.subr.bf16.mxu0 0
          %1417 = vmatpush1.bf16.msra.mxu0 0
          %1418 = vmatprep.subr.bf16.mxu0 0
          %1419 = vmatpush1.bf16.msra.mxu0 0
          %1420 = vmatprep.mubr.bf16.mxu0 0
          %1421 = vmatmul.mubr.bf16.gmra.mrb[0].mxu0 %v1386
          %v1422 = vpop.f32.mrb[0].mxu0
          %v1423 = vadd.f32 0.0, %v1422
          %v1424 = vpop.f32.mrb[0].mxu0
          %v1425 = vpop.f32.mrb[0].mxu0
          %v1426 = vadd.f32 0.0, %v1425
          %v1427 = vpop.f32.mrb[0].mxu0
          %1428 = vdwg.mxu0
          %v1429 = vadd.f32 %v1374, %v1423
          %v1430 = vadd.f32 %v1375, %v1426
          %1431 = vst.msk [vmem:[#allocation4] sm:$0xff] %vm1264, %v1429
          %1432 = vst.msk [vmem:[#allocation4 + $0x8] sm:$0xff] %vm1264, %v1430
          %1433 = vst.msk [vmem:[#allocation2] sm:$0xff] %vm1359, %v1323
          %1434 = vst.msk [vmem:[#allocation2 + $0x8] sm:$0xff] %vm1359, %v1324
          %v1435 = vld [vmem:[%s373] sm:$0xf]
          %v1436 = vld [vmem:[%s373 + $0x4] sm:$0xf]
          %v1437 = vld [vmem:[%s380] sm:$0xf]
          %v1438 = vld [vmem:[%s380 + $0x4] sm:$0xf]
          %v1441 = vunpack.c.l.b16 %v1435
          %v1442 = vunpack.c.l.b16 %v1436
          %v1443 = vpack.c.b16 %v1442, %v1441
          %1444 = vrot.lane.b32.xlu0 %v1443, 96
          %v1445 = vpop.permute.xlu0 %1444
          %v1448 = vunpack.c.l.b16 %v1437
          %v1449 = vunpack.c.l.b16 %v1438
          %v1450 = vpack.c.b16 %v1449, %v1448
          %1451 = vrot.lane.b32.xlu0 %v1450, 96
          %v1452 = vpop.permute.xlu0 %1451
          %v1454 = vsel %vm1264, %v1445, 0
          %v1457 = vsel %vm1264, %v1452, 0
          %1459 = vmatprep.subr.bf16.mxu0 0
          %1460 = vmatpush1.bf16.xpose.msra.mxu0 %v1457
          %1461 = vmatprep.subr.bf16.mxu0 0
          %1462 = vmatpush1.bf16.xpose.msra.mxu0 0
          %1463 = vmatprep.subr.bf16.mxu0 0
          %1464 = vmatpush1.bf16.xpose.msra.mxu0 0
          %1465 = vmatprep.subr.bf16.mxu0 0
          %1466 = vmatpush1.bf16.xpose.msra.mxu0 0
          %1467 = vmatprep.subr.bf16.mxu0 0
          %1468 = vmatpush1.bf16.xpose.msra.mxu0 0
          %1469 = vmatprep.subr.bf16.mxu0 0
          %1470 = vmatpush1.bf16.xpose.msra.mxu0 0
          %1471 = vmatprep.subr.bf16.mxu0 0
          %1472 = vmatpush1.bf16.xpose.msra.mxu0 0
          %1473 = vmatprep.subr.bf16.mxu0 0
          %1474 = vmatpush1.bf16.xpose.msra.mxu0 0
          %1475 = vmatprep.subr.bf16.mxu0 0
          %1476 = vmatpush1.bf16.xpose.msra.mxu0 0
          %1477 = vmatprep.subr.bf16.mxu0 0
          %1478 = vmatpush1.bf16.xpose.msra.mxu0 0
          %1479 = vmatprep.subr.bf16.mxu0 0
          %1480 = vmatpush1.bf16.xpose.msra.mxu0 0
          %1481 = vmatprep.subr.bf16.mxu0 0
          %1482 = vmatpush1.bf16.xpose.msra.mxu0 0
          %1483 = vmatprep.subr.bf16.mxu0 0
          %1484 = vmatpush1.bf16.xpose.msra.mxu0 0
          %1485 = vmatprep.subr.bf16.mxu0 0
          %1486 = vmatpush1.bf16.xpose.msra.mxu0 0
          %1487 = vmatprep.subr.bf16.mxu0 0
          %1488 = vmatpush1.bf16.xpose.msra.mxu0 0
          %1489 = vmatprep.subr.bf16.mxu0 0
          %1490 = vmatpush1.bf16.xpose.msra.mxu0 0
          %1491 = vmatprep.mubr.bf16.mxu0 0
          %1492 = vmatmul.mubr.bf16.gmra.mrb[0].mxu0 %v1454
          %v1493 = vpop.f32.mrb[0].mxu0
          %v1494 = vadd.f32 0.0, %v1493
          %v1495 = vpop.f32.mrb[0].mxu0
          %v1496 = vpop.f32.mrb[0].mxu0
          %v1497 = vadd.f32 0.0, %v1496
          %v1498 = vpop.f32.mrb[0].mxu0
          %1499 = vdwg.mxu0
          %v1500 = vsel %vm1248, %v1494, -1e+30
          %v1501 = vsel %vm1249, %v1497, -1e+30
          %v1502 = vld [vmem:[#allocation2] sm:$0xff]
          %v1503 = vld [vmem:[#allocation2 + $0x8] sm:$0xff]
          %v1504 = vsel %vm1316, %v1500, -inf
          %1505 = vmax.xlane.f32.xlu0 %v1504
          %v1506 = vpop.xlane.xlu0 %1505
          %v1507 = vsel %vm1316, %v1501, -inf
          %1508 = vmax.xlane.f32.xlu0 %v1507
          %v1509 = vpop.xlane.xlu0 %1508
          %v1510 = vmax.f32 %v1502, %v1506
          %v1511 = vmax.f32 %v1503, %v1509
          %v1512 = vsub.f32 %v1502, %v1510
          %v1513 = vsub.f32 %v1503, %v1511
          %v1514 = vmul.f32 %v1512, 1.442695
          %v1515 = vpow.pop %v1514
          %v1516 = vmul.f32 %v1513, 1.442695
          %v1517 = vpow.pop %v1516
          %1519 = vset.pattern.permute.xlu0 1
          %1520 = vperm.xlu0 %1519, %v1510
          %v1521 = vpop.permute.xlu0 %1520
          %1524 = vset.pattern.permute.xlu0 1
          %1525 = vperm.xlu0 %1524, %v1511
          %v1526 = vpop.permute.xlu0 %1525
          %v1528 = vsub.f32 %v1500, %v1521
          %v1529 = vsub.f32 %v1501, %v1526
          %v1530 = vmul.f32 %v1528, 1.442695
          %v1531 = vpow.pop %v1530
          %v1532 = vmul.f32 %v1529, 1.442695
          %v1533 = vpow.pop %v1532
          %v1534 = vld [vmem:[#allocation3] sm:$0xff]
          %v1535 = vld [vmem:[#allocation3 + $0x8] sm:$0xff]
          %v1536 = vmul.f32 %v1515, %v1534
          %v1537 = vmul.f32 %v1517, %v1535
          %v1538 = vsel %vm1316, %v1531, 0.0
          %1539 = vadd.xlane.f32.xlu0 %v1538
          %v1540 = vpop.xlane.xlu0 %1539
          %v1541 = vsel %vm1316, %v1533, 0.0
          %1542 = vadd.xlane.f32.xlu0 %v1541
          %v1543 = vpop.xlane.xlu0 %1542
          %v1544 = vadd.f32 %v1536, %v1540
          %v1545 = vadd.f32 %v1537, %v1543
          %vm1546 = vcmask 15368
          %1547 = vst.msk [vmem:[#allocation3] sm:$0xff] %vm1546, %v1544
          %1548 = vst.msk [vmem:[#allocation3 + $0x8] sm:$0xff] %vm1546, %v1545
          %v1549 = vld [vmem:[#allocation4] sm:$0xff]
          %v1550 = vld [vmem:[#allocation4 + $0x8] sm:$0xff]
          %1552 = vset.pattern.permute.xlu0 1
          %1553 = vperm.xlu0 %1552, %v1515
          %v1554 = vpop.permute.xlu0 %1553
          %1557 = vset.pattern.permute.xlu0 1
          %1558 = vperm.xlu0 %1557, %v1517
          %v1559 = vpop.permute.xlu0 %1558
          %v1561 = vmul.f32 %v1554, %v1549
          %v1562 = vmul.f32 %v1559, %v1550
          %v1563 = vpack.c.bf16 %v1533, %v1531
          %v1564 = vld [vmem:[%s387] sm:$0xf]
          %v1565 = vld [vmem:[%s387 + $0x4] sm:$0xf]
          %v1568 = vunpack.c.l.b16 %v1564
          %v1569 = vunpack.c.l.b16 %v1565
          %v1570 = vpack.c.b16 %v1569, %v1568
          %1571 = vrot.lane.b32.xlu0 %v1570, 96
          %v1572 = vpop.permute.xlu0 %1571
          %v1575 = vsel %vm1316, %v1563, 0
          %1577 = vmatprep.subr.bf16.mxu0 0
          %1578 = vmatpush1.bf16.msra.mxu0 %v1572
          %1579 = vmatprep.subr.bf16.mxu0 0
          %1580 = vmatpush1.bf16.msra.mxu0 0
          %1581 = vmatprep.subr.bf16.mxu0 0
          %1582 = vmatpush1.bf16.msra.mxu0 0
          %1583 = vmatprep.subr.bf16.mxu0 0
          %1584 = vmatpush1.bf16.msra.mxu0 0
          %1585 = vmatprep.subr.bf16.mxu0 0
          %1586 = vmatpush1.bf16.msra.mxu0 0
          %1587 = vmatprep.subr.bf16.mxu0 0
          %1588 = vmatpush1.bf16.msra.mxu0 0
          %1589 = vmatprep.subr.bf16.mxu0 0
          %1590 = vmatpush1.bf16.msra.mxu0 0
          %1591 = vmatprep.subr.bf16.mxu0 0
          %1592 = vmatpush1.bf16.msra.mxu0 0
          %1593 = vmatprep.subr.bf16.mxu0 0
          %1594 = vmatpush1.bf16.msra.mxu0 0
          %1595 = vmatprep.subr.bf16.mxu0 0
          %1596 = vmatpush1.bf16.msra.mxu0 0
          %1597 = vmatprep.subr.bf16.mxu0 0
          %1598 = vmatpush1.bf16.msra.mxu0 0
          %1599 = vmatprep.subr.bf16.mxu0 0
          %1600 = vmatpush1.bf16.msra.mxu0 0
          %1601 = vmatprep.subr.bf16.mxu0 0
          %1602 = vmatpush1.bf16.msra.mxu0 0
          %1603 = vmatprep.subr.bf16.mxu0 0
          %1604 = vmatpush1.bf16.msra.mxu0 0
          %1605 = vmatprep.subr.bf16.mxu0 0
          %1606 = vmatpush1.bf16.msra.mxu0 0
          %1607 = vmatprep.subr.bf16.mxu0 0
          %1608 = vmatpush1.bf16.msra.mxu0 0
          %1609 = vmatprep.mubr.bf16.mxu0 0
          %1610 = vmatmul.mubr.bf16.gmra.mrb[0].mxu0 %v1575
          %v1611 = vpop.f32.mrb[0].mxu0
          %v1612 = vadd.f32 0.0, %v1611
          %v1613 = vpop.f32.mrb[0].mxu0
          %v1614 = vpop.f32.mrb[0].mxu0
          %v1615 = vadd.f32 0.0, %v1614
          %v1616 = vpop.f32.mrb[0].mxu0
          %1617 = vdwg.mxu0
          %1620 = vrot.lane.b32.xlu0 %v1612, 32
          %v1621 = vpop.permute.xlu0 %1620
          %1622 = vrot.lane.b32.xlu0 %v1615, 32
          %v1623 = vpop.permute.xlu0 %1622
          %v1626 = vadd.f32 %v1561, %v1621
          %v1627 = vadd.f32 %v1562, %v1623
          %vm1628 = vcmask 523520
          %1629 = vst.msk [vmem:[#allocation4] sm:$0xff] %vm1628, %v1626
          %1630 = vst.msk [vmem:[#allocation4 + $0x8] sm:$0xff] %vm1628, %v1627
          %1631 = vst.msk [vmem:[#allocation2] sm:$0xff] %vm1546, %v1510
          %1632 = vst.msk [vmem:[#allocation2 + $0x8] sm:$0xff] %vm1546, %v1511
          %v1633 = vld [vmem:[%s373] sm:$0xf]
          %v1634 = vld [vmem:[%s373 + $0x4] sm:$0xf]
          %v1635 = vld [vmem:[%s380] sm:$0xf]
          %v1636 = vld [vmem:[%s380 + $0x4] sm:$0xf]
          %v1639 = vunpack.c.l.b16 %v1633
          %v1640 = vunpack.c.l.b16 %v1634
          %v1641 = vpack.c.b16 %v1640, %v1639
          %1642 = vrot.lane.b32.xlu0 %v1641, 64
          %v1643 = vpop.permute.xlu0 %1642
          %v1646 = vunpack.c.l.b16 %v1635
          %v1647 = vunpack.c.l.b16 %v1636
          %v1648 = vpack.c.b16 %v1647, %v1646
          %1649 = vrot.lane.b32.xlu0 %v1648, 64
          %v1650 = vpop.permute.xlu0 %1649
          %v1652 = vsel %vm1264, %v1643, 0
          %v1655 = vsel %vm1264, %v1650, 0
          %1657 = vmatprep.subr.bf16.mxu0 0
          %1658 = vmatpush1.bf16.xpose.msra.mxu0 %v1655
          %1659 = vmatprep.subr.bf16.mxu0 0
          %1660 = vmatpush1.bf16.xpose.msra.mxu0 0
          %1661 = vmatprep.subr.bf16.mxu0 0
          %1662 = vmatpush1.bf16.xpose.msra.mxu0 0
          %1663 = vmatprep.subr.bf16.mxu0 0
          %1664 = vmatpush1.bf16.xpose.msra.mxu0 0
          %1665 = vmatprep.subr.bf16.mxu0 0
          %1666 = vmatpush1.bf16.xpose.msra.mxu0 0
          %1667 = vmatprep.subr.bf16.mxu0 0
          %1668 = vmatpush1.bf16.xpose.msra.mxu0 0
          %1669 = vmatprep.subr.bf16.mxu0 0
          %1670 = vmatpush1.bf16.xpose.msra.mxu0 0
          %1671 = vmatprep.subr.bf16.mxu0 0
          %1672 = vmatpush1.bf16.xpose.msra.mxu0 0
          %1673 = vmatprep.subr.bf16.mxu0 0
          %1674 = vmatpush1.bf16.xpose.msra.mxu0 0
          %1675 = vmatprep.subr.bf16.mxu0 0
          %1676 = vmatpush1.bf16.xpose.msra.mxu0 0
          %1677 = vmatprep.subr.bf16.mxu0 0
          %1678 = vmatpush1.bf16.xpose.msra.mxu0 0
          %1679 = vmatprep.subr.bf16.mxu0 0
          %1680 = vmatpush1.bf16.xpose.msra.mxu0 0
          %1681 = vmatprep.subr.bf16.mxu0 0
          %1682 = vmatpush1.bf16.xpose.msra.mxu0 0
          %1683 = vmatprep.subr.bf16.mxu0 0
          %1684 = vmatpush1.bf16.xpose.msra.mxu0 0
          %1685 = vmatprep.subr.bf16.mxu0 0
          %1686 = vmatpush1.bf16.xpose.msra.mxu0 0
          %1687 = vmatprep.subr.bf16.mxu0 0
          %1688 = vmatpush1.bf16.xpose.msra.mxu0 0
          %1689 = vmatprep.mubr.bf16.mxu0 0
          %1690 = vmatmul.mubr.bf16.gmra.mrb[0].mxu0 %v1652
          %v1691 = vpop.f32.mrb[0].mxu0
          %v1692 = vadd.f32 0.0, %v1691
          %v1693 = vpop.f32.mrb[0].mxu0
          %v1694 = vpop.f32.mrb[0].mxu0
          %v1695 = vadd.f32 0.0, %v1694
          %v1696 = vpop.f32.mrb[0].mxu0
          %1697 = vdwg.mxu0
          %v1698 = vsel %vm1248, %v1692, -1e+30
          %v1699 = vsel %vm1249, %v1695, -1e+30
          %v1700 = vld [vmem:[#allocation2] sm:$0xff]
          %v1701 = vld [vmem:[#allocation2 + $0x8] sm:$0xff]
          %v1702 = vsel %vm1316, %v1698, -inf
          %1703 = vmax.xlane.f32.xlu0 %v1702
          %v1704 = vpop.xlane.xlu0 %1703
          %v1705 = vsel %vm1316, %v1699, -inf
          %1706 = vmax.xlane.f32.xlu0 %v1705
          %v1707 = vpop.xlane.xlu0 %1706
          %v1708 = vmax.f32 %v1700, %v1704
          %v1709 = vmax.f32 %v1701, %v1707
          %v1710 = vsub.f32 %v1700, %v1708
          %v1711 = vsub.f32 %v1701, %v1709
          %v1712 = vmul.f32 %v1710, 1.442695
          %v1713 = vpow.pop %v1712
          %v1714 = vmul.f32 %v1711, 1.442695
          %v1715 = vpow.pop %v1714
          %1717 = vset.pattern.permute.xlu0 2
          %1718 = vperm.xlu0 %1717, %v1708
          %v1719 = vpop.permute.xlu0 %1718
          %1722 = vset.pattern.permute.xlu0 2
          %1723 = vperm.xlu0 %1722, %v1709
          %v1724 = vpop.permute.xlu0 %1723
          %v1726 = vsub.f32 %v1698, %v1719
          %v1727 = vsub.f32 %v1699, %v1724
          %v1728 = vmul.f32 %v1726, 1.442695
          %v1729 = vpow.pop %v1728
          %v1730 = vmul.f32 %v1727, 1.442695
          %v1731 = vpow.pop %v1730
          %v1732 = vld [vmem:[#allocation3] sm:$0xff]
          %v1733 = vld [vmem:[#allocation3 + $0x8] sm:$0xff]
          %v1734 = vmul.f32 %v1713, %v1732
          %v1735 = vmul.f32 %v1715, %v1733
          %v1736 = vsel %vm1316, %v1729, 0.0
          %1737 = vadd.xlane.f32.xlu0 %v1736
          %v1738 = vpop.xlane.xlu0 %1737
          %v1739 = vsel %vm1316, %v1731, 0.0
          %1740 = vadd.xlane.f32.xlu0 %v1739
          %v1741 = vpop.xlane.xlu0 %1740
          %v1742 = vadd.f32 %v1734, %v1738
          %v1743 = vadd.f32 %v1735, %v1741
          %vm1744 = vcmask 23568
          %1745 = vst.msk [vmem:[#allocation3] sm:$0xff] %vm1744, %v1742
          %1746 = vst.msk [vmem:[#allocation3 + $0x8] sm:$0xff] %vm1744, %v1743
          %v1747 = vld [vmem:[#allocation4] sm:$0xff]
          %v1748 = vld [vmem:[#allocation4 + $0x8] sm:$0xff]
          %1750 = vset.pattern.permute.xlu0 2
          %1751 = vperm.xlu0 %1750, %v1713
          %v1752 = vpop.permute.xlu0 %1751
          %1755 = vset.pattern.permute.xlu0 2
          %1756 = vperm.xlu0 %1755, %v1715
          %v1757 = vpop.permute.xlu0 %1756
          %v1759 = vmul.f32 %v1752, %v1747
          %v1760 = vmul.f32 %v1757, %v1748
          %v1761 = vpack.c.bf16 %v1731, %v1729
          %v1762 = vld [vmem:[%s387] sm:$0xf]
          %v1763 = vld [vmem:[%s387 + $0x4] sm:$0xf]
          %v1766 = vunpack.c.l.b16 %v1762
          %v1767 = vunpack.c.l.b16 %v1763
          %v1768 = vpack.c.b16 %v1767, %v1766
          %1769 = vrot.lane.b32.xlu0 %v1768, 64
          %v1770 = vpop.permute.xlu0 %1769
          %v1773 = vsel %vm1316, %v1761, 0
          %1775 = vmatprep.subr.bf16.mxu0 0
          %1776 = vmatpush1.bf16.msra.mxu0 %v1770
          %1777 = vmatprep.subr.bf16.mxu0 0
          %1778 = vmatpush1.bf16.msra.mxu0 0
          %1779 = vmatprep.subr.bf16.mxu0 0
          %1780 = vmatpush1.bf16.msra.mxu0 0
          %1781 = vmatprep.subr.bf16.mxu0 0
          %1782 = vmatpush1.bf16.msra.mxu0 0
          %1783 = vmatprep.subr.bf16.mxu0 0
          %1784 = vmatpush1.bf16.msra.mxu0 0
          %1785 = vmatprep.subr.bf16.mxu0 0
          %1786 = vmatpush1.bf16.msra.mxu0 0
          %1787 = vmatprep.subr.bf16.mxu0 0
          %1788 = vmatpush1.bf16.msra.mxu0 0
          %1789 = vmatprep.subr.bf16.mxu0 0
          %1790 = vmatpush1.bf16.msra.mxu0 0
          %1791 = vmatprep.subr.bf16.mxu0 0
          %1792 = vmatpush1.bf16.msra.mxu0 0
          %1793 = vmatprep.subr.bf16.mxu0 0
          %1794 = vmatpush1.bf16.msra.mxu0 0
          %1795 = vmatprep.subr.bf16.mxu0 0
          %1796 = vmatpush1.bf16.msra.mxu0 0
          %1797 = vmatprep.subr.bf16.mxu0 0
          %1798 = vmatpush1.bf16.msra.mxu0 0
          %1799 = vmatprep.subr.bf16.mxu0 0
          %1800 = vmatpush1.bf16.msra.mxu0 0
          %1801 = vmatprep.subr.bf16.mxu0 0
          %1802 = vmatpush1.bf16.msra.mxu0 0
          %1803 = vmatprep.subr.bf16.mxu0 0
          %1804 = vmatpush1.bf16.msra.mxu0 0
          %1805 = vmatprep.subr.bf16.mxu0 0
          %1806 = vmatpush1.bf16.msra.mxu0 0
          %1807 = vmatprep.mubr.bf16.mxu0 0
          %1808 = vmatmul.mubr.bf16.gmra.mrb[0].mxu0 %v1773
          %v1809 = vpop.f32.mrb[0].mxu0
          %v1810 = vadd.f32 0.0, %v1809
          %v1811 = vpop.f32.mrb[0].mxu0
          %v1812 = vpop.f32.mrb[0].mxu0
          %v1813 = vadd.f32 0.0, %v1812
          %v1814 = vpop.f32.mrb[0].mxu0
          %1815 = vdwg.mxu0
          %1818 = vrot.lane.b32.xlu0 %v1810, 64
          %v1819 = vpop.permute.xlu0 %1818
          %1820 = vrot.lane.b32.xlu0 %v1813, 64
          %v1821 = vpop.permute.xlu0 %1820
          %v1824 = vadd.f32 %v1759, %v1819
          %v1825 = vadd.f32 %v1760, %v1821
          %vm1826 = vcmask 785920
          %1827 = vst.msk [vmem:[#allocation4] sm:$0xff] %vm1826, %v1824
          %1828 = vst.msk [vmem:[#allocation4 + $0x8] sm:$0xff] %vm1826, %v1825
          %1829 = vst.msk [vmem:[#allocation2] sm:$0xff] %vm1744, %v1708
          %1830 = vst.msk [vmem:[#allocation2 + $0x8] sm:$0xff] %vm1744, %v1709
          %v1831 = vld [vmem:[%s373] sm:$0xf]
          %v1832 = vld [vmem:[%s373 + $0x4] sm:$0xf]
          %v1833 = vld [vmem:[%s380] sm:$0xf]
          %v1834 = vld [vmem:[%s380 + $0x4] sm:$0xf]
          %v1837 = vunpack.c.l.b16 %v1831
          %v1838 = vunpack.c.l.b16 %v1832
          %v1839 = vpack.c.b16 %v1838, %v1837
          %1840 = vrot.lane.b32.xlu0 %v1839, 32
          %v1841 = vpop.permute.xlu0 %1840
          %v1844 = vunpack.c.l.b16 %v1833
          %v1845 = vunpack.c.l.b16 %v1834
          %v1846 = vpack.c.b16 %v1845, %v1844
          %1847 = vrot.lane.b32.xlu0 %v1846, 32
          %v1848 = vpop.permute.xlu0 %1847
          %v1850 = vsel %vm1264, %v1841, 0
          %v1853 = vsel %vm1264, %v1848, 0
          %1855 = vmatprep.subr.bf16.mxu0 0
          %1856 = vmatpush1.bf16.xpose.msra.mxu0 %v1853
          %1857 = vmatprep.subr.bf16.mxu0 0
          %1858 = vmatpush1.bf16.xpose.msra.mxu0 0
          %1859 = vmatprep.subr.bf16.mxu0 0
          %1860 = vmatpush1.bf16.xpose.msra.mxu0 0
          %1861 = vmatprep.subr.bf16.mxu0 0
          %1862 = vmatpush1.bf16.xpose.msra.mxu0 0
          %1863 = vmatprep.subr.bf16.mxu0 0
          %1864 = vmatpush1.bf16.xpose.msra.mxu0 0
          %1865 = vmatprep.subr.bf16.mxu0 0
          %1866 = vmatpush1.bf16.xpose.msra.mxu0 0
          %1867 = vmatprep.subr.bf16.mxu0 0
          %1868 = vmatpush1.bf16.xpose.msra.mxu0 0
          %1869 = vmatprep.subr.bf16.mxu0 0
          %1870 = vmatpush1.bf16.xpose.msra.mxu0 0
          %1871 = vmatprep.subr.bf16.mxu0 0
          %1872 = vmatpush1.bf16.xpose.msra.mxu0 0
          %1873 = vmatprep.subr.bf16.mxu0 0
          %1874 = vmatpush1.bf16.xpose.msra.mxu0 0
          %1875 = vmatprep.subr.bf16.mxu0 0
          %1876 = vmatpush1.bf16.xpose.msra.mxu0 0
          %1877 = vmatprep.subr.bf16.mxu0 0
          %1878 = vmatpush1.bf16.xpose.msra.mxu0 0
          %1879 = vmatprep.subr.bf16.mxu0 0
          %1880 = vmatpush1.bf16.xpose.msra.mxu0 0
          %1881 = vmatprep.subr.bf16.mxu0 0
          %1882 = vmatpush1.bf16.xpose.msra.mxu0 0
          %1883 = vmatprep.subr.bf16.mxu0 0
          %1884 = vmatpush1.bf16.xpose.msra.mxu0 0
          %1885 = vmatprep.subr.bf16.mxu0 0
          %1886 = vmatpush1.bf16.xpose.msra.mxu0 0
          %1887 = vmatprep.mubr.bf16.mxu0 0
          %1888 = vmatmul.mubr.bf16.gmra.mrb[0].mxu0 %v1850
          %v1889 = vpop.f32.mrb[0].mxu0
          %v1890 = vadd.f32 0.0, %v1889
          %v1891 = vpop.f32.mrb[0].mxu0
          %v1892 = vpop.f32.mrb[0].mxu0
          %v1893 = vadd.f32 0.0, %v1892
          %v1894 = vpop.f32.mrb[0].mxu0
          %1895 = vdwg.mxu0
          %v1896 = vsel %vm1248, %v1890, -1e+30
          %v1897 = vsel %vm1249, %v1893, -1e+30
          %v1898 = vld [vmem:[#allocation2] sm:$0xff]
          %v1899 = vld [vmem:[#allocation2 + $0x8] sm:$0xff]
          %v1900 = vsel %vm1316, %v1896, -inf
          %1901 = vmax.xlane.f32.xlu0 %v1900
          %v1902 = vpop.xlane.xlu0 %1901
          %v1903 = vsel %vm1316, %v1897, -inf
          %1904 = vmax.xlane.f32.xlu0 %v1903
          %v1905 = vpop.xlane.xlu0 %1904
          %v1906 = vmax.f32 %v1898, %v1902
          %v1907 = vmax.f32 %v1899, %v1905
          %v1908 = vsub.f32 %v1898, %v1906
          %v1909 = vsub.f32 %v1899, %v1907
          %v1910 = vmul.f32 %v1908, 1.442695
          %v1911 = vpow.pop %v1910
          %v1912 = vmul.f32 %v1909, 1.442695
          %v1913 = vpow.pop %v1912
          %1915 = vset.pattern.permute.xlu0 3
          %1916 = vperm.xlu0 %1915, %v1906
          %v1917 = vpop.permute.xlu0 %1916
          %1920 = vset.pattern.permute.xlu0 3
          %1921 = vperm.xlu0 %1920, %v1907
          %v1922 = vpop.permute.xlu0 %1921
          %v1924 = vsub.f32 %v1896, %v1917
          %v1925 = vsub.f32 %v1897, %v1922
          %v1926 = vmul.f32 %v1924, 1.442695
          %v1927 = vpow.pop %v1926
          %v1928 = vmul.f32 %v1925, 1.442695
          %v1929 = vpow.pop %v1928
          %v1930 = vld [vmem:[#allocation3] sm:$0xff]
          %v1931 = vld [vmem:[#allocation3 + $0x8] sm:$0xff]
          %v1932 = vmul.f32 %v1911, %v1930
          %v1933 = vmul.f32 %v1913, %v1931
          %v1934 = vsel %vm1316, %v1927, 0.0
          %1935 = vadd.xlane.f32.xlu0 %v1934
          %v1936 = vpop.xlane.xlu0 %1935
          %v1937 = vsel %vm1316, %v1929, 0.0
          %1938 = vadd.xlane.f32.xlu0 %v1937
          %v1939 = vpop.xlane.xlu0 %1938
          %v1940 = vadd.f32 %v1932, %v1936
          %v1941 = vadd.f32 %v1933, %v1939
          %vm1942 = vcmask 31768
          %1943 = vst.msk [vmem:[#allocation3] sm:$0xff] %vm1942, %v1940
          %1944 = vst.msk [vmem:[#allocation3 + $0x8] sm:$0xff] %vm1942, %v1941
          %v1945 = vld [vmem:[#allocation4] sm:$0xff]
          %v1946 = vld [vmem:[#allocation4 + $0x8] sm:$0xff]
          %1948 = vset.pattern.permute.xlu0 3
          %1949 = vperm.xlu0 %1948, %v1911
          %v1950 = vpop.permute.xlu0 %1949
          %1953 = vset.pattern.permute.xlu0 3
          %1954 = vperm.xlu0 %1953, %v1913
          %v1955 = vpop.permute.xlu0 %1954
          %v1957 = vmul.f32 %v1950, %v1945
          %v1958 = vmul.f32 %v1955, %v1946
          %v1959 = vpack.c.bf16 %v1929, %v1927
          %v1960 = vld [vmem:[%s387] sm:$0xf]
          %v1961 = vld [vmem:[%s387 + $0x4] sm:$0xf]
          %v1964 = vunpack.c.l.b16 %v1960
          %v1965 = vunpack.c.l.b16 %v1961
          %v1966 = vpack.c.b16 %v1965, %v1964
          %1967 = vrot.lane.b32.xlu0 %v1966, 32
          %v1968 = vpop.permute.xlu0 %1967
          %v1971 = vsel %vm1316, %v1959, 0
          %1973 = vmatprep.subr.bf16.mxu0 0
          %1974 = vmatpush1.bf16.msra.mxu0 %v1968
          %1975 = vmatprep.subr.bf16.mxu0 0
          %1976 = vmatpush1.bf16.msra.mxu0 0
          %1977 = vmatprep.subr.bf16.mxu0 0
          %1978 = vmatpush1.bf16.msra.mxu0 0
          %1979 = vmatprep.subr.bf16.mxu0 0
          %1980 = vmatpush1.bf16.msra.mxu0 0
          %1981 = vmatprep.subr.bf16.mxu0 0
          %1982 = vmatpush1.bf16.msra.mxu0 0
          %1983 = vmatprep.subr.bf16.mxu0 0
          %1984 = vmatpush1.bf16.msra.mxu0 0
          %1985 = vmatprep.subr.bf16.mxu0 0
          %1986 = vmatpush1.bf16.msra.mxu0 0
          %1987 = vmatprep.subr.bf16.mxu0 0
          %1988 = vmatpush1.bf16.msra.mxu0 0
          %1989 = vmatprep.subr.bf16.mxu0 0
          %1990 = vmatpush1.bf16.msra.mxu0 0
          %1991 = vmatprep.subr.bf16.mxu0 0
          %1992 = vmatpush1.bf16.msra.mxu0 0
          %1993 = vmatprep.subr.bf16.mxu0 0
          %1994 = vmatpush1.bf16.msra.mxu0 0
          %1995 = vmatprep.subr.bf16.mxu0 0
          %1996 = vmatpush1.bf16.msra.mxu0 0
          %1997 = vmatprep.subr.bf16.mxu0 0
          %1998 = vmatpush1.bf16.msra.mxu0 0
          %1999 = vmatprep.subr.bf16.mxu0 0
          %2000 = vmatpush1.bf16.msra.mxu0 0
          %2001 = vmatprep.subr.bf16.mxu0 0
          %2002 = vmatpush1.bf16.msra.mxu0 0
          %2003 = vmatprep.subr.bf16.mxu0 0
          %2004 = vmatpush1.bf16.msra.mxu0 0
          %2005 = vmatprep.mubr.bf16.mxu0 0
          %2006 = vmatmul.mubr.bf16.gmra.mrb[0].mxu0 %v1971
          %v2007 = vpop.f32.mrb[0].mxu0
          %v2008 = vadd.f32 0.0, %v2007
          %v2009 = vpop.f32.mrb[0].mxu0
          %v2010 = vpop.f32.mrb[0].mxu0
          %v2011 = vadd.f32 0.0, %v2010
          %v2012 = vpop.f32.mrb[0].mxu0
          %2013 = vdwg.mxu0
          %2016 = vrot.lane.b32.xlu0 %v2008, 96
          %v2017 = vpop.permute.xlu0 %2016
          %2018 = vrot.lane.b32.xlu0 %v2011, 96
          %v2019 = vpop.permute.xlu0 %2018
          %v2022 = vadd.f32 %v1957, %v2017
          %v2023 = vadd.f32 %v1958, %v2019
          %vm2024 = vcmask 1048320
          %2025 = vst.msk [vmem:[#allocation4] sm:$0xff] %vm2024, %v2022
          %2026 = vst.msk [vmem:[#allocation4 + $0x8] sm:$0xff] %vm2024, %v2023
          %2027 = vst.msk [vmem:[#allocation2] sm:$0xff] %vm1942, %v1906
          %2028 = vst.msk [vmem:[#allocation2 + $0x8] sm:$0xff] %vm1942, %v1907
        $region167: #{llama_forward.13} parent=142 // pred_fallthru
          _
        // Predicated region
        $region168: #{llama_forward.13} parent=142 // pred_check
          %p2029 = pneg %p446
        $region169: #{llama_forward.13} parent=142 // pred_check_branch
          %2031 = sbr.rel (%p2029) target = $region171
        $region170: #{llama_forward.13} parent=142 // pred_region
          %v2032 = vld [vmem:[#allocation4] sm:$0xff]
          %v2033 = vld [vmem:[#allocation4 + $0x8] sm:$0xff]
          %v2034 = vld [vmem:[#allocation3] sm:$0xff]
          %v2035 = vld [vmem:[#allocation3 + $0x8] sm:$0xff]
          %2037 = vset.pattern.permute.xlu0 0
          %2038 = vperm.xlu0 %2037, %v2034
          %v2039 = vpop.permute.xlu0 %2038
          %2042 = vset.pattern.permute.xlu0 0
          %2043 = vperm.xlu0 %2042, %v2035
          %v2044 = vpop.permute.xlu0 %2043
          %v2046 = vrcp.pop %v2039
          %v2047 = vmul.f32 %v2032, %v2046
          %v2048 = vrcp.pop %v2044
          %v2049 = vmul.f32 %v2033, %v2048
          %v2050 = vpack.c.bf16 %v2049, %v2047
          %v2052 = vunpack.c.l.b16 %v2050
          %v2053 = vunpack.c.h.b16 %v2050
          %v2054 = vpack.c.b16 %v2052, %v2052
          %v2055 = vpack.c.b16 %v2053, %v2053
          %vm2058 = vcmask 257024
          %2059 = vst.msk [vmem:[%s443] sm:$0xf] %vm2058, %v2054
          %2060 = vst.msk [vmem:[%s443 + $0x4] sm:$0xf] %vm2058, %v2055
          %v2061 = vld [vmem:[#allocation4] sm:$0xff]
          %v2062 = vld [vmem:[#allocation4 + $0x8] sm:$0xff]
          %v2063 = vld [vmem:[#allocation3] sm:$0xff]
          %v2064 = vld [vmem:[#allocation3 + $0x8] sm:$0xff]
          %2066 = vset.pattern.permute.xlu0 1
          %2067 = vperm.xlu0 %2066, %v2063
          %v2068 = vpop.permute.xlu0 %2067
          %2071 = vset.pattern.permute.xlu0 1
          %2072 = vperm.xlu0 %2071, %v2064
          %v2073 = vpop.permute.xlu0 %2072
          %v2075 = vrcp.pop %v2068
          %v2076 = vmul.f32 %v2061, %v2075
          %v2077 = vrcp.pop %v2073
          %v2078 = vmul.f32 %v2062, %v2077
          %v2079 = vpack.c.bf16 %v2078, %v2076
          %v2081 = vunpack.c.l.b16 %v2079
          %v2082 = vunpack.c.h.b16 %v2079
          %v2083 = vpack.c.b16 %v2081, %v2081
          %v2084 = vpack.c.b16 %v2082, %v2082
          %vm2087 = vcmask 519424
          %2088 = vst.msk [vmem:[%s443] sm:$0xf] %vm2087, %v2083
          %2089 = vst.msk [vmem:[%s443 + $0x4] sm:$0xf] %vm2087, %v2084
          %v2090 = vld [vmem:[#allocation4] sm:$0xff]
          %v2091 = vld [vmem:[#allocation4 + $0x8] sm:$0xff]
          %v2092 = vld [vmem:[#allocation3] sm:$0xff]
          %v2093 = vld [vmem:[#allocation3 + $0x8] sm:$0xff]
          %2095 = vset.pattern.permute.xlu0 2
          %2096 = vperm.xlu0 %2095, %v2092
          %v2097 = vpop.permute.xlu0 %2096
          %2100 = vset.pattern.permute.xlu0 2
          %2101 = vperm.xlu0 %2100, %v2093
          %v2102 = vpop.permute.xlu0 %2101
          %v2104 = vrcp.pop %v2097
          %v2105 = vmul.f32 %v2090, %v2104
          %v2106 = vrcp.pop %v2102
          %v2107 = vmul.f32 %v2091, %v2106
          %v2108 = vpack.c.bf16 %v2107, %v2105
          %v2110 = vunpack.c.l.b16 %v2108
          %v2111 = vunpack.c.h.b16 %v2108
          %v2112 = vpack.c.b16 %v2110, %v2110
          %v2113 = vpack.c.b16 %v2111, %v2111
          %vm2116 = vcmask 781824
          %2117 = vst.msk [vmem:[%s443] sm:$0xf] %vm2116, %v2112
          %2118 = vst.msk [vmem:[%s443 + $0x4] sm:$0xf] %vm2116, %v2113
          %v2119 = vld [vmem:[#allocation4] sm:$0xff]
          %v2120 = vld [vmem:[#allocation4 + $0x8] sm:$0xff]
          %v2121 = vld [vmem:[#allocation3] sm:$0xff]
          %v2122 = vld [vmem:[#allocation3 + $0x8] sm:$0xff]
          %2124 = vset.pattern.permute.xlu0 3
          %2125 = vperm.xlu0 %2124, %v2121
          %v2126 = vpop.permute.xlu0 %2125
          %2129 = vset.pattern.permute.xlu0 3
          %2130 = vperm.xlu0 %2129, %v2122
          %v2131 = vpop.permute.xlu0 %2130
          %v2133 = vrcp.pop %v2126
          %v2134 = vmul.f32 %v2119, %v2133
          %v2135 = vrcp.pop %v2131
          %v2136 = vmul.f32 %v2120, %v2135
          %v2137 = vpack.c.bf16 %v2136, %v2134
          %v2139 = vunpack.c.l.b16 %v2137
          %v2140 = vunpack.c.h.b16 %v2137
          %v2141 = vpack.c.b16 %v2139, %v2139
          %v2142 = vpack.c.b16 %v2140, %v2140
          %vm2145 = vcmask 1044224
          %2146 = vst.msk [vmem:[%s443] sm:$0xf] %vm2145, %v2141
          %2147 = vst.msk [vmem:[%s443 + $0x4] sm:$0xf] %vm2145, %v2142
        $region171: #{llama_forward.13} parent=142 // pred_fallthru
          _
        %s2148 = smul.u32 2, %s22
        %p2149 = scmp.lt.s32.totalorder %s20, 1
        %s2150 = scalar_select %p2149, %s20, 1
        %p2151 = scmp.lt.s32.totalorder %s2148, 1
        %s2152 = scalar_select %p2151, %s2148, 1
        %p2153 = scmp.lt.s32.totalorder %s21, 0
        %s2154 = scalar_select %p2153, %s21, 0
        %s2155 = sadd.s32 %s2154, %s2152
        %s2156 = smul.addr %s2150, 2
        %s2157 = sadd.s32 %s2155, %s2156
        %s2158 = smul.addr %s2157, 4
        %s2159 = scalar_lea.vmem %s3, %s2158
        // Predicated region
        $region172: #{llama_forward.13} parent=142 // pred_check
          %p2160 = pneg %p164
        $region173: #{llama_forward.13} parent=142 // pred_check_branch
          %2162 = sbr.rel (%p2160) target = $region175
        $region174: #{llama_forward.13} parent=142 // pred_region
          %s2163 = smul.u32 2, %s22
        $region175: #{llama_forward.13} parent=142 // pred_fallthru
          _
      $region143: #{llama_forward.13} parent=5 // pred_fallthru
        _
      %p2164 = scmp.le.s32.totalorder 2, %s9
      // Predicated region
      $region176: #{llama_forward.13} parent=5 // pred_check
        %p2165 = pneg %p2164
      $region177: #{llama_forward.13} parent=5 // pred_check_branch
        %2167 = sbr.rel (%p2165) target = $region179
      $region178: #{llama_forward.13} parent=5 // pred_region
        %s2168 = ssub.s32 %s9, 2
        // Predicated region
        $region180: #{llama_forward.13} parent=178 // pred_check
          %p2169 = pneg %p170
        $region181: #{llama_forward.13} parent=178 // pred_check_branch
          %2171 = sbr.rel (%p2169) target = $region183
        $region182: #{llama_forward.13} parent=178 // pred_region
          %s2172 = smul.u32 2, %s26
          %p2173 = scmp.lt.s32.totalorder %s24, 1
          %s2174 = scalar_select %p2173, %s24, 1
          %p2175 = scmp.lt.s32.totalorder %s2172, 1
          %s2176 = scalar_select %p2175, %s2172, 1
          %p2177 = scmp.lt.s32.totalorder %s25, 0
          %s2178 = scalar_select %p2177, %s25, 0
          %s2179 = sadd.s32 %s2178, %s2176
          %s2180 = smul.addr %s2174, 2
          %s2181 = sadd.s32 %s2179, %s2180
          %s2182 = smul.addr %s2181, 4
          %s2183 = scalar_lea.vmem %s3, %s2182
        $region183: #{llama_forward.13} parent=178 // pred_fallthru
          _
      $region179: #{llama_forward.13} parent=5 // pred_fallthru
        _
    $region6: #{llama_forward.13} parent=1 // loop_footer
      %s13 = sadd.s32 1, %s9
    $region7: #{llama_forward.13} parent=1 // loop_footer_branch
      %8 = sbr.rel target = $region3
    $region8: #{llama_forward.13} parent=1 // loop_exit
      _

// kernel: llama_forward.21
$region0: #{llama_forward.21}
  #allocation0 [shape = 'u32[]', space=smem, size = 0x4, offset = 0x4, fixed_abs, tag = 'smem constant byte address 0x4 - core index']
  #allocation1 [shape = 'u32[144,128]{1,0:T(1,128)}', space=vmem, size = 0x12000, scoped, tag = 'internal scratch']
  %s0 = inlined_call_operand.vmem [shape: f32[32,128], index: 0, kind: input, shape index: {}]
  %s1 = inlined_call_operand.vmem [shape: f32[1,128], index: 1, kind: input, shape index: {}]
  %s2 = inlined_call_operand.vmem [shape: bf16[128,256], index: 2, kind: input, shape index: {}]
  %s3 = inlined_call_operand.hbm [shape: f32[32,256], index: 3, kind: output, shape index: {}]
  %s4 = sld [smem:[#allocation0]]
  $region22: #{llama_forward.21} parent=0
    _
  %s6 = ssub.s32 1, %s4
  %s7 = scalar_select 0, %s6, %s4
  $region1: #{llama_forward.21} parent=0
    #allocation2 [shape = 'u8[32768]{0}', space=vmem, size = 0x8000, scoped, tag = 'output window, operand 0, single buffered']
    #allocation3 [shape = 's32[1]{0}', space=sflag, size = 0x4, scoped, tag = 'scoped memory for llama_forward.21']
    %8 = vsyncpa [#allocation3], 0
    // Predicated region
    $region2: #{llama_forward.21} parent=1 // pred_check
      _
    $region3: #{llama_forward.21} parent=1 // pred_check_branch
      %10 = sbr.rel (0) target = $region5
    $region4: #{llama_forward.21} parent=1 // pred_region
      _
    $region5: #{llama_forward.21} parent=1 // pred_fallthru
      _
    // Predicated region
    $region6: #{llama_forward.21} parent=1 // pred_check
      _
    $region7: #{llama_forward.21} parent=1 // pred_check_branch
      %12 = sbr.rel (0) target = $region9
    $region8: #{llama_forward.21} parent=1 // pred_region
      _
    $region9: #{llama_forward.21} parent=1 // pred_fallthru
      _
    // Predicated region
    $region10: #{llama_forward.21} parent=1 // pred_check
      _
    $region11: #{llama_forward.21} parent=1 // pred_check_branch
      %14 = sbr.rel (0) target = $region13
    $region12: #{llama_forward.21} parent=1 // pred_region
      _
    $region13: #{llama_forward.21} parent=1 // pred_fallthru
      _
    %v16 = vld [vmem:[%s0] sm:$0xff]
    %v17 = vld [vmem:[%s0 + $0x8] sm:$0xff]
    %v18 = vld [vmem:[%s0 + $0x10] sm:$0xff]
    %v19 = vld [vmem:[%s0 + $0x18] sm:$0xff]
    %v20 = vmul.f32 %v16, %v16
    %v21 = vmul.f32 %v17, %v17
    %v22 = vmul.f32 %v18, %v18
    %v23 = vmul.f32 %v19, %v19
    %24 = vadd.xlane.f32.xlu0 %v20
    %v25 = vpop.xlane.xlu0 %24
    %26 = vadd.xlane.f32.xlu0 %v21
    %v27 = vpop.xlane.xlu0 %26
    %28 = vadd.xlane.f32.xlu0 %v22
    %v29 = vpop.xlane.xlu0 %28
    %30 = vadd.xlane.f32.xlu0 %v23
    %v31 = vpop.xlane.xlu0 %30
    %v32 = vrcp.pop 128.0
    %v33 = vmul.f32 %v25, %v32
    %v34 = vmul.f32 %v27, %v32
    %v35 = vmul.f32 %v29, %v32
    %v36 = vmul.f32 %v31, %v32
    %v37 = vadd.f32 %v33, 1.1920929e-07
    %v38 = vadd.f32 %v34, 1.1920929e-07
    %v39 = vadd.f32 %v35, 1.1920929e-07
    %v40 = vadd.f32 %v36, 1.1920929e-07
    %v41 = vrsqrt.pop %v37
    %v42 = vrsqrt.pop %v38
    %v43 = vrsqrt.pop %v39
    %v44 = vrsqrt.pop %v40
    %v45 = vmul.f32 %v16, %v41
    %v46 = vmul.f32 %v17, %v42
    %v47 = vmul.f32 %v18, %v43
    %v48 = vmul.f32 %v19, %v44
    %v49 = vld [vmem:[%s1] sm:$0x1]
    %v51 = vlaneseq
    %v52 = vshrl.u32 %v51, 7
    %v53 = vsub.s32 0, %v52
    %v54 = vrot.slane %v49, %v53
    %v56 = vmul.f32 %v45, %v54
    %v57 = vmul.f32 %v46, %v54
    %v58 = vmul.f32 %v47, %v54
    %v59 = vmul.f32 %v48, %v54
    %v60 = vpack.c.bf16 %v57, %v56
    %v61 = vpack.c.bf16 %v59, %v58
    %v62 = vld [vmem:[%s2] sm:$0xff]
    %v63 = vld [vmem:[%s2 + $0x8] sm:$0xff]
    %v64 = vld [vmem:[%s2 + $0x10] sm:$0xff]
    %v65 = vld [vmem:[%s2 + $0x18] sm:$0xff]
    %v66 = vld [vmem:[%s2 + $0x20] sm:$0xff]
    %v67 = vld [vmem:[%s2 + $0x28] sm:$0xff]
    %v68 = vld [vmem:[%s2 + $0x30] sm:$0xff]
    %v69 = vld [vmem:[%s2 + $0x38] sm:$0xff]
    %v70 = vld [vmem:[%s2 + $0x40] sm:$0xff]
    %v71 = vld [vmem:[%s2 + $0x48] sm:$0xff]
    %v72 = vld [vmem:[%s2 + $0x50] sm:$0xff]
    %v73 = vld [vmem:[%s2 + $0x58] sm:$0xff]
    %v74 = vld [vmem:[%s2 + $0x60] sm:$0xff]
    %v75 = vld [vmem:[%s2 + $0x68] sm:$0xff]
    %v76 = vld [vmem:[%s2 + $0x70] sm:$0xff]
    %v77 = vld [vmem:[%s2 + $0x78] sm:$0xff]
    %v94 = vunpack.c.l.b16 %v62
    %v95 = vunpack.c.h.b16 %v62
    %v96 = vunpack.c.l.b16 %v63
    %v97 = vunpack.c.h.b16 %v63
    %v98 = vunpack.c.l.b16 %v64
    %v99 = vunpack.c.h.b16 %v64
    %v100 = vunpack.c.l.b16 %v65
    %v101 = vunpack.c.h.b16 %v65
    %v102 = vunpack.c.l.b16 %v66
    %v103 = vunpack.c.h.b16 %v66
    %v104 = vunpack.c.l.b16 %v67
    %v105 = vunpack.c.h.b16 %v67
    %v106 = vunpack.c.l.b16 %v68
    %v107 = vunpack.c.h.b16 %v68
    %v108 = vunpack.c.l.b16 %v69
    %v109 = vunpack.c.h.b16 %v69
    %v110 = vunpack.c.l.b16 %v70
    %v111 = vunpack.c.h.b16 %v70
    %v112 = vunpack.c.l.b16 %v71
    %v113 = vunpack.c.h.b16 %v71
    %v114 = vunpack.c.l.b16 %v72
    %v115 = vunpack.c.h.b16 %v72
    %v116 = vunpack.c.l.b16 %v73
    %v117 = vunpack.c.h.b16 %v73
    %v118 = vunpack.c.l.b16 %v74
    %v119 = vunpack.c.h.b16 %v74
    %v120 = vunpack.c.l.b16 %v75
    %v121 = vunpack.c.h.b16 %v75
    %v122 = vunpack.c.l.b16 %v76
    %v123 = vunpack.c.h.b16 %v76
    %v124 = vunpack.c.l.b16 %v77
    %v125 = vunpack.c.h.b16 %v77
    %v126 = vpack.c.b16 %v96, %v94
    %v127 = vpack.c.b16 %v97, %v95
    %v128 = vpack.c.b16 %v100, %v98
    %v129 = vpack.c.b16 %v101, %v99
    %v130 = vpack.c.b16 %v104, %v102
    %v131 = vpack.c.b16 %v105, %v103
    %v132 = vpack.c.b16 %v108, %v106
    %v133 = vpack.c.b16 %v109, %v107
    %v134 = vpack.c.b16 %v112, %v110
    %v135 = vpack.c.b16 %v113, %v111
    %v136 = vpack.c.b16 %v116, %v114
    %v137 = vpack.c.b16 %v117, %v115
    %v138 = vpack.c.b16 %v120, %v118
    %v139 = vpack.c.b16 %v121, %v119
    %v140 = vpack.c.b16 %v124, %v122
    %v141 = vpack.c.b16 %v125, %v123
    %158 = vmatprep.subr.bf16.mxu0 %v127
    %159 = vmatpush1.bf16.msra.mxu0 %v126
    %160 = vmatprep.subr.bf16.mxu0 %v129
    %161 = vmatpush1.bf16.msra.mxu0 %v128
    %162 = vmatprep.subr.bf16.mxu0 %v131
    %163 = vmatpush1.bf16.msra.mxu0 %v130
    %164 = vmatprep.subr.bf16.mxu0 %v133
    %165 = vmatpush1.bf16.msra.mxu0 %v132
    %166 = vmatprep.subr.bf16.mxu0 %v135
    %167 = vmatpush1.bf16.msra.mxu0 %v134
    %168 = vmatprep.subr.bf16.mxu0 %v137
    %169 = vmatpush1.bf16.msra.mxu0 %v136
    %170 = vmatprep.subr.bf16.mxu0 %v139
    %171 = vmatpush1.bf16.msra.mxu0 %v138
    %172 = vmatprep.subr.bf16.mxu0 %v141
    %173 = vmatpush1.bf16.msra.mxu0 %v140
    %174 = vmatprep.subr.bf16.mxu0 0
    %175 = vmatpush1.bf16.msra.mxu0 0
    %176 = vmatprep.subr.bf16.mxu0 0
    %177 = vmatpush1.bf16.msra.mxu0 0
    %178 = vmatprep.subr.bf16.mxu0 0
    %179 = vmatpush1.bf16.msra.mxu0 0
    %180 = vmatprep.subr.bf16.mxu0 0
    %181 = vmatpush1.bf16.msra.mxu0 0
    %182 = vmatprep.subr.bf16.mxu0 0
    %183 = vmatpush1.bf16.msra.mxu0 0
    %184 = vmatprep.subr.bf16.mxu0 0
    %185 = vmatpush1.bf16.msra.mxu0 0
    %186 = vmatprep.subr.bf16.mxu0 0
    %187 = vmatpush1.bf16.msra.mxu0 0
    %188 = vmatprep.subr.bf16.mxu0 0
    %189 = vmatpush1.bf16.msra.mxu0 0
    %190 = vmatprep.mubr.bf16.mxu0 0
    %191 = vmatmul.mubr.bf16.gmra.mrb[0].mxu0 %v60
    %v192 = vpop.f32.mrb[0].mxu0
    %v193 = vadd.f32 0.0, %v192
    %v194 = vpop.f32.mrb[0].mxu0
    %v195 = vadd.f32 0.0, %v194
    %v196 = vpop.f32.mrb[0].mxu0
    %v197 = vadd.f32 0.0, %v196
    %v198 = vpop.f32.mrb[0].mxu0
    %v199 = vadd.f32 0.0, %v198
    %200 = vmatprep.mubr.bf16.mxu0 0
    %201 = vmatmul.mubr.bf16.gmra.mrb[0].mxu0 %v61
    %v202 = vpop.f32.mrb[0].mxu0
    %v203 = vadd.f32 0.0, %v202
    %v204 = vpop.f32.mrb[0].mxu0
    %v205 = vadd.f32 0.0, %v204
    %v206 = vpop.f32.mrb[0].mxu0
    %v207 = vadd.f32 0.0, %v206
    %v208 = vpop.f32.mrb[0].mxu0
    %v209 = vadd.f32 0.0, %v208
    %210 = vdwg.mxu0
    %211 = vst [vmem:[#allocation2] sm:$0xff] %v193
    %212 = vst [vmem:[#allocation2 + $0x8] sm:$0xff] %v195
    %213 = vst [vmem:[#allocation2 + $0x10] sm:$0xff] %v197
    %214 = vst [vmem:[#allocation2 + $0x18] sm:$0xff] %v199
    %215 = vst [vmem:[#allocation2 + $0x20] sm:$0xff] %v203
    %216 = vst [vmem:[#allocation2 + $0x28] sm:$0xff] %v205
    %217 = vst [vmem:[#allocation2 + $0x30] sm:$0xff] %v207
    %218 = vst [vmem:[#allocation2 + $0x38] sm:$0xff] %v209
    // Predicated region
    $region14: #{llama_forward.21} parent=1 // pred_check
      _
    $region15: #{llama_forward.21} parent=1 // pred_check_branch
      %220 = sbr.rel (0) target = $region17
    $region16: #{llama_forward.21} parent=1 // pred_region
      %s222 = ssub.s32 1024, 1024
      %223 = vsyncadd [#allocation3], %s222
      %s224 = sshll.u32 [#allocation2], 4
      %s225 = int_to_ptr.vmem [resolvable:$true] %s224
      %230 = dma.vmem_to_hbm [thread:$0]  %s225, 1024, %s3, [#allocation3], 256, 256, 16
    $region17: #{llama_forward.21} parent=1 // pred_fallthru
      _
    // Predicated region
    $region18: #{llama_forward.21} parent=1 // pred_check
      _
    $region19: #{llama_forward.21} parent=1 // pred_check_branch
      %232 = sbr.rel (0) target = $region21
    $region20: #{llama_forward.21} parent=1 // pred_region
      %233 = dma.done [#allocation3], 1024
    $region21: #{llama_forward.21} parent=1 // pred_fallthru
      _
    %234 = vsyncpa [#allocation3], 1

// kernel: llama_forward.15
$region0: #{llama_forward.15}
  #allocation0 [shape = 'u32[]', space=smem, size = 0x4, offset = 0x4, fixed_abs, tag = 'smem constant byte address 0x4 - core index']
  #allocation1 [shape = 'u32[144,128]{1,0:T(1,128)}', space=vmem, size = 0x12000, scoped, tag = 'internal scratch']
  #allocation2 [shape = 'f32[32,128]{1,0:T(8,128)}', space=vmem, size = 0x4000, scoped, tag = 'scratch operand']
  #allocation3 [shape = 'bf16[32,128]{1,0:T(16,128)(2,1)}', space=vmem, size = 0x2000, scoped, tag = 'scratch operand']
  %s0 = inlined_call_operand.vmem [shape: f32[32,128], index: 0, kind: input, shape index: {}]
  %s1 = inlined_call_operand.vmem [shape: f32[1,128], index: 1, kind: input, shape index: {}]
  %s2 = inlined_call_operand.vmem [shape: bf16[128,512], index: 2, kind: input, shape index: {}]
  %s3 = inlined_call_operand.vmem [shape: bf16[128,512], index: 3, kind: input, shape index: {}]
  %s4 = inlined_call_operand.vmem [shape: bf16[512,128], index: 4, kind: input, shape index: {}]
  %s5 = inlined_call_operand.vmem [shape: f32[32,128], index: 5, kind: output, shape index: {}]
  %s6 = sld [smem:[#allocation0]]
  $region137: #{llama_forward.15} parent=0
    _
  %s8 = ssub.s32 1, %s6
  %s9 = scalar_select 0, %s8, %s6
  $region1: #{llama_forward.15} parent=0
    #allocation4 [shape = 'u8[131072]{0}', space=vmem, size = 0x20000, scoped, tag = 'input window, operand 2']
    #allocation5 [shape = 'u8[131072]{0}', space=vmem, size = 0x20000, scoped, tag = 'input window, operand 3']
    loop: start=0, step=1, limit=4
    $region2: #{llama_forward.15} parent=1 // loop_pre_header
      _
    $region3: #{llama_forward.15} parent=1 // loop_header
      %s11 = sphi 0, %s15
      %p12 = scmp.ge.s32.totalorder %s11, 4
      %s18 = sphi 0, %s30
      %s19 = sphi 0, %s26
      %s20 = sphi 0, %s18
      %s21 = sphi 0, %s19
      %s22 = sphi 0, %s20
      %s23 = sphi 0, %s21
      %s33 = sphi 0, %s35
      %s36 = sphi 0, %s33
      %s37 = sphi 0, %s36
      %s53 = sphi 0, %s37
      %s57 = sphi 0, %s57
      %s59 = sphi 0, %s57
      %s60 = sphi 0, %s59
      %s74 = sphi 0, %s60
      %s80 = sphi 0, %s82
      %s83 = sphi 0, %s80
      %s84 = sphi 0, %s83
      %s100 = sphi 0, %s84
      %s106 = sphi 0, %s108
      %s109 = sphi 0, %s106
      %s110 = sphi 0, %s109
      %s126 = sphi 0, %s110
      %s132 = sphi 0, %s134
      %s135 = sphi 0, %s132
      %s136 = sphi 0, %s135
      %s152 = sphi 0, %s136
      %s158 = sphi 0, %s160
      %s161 = sphi 0, %s158
      %s162 = sphi 0, %s161
      %s178 = sphi 0, %s162
    $region4: #{llama_forward.15} parent=1 // loop_header_branch
      %14 = sbr.rel (%p12) target = $region8
    $region5: #{llama_forward.15} parent=1 // loop_body
      %s16 = ssub.s32 %s11, 1
      %s17 = ssub.s32 %s11, 2
      %s24 = sadd.s32 1, %s19
      %p25 = scmp.ge.s32.totalorder %s24, 2
      %s26 = scalar_select %p25, 0, %s24
      %s27 = sadd.s32 1, %s18
      %s28 = scalar_select %p25, %s27, %s18
      %p29 = scmp.ge.s32.totalorder %s28, 1
      %s30 = scalar_select %p29, 0, %s28
      %s31 = ssub.s32 %s18, %s30
      %p32 = scmp.eq.s32.totalorder %s31, 0
      %s34 = sadd.s32 %s33, 1
      %s35 = scalar_select %p32, %s33, %s34
      %p38 = pneg %p32
      %p39 = scmp.eq.s32.totalorder %s11, 1
      %p40 = por %p38, %p39
      %p41 = scmp.ne.s32.totalorder %s33, %s36
      %p42 = scmp.eq.s32.totalorder %s11, 0
      %p43 = por %p41, %p42
      %p44 = scmp.ne.s32.totalorder %s33, %s36
      %p45 = scmp.eq.s32.totalorder %s16, 1
      %p46 = por %p44, %p45
      %p47 = scmp.ne.s32.totalorder %s36, %s37
      %p48 = scmp.eq.s32.totalorder %s16, 0
      %p49 = por %p47, %p48
      %p50 = scmp.ne.s32.totalorder %s36, %s37
      %p51 = scmp.eq.s32.totalorder %s17, 1
      %p52 = por %p50, %p51
      %p54 = scmp.ne.s32.totalorder %s37, %s53
      %p55 = scmp.eq.s32.totalorder %s17, 0
      %p56 = por %p54, %p55
      %s58 = sadd.s32 %s57, 1
      %p61 = scmp.eq.s32.totalorder %s11, 1
      %p62 = scmp.ne.s32.totalorder %s57, %s59
      %p63 = scmp.eq.s32.totalorder %s11, 0
      %p64 = por %p62, %p63
      %p65 = scmp.ne.s32.totalorder %s57, %s59
      %p66 = scmp.eq.s32.totalorder %s16, 1
      %p67 = por %p65, %p66
      %p68 = scmp.ne.s32.totalorder %s59, %s60
      %p69 = scmp.eq.s32.totalorder %s16, 0
      %p70 = por %p68, %p69
      %p71 = scmp.ne.s32.totalorder %s59, %s60
      %p72 = scmp.eq.s32.totalorder %s17, 1
      %p73 = por %p71, %p72
      %p75 = scmp.ne.s32.totalorder %s60, %s74
      %p76 = scmp.eq.s32.totalorder %s17, 0
      %p77 = por %p75, %p76
      %s78 = ssub.s32 %s19, %s26
      %p79 = scmp.eq.s32.totalorder %s78, 0
      %s81 = sadd.s32 %s80, 1
      %s82 = scalar_select %p79, %s80, %s81
      %p85 = pneg %p79
      %p86 = scmp.eq.s32.totalorder %s11, 1
      %p87 = por %p85, %p86
      %p88 = scmp.ne.s32.totalorder %s80, %s83
      %p89 = scmp.eq.s32.totalorder %s11, 0
      %p90 = por %p88, %p89
      %p91 = scmp.ne.s32.totalorder %s80, %s83
      %p92 = scmp.eq.s32.totalorder %s16, 1
      %p93 = por %p91, %p92
      %p94 = scmp.ne.s32.totalorder %s83, %s84
      %p95 = scmp.eq.s32.totalorder %s16, 0
      %p96 = por %p94, %p95
      %p97 = scmp.ne.s32.totalorder %s83, %s84
      %p98 = scmp.eq.s32.totalorder %s17, 1
      %p99 = por %p97, %p98
      %p101 = scmp.ne.s32.totalorder %s84, %s100
      %p102 = scmp.eq.s32.totalorder %s17, 0
      %p103 = por %p101, %p102
      %s104 = ssub.s32 %s19, %s26
      %p105 = scmp.eq.s32.totalorder %s104, 0
      %s107 = sadd.s32 %s106, 1
      %s108 = scalar_select %p105, %s106, %s107
      %p111 = pneg %p105
      %p112 = scmp.eq.s32.totalorder %s11, 1
      %p113 = por %p111, %p112
      %p114 = scmp.ne.s32.totalorder %s106, %s109
      %p115 = scmp.eq.s32.totalorder %s11, 0
      %p116 = por %p114, %p115
      %p117 = scmp.ne.s32.totalorder %s106, %s109
      %p118 = scmp.eq.s32.totalorder %s16, 1
      %p119 = por %p117, %p118
      %p120 = scmp.ne.s32.totalorder %s109, %s110
      %p121 = scmp.eq.s32.totalorder %s16, 0
      %p122 = por %p120, %p121
      %p123 = scmp.ne.s32.totalorder %s109, %s110
      %p124 = scmp.eq.s32.totalorder %s17, 1
      %p125 = por %p123, %p124
      %p127 = scmp.ne.s32.totalorder %s110, %s126
      %p128 = scmp.eq.s32.totalorder %s17, 0
      %p129 = por %p127, %p128
      %s130 = ssub.s32 %s19, %s26
      %p131 = scmp.eq.s32.totalorder %s130, 0
      %s133 = sadd.s32 %s132, 1
      %s134 = scalar_select %p131, %s132, %s133
      %p137 = pneg %p131
      %p138 = scmp.eq.s32.totalorder %s11, 1
      %p139 = por %p137, %p138
      %p140 = scmp.ne.s32.totalorder %s132, %s135
      %p141 = scmp.eq.s32.totalorder %s11, 0
      %p142 = por %p140, %p141
      %p143 = scmp.ne.s32.totalorder %s132, %s135
      %p144 = scmp.eq.s32.totalorder %s16, 1
      %p145 = por %p143, %p144
      %p146 = scmp.ne.s32.totalorder %s135, %s136
      %p147 = scmp.eq.s32.totalorder %s16, 0
      %p148 = por %p146, %p147
      %p149 = scmp.ne.s32.totalorder %s135, %s136
      %p150 = scmp.eq.s32.totalorder %s17, 1
      %p151 = por %p149, %p150
      %p153 = scmp.ne.s32.totalorder %s136, %s152
      %p154 = scmp.eq.s32.totalorder %s17, 0
      %p155 = por %p153, %p154
      %s156 = ssub.s32 %s18, %s30
      %p157 = scmp.eq.s32.totalorder %s156, 0
      %s159 = sadd.s32 %s158, 1
      %s160 = scalar_select %p157, %s158, %s159
      %p163 = pneg %p157
      %p164 = scmp.eq.s32.totalorder %s11, 1
      %p165 = por %p163, %p164
      %p166 = scmp.ne.s32.totalorder %s158, %s161
      %p167 = scmp.eq.s32.totalorder %s11, 0
      %p168 = por %p166, %p167
      %p169 = scmp.ne.s32.totalorder %s158, %s161
      %p170 = scmp.eq.s32.totalorder %s16, 1
      %p171 = por %p169, %p170
      %p172 = scmp.ne.s32.totalorder %s161, %s162
      %p173 = scmp.eq.s32.totalorder %s16, 0
      %p174 = por %p172, %p173
      %p175 = scmp.ne.s32.totalorder %s161, %s162
      %p176 = scmp.eq.s32.totalorder %s17, 1
      %p177 = por %p175, %p176
      %p179 = scmp.ne.s32.totalorder %s162, %s178
      %p180 = scmp.eq.s32.totalorder %s17, 0
      %p181 = por %p179, %p180
      %p182 = scmp.le.s32.totalorder 1, %s11
      %p183 = scmp.lt.s32.totalorder %s11, 3
      %p184 = pnand %p182, %p183
      %p185 = pneg %p184
      // Predicated region
      $region9: #{llama_forward.15} parent=5 // pred_check
        _
      $region10: #{llama_forward.15} parent=5 // pred_check_branch
        %187 = sbr.rel (%p184) target = $region12
      $region11: #{llama_forward.15} parent=5 // pred_region
        %s188 = ssub.s32 %s11, 1
        // Predicated region
        $region13: #{llama_forward.15} parent=11 // pred_check
          %p189 = pneg %p49
        $region14: #{llama_forward.15} parent=11 // pred_check_branch
          %191 = sbr.rel (%p189) target = $region16
        $region15: #{llama_forward.15} parent=11 // pred_region
          %s192 = smul.u32 4, %s20
          %p193 = scmp.lt.s32.totalorder %s192, 3
          %s194 = scalar_select %p193, %s192, 3
          %s195 = smul.addr %s194, 8
          %s196 = scalar_lea.vmem %s0, %s195
          %s197 = smul.u32 4, %s20
        $region16: #{llama_forward.15} parent=11 // pred_fallthru
          _
        // Predicated region
        $region17: #{llama_forward.15} parent=11 // pred_check
          %p198 = pneg %p70
        $region18: #{llama_forward.15} parent=11 // pred_check_branch
          %200 = sbr.rel (%p198) target = $region20
        $region19: #{llama_forward.15} parent=11 // pred_region
          _
        $region20: #{llama_forward.15} parent=11 // pred_fallthru
          _
      $region12: #{llama_forward.15} parent=5 // pred_fallthru
        _
      %p201 = scmp.lt.s32.totalorder %s11, 2
      // Predicated region
      $region21: #{llama_forward.15} parent=5 // pred_check
        %p202 = pneg %p201
      $region22: #{llama_forward.15} parent=5 // pred_check_branch
        %204 = sbr.rel (%p202) target = $region24
      $region23: #{llama_forward.15} parent=5 // pred_region
        // Predicated region
        $region25: #{llama_forward.15} parent=23 // pred_check
          %p205 = pneg %p90
        $region26: #{llama_forward.15} parent=23 // pred_check_branch
          %207 = sbr.rel (%p205) target = $region28
        $region27: #{llama_forward.15} parent=23 // pred_region
          %s208 = sand.u32 %s80, 1
          %s209 = sand.u32 %s80, 1
          %s210 = smul.addr %s209, 128
          %s211 = scalar_lea.vmem [#allocation4], %s210
          %s212 = smul.u32 2, %s19
          %s213 = smul.addr %s212, 4
          %s214 = scalar_lea.vmem %s2, %s213
          // Predicated region
          $region29: #{llama_forward.15} parent=27 // pred_check
            _
          $region30: #{llama_forward.15} parent=27 // pred_check_branch
            %216 = sbr.rel (0) target = $region32
          $region31: #{llama_forward.15} parent=27 // pred_region
            // Predicated region
            $region33: #{llama_forward.15} parent=31 // pred_check
              _
            $region34: #{llama_forward.15} parent=31 // pred_check_branch
              %218 = sbr.rel (0) target = $region36
            $region35: #{llama_forward.15} parent=31 // pred_region
              // Predicated region
              $region48: #{llama_forward.15} parent=35 // pred_check
                _
              $region49: #{llama_forward.15} parent=35 // pred_check_branch
                %263 = sbr.rel (0) target = $region51
              $region50: #{llama_forward.15} parent=35 // pred_region
                loop: start=0, step=1, limit=1
                $region52: #{llama_forward.15} parent=50 // loop_pre_header
                  _
                $region53: #{llama_forward.15} parent=50 // loop_header
                  %s265 = sphi 0, %s269
                  %p266 = scmp.ge.s32.totalorder %s265, 1
                  %s270 = sphi %s214, %s214
                  %s271 = sphi %s211, %s211
                $region54: #{llama_forward.15} parent=50 // loop_header_branch
                  %268 = sbr.rel (%p266) target = $region58
                $region55: #{llama_forward.15} parent=50 // loop_body
                  %v272 = vld [vmem:[%s270] sm:$0xff]
                  %273 = vst [vmem:[%s271] sm:$0xff] %v272
                  %v274 = vld [vmem:[%s270 + $0x10] sm:$0xff]
                  %275 = vst [vmem:[%s271 + $0x8] sm:$0xff] %v274
                  %v276 = vld [vmem:[%s270 + $0x20] sm:$0xff]
                  %277 = vst [vmem:[%s271 + $0x10] sm:$0xff] %v276
                  %v278 = vld [vmem:[%s270 + $0x30] sm:$0xff]
                  %279 = vst [vmem:[%s271 + $0x18] sm:$0xff] %v278
                  %v280 = vld [vmem:[%s270 + $0x40] sm:$0xff]
                  %281 = vst [vmem:[%s271 + $0x20] sm:$0xff] %v280
                  %v282 = vld [vmem:[%s270 + $0x50] sm:$0xff]
                  %283 = vst [vmem:[%s271 + $0x28] sm:$0xff] %v282
                  %v284 = vld [vmem:[%s270 + $0x60] sm:$0xff]
                  %285 = vst [vmem:[%s271 + $0x30] sm:$0xff] %v284
                  %v286 = vld [vmem:[%s270 + $0x70] sm:$0xff]
                  %287 = vst [vmem:[%s271 + $0x38] sm:$0xff] %v286
                  %v288 = vld [vmem:[%s270 + $0x80] sm:$0xff]
                  %289 = vst [vmem:[%s271 + $0x40] sm:$0xff] %v288
                  %v290 = vld [vmem:[%s270 + $0x90] sm:$0xff]
                  %291 = vst [vmem:[%s271 + $0x48] sm:$0xff] %v290
                  %v292 = vld [vmem:[%s270 + $0xa0] sm:$0xff]
                  %293 = vst [vmem:[%s271 + $0x50] sm:$0xff] %v292
                  %v294 = vld [vmem:[%s270 + $0xb0] sm:$0xff]
                  %295 = vst [vmem:[%s271 + $0x58] sm:$0xff] %v294
                  %v296 = vld [vmem:[%s270 + $0xc0] sm:$0xff]
                  %297 = vst [vmem:[%s271 + $0x60] sm:$0xff] %v296
                  %v298 = vld [vmem:[%s270 + $0xd0] sm:$0xff]
                  %299 = vst [vmem:[%s271 + $0x68] sm:$0xff] %v298
                  %v300 = vld [vmem:[%s270 + $0xe0] sm:$0xff]
                  %301 = vst [vmem:[%s271 + $0x70] sm:$0xff] %v300
                  %v302 = vld [vmem:[%s270 + $0xf0] sm:$0xff]
                  %303 = vst [vmem:[%s271 + $0x78] sm:$0xff] %v302
                $region56: #{llama_forward.15} parent=50 // loop_footer
                  %s269 = sadd.s32 1, %s265
                $region57: #{llama_forward.15} parent=50 // loop_footer_branch
                  %264 = sbr.rel target = $region53
                $region58: #{llama_forward.15} parent=50 // loop_exit
                  _
              $region51: #{llama_forward.15} parent=35 // pred_fallthru
                _
              // Predicated region
              $region59: #{llama_forward.15} parent=35 // pred_check
                _
              $region60: #{llama_forward.15} parent=35 // pred_check_branch
                %305 = sbr.rel target = $region62
              $region61: #{llama_forward.15} parent=35 // pred_region
                _
              $region62: #{llama_forward.15} parent=35 // pred_fallthru
                _
            $region36: #{llama_forward.15} parent=31 // pred_fallthru
              _
            // Predicated region
            $region37: #{llama_forward.15} parent=31 // pred_check
              _
            $region38: #{llama_forward.15} parent=31 // pred_check_branch
              %220 = sbr.rel target = $region40
            $region39: #{llama_forward.15} parent=31 // pred_region
              loop: start=0, step=1, limit=1
              $region41: #{llama_forward.15} parent=39 // loop_pre_header
                _
              $region42: #{llama_forward.15} parent=39 // loop_header
                %s223 = sphi 0, %s227
                %p224 = scmp.ge.s32.totalorder %s223, 1
                %s228 = sphi %s214, %s214
                %s229 = sphi %s211, %s211
              $region43: #{llama_forward.15} parent=39 // loop_header_branch
                %226 = sbr.rel (%p224) target = $region47
              $region44: #{llama_forward.15} parent=39 // loop_body
                %v230 = vld [vmem:[%s228] sm:$0xff]
                %231 = vst [vmem:[%s229] sm:$0xff] %v230
                %v232 = vld [vmem:[%s228 + $0x10] sm:$0xff]
                %233 = vst [vmem:[%s229 + $0x8] sm:$0xff] %v232
                %v234 = vld [vmem:[%s228 + $0x20] sm:$0xff]
                %235 = vst [vmem:[%s229 + $0x10] sm:$0xff] %v234
                %v236 = vld [vmem:[%s228 + $0x30] sm:$0xff]
                %237 = vst [vmem:[%s229 + $0x18] sm:$0xff] %v236
                %v238 = vld [vmem:[%s228 + $0x40] sm:$0xff]
                %239 = vst [vmem:[%s229 + $0x20] sm:$0xff] %v238
                %v240 = vld [vmem:[%s228 + $0x50] sm:$0xff]
                %241 = vst [vmem:[%s229 + $0x28] sm:$0xff] %v240
                %v242 = vld [vmem:[%s228 + $0x60] sm:$0xff]
                %243 = vst [vmem:[%s229 + $0x30] sm:$0xff] %v242
                %v244 = vld [vmem:[%s228 + $0x70] sm:$0xff]
                %245 = vst [vmem:[%s229 + $0x38] sm:$0xff] %v244
                %v246 = vld [vmem:[%s228 + $0x80] sm:$0xff]
                %247 = vst [vmem:[%s229 + $0x40] sm:$0xff] %v246
                %v248 = vld [vmem:[%s228 + $0x90] sm:$0xff]
                %249 = vst [vmem:[%s229 + $0x48] sm:$0xff] %v248
                %v250 = vld [vmem:[%s228 + $0xa0] sm:$0xff]
                %251 = vst [vmem:[%s229 + $0x50] sm:$0xff] %v250
                %v252 = vld [vmem:[%s228 + $0xb0] sm:$0xff]
                %253 = vst [vmem:[%s229 + $0x58] sm:$0xff] %v252
                %v254 = vld [vmem:[%s228 + $0xc0] sm:$0xff]
                %255 = vst [vmem:[%s229 + $0x60] sm:$0xff] %v254
                %v256 = vld [vmem:[%s228 + $0xd0] sm:$0xff]
                %257 = vst [vmem:[%s229 + $0x68] sm:$0xff] %v256
                %v258 = vld [vmem:[%s228 + $0xe0] sm:$0xff]
                %259 = vst [vmem:[%s229 + $0x70] sm:$0xff] %v258
                %v260 = vld [vmem:[%s228 + $0xf0] sm:$0xff]
                %261 = vst [vmem:[%s229 + $0x78] sm:$0xff] %v260
              $region45: #{llama_forward.15} parent=39 // loop_footer
                %s227 = sadd.s32 1, %s223
              $region46: #{llama_forward.15} parent=39 // loop_footer_branch
                %222 = sbr.rel target = $region42
              $region47: #{llama_forward.15} parent=39 // loop_exit
                _
            $region40: #{llama_forward.15} parent=31 // pred_fallthru
              _
          $region32: #{llama_forward.15} parent=27 // pred_fallthru
            _
          %306 = vnop
        $region28: #{llama_forward.15} parent=23 // pred_fallthru
          _
        // Predicated region
        $region63: #{llama_forward.15} parent=23 // pred_check
          %p307 = pneg %p116
        $region64: #{llama_forward.15} parent=23 // pred_check_branch
          %309 = sbr.rel (%p307) target = $region66
        $region65: #{llama_forward.15} parent=23 // pred_region
          %s310 = sand.u32 %s106, 1
          %s311 = sand.u32 %s106, 1
          %s312 = smul.addr %s311, 128
          %s313 = scalar_lea.vmem [#allocation5], %s312
          %s314 = smul.u32 2, %s19
          %s315 = smul.addr %s314, 4
          %s316 = scalar_lea.vmem %s3, %s315
          // Predicated region
          $region67: #{llama_forward.15} parent=65 // pred_check
            _
          $region68: #{llama_forward.15} parent=65 // pred_check_branch
            %318 = sbr.rel (0) target = $region70
          $region69: #{llama_forward.15} parent=65 // pred_region
            // Predicated region
            $region71: #{llama_forward.15} parent=69 // pred_check
              _
            $region72: #{llama_forward.15} parent=69 // pred_check_branch
              %320 = sbr.rel (0) target = $region74
            $region73: #{llama_forward.15} parent=69 // pred_region
              // Predicated region
              $region86: #{llama_forward.15} parent=73 // pred_check
                _
              $region87: #{llama_forward.15} parent=73 // pred_check_branch
                %365 = sbr.rel (0) target = $region89
              $region88: #{llama_forward.15} parent=73 // pred_region
                loop: start=0, step=1, limit=1
                $region90: #{llama_forward.15} parent=88 // loop_pre_header
                  _
                $region91: #{llama_forward.15} parent=88 // loop_header
                  %s367 = sphi 0, %s371
                  %p368 = scmp.ge.s32.totalorder %s367, 1
                  %s372 = sphi %s316, %s316
                  %s373 = sphi %s313, %s313
                $region92: #{llama_forward.15} parent=88 // loop_header_branch
                  %370 = sbr.rel (%p368) target = $region96
                $region93: #{llama_forward.15} parent=88 // loop_body
                  %v374 = vld [vmem:[%s372] sm:$0xff]
                  %375 = vst [vmem:[%s373] sm:$0xff] %v374
                  %v376 = vld [vmem:[%s372 + $0x10] sm:$0xff]
                  %377 = vst [vmem:[%s373 + $0x8] sm:$0xff] %v376
                  %v378 = vld [vmem:[%s372 + $0x20] sm:$0xff]
                  %379 = vst [vmem:[%s373 + $0x10] sm:$0xff] %v378
                  %v380 = vld [vmem:[%s372 + $0x30] sm:$0xff]
                  %381 = vst [vmem:[%s373 + $0x18] sm:$0xff] %v380
                  %v382 = vld [vmem:[%s372 + $0x40] sm:$0xff]
                  %383 = vst [vmem:[%s373 + $0x20] sm:$0xff] %v382
                  %v384 = vld [vmem:[%s372 + $0x50] sm:$0xff]
                  %385 = vst [vmem:[%s373 + $0x28] sm:$0xff] %v384
                  %v386 = vld [vmem:[%s372 + $0x60] sm:$0xff]
                  %387 = vst [vmem:[%s373 + $0x30] sm:$0xff] %v386
                  %v388 = vld [vmem:[%s372 + $0x70] sm:$0xff]
                  %389 = vst [vmem:[%s373 + $0x38] sm:$0xff] %v388
                  %v390 = vld [vmem:[%s372 + $0x80] sm:$0xff]
                  %391 = vst [vmem:[%s373 + $0x40] sm:$0xff] %v390
                  %v392 = vld [vmem:[%s372 + $0x90] sm:$0xff]
                  %393 = vst [vmem:[%s373 + $0x48] sm:$0xff] %v392
                  %v394 = vld [vmem:[%s372 + $0xa0] sm:$0xff]
                  %395 = vst [vmem:[%s373 + $0x50] sm:$0xff] %v394
                  %v396 = vld [vmem:[%s372 + $0xb0] sm:$0xff]
                  %397 = vst [vmem:[%s373 + $0x58] sm:$0xff] %v396
                  %v398 = vld [vmem:[%s372 + $0xc0] sm:$0xff]
                  %399 = vst [vmem:[%s373 + $0x60] sm:$0xff] %v398
                  %v400 = vld [vmem:[%s372 + $0xd0] sm:$0xff]
                  %401 = vst [vmem:[%s373 + $0x68] sm:$0xff] %v400
                  %v402 = vld [vmem:[%s372 + $0xe0] sm:$0xff]
                  %403 = vst [vmem:[%s373 + $0x70] sm:$0xff] %v402
                  %v404 = vld [vmem:[%s372 + $0xf0] sm:$0xff]
                  %405 = vst [vmem:[%s373 + $0x78] sm:$0xff] %v404
                $region94: #{llama_forward.15} parent=88 // loop_footer
                  %s371 = sadd.s32 1, %s367
                $region95: #{llama_forward.15} parent=88 // loop_footer_branch
                  %366 = sbr.rel target = $region91
                $region96: #{llama_forward.15} parent=88 // loop_exit
                  _
              $region89: #{llama_forward.15} parent=73 // pred_fallthru
                _
              // Predicated region
              $region97: #{llama_forward.15} parent=73 // pred_check
                _
              $region98: #{llama_forward.15} parent=73 // pred_check_branch
                %407 = sbr.rel target = $region100
              $region99: #{llama_forward.15} parent=73 // pred_region
                _
              $region100: #{llama_forward.15} parent=73 // pred_fallthru
                _
            $region74: #{llama_forward.15} parent=69 // pred_fallthru
              _
            // Predicated region
            $region75: #{llama_forward.15} parent=69 // pred_check
              _
            $region76: #{llama_forward.15} parent=69 // pred_check_branch
              %322 = sbr.rel target = $region78
            $region77: #{llama_forward.15} parent=69 // pred_region
              loop: start=0, step=1, limit=1
              $region79: #{llama_forward.15} parent=77 // loop_pre_header
                _
              $region80: #{llama_forward.15} parent=77 // loop_header
                %s325 = sphi 0, %s329
                %p326 = scmp.ge.s32.totalorder %s325, 1
                %s330 = sphi %s316, %s316
                %s331 = sphi %s313, %s313
              $region81: #{llama_forward.15} parent=77 // loop_header_branch
                %328 = sbr.rel (%p326) target = $region85
              $region82: #{llama_forward.15} parent=77 // loop_body
                %v332 = vld [vmem:[%s330] sm:$0xff]
                %333 = vst [vmem:[%s331] sm:$0xff] %v332
                %v334 = vld [vmem:[%s330 + $0x10] sm:$0xff]
                %335 = vst [vmem:[%s331 + $0x8] sm:$0xff] %v334
                %v336 = vld [vmem:[%s330 + $0x20] sm:$0xff]
                %337 = vst [vmem:[%s331 + $0x10] sm:$0xff] %v336
                %v338 = vld [vmem:[%s330 + $0x30] sm:$0xff]
                %339 = vst [vmem:[%s331 + $0x18] sm:$0xff] %v338
                %v340 = vld [vmem:[%s330 + $0x40] sm:$0xff]
                %341 = vst [vmem:[%s331 + $0x20] sm:$0xff] %v340
                %v342 = vld [vmem:[%s330 + $0x50] sm:$0xff]
                %343 = vst [vmem:[%s331 + $0x28] sm:$0xff] %v342
                %v344 = vld [vmem:[%s330 + $0x60] sm:$0xff]
                %345 = vst [vmem:[%s331 + $0x30] sm:$0xff] %v344
                %v346 = vld [vmem:[%s330 + $0x70] sm:$0xff]
                %347 = vst [vmem:[%s331 + $0x38] sm:$0xff] %v346
                %v348 = vld [vmem:[%s330 + $0x80] sm:$0xff]
                %349 = vst [vmem:[%s331 + $0x40] sm:$0xff] %v348
                %v350 = vld [vmem:[%s330 + $0x90] sm:$0xff]
                %351 = vst [vmem:[%s331 + $0x48] sm:$0xff] %v350
                %v352 = vld [vmem:[%s330 + $0xa0] sm:$0xff]
                %353 = vst [vmem:[%s331 + $0x50] sm:$0xff] %v352
                %v354 = vld [vmem:[%s330 + $0xb0] sm:$0xff]
                %355 = vst [vmem:[%s331 + $0x58] sm:$0xff] %v354
                %v356 = vld [vmem:[%s330 + $0xc0] sm:$0xff]
                %357 = vst [vmem:[%s331 + $0x60] sm:$0xff] %v356
                %v358 = vld [vmem:[%s330 + $0xd0] sm:$0xff]
                %359 = vst [vmem:[%s331 + $0x68] sm:$0xff] %v358
                %v360 = vld [vmem:[%s330 + $0xe0] sm:$0xff]
                %361 = vst [vmem:[%s331 + $0x70] sm:$0xff] %v360
                %v362 = vld [vmem:[%s330 + $0xf0] sm:$0xff]
                %363 = vst [vmem:[%s331 + $0x78] sm:$0xff] %v362
              $region83: #{llama_forward.15} parent=77 // loop_footer
                %s329 = sadd.s32 1, %s325
              $region84: #{llama_forward.15} parent=77 // loop_footer_branch
                %324 = sbr.rel target = $region80
              $region85: #{llama_forward.15} parent=77 // loop_exit
                _
            $region78: #{llama_forward.15} parent=69 // pred_fallthru
              _
          $region70: #{llama_forward.15} parent=65 // pred_fallthru
            _
          %408 = vnop
        $region66: #{llama_forward.15} parent=23 // pred_fallthru
          _
        // Predicated region
        $region101: #{llama_forward.15} parent=23 // pred_check
          %p409 = pneg %p142
        $region102: #{llama_forward.15} parent=23 // pred_check_branch
          %411 = sbr.rel (%p409) target = $region104
        $region103: #{llama_forward.15} parent=23 // pred_region
          %s412 = smul.u32 32, %s19
          %p413 = scmp.lt.s32.totalorder %s412, 63
          %s414 = scalar_select %p413, %s412, 63
          %s415 = smul.addr %s414, 4
          %s416 = scalar_lea.vmem %s4, %s415
          %s417 = smul.u32 32, %s19
        $region104: #{llama_forward.15} parent=23 // pred_fallthru
          _
      $region24: #{llama_forward.15} parent=5 // pred_fallthru
        _
      %p418 = scmp.le.s32.totalorder 1, %s11
      %p419 = scmp.lt.s32.totalorder %s11, 3
      %p420 = pnand %p418, %p419
      %p421 = pneg %p420
      // Predicated region
      $region105: #{llama_forward.15} parent=5 // pred_check
        _
      $region106: #{llama_forward.15} parent=5 // pred_check_branch
        %423 = sbr.rel (%p420) target = $region108
      $region107: #{llama_forward.15} parent=5 // pred_region
        %s424 = ssub.s32 %s11, 1
        %s425 = sand.u32 %s83, 1
        %s426 = sand.u32 %s83, 1
        %s427 = smul.addr %s426, 128
        %s428 = scalar_lea.vmem [#allocation4], %s427
        // Predicated region
        $region109: #{llama_forward.15} parent=107 // pred_check
          %p429 = pneg %p96
        $region110: #{llama_forward.15} parent=107 // pred_check_branch
          %431 = sbr.rel (%p429) target = $region112
        $region111: #{llama_forward.15} parent=107 // pred_region
          _
        $region112: #{llama_forward.15} parent=107 // pred_fallthru
          _
        %s432 = sand.u32 %s109, 1
        %s433 = sand.u32 %s109, 1
        %s434 = smul.addr %s433, 128
        %s435 = scalar_lea.vmem [#allocation5], %s434
        // Predicated region
        $region113: #{llama_forward.15} parent=107 // pred_check
          %p436 = pneg %p122
        $region114: #{llama_forward.15} parent=107 // pred_check_branch
          %438 = sbr.rel (%p436) target = $region116
        $region115: #{llama_forward.15} parent=107 // pred_region
          _
        $region116: #{llama_forward.15} parent=107 // pred_fallthru
          _
        %s439 = smul.u32 4, %s20
        %p440 = scmp.lt.s32.totalorder %s439, 3
        %s441 = scalar_select %p440, %s439, 3
        %s442 = smul.addr %s441, 8
        %s443 = scalar_lea.vmem %s0, %s442
        %p444 = pneg %p49
        %p445 = pneg %p46
        %p446 = pneg %p70
        %p447 = pneg %p67
        %s448 = sand.u32 %s83, 1
        %s449 = sand.u32 %s83, 1
        %s450 = smul.addr %s449, 128
        %s451 = scalar_lea.vmem [#allocation4], %s450
        %p452 = pneg %p96
        %p453 = pneg %p93
        %s454 = sand.u32 %s109, 1
        %s455 = sand.u32 %s109, 1
        %s456 = smul.addr %s455, 128
        %s457 = scalar_lea.vmem [#allocation5], %s456
        %p458 = pneg %p122
        %p459 = pneg %p119
        %s460 = smul.u32 32, %s21
        %p461 = scmp.lt.s32.totalorder %s460, 63
        %s462 = scalar_select %p461, %s460, 63
        %s463 = smul.addr %s462, 4
        %s464 = scalar_lea.vmem %s4, %s463
        %p465 = pneg %p148
        %p466 = pneg %p145
        %p467 = pneg %p174
        %p468 = pneg %p171
        %s469 = smul.u32 4, %s20
        %p470 = scmp.lt.s32.totalorder %s469, 3
        %s471 = scalar_select %p470, %s469, 3
        %s472 = smul.addr %s471, 8
        %s473 = scalar_lea.vmem %s5, %s472
        %s474 = smul.u32 4, %s20
        %p475 = scmp.lt.s32.totalorder %s474, 3
        %s476 = scalar_select %p475, %s474, 3
        %s477 = smul.addr %s476, 8
        %s478 = scalar_lea.vmem %s0, %s477
        %s479 = smul.u32 4, %s20
        %s480 = smul.u32 2, %s21
        %s481 = smul.u32 2, %s21
        %s482 = smul.u32 32, %s21
        %p483 = scmp.lt.s32.totalorder %s482, 63
        %s484 = scalar_select %p483, %s482, 63
        %s485 = smul.addr %s484, 4
        %s486 = scalar_lea.vmem %s4, %s485
        %s487 = smul.u32 32, %s21
        %s488 = smul.u32 4, %s20
        %p489 = scmp.lt.s32.totalorder %s488, 3
        %s490 = scalar_select %p489, %s488, 3
        %s491 = smul.addr %s490, 8
        %s492 = scalar_lea.vmem %s5, %s491
        %s493 = smul.u32 4, %s20
        %p495 = scmp.eq.s32.totalorder %s21, 0
        // Predicated region
        $region117: #{llama_forward.15} parent=107 // pred_check
          %p496 = pneg %p495
        $region118: #{llama_forward.15} parent=107 // pred_check_branch
          %498 = sbr.rel (%p496) target = $region120
        $region119: #{llama_forward.15} parent=107 // pred_region
          %v499 = vld [vmem:[%s478] sm:$0xff]
          %v500 = vld [vmem:[%s478 + $0x8] sm:$0xff]
          %v501 = vld [vmem:[%s478 + $0x10] sm:$0xff]
          %v502 = vld [vmem:[%s478 + $0x18] sm:$0xff]
          %v503 = vmul.f32 %v499, %v499
          %v504 = vmul.f32 %v500, %v500
          %v505 = vmul.f32 %v501, %v501
          %v506 = vmul.f32 %v502, %v502
          %507 = vadd.xlane.f32.xlu0 %v503
          %v508 = vpop.xlane.xlu0 %507
          %509 = vadd.xlane.f32.xlu0 %v504
          %v510 = vpop.xlane.xlu0 %509
          %511 = vadd.xlane.f32.xlu0 %v505
          %v512 = vpop.xlane.xlu0 %511
          %513 = vadd.xlane.f32.xlu0 %v506
          %v514 = vpop.xlane.xlu0 %513
          %v515 = vrcp.pop 128.0
          %v516 = vmul.f32 %v508, %v515
          %v517 = vmul.f32 %v510, %v515
          %v518 = vmul.f32 %v512, %v515
          %v519 = vmul.f32 %v514, %v515
          %v520 = vadd.f32 %v516, 1.1920929e-07
          %v521 = vadd.f32 %v517, 1.1920929e-07
          %v522 = vadd.f32 %v518, 1.1920929e-07
          %v523 = vadd.f32 %v519, 1.1920929e-07
          %v524 = vrsqrt.pop %v520
          %v525 = vrsqrt.pop %v521
          %v526 = vrsqrt.pop %v522
          %v527 = vrsqrt.pop %v523
          %v528 = vmul.f32 %v499, %v524
          %v529 = vmul.f32 %v500, %v525
          %v530 = vmul.f32 %v501, %v526
          %v531 = vmul.f32 %v502, %v527
          %v532 = vld [vmem:[%s1] sm:$0x1]
          %v534 = vlaneseq
          %v535 = vshrl.u32 %v534, 7
          %v536 = vsub.s32 0, %v535
          %v537 = vrot.slane %v532, %v536
          %v539 = vmul.f32 %v528, %v537
          %v540 = vmul.f32 %v529, %v537
          %v541 = vmul.f32 %v530, %v537
          %v542 = vmul.f32 %v531, %v537
          %v543 = vpack.c.bf16 %v540, %v539
          %v544 = vpack.c.bf16 %v542, %v541
          %545 = vst [vmem:[#allocation3] sm:$0xff] %v543
          %546 = vst [vmem:[#allocation3 + $0x8] sm:$0xff] %v544
          %547 = vst [vmem:[#allocation2] sm:$0xff] 0.0
          %548 = vst [vmem:[#allocation2 + $0x8] sm:$0xff] 0.0
          %549 = vst [vmem:[#allocation2 + $0x10] sm:$0xff] 0.0
          %550 = vst [vmem:[#allocation2 + $0x18] sm:$0xff] 0.0
        $region120: #{llama_forward.15} parent=107 // pred_fallthru
          _
        %v551 = vld [vmem:[#allocation3] sm:$0xff]
        %v552 = vld [vmem:[#allocation3 + $0x8] sm:$0xff]
        %v553 = vld [vmem:[%s428] sm:$0xff]
        %v554 = vld [vmem:[%s428 + $0x8] sm:$0xff]
        %v555 = vld [vmem:[%s428 + $0x10] sm:$0xff]
        %v556 = vld [vmem:[%s428 + $0x18] sm:$0xff]
        %v557 = vld [vmem:[%s428 + $0x20] sm:$0xff]
        %v558 = vld [vmem:[%s428 + $0x28] sm:$0xff]
        %v559 = vld [vmem:[%s428 + $0x30] sm:$0xff]
        %v560 = vld [vmem:[%s428 + $0x38] sm:$0xff]
        %v561 = vld [vmem:[%s428 + $0x40] sm:$0xff]
        %v562 = vld [vmem:[%s428 + $0x48] sm:$0xff]
        %v563 = vld [vmem:[%s428 + $0x50] sm:$0xff]
        %v564 = vld [vmem:[%s428 + $0x58] sm:$0xff]
        %v565 = vld [vmem:[%s428 + $0x60] sm:$0xff]
        %v566 = vld [vmem:[%s428 + $0x68] sm:$0xff]
        %v567 = vld [vmem:[%s428 + $0x70] sm:$0xff]
        %v568 = vld [vmem:[%s428 + $0x78] sm:$0xff]
        %v585 = vunpack.c.l.b16 %v553
        %v586 = vunpack.c.h.b16 %v553
        %v587 = vunpack.c.l.b16 %v554
        %v588 = vunpack.c.h.b16 %v554
        %v589 = vunpack.c.l.b16 %v555
        %v590 = vunpack.c.h.b16 %v555
        %v591 = vunpack.c.l.b16 %v556
        %v592 = vunpack.c.h.b16 %v556
        %v593 = vunpack.c.l.b16 %v557
        %v594 = vunpack.c.h.b16 %v557
        %v595 = vunpack.c.l.b16 %v558
        %v596 = vunpack.c.h.b16 %v558
        %v597 = vunpack.c.l.b16 %v559
        %v598 = vunpack.c.h.b16 %v559
        %v599 = vunpack.c.l.b16 %v560
        %v600 = vunpack.c.h.b16 %v560
        %v601 = vunpack.c.l.b16 %v561
        %v602 = vunpack.c.h.b16 %v561
        %v603 = vunpack.c.l.b16 %v562
        %v604 = vunpack.c.h.b16 %v562
        %v605 = vunpack.c.l.b16 %v563
        %v606 = vunpack.c.h.b16 %v563
        %v607 = vunpack.c.l.b16 %v564
        %v608 = vunpack.c.h.b16 %v564
        %v609 = vunpack.c.l.b16 %v565
        %v610 = vunpack.c.h.b16 %v565
        %v611 = vunpack.c.l.b16 %v566
        %v612 = vunpack.c.h.b16 %v566
        %v613 = vunpack.c.l.b16 %v567
        %v614 = vunpack.c.h.b16 %v567
        %v615 = vunpack.c.l.b16 %v568
        %v616 = vunpack.c.h.b16 %v568
        %v617 = vpack.c.b16 %v587, %v585
        %v618 = vpack.c.b16 %v588, %v586
        %v619 = vpack.c.b16 %v591, %v589
        %v620 = vpack.c.b16 %v592, %v590
        %v621 = vpack.c.b16 %v595, %v593
        %v622 = vpack.c.b16 %v596, %v594
        %v623 = vpack.c.b16 %v599, %v597
        %v624 = vpack.c.b16 %v600, %v598
        %v625 = vpack.c.b16 %v603, %v601
        %v626 = vpack.c.b16 %v604, %v602
        %v627 = vpack.c.b16 %v607, %v605
        %v628 = vpack.c.b16 %v608, %v606
        %v629 = vpack.c.b16 %v611, %v609
        %v630 = vpack.c.b16 %v612, %v610
        %v631 = vpack.c.b16 %v615, %v613
        %v632 = vpack.c.b16 %v616, %v614
        %649 = vmatprep.subr.bf16.mxu0 %v618
        %650 = vmatpush1.bf16.msra.mxu0 %v617
        %651 = vmatprep.subr.bf16.mxu0 %v620
        %652 = vmatpush1.bf16.msra.mxu0 %v619
        %653 = vmatprep.subr.bf16.mxu0 %v622
        %654 = vmatpush1.bf16.msra.mxu0 %v621
        %655 = vmatprep.subr.bf16.mxu0 %v624
        %656 = vmatpush1.bf16.msra.mxu0 %v623
        %657 = vmatprep.subr.bf16.mxu0 %v626
        %658 = vmatpush1.bf16.msra.mxu0 %v625
        %659 = vmatprep.subr.bf16.mxu0 %v628
        %660 = vmatpush1.bf16.msra.mxu0 %v627
        %661 = vmatprep.subr.bf16.mxu0 %v630
        %662 = vmatpush1.bf16.msra.mxu0 %v629
        %663 = vmatprep.subr.bf16.mxu0 %v632
        %664 = vmatpush1.bf16.msra.mxu0 %v631
        %665 = vmatprep.subr.bf16.mxu0 0
        %666 = vmatpush1.bf16.msra.mxu0 0
        %667 = vmatprep.subr.bf16.mxu0 0
        %668 = vmatpush1.bf16.msra.mxu0 0
        %669 = vmatprep.subr.bf16.mxu0 0
        %670 = vmatpush1.bf16.msra.mxu0 0
        %671 = vmatprep.subr.bf16.mxu0 0
        %672 = vmatpush1.bf16.msra.mxu0 0
        %673 = vmatprep.subr.bf16.mxu0 0
        %674 = vmatpush1.bf16.msra.mxu0 0
        %675 = vmatprep.subr.bf16.mxu0 0
        %676 = vmatpush1.bf16.msra.mxu0 0
        %677 = vmatprep.subr.bf16.mxu0 0
        %678 = vmatpush1.bf16.msra.mxu0 0
        %679 = vmatprep.subr.bf16.mxu0 0
        %680 = vmatpush1.bf16.msra.mxu0 0
        %681 = vmatprep.mubr.bf16.mxu0 0
        %682 = vmatmul.mubr.bf16.gmra.mrb[0].mxu0 %v551
        %v683 = vpop.f32.mrb[0].mxu0
        %v684 = vadd.f32 0.0, %v683
        %v685 = vpop.f32.mrb[0].mxu0
        %v686 = vadd.f32 0.0, %v685
        %v687 = vpop.f32.mrb[0].mxu0
        %v688 = vadd.f32 0.0, %v687
        %v689 = vpop.f32.mrb[0].mxu0
        %v690 = vadd.f32 0.0, %v689
        %691 = vmatprep.mubr.bf16.mxu0 0
        %692 = vmatmul.mubr.bf16.gmra.mrb[0].mxu0 %v552
        %v693 = vpop.f32.mrb[0].mxu0
        %v694 = vadd.f32 0.0, %v693
        %v695 = vpop.f32.mrb[0].mxu0
        %v696 = vadd.f32 0.0, %v695
        %v697 = vpop.f32.mrb[0].mxu0
        %v698 = vadd.f32 0.0, %v697
        %v699 = vpop.f32.mrb[0].mxu0
        %v700 = vadd.f32 0.0, %v699
        %701 = vdwg.mxu0
        %v702 = vld [vmem:[%s435] sm:$0xff]
        %v703 = vld [vmem:[%s435 + $0x8] sm:$0xff]
        %v704 = vld [vmem:[%s435 + $0x10] sm:$0xff]
        %v705 = vld [vmem:[%s435 + $0x18] sm:$0xff]
        %v706 = vld [vmem:[%s435 + $0x20] sm:$0xff]
        %v707 = vld [vmem:[%s435 + $0x28] sm:$0xff]
        %v708 = vld [vmem:[%s435 + $0x30] sm:$0xff]
        %v709 = vld [vmem:[%s435 + $0x38] sm:$0xff]
        %v710 = vld [vmem:[%s435 + $0x40] sm:$0xff]
        %v711 = vld [vmem:[%s435 + $0x48] sm:$0xff]
        %v712 = vld [vmem:[%s435 + $0x50] sm:$0xff]
        %v713 = vld [vmem:[%s435 + $0x58] sm:$0xff]
        %v714 = vld [vmem:[%s435 + $0x60] sm:$0xff]
        %v715 = vld [vmem:[%s435 + $0x68] sm:$0xff]
        %v716 = vld [vmem:[%s435 + $0x70] sm:$0xff]
        %v717 = vld [vmem:[%s435 + $0x78] sm:$0xff]
        %v734 = vunpack.c.l.b16 %v702
        %v735 = vunpack.c.h.b16 %v702
        %v736 = vunpack.c.l.b16 %v703
        %v737 = vunpack.c.h.b16 %v703
        %v738 = vunpack.c.l.b16 %v704
        %v739 = vunpack.c.h.b16 %v704
        %v740 = vunpack.c.l.b16 %v705
        %v741 = vunpack.c.h.b16 %v705
        %v742 = vunpack.c.l.b16 %v706
        %v743 = vunpack.c.h.b16 %v706
        %v744 = vunpack.c.l.b16 %v707
        %v745 = vunpack.c.h.b16 %v707
        %v746 = vunpack.c.l.b16 %v708
        %v747 = vunpack.c.h.b16 %v708
        %v748 = vunpack.c.l.b16 %v709
        %v749 = vunpack.c.h.b16 %v709
        %v750 = vunpack.c.l.b16 %v710
        %v751 = vunpack.c.h.b16 %v710
        %v752 = vunpack.c.l.b16 %v711
        %v753 = vunpack.c.h.b16 %v711
        %v754 = vunpack.c.l.b16 %v712
        %v755 = vunpack.c.h.b16 %v712
        %v756 = vunpack.c.l.b16 %v713
        %v757 = vunpack.c.h.b16 %v713
        %v758 = vunpack.c.l.b16 %v714
        %v759 = vunpack.c.h.b16 %v714
        %v760 = vunpack.c.l.b16 %v715
        %v761 = vunpack.c.h.b16 %v715
        %v762 = vunpack.c.l.b16 %v716
        %v763 = vunpack.c.h.b16 %v716
        %v764 = vunpack.c.l.b16 %v717
        %v765 = vunpack.c.h.b16 %v717
        %v766 = vpack.c.b16 %v736, %v734
        %v767 = vpack.c.b16 %v737, %v735
        %v768 = vpack.c.b16 %v740, %v738
        %v769 = vpack.c.b16 %v741, %v739
        %v770 = vpack.c.b16 %v744, %v742
        %v771 = vpack.c.b16 %v745, %v743
        %v772 = vpack.c.b16 %v748, %v746
        %v773 = vpack.c.b16 %v749, %v747
        %v774 = vpack.c.b16 %v752, %v750
        %v775 = vpack.c.b16 %v753, %v751
        %v776 = vpack.c.b16 %v756, %v754
        %v777 = vpack.c.b16 %v757, %v755
        %v778 = vpack.c.b16 %v760, %v758
        %v779 = vpack.c.b16 %v761, %v759
        %v780 = vpack.c.b16 %v764, %v762
        %v781 = vpack.c.b16 %v765, %v763
        %798 = vmatprep.subr.bf16.mxu0 %v767
        %799 = vmatpush1.bf16.msra.mxu0 %v766
        %800 = vmatprep.subr.bf16.mxu0 %v769
        %801 = vmatpush1.bf16.msra.mxu0 %v768
        %802 = vmatprep.subr.bf16.mxu0 %v771
        %803 = vmatpush1.bf16.msra.mxu0 %v770
        %804 = vmatprep.subr.bf16.mxu0 %v773
        %805 = vmatpush1.bf16.msra.mxu0 %v772
        %806 = vmatprep.subr.bf16.mxu0 %v775
        %807 = vmatpush1.bf16.msra.mxu0 %v774
        %808 = vmatprep.subr.bf16.mxu0 %v777
        %809 = vmatpush1.bf16.msra.mxu0 %v776
        %810 = vmatprep.subr.bf16.mxu0 %v779
        %811 = vmatpush1.bf16.msra.mxu0 %v778
        %812 = vmatprep.subr.bf16.mxu0 %v781
        %813 = vmatpush1.bf16.msra.mxu0 %v780
        %814 = vmatprep.subr.bf16.mxu0 0
        %815 = vmatpush1.bf16.msra.mxu0 0
        %816 = vmatprep.subr.bf16.mxu0 0
        %817 = vmatpush1.bf16.msra.mxu0 0
        %818 = vmatprep.subr.bf16.mxu0 0
        %819 = vmatpush1.bf16.msra.mxu0 0
        %820 = vmatprep.subr.bf16.mxu0 0
        %821 = vmatpush1.bf16.msra.mxu0 0
        %822 = vmatprep.subr.bf16.mxu0 0
        %823 = vmatpush1.bf16.msra.mxu0 0
        %824 = vmatprep.subr.bf16.mxu0 0
        %825 = vmatpush1.bf16.msra.mxu0 0
        %826 = vmatprep.subr.bf16.mxu0 0
        %827 = vmatpush1.bf16.msra.mxu0 0
        %828 = vmatprep.subr.bf16.mxu0 0
        %829 = vmatpush1.bf16.msra.mxu0 0
        %830 = vmatprep.mubr.bf16.mxu0 0
        %831 = vmatmul.mubr.bf16.gmra.mrb[0].mxu0 %v551
        %v832 = vpop.f32.mrb[0].mxu0
        %v833 = vadd.f32 0.0, %v832
        %v834 = vpop.f32.mrb[0].mxu0
        %v835 = vadd.f32 0.0, %v834
        %v836 = vpop.f32.mrb[0].mxu0
        %v837 = vadd.f32 0.0, %v836
        %v838 = vpop.f32.mrb[0].mxu0
        %v839 = vadd.f32 0.0, %v838
        %840 = vmatprep.mubr.bf16.mxu0 0
        %841 = vmatmul.mubr.bf16.gmra.mrb[0].mxu0 %v552
        %v842 = vpop.f32.mrb[0].mxu0
        %v843 = vadd.f32 0.0, %v842
        %v844 = vpop.f32.mrb[0].mxu0
        %v845 = vadd.f32 0.0, %v844
        %v846 = vpop.f32.mrb[0].mxu0
        %v847 = vadd.f32 0.0, %v846
        %v848 = vpop.f32.mrb[0].mxu0
        %v849 = vadd.f32 0.0, %v848
        %850 = vdwg.mxu0
        %v851 = vxor.u32 %v833, 2147483648
        %v852 = vxor.u32 %v835, 2147483648
        %v853 = vxor.u32 %v837, 2147483648
        %v854 = vxor.u32 %v839, 2147483648
        %v855 = vxor.u32 %v843, 2147483648
        %v856 = vxor.u32 %v845, 2147483648
        %v857 = vxor.u32 %v847, 2147483648
        %v858 = vxor.u32 %v849, 2147483648
        %v859 = vmul.f32 %v851, 1.442695
        %v860 = vpow.pop %v859
        %v861 = vmul.f32 %v852, 1.442695
        %v862 = vpow.pop %v861
        %v863 = vmul.f32 %v853, 1.442695
        %v864 = vpow.pop %v863
        %v865 = vmul.f32 %v854, 1.442695
        %v866 = vpow.pop %v865
        %v867 = vmul.f32 %v855, 1.442695
        %v868 = vpow.pop %v867
        %v869 = vmul.f32 %v856, 1.442695
        %v870 = vpow.pop %v869
        %v871 = vmul.f32 %v857, 1.442695
        %v872 = vpow.pop %v871
        %v873 = vmul.f32 %v858, 1.442695
        %v874 = vpow.pop %v873
        %v875 = vadd.f32 %v860, 1.0
        %v876 = vadd.f32 %v862, 1.0
        %v877 = vadd.f32 %v864, 1.0
        %v878 = vadd.f32 %v866, 1.0
        %v879 = vadd.f32 %v868, 1.0
        %v880 = vadd.f32 %v870, 1.0
        %v881 = vadd.f32 %v872, 1.0
        %v882 = vadd.f32 %v874, 1.0
        %v883 = vrcp.pop %v875
        %v884 = vmul.f32 1.0, %v883
        %v885 = vrcp.pop %v876
        %v886 = vmul.f32 1.0, %v885
        %v887 = vrcp.pop %v877
        %v888 = vmul.f32 1.0, %v887
        %v889 = vrcp.pop %v878
        %v890 = vmul.f32 1.0, %v889
        %v891 = vrcp.pop %v879
        %v892 = vmul.f32 1.0, %v891
        %v893 = vrcp.pop %v880
        %v894 = vmul.f32 1.0, %v893
        %v895 = vrcp.pop %v881
        %v896 = vmul.f32 1.0, %v895
        %v897 = vrcp.pop %v882
        %v898 = vmul.f32 1.0, %v897
        %v899 = vmul.f32 %v833, %v884
        %v900 = vmul.f32 %v835, %v886
        %v901 = vmul.f32 %v837, %v888
        %v902 = vmul.f32 %v839, %v890
        %v903 = vmul.f32 %v843, %v892
        %v904 = vmul.f32 %v845, %v894
        %v905 = vmul.f32 %v847, %v896
        %v906 = vmul.f32 %v849, %v898
        %v907 = vmul.f32 %v684, %v899
        %v908 = vmul.f32 %v686, %v900
        %v909 = vmul.f32 %v688, %v901
        %v910 = vmul.f32 %v690, %v902
        %v911 = vmul.f32 %v694, %v903
        %v912 = vmul.f32 %v696, %v904
        %v913 = vmul.f32 %v698, %v905
        %v914 = vmul.f32 %v700, %v906
        %v915 = vpack.c.bf16 %v909, %v907
        %v916 = vpack.c.bf16 %v910, %v908
        %v917 = vpack.c.bf16 %v913, %v911
        %v918 = vpack.c.bf16 %v914, %v912
        %v919 = vld [vmem:[#allocation2] sm:$0xff]
        %v920 = vld [vmem:[#allocation2 + $0x8] sm:$0xff]
        %v921 = vld [vmem:[#allocation2 + $0x10] sm:$0xff]
        %v922 = vld [vmem:[#allocation2 + $0x18] sm:$0xff]
        %v923 = vld [vmem:[%s486] sm:$0xf]
        %v924 = vld [vmem:[%s486 + $0x4] sm:$0xf]
        %v925 = vld [vmem:[%s486 + $0x8] sm:$0xf]
        %v926 = vld [vmem:[%s486 + $0xc] sm:$0xf]
        %v927 = vld [vmem:[%s486 + $0x10] sm:$0xf]
        %v928 = vld [vmem:[%s486 + $0x14] sm:$0xf]
        %v929 = vld [vmem:[%s486 + $0x18] sm:$0xf]
        %v930 = vld [vmem:[%s486 + $0x1c] sm:$0xf]
        %v931 = vld [vmem:[%s486 + $0x20] sm:$0xf]
        %v932 = vld [vmem:[%s486 + $0x24] sm:$0xf]
        %v933 = vld [vmem:[%s486 + $0x28] sm:$0xf]
        %v934 = vld [vmem:[%s486 + $0x2c] sm:$0xf]
        %v935 = vld [vmem:[%s486 + $0x30] sm:$0xf]
        %v936 = vld [vmem:[%s486 + $0x34] sm:$0xf]
        %v937 = vld [vmem:[%s486 + $0x38] sm:$0xf]
        %v938 = vld [vmem:[%s486 + $0x3c] sm:$0xf]
        %v939 = vld [vmem:[%s486 + $0x40] sm:$0xf]
        %v940 = vld [vmem:[%s486 + $0x44] sm:$0xf]
        %v941 = vld [vmem:[%s486 + $0x48] sm:$0xf]
        %v942 = vld [vmem:[%s486 + $0x4c] sm:$0xf]
        %v943 = vld [vmem:[%s486 + $0x50] sm:$0xf]
        %v944 = vld [vmem:[%s486 + $0x54] sm:$0xf]
        %v945 = vld [vmem:[%s486 + $0x58] sm:$0xf]
        %v946 = vld [vmem:[%s486 + $0x5c] sm:$0xf]
        %v947 = vld [vmem:[%s486 + $0x60] sm:$0xf]
        %v948 = vld [vmem:[%s486 + $0x64] sm:$0xf]
        %v949 = vld [vmem:[%s486 + $0x68] sm:$0xf]
        %v950 = vld [vmem:[%s486 + $0x6c] sm:$0xf]
        %v951 = vld [vmem:[%s486 + $0x70] sm:$0xf]
        %v952 = vld [vmem:[%s486 + $0x74] sm:$0xf]
        %v953 = vld [vmem:[%s486 + $0x78] sm:$0xf]
        %v954 = vld [vmem:[%s486 + $0x7c] sm:$0xf]
        %v987 = vunpack.c.l.b16 %v923
        %v988 = vunpack.c.l.b16 %v924
        %v989 = vunpack.c.l.b16 %v925
        %v990 = vunpack.c.l.b16 %v926
        %v991 = vunpack.c.l.b16 %v927
        %v992 = vunpack.c.l.b16 %v928
        %v993 = vunpack.c.l.b16 %v929
        %v994 = vunpack.c.l.b16 %v930
        %v995 = vunpack.c.l.b16 %v931
        %v996 = vunpack.c.l.b16 %v932
        %v997 = vunpack.c.l.b16 %v933
        %v998 = vunpack.c.l.b16 %v934
        %v999 = vunpack.c.l.b16 %v935
        %v1000 = vunpack.c.l.b16 %v936
        %v1001 = vunpack.c.l.b16 %v937
        %v1002 = vunpack.c.l.b16 %v938
        %v1003 = vunpack.c.l.b16 %v939
        %v1004 = vunpack.c.l.b16 %v940
        %v1005 = vunpack.c.l.b16 %v941
        %v1006 = vunpack.c.l.b16 %v942
        %v1007 = vunpack.c.l.b16 %v943
        %v1008 = vunpack.c.l.b16 %v944
        %v1009 = vunpack.c.l.b16 %v945
        %v1010 = vunpack.c.l.b16 %v946
        %v1011 = vunpack.c.l.b16 %v947
        %v1012 = vunpack.c.l.b16 %v948
        %v1013 = vunpack.c.l.b16 %v949
        %v1014 = vunpack.c.l.b16 %v950
        %v1015 = vunpack.c.l.b16 %v951
        %v1016 = vunpack.c.l.b16 %v952
        %v1017 = vunpack.c.l.b16 %v953
        %v1018 = vunpack.c.l.b16 %v954
        %v1019 = vpack.c.b16 %v988, %v987
        %v1020 = vpack.c.b16 %v990, %v989
        %v1021 = vpack.c.b16 %v992, %v991
        %v1022 = vpack.c.b16 %v994, %v993
        %v1023 = vpack.c.b16 %v996, %v995
        %v1024 = vpack.c.b16 %v998, %v997
        %v1025 = vpack.c.b16 %v1000, %v999
        %v1026 = vpack.c.b16 %v1002, %v1001
        %v1027 = vpack.c.b16 %v1004, %v1003
        %v1028 = vpack.c.b16 %v1006, %v1005
        %v1029 = vpack.c.b16 %v1008, %v1007
        %v1030 = vpack.c.b16 %v1010, %v1009
        %v1031 = vpack.c.b16 %v1012, %v1011
        %v1032 = vpack.c.b16 %v1014, %v1013
        %v1033 = vpack.c.b16 %v1016, %v1015
        %v1034 = vpack.c.b16 %v1018, %v1017
        %1051 = vmatprep.subr.bf16.mxu0 0
        %1052 = vmatpush1.bf16.msra.mxu0 %v1019
        %1053 = vmatprep.subr.bf16.mxu0 0
        %1054 = vmatpush1.bf16.msra.mxu0 %v1020
        %1055 = vmatprep.subr.bf16.mxu0 0
        %1056 = vmatpush1.bf16.msra.mxu0 %v1021
        %1057 = vmatprep.subr.bf16.mxu0 0
        %1058 = vmatpush1.bf16.msra.mxu0 %v1022
        %1059 = vmatprep.subr.bf16.mxu0 0
        %1060 = vmatpush1.bf16.msra.mxu0 %v1023
        %1061 = vmatprep.subr.bf16.mxu0 0
        %1062 = vmatpush1.bf16.msra.mxu0 %v1024
        %1063 = vmatprep.subr.bf16.mxu0 0
        %1064 = vmatpush1.bf16.msra.mxu0 %v1025
        %1065 = vmatprep.subr.bf16.mxu0 0
        %1066 = vmatpush1.bf16.msra.mxu0 %v1026
        %1067 = vmatprep.subr.bf16.mxu0 0
        %1068 = vmatpush1.bf16.msra.mxu0 %v1027
        %1069 = vmatprep.subr.bf16.mxu0 0
        %1070 = vmatpush1.bf16.msra.mxu0 %v1028
        %1071 = vmatprep.subr.bf16.mxu0 0
        %1072 = vmatpush1.bf16.msra.mxu0 %v1029
        %1073 = vmatprep.subr.bf16.mxu0 0
        %1074 = vmatpush1.bf16.msra.mxu0 %v1030
        %1075 = vmatprep.subr.bf16.mxu0 0
        %1076 = vmatpush1.bf16.msra.mxu0 %v1031
        %1077 = vmatprep.subr.bf16.mxu0 0
        %1078 = vmatpush1.bf16.msra.mxu0 %v1032
        %1079 = vmatprep.subr.bf16.mxu0 0
        %1080 = vmatpush1.bf16.msra.mxu0 %v1033
        %1081 = vmatprep.subr.bf16.mxu0 0
        %1082 = vmatpush1.bf16.msra.mxu0 %v1034
        %1083 = vmatprep.mubr.bf16.mxu0 %v916
        %1084 = vmatmul.mubr.bf16.gmra.mrb[0].mxu0 %v915
        %v1085 = vpop.f32.mrb[0].mxu0
        %v1086 = vadd.f32 0.0, %v1085
        %v1087 = vpop.f32.mrb[0].mxu0
        %v1088 = vpop.f32.mrb[0].mxu0
        %v1089 = vadd.f32 0.0, %v1088
        %v1090 = vpop.f32.mrb[0].mxu0
        %1091 = vmatprep.mubr.bf16.mxu0 %v918
        %1092 = vmatmul.mubr.bf16.gmra.mrb[0].mxu0 %v917
        %v1093 = vpop.f32.mrb[0].mxu0
        %v1094 = vadd.f32 0.0, %v1093
        %v1095 = vpop.f32.mrb[0].mxu0
        %v1096 = vpop.f32.mrb[0].mxu0
        %v1097 = vadd.f32 0.0, %v1096
        %v1098 = vpop.f32.mrb[0].mxu0
        %1099 = vdwg.mxu0
        %v1100 = vadd.f32 %v919, %v1086
        %v1101 = vadd.f32 %v920, %v1089
        %v1102 = vadd.f32 %v921, %v1094
        %v1103 = vadd.f32 %v922, %v1097
        %1104 = vst [vmem:[#allocation2] sm:$0xff] %v1100
        %1105 = vst [vmem:[#allocation2 + $0x8] sm:$0xff] %v1101
        %1106 = vst [vmem:[#allocation2 + $0x10] sm:$0xff] %v1102
        %1107 = vst [vmem:[#allocation2 + $0x18] sm:$0xff] %v1103
        %p1108 = scmp.eq.s32.totalorder %s21, 1
        // Predicated region
        $region121: #{llama_forward.15} parent=107 // pred_check
          %p1109 = pneg %p1108
        $region122: #{llama_forward.15} parent=107 // pred_check_branch
          %1111 = sbr.rel (%p1109) target = $region124
        $region123: #{llama_forward.15} parent=107 // pred_region
          %v1112 = vld [vmem:[%s478] sm:$0xff]
          %v1113 = vld [vmem:[%s478 + $0x8] sm:$0xff]
          %v1114 = vld [vmem:[%s478 + $0x10] sm:$0xff]
          %v1115 = vld [vmem:[%s478 + $0x18] sm:$0xff]
          %v1116 = vld [vmem:[#allocation2] sm:$0xff]
          %v1117 = vld [vmem:[#allocation2 + $0x8] sm:$0xff]
          %v1118 = vld [vmem:[#allocation2 + $0x10] sm:$0xff]
          %v1119 = vld [vmem:[#allocation2 + $0x18] sm:$0xff]
          %v1120 = vadd.f32 %v1112, %v1116
          %v1121 = vadd.f32 %v1113, %v1117
          %v1122 = vadd.f32 %v1114, %v1118
          %v1123 = vadd.f32 %v1115, %v1119
          %1124 = vst [vmem:[%s492] sm:$0xff] %v1120
          %1125 = vst [vmem:[%s492 + $0x8] sm:$0xff] %v1121
          %1126 = vst [vmem:[%s492 + $0x10] sm:$0xff] %v1122
          %1127 = vst [vmem:[%s492 + $0x18] sm:$0xff] %v1123
        $region124: #{llama_forward.15} parent=107 // pred_fallthru
          _
        %s1128 = smul.u32 4, %s20
        %p1129 = scmp.lt.s32.totalorder %s1128, 3
        %s1130 = scalar_select %p1129, %s1128, 3
        %s1131 = smul.addr %s1130, 8
        %s1132 = scalar_lea.vmem %s5, %s1131
        // Predicated region
        $region125: #{llama_forward.15} parent=107 // pred_check
          %p1133 = pneg %p171
        $region126: #{llama_forward.15} parent=107 // pred_check_branch
          %1135 = sbr.rel (%p1133) target = $region128
        $region127: #{llama_forward.15} parent=107 // pred_region
          %s1136 = smul.u32 4, %s20
        $region128: #{llama_forward.15} parent=107 // pred_fallthru
          _
        // Predicated region
        $region129: #{llama_forward.15} parent=107 // pred_check
          %p1137 = pneg %p171
        $region130: #{llama_forward.15} parent=107 // pred_check_branch
          %1139 = sbr.rel (%p1137) target = $region132
        $region131: #{llama_forward.15} parent=107 // pred_region
          %s1140 = smul.u32 4, %s20
          %p1141 = scmp.lt.s32.totalorder %s1140, 3
          %s1142 = scalar_select %p1141, %s1140, 3
          %s1143 = smul.addr %s1142, 8
          %s1144 = scalar_lea.vmem %s5, %s1143
        $region132: #{llama_forward.15} parent=107 // pred_fallthru
          _
      $region108: #{llama_forward.15} parent=5 // pred_fallthru
        _
      %p1145 = scmp.le.s32.totalorder 2, %s11
      // Predicated region
      $region133: #{llama_forward.15} parent=5 // pred_check
        %p1146 = pneg %p1145
      $region134: #{llama_forward.15} parent=5 // pred_check_branch
        %1148 = sbr.rel (%p1146) target = $region136
      $region135: #{llama_forward.15} parent=5 // pred_region
        %s1149 = ssub.s32 %s11, 2
      $region136: #{llama_forward.15} parent=5 // pred_fallthru
        _
    $region6: #{llama_forward.15} parent=1 // loop_footer
      %s15 = sadd.s32 1, %s11
    $region7: #{llama_forward.15} parent=1 // loop_footer_branch
      %10 = sbr.rel target = $region3
    $region8: #{llama_forward.15} parent=1 // loop_exit
      _

</llo_original>
